<compile_context>
chip_gen: v6e
topology: v6e:2x2x1
jax: 0.10.0
libtpu: 0.0.40
codegen_flags: <defaults>
</compile_context>

<pallas_src>
from functools import partial

import jax
import jax.numpy as jnp
import numpy as np
from jax.experimental import pallas as pl
from jax.experimental.pallas import tpu as pltpu

EPS = 1e-5
KSIZE = 3          # DoubleConv defaults: kernel_size=3, stride=1, padding='same'
LANE = 128         # TPU lane width: channel dims padded to a multiple of this


def _round_up(x, m):
    return ((x + m - 1) // m) * m


def _pick_tile_h(h, w, target_rows=2048):
    """Largest divisor of H whose tile (tile_h * W conv rows) stays <= target_rows."""
    best = 1
    for t in range(1, h + 1):
        if h % t == 0 and t * w <= target_rows:
            best = t
    return best


def _vmem_limit_bytes():
    # ~3/4 of physical VMEM leaves headroom for compiler-internal scratch:
    # v7x (64 MiB physical) -> ~48 MiB; v5e/v6e (128 MiB) -> ~96 MiB.
    try:
        cap = int(pltpu.get_tpu_info().vmem_capacity_bytes)
    except Exception:
        cap = 0
    if cap <= 0:
        cap = 64 * 1024 * 1024
    return (cap * 3) // 4


def _weight_matrix(w_oihw, cin_pad, cpad):
    """(C_out, C_in, kh, kw) -> (9*cin_pad, cpad) matmul matrix matching the im2col order."""
    c_out, cin_w = w_oihw.shape[0], w_oihw.shape[1]
    wt = jnp.transpose(w_oihw, (2, 3, 1, 0))                       # (kh, kw, cin, cout)
    wt = jnp.pad(wt, ((0, 0), (0, 0), (0, cin_pad - cin_w), (0, cpad - c_out)))
    return wt.reshape(KSIZE * KSIZE * cin_pad, cpad).astype(jnp.bfloat16)


def _bn_scale_shift(stats, count, gamma, beta, cpad):
    """Reduce per-tile partial sums -> per-channel scale/shift so BN is y*scale + shift."""
    s = jnp.sum(stats, axis=(0, 1))                                # (2, cpad) f32
    mean = s[0] / count
    var = jnp.maximum(s[1] / count - mean * mean, 0.0)             # biased var (PyTorch BN)
    c = gamma.shape[0]
    g = jnp.pad(gamma.astype(jnp.float32), (0, cpad - c), constant_values=1.0)
    b = jnp.pad(beta.astype(jnp.float32), (0, cpad - c))
    scale = jax.lax.rsqrt(var + EPS) * g
    shift = b - mean * scale
    return scale.reshape(1, cpad), shift.reshape(1, cpad)


# ---------------------------------------------------------------------------
# Conv (+ optional fused previous-block BN/ReLU on the input) + per-tile BN stats.
# Grid: (N, H // tile_h), both axes 'parallel'.
# ---------------------------------------------------------------------------
def _conv_stats_kernel(x_ref, top_ref, bot_ref, w_ref, scale_ref, shift_ref,
                       y_ref, stats_ref, work_ref, *, prenorm, tile_h):
    W = x_ref.shape[2]
    cin = x_ref.shape[3]
    cpad = y_ref.shape[3]
    hw = tile_h * W
    h = pl.program_id(1)
    n_h = pl.num_programs(1)
    cdt = jnp.bfloat16                      # MXU compute dtype (f32 accumulation)

    def pre(v):
        # Fused previous-block BatchNorm + ReLU (block 2 only).
        if prenorm:
            shp = (1,) * (v.ndim - 1) + (cin,)
            s = scale_ref[...].reshape(shp)
            t = shift_ref[...].reshape(shp)
            return jnp.maximum(v.astype(jnp.float32) * s + t, 0.0).astype(cdt)
        return v.astype(cdt)

    x = pre(x_ref[0])                       # (tile_h, W, cin)
    top = pre(top_ref[0, 0])                # (W, cin)  row above the tile (clamped)
    bot = pre(bot_ref[0, 0])                # (W, cin)  row below the tile (clamped)
    # 'same' zero padding handled in-kernel: halo rows outside the image are zero.
    # Masked AFTER the fused BN/ReLU, since padding pads the normalized activation.
    top = jnp.where(h == 0, jnp.zeros_like(top), top)
    bot = jnp.where(h == n_h - 1, jnp.zeros_like(bot), bot)

    # Zero-haloed (tile_h+2, W+2, cin) working tile in VMEM (column halo = zeros).
    work_ref[...] = jnp.zeros_like(work_ref)
    work_ref[1:tile_h + 1, 1:W + 1, :] = x
    work_ref[0, 1:W + 1, :] = top
    work_ref[tile_h + 1, 1:W + 1, :] = bot

    def tap(kh, kw):
        return work_ref[kh:kh + tile_h, kw:kw + W, :].reshape(hw, cin)

    if cin % LANE == 0:
        # K-fused im2col: one MXU matmul with K = 9*cin (fills the 256-deep MXU) instead of
        # 9 small matmuls.  Lane-aligned concat since cin is a multiple of 128.
        cols = jnp.concatenate(
            [tap(kh, kw) for kh in range(KSIZE) for kw in range(KSIZE)], axis=-1)
        acc = jnp.dot(cols, w_ref[...], preferred_element_type=jnp.float32)
    else:
        # Tiny-cin fallback (first conv: cin=4): 9 taps accumulated in f32; negligible cost.
        acc = jnp.zeros((hw, cpad), jnp.float32)
        for t in range(KSIZE * KSIZE):
            kh, kw = divmod(t, KSIZE)
            acc = acc + jnp.dot(tap(kh, kw), w_ref[t * cin:(t + 1) * cin, :],
                                preferred_element_type=jnp.float32)

    y_ref[0] = acc.reshape(tile_h, W, cpad).astype(y_ref.dtype)

    # Per-tile partial BN statistics, reduced once in the wrapper -> both grid axes stay
    # 'parallel' (no revisited accumulator block).
    s = jnp.sum(acc, axis=0, keepdims=True)
    sq = jnp.sum(acc * acc, axis=0, keepdims=True)
    stats_ref[0, 0, :, :] = jnp.concatenate([s, sq], axis=0)


def _conv_pass(x, w_mat, scale, shift, cpad, *, prenorm, tile_h, vmem_limit):
    N, H, W, cin = x.shape
    nH = H // tile_h
    kernel = partial(_conv_stats_kernel, prenorm=prenorm, tile_h=tile_h)

    def center_map(n, h):
        return (n, h, 0, 0)

    def top_map(n, h):                       # block size 1 along H -> element row index
        return (n, jnp.maximum(h * tile_h - 1, 0), 0, 0)

    def bot_map(n, h):
        return (n, jnp.minimum((h + 1) * tile_h, H - 1), 0, 0)

    def bcast_map(n, h):
        return (0, 0)

    y, stats = pl.pallas_call(
        kernel,
        out_shape=(
            jax.ShapeDtypeStruct((N, H, W, cpad), jnp.bfloat16),
            jax.ShapeDtypeStruct((N, nH, 2, cpad), jnp.float32),
        ),
        grid=(N, nH),
        in_specs=[
            pl.BlockSpec((1, tile_h, W, cin), center_map),
            pl.BlockSpec((1, 1, W, cin), top_map),
            pl.BlockSpec((1, 1, W, cin), bot_map),
            pl.BlockSpec((KSIZE * KSIZE * cin, cpad), bcast_map),
            pl.BlockSpec((1, cin), bcast_map),
            pl.BlockSpec((1, cin), bcast_map),
        ],
        out_specs=(
            pl.BlockSpec((1, tile_h, W, cpad), center_map),
            pl.BlockSpec((1, 1, 2, cpad), lambda n, h: (n, h, 0, 0)),
        ),
        scratch_shapes=[pltpu.VMEM((tile_h + 2, W + 2, cin), jnp.bfloat16)],
        compiler_params=pltpu.CompilerParams(
            dimension_semantics=("parallel", "parallel"),
            vmem_limit_bytes=vmem_limit),
    )(x, x, x, w_mat, scale, shift)
    return y, stats


# ---------------------------------------------------------------------------
# Final BatchNorm + ReLU; stores only the c_out real channels in f32 (NHWC).
# ---------------------------------------------------------------------------
def _bn_relu_kernel(y_ref, scale_ref, shift_ref, o_ref):
    cpad = y_ref.shape[3]
    c_out = o_ref.shape[3]
    y = y_ref[...].astype(jnp.float32)
    s = scale_ref[...].reshape(1, 1, 1, cpad)
    t = shift_ref[...].reshape(1, 1, 1, cpad)
    yn = jnp.maximum(y * s + t, 0.0)
    o_ref[...] = yn[:, :, :, :c_out].astype(o_ref.dtype)


def _bn_relu_pass(y, scale, shift, c_out, *, tile_h, vmem_limit):
    N, H, W, cpad = y.shape
    nH = H // tile_h
    return pl.pallas_call(
        _bn_relu_kernel,
        out_shape=jax.ShapeDtypeStruct((N, H, W, c_out), jnp.float32),
        grid=(N, nH),
        in_specs=[
            pl.BlockSpec((1, tile_h, W, cpad), lambda n, h: (n, h, 0, 0)),
            pl.BlockSpec((1, cpad), lambda n, h: (0, 0)),
            pl.BlockSpec((1, cpad), lambda n, h: (0, 0)),
        ],
        out_specs=pl.BlockSpec((1, tile_h, W, c_out), lambda n, h: (n, h, 0, 0)),
        compiler_params=pltpu.CompilerParams(
            dimension_semantics=("parallel", "parallel"),
            vmem_limit_bytes=vmem_limit),
    )(y, scale, shift)


def double_conv_forward(x_nchw, params):
    w1, g1, b1, w2, g2, b2 = params
    N, cin, H, W = x_nchw.shape
    c_out = w1.shape[0]
    cpad = _round_up(c_out, LANE)
    tile_h = _pick_tile_h(H, W)
    vmem_limit = _vmem_limit_bytes()

    # NCHW -> NHWC (channels on lanes); bf16 cast fused into this single boundary transpose.
    x = jnp.transpose(x_nchw, (0, 2, 3, 1)).astype(jnp.bfloat16)

    w1m = _weight_matrix(w1, cin, cpad)       # (9*cin, cpad)
    w2m = _weight_matrix(w2, cpad, cpad)      # (9*cpad, cpad); padded in-channels are zero

    count = float(N * H * W)
    zeros = jnp.zeros((1, cin), jnp.float32)  # unused prenorm slots for block 1

    # Block 1: conv + per-tile BN partial stats.
    y1, st1 = _conv_pass(x, w1m, zeros, zeros, cpad,
                         prenorm=False, tile_h=tile_h, vmem_limit=vmem_limit)
    scale1, shift1 = _bn_scale_shift(st1, count, g1, b1, cpad)

    # Block 2: conv with block-1's BN+ReLU fused in as an input pre-norm (no intermediate
    # BN/ReLU pass, no wrapper pad of y1), + block-2 BN partial stats.
    y2, st2 = _conv_pass(y1, w2m, scale1, shift1, cpad,
                         prenorm=True, tile_h=tile_h, vmem_limit=vmem_limit)
    scale2, shift2 = _bn_scale_shift(st2, count, g2, b2, cpad)

    # Final BN + ReLU; only the c_out real channels are written (f32, NHWC).
    out = _bn_relu_pass(y2, scale2, shift2, c_out, tile_h=tile_h, vmem_limit=vmem_limit)

    return jnp.transpose(out, (0, 3, 1, 2))   # NHWC -> NCHW at the true model boundary


def _reference_forward(x_nchw, params):
    # Pure-JAX f32 reference (lax conv + batch-stat BN + ReLU), matching PyTorch semantics.
    w1, g1, b1, w2, g2, b2 = params

    def block(x, w, g, b):
        y = jax.lax.conv_general_dilated(
            x, w, window_strides=(1, 1), padding="SAME",
            dimension_numbers=("NCHW", "OIHW", "NCHW"))
        mean = jnp.mean(y, axis=(0, 2, 3), keepdims=True)
        var = jnp.mean((y - mean) ** 2, axis=(0, 2, 3), keepdims=True)
        yn = (y - mean) * jax.lax.rsqrt(var + EPS)
        yn = yn * g.reshape(1, -1, 1, 1) + b.reshape(1, -1, 1, 1)
        return jnp.maximum(yn, 0.0)

    return block(block(x_nchw, w1, g1, b1), w2, g2, b2)


if __name__ == "__main__":
    key = jax.random.PRNGKey(0)
    k_x, k_w1, k_w2, k_g1, k_b1, k_g2, k_b2 = jax.random.split(key, 7)

    N, C_IN, H, W = 2, 4, 16, 16
    C_OUT = 8

    x = jax.random.normal(k_x, (N, C_IN, H, W), dtype=jnp.float32)

    w1 = jax.random.normal(k_w1, (C_OUT, C_IN, KSIZE, KSIZE), dtype=jnp.float32) * 0.1
    w2 = jax.random.normal(k_w2, (C_OUT, C_OUT, KSIZE, KSIZE), dtype=jnp.float32) * 0.1
    g1 = 1.0 + 0.1 * jax.random.normal(k_g1, (C_OUT,), dtype=jnp.float32)
    b1 = 0.1 * jax.random.normal(k_b1, (C_OUT,), dtype=jnp.float32)
    g2 = 1.0 + 0.1 * jax.random.normal(k_g2, (C_OUT,), dtype=jnp.float32)
    b2 = 0.1 * jax.random.normal(k_b2, (C_OUT,), dtype=jnp.float32)
    params = (w1, g1, b1, w2, g2, b2)

    out = jax.block_until_ready(jax.jit(double_conv_forward)(x, params))
    assert out.shape == (N, C_OUT, H, W)

    ref = jax.block_until_ready(_reference_forward(x, params))
    # bf16 MXU inputs + bf16 intermediate activations -> looser tolerance than pure f32.
    np.testing.assert_allclose(np.asarray(out), np.asarray(ref), rtol=5e-2, atol=5e-2)

    print("KERNEL_OK")
</pallas_src>

<mosaic_0001>
module attributes {stable_mosaic.version = 11 : i64} {
  func.func @_conv_stats_kernel(%arg0: i32, %arg1: i32, %arg2: memref<1x16x16x4xbf16, #tpu.memory_space<vmem>>, %arg3: memref<1x1x16x4xbf16, #tpu.memory_space<vmem>>, %arg4: memref<1x1x16x4xbf16, #tpu.memory_space<vmem>>, %arg5: memref<36x128xbf16, #tpu.memory_space<vmem>>, %arg6: memref<1x4xf32, #tpu.memory_space<vmem>>, %arg7: memref<1x4xf32, #tpu.memory_space<vmem>>, %arg8: memref<1x16x16x128xbf16, #tpu.memory_space<vmem>>, %arg9: memref<1x1x2x128xf32, #tpu.memory_space<vmem>>, %arg10: memref<18x18x4xbf16, #tpu.memory_space<vmem>>) attributes {dimension_semantics = [#tpu.dimension_semantics<parallel>, #tpu.dimension_semantics<parallel>], iteration_bounds = array<i64: 2, 1>, scalar_prefetch = 0 : i64, scratch_operands = 1 : i64, tpu.core_type = #tpu.core_type<tc>, window_params = [{transform_indices = @transform_0, window_bounds = array<i64: 1, 16, 16, 4>}, {transform_indices = @transform_1, window_bounds = array<i64: 1, 1, 16, 4>}, {transform_indices = @transform_2, window_bounds = array<i64: 1, 1, 16, 4>}, {pipeline_mode = #tpu.pipeline_mode<synchronous>, transform_indices = @transform_3, window_bounds = array<i64: 36, 128>}, {pipeline_mode = #tpu.pipeline_mode<synchronous>, transform_indices = @transform_4, window_bounds = array<i64: 1, 4>}, {pipeline_mode = #tpu.pipeline_mode<synchronous>, transform_indices = @transform_5, window_bounds = array<i64: 1, 4>}, {transform_indices = @transform_6, window_bounds = array<i64: 1, 16, 16, 128>}, {transform_indices = @transform_7, window_bounds = array<i64: 1, 1, 2, 128>}]} {
    %c0 = arith.constant 0 : index
    %c0_0 = arith.constant 0 : index
    %c0_1 = arith.constant 0 : index
    %c0_2 = arith.constant 0 : index
    %0 = vector.load %arg2[%c0, %c0_0, %c0_1, %c0_2] : memref<1x16x16x4xbf16, #tpu.memory_space<vmem>>, vector<1x16x16x4xbf16>
    %1 = vector.shape_cast %0 : vector<1x16x16x4xbf16> to vector<16x16x4xbf16>
    %c0_3 = arith.constant 0 : index
    %c0_4 = arith.constant 0 : index
    %c0_5 = arith.constant 0 : index
    %c0_6 = arith.constant 0 : index
    %2 = vector.load %arg3[%c0_3, %c0_4, %c0_5, %c0_6] : memref<1x1x16x4xbf16, #tpu.memory_space<vmem>>, vector<1x1x16x4xbf16>
    %3 = vector.shape_cast %2 : vector<1x1x16x4xbf16> to vector<16x4xbf16>
    %c0_7 = arith.constant 0 : index
    %c0_8 = arith.constant 0 : index
    %c0_9 = arith.constant 0 : index
    %c0_10 = arith.constant 0 : index
    %4 = vector.load %arg4[%c0_7, %c0_8, %c0_9, %c0_10] : memref<1x1x16x4xbf16, #tpu.memory_space<vmem>>, vector<1x1x16x4xbf16>
    %5 = vector.shape_cast %4 : vector<1x1x16x4xbf16> to vector<16x4xbf16>
    %c0_i32 = arith.constant 0 : i32
    %6 = arith.cmpi eq, %arg1, %c0_i32 : i32
    %cst = arith.constant 0.000000e+00 : bf16
    %7 = vector.broadcast %cst : bf16 to vector<16x4xbf16>
    %8 = arith.select %6, %7, %3 : vector<16x4xbf16>
    %c0_i32_11 = arith.constant 0 : i32
    %9 = arith.cmpi eq, %arg1, %c0_i32_11 : i32
    %cst_12 = arith.constant 0.000000e+00 : bf16
    %10 = vector.broadcast %cst_12 : bf16 to vector<16x4xbf16>
    %11 = arith.select %9, %10, %5 : vector<16x4xbf16>
    %cst_13 = arith.constant 0.000000e+00 : bf16
    %12 = vector.broadcast %cst_13 : bf16 to vector<18x18x4xbf16>
    %c0_14 = arith.constant 0 : index
    %c0_15 = arith.constant 0 : index
    %c0_16 = arith.constant 0 : index
    %13 = vector.load %arg10[%c0_14, %c0_15, %c0_16] : memref<18x18x4xbf16, #tpu.memory_space<vmem>>, vector<18x18x4xbf16>
    tpu.vector_store %arg10[%c0_14, %c0_15, %c0_16], %12 {strides = array<i32>} : memref<18x18x4xbf16, #tpu.memory_space<vmem>>, vector<18x18x4xbf16>,
    %c1 = arith.constant 1 : index
    %c1_17 = arith.constant 1 : index
    %c0_18 = arith.constant 0 : index
    %14 = vector.load %arg10[%c1, %c1_17, %c0_18] : memref<18x18x4xbf16, #tpu.memory_space<vmem>>, vector<16x16x4xbf16>
    tpu.vector_store %arg10[%c1, %c1_17, %c0_18], %1 {strides = array<i32>} : memref<18x18x4xbf16, #tpu.memory_space<vmem>>, vector<16x16x4xbf16>,
    %c0_19 = arith.constant 0 : index
    %c1_20 = arith.constant 1 : index
    %c0_21 = arith.constant 0 : index
    %15 = vector.load %arg10[%c0_19, %c1_20, %c0_21] : memref<18x18x4xbf16, #tpu.memory_space<vmem>>, vector<1x16x4xbf16>
    %16 = vector.shape_cast %15 : vector<1x16x4xbf16> to vector<16x4xbf16>
    %17 = vector.shape_cast %8 : vector<16x4xbf16> to vector<1x16x4xbf16>
    tpu.vector_store %arg10[%c0_19, %c1_20, %c0_21], %17 {strides = array<i32>} : memref<18x18x4xbf16, #tpu.memory_space<vmem>>, vector<1x16x4xbf16>,
    %c17 = arith.constant 17 : index
    %c1_22 = arith.constant 1 : index
    %c0_23 = arith.constant 0 : index
    %18 = vector.load %arg10[%c17, %c1_22, %c0_23] : memref<18x18x4xbf16, #tpu.memory_space<vmem>>, vector<1x16x4xbf16>
    %19 = vector.shape_cast %18 : vector<1x16x4xbf16> to vector<16x4xbf16>
    %20 = vector.shape_cast %11 : vector<16x4xbf16> to vector<1x16x4xbf16>
    tpu.vector_store %arg10[%c17, %c1_22, %c0_23], %20 {strides = array<i32>} : memref<18x18x4xbf16, #tpu.memory_space<vmem>>, vector<1x16x4xbf16>,
    %cst_24 = arith.constant 0.000000e+00 : f32
    %21 = vector.broadcast %cst_24 : f32 to vector<256x128xf32>
    %c0_25 = arith.constant 0 : index
    %c0_26 = arith.constant 0 : index
    %c0_27 = arith.constant 0 : index
    %22 = vector.load %arg10[%c0_25, %c0_26, %c0_27] : memref<18x18x4xbf16, #tpu.memory_space<vmem>>, vector<16x16x4xbf16>
    %23 = vector.shape_cast %22 : vector<16x16x4xbf16> to vector<256x4xbf16>
    %c0_28 = arith.constant 0 : index
    %c0_29 = arith.constant 0 : index
    %24 = vector.load %arg5[%c0_28, %c0_29] : memref<36x128xbf16, #tpu.memory_space<vmem>>, vector<4x128xbf16>
    %cst_30 = arith.constant dense<0.000000e+00> : vector<256x128xf32>
    %25 = tpu.matmul %23, %24, %cst_30 {dimension_numbers = #tpu.dot_dimension_numbers<[1], [0], [0], [1], [0, 0, 1, 1], [], []>} : vector<256x4xbf16>, vector<4x128xbf16>, vector<256x128xf32> -> vector<256x128xf32>
    %26 = arith.addf %21, %25 : vector<256x128xf32>
    %c0_31 = arith.constant 0 : index
    %c1_32 = arith.constant 1 : index
    %c0_33 = arith.constant 0 : index
    %27 = vector.load %arg10[%c0_31, %c1_32, %c0_33] : memref<18x18x4xbf16, #tpu.memory_space<vmem>>, vector<16x16x4xbf16>
    %28 = vector.shape_cast %27 : vector<16x16x4xbf16> to vector<256x4xbf16>
    %c4 = arith.constant 4 : index
    %c0_34 = arith.constant 0 : index
    %29 = vector.load %arg5[%c4, %c0_34] : memref<36x128xbf16, #tpu.memory_space<vmem>>, vector<4x128xbf16>
    %cst_35 = arith.constant dense<0.000000e+00> : vector<256x128xf32>
    %30 = tpu.matmul %28, %29, %cst_35 {dimension_numbers = #tpu.dot_dimension_numbers<[1], [0], [0], [1], [0, 0, 1, 1], [], []>} : vector<256x4xbf16>, vector<4x128xbf16>, vector<256x128xf32> -> vector<256x128xf32>
    %31 = arith.addf %26, %30 : vector<256x128xf32>
    %c0_36 = arith.constant 0 : index
    %c2 = arith.constant 2 : index
    %c0_37 = arith.constant 0 : index
    %32 = vector.load %arg10[%c0_36, %c2, %c0_37] : memref<18x18x4xbf16, #tpu.memory_space<vmem>>, vector<16x16x4xbf16>
    %33 = vector.shape_cast %32 : vector<16x16x4xbf16> to vector<256x4xbf16>
    %c8 = arith.constant 8 : index
    %c0_38 = arith.constant 0 : index
    %34 = vector.load %arg5[%c8, %c0_38] : memref<36x128xbf16, #tpu.memory_space<vmem>>, vector<4x128xbf16>
    %cst_39 = arith.constant dense<0.000000e+00> : vector<256x128xf32>
    %35 = tpu.matmul %33, %34, %cst_39 {dimension_numbers = #tpu.dot_dimension_numbers<[1], [0], [0], [1], [0, 0, 1, 1], [], []>} : vector<256x4xbf16>, vector<4x128xbf16>, vector<256x128xf32> -> vector<256x128xf32>
    %36 = arith.addf %31, %35 : vector<256x128xf32>
    %c1_40 = arith.constant 1 : index
    %c0_41 = arith.constant 0 : index
    %c0_42 = arith.constant 0 : index
    %37 = vector.load %arg10[%c1_40, %c0_41, %c0_42] : memref<18x18x4xbf16, #tpu.memory_space<vmem>>, vector<16x16x4xbf16>
    %38 = vector.shape_cast %37 : vector<16x16x4xbf16> to vector<256x4xbf16>
    %c12 = arith.constant 12 : index
    %c0_43 = arith.constant 0 : index
    %39 = vector.load %arg5[%c12, %c0_43] : memref<36x128xbf16, #tpu.memory_space<vmem>>, vector<4x128xbf16>
    %cst_44 = arith.constant dense<0.000000e+00> : vector<256x128xf32>
    %40 = tpu.matmul %38, %39, %cst_44 {dimension_numbers = #tpu.dot_dimension_numbers<[1], [0], [0], [1], [0, 0, 1, 1], [], []>} : vector<256x4xbf16>, vector<4x128xbf16>, vector<256x128xf32> -> vector<256x128xf32>
    %41 = arith.addf %36, %40 : vector<256x128xf32>
    %c1_45 = arith.constant 1 : index
    %c1_46 = arith.constant 1 : index
    %c0_47 = arith.constant 0 : index
    %42 = vector.load %arg10[%c1_45, %c1_46, %c0_47] : memref<18x18x4xbf16, #tpu.memory_space<vmem>>, vector<16x16x4xbf16>
    %43 = vector.shape_cast %42 : vector<16x16x4xbf16> to vector<256x4xbf16>
    %c16 = arith.constant 16 : index
    %c0_48 = arith.constant 0 : index
    %44 = vector.load %arg5[%c16, %c0_48] : memref<36x128xbf16, #tpu.memory_space<vmem>>, vector<4x128xbf16>
    %cst_49 = arith.constant dense<0.000000e+00> : vector<256x128xf32>
    %45 = tpu.matmul %43, %44, %cst_49 {dimension_numbers = #tpu.dot_dimension_numbers<[1], [0], [0], [1], [0, 0, 1, 1], [], []>} : vector<256x4xbf16>, vector<4x128xbf16>, vector<256x128xf32> -> vector<256x128xf32>
    %46 = arith.addf %41, %45 : vector<256x128xf32>
    %c1_50 = arith.constant 1 : index
    %c2_51 = arith.constant 2 : index
    %c0_52 = arith.constant 0 : index
    %47 = vector.load %arg10[%c1_50, %c2_51, %c0_52] : memref<18x18x4xbf16, #tpu.memory_space<vmem>>, vector<16x16x4xbf16>
    %48 = vector.shape_cast %47 : vector<16x16x4xbf16> to vector<256x4xbf16>
    %c20 = arith.constant 20 : index
    %c0_53 = arith.constant 0 : index
    %49 = vector.load %arg5[%c20, %c0_53] : memref<36x128xbf16, #tpu.memory_space<vmem>>, vector<4x128xbf16>
    %cst_54 = arith.constant dense<0.000000e+00> : vector<256x128xf32>
    %50 = tpu.matmul %48, %49, %cst_54 {dimension_numbers = #tpu.dot_dimension_numbers<[1], [0], [0], [1], [0, 0, 1, 1], [], []>} : vector<256x4xbf16>, vector<4x128xbf16>, vector<256x128xf32> -> vector<256x128xf32>
    %51 = arith.addf %46, %50 : vector<256x128xf32>
    %c2_55 = arith.constant 2 : index
    %c0_56 = arith.constant 0 : index
    %c0_57 = arith.constant 0 : index
    %52 = vector.load %arg10[%c2_55, %c0_56, %c0_57] : memref<18x18x4xbf16, #tpu.memory_space<vmem>>, vector<16x16x4xbf16>
    %53 = vector.shape_cast %52 : vector<16x16x4xbf16> to vector<256x4xbf16>
    %c24 = arith.constant 24 : index
    %c0_58 = arith.constant 0 : index
    %54 = vector.load %arg5[%c24, %c0_58] : memref<36x128xbf16, #tpu.memory_space<vmem>>, vector<4x128xbf16>
    %cst_59 = arith.constant dense<0.000000e+00> : vector<256x128xf32>
    %55 = tpu.matmul %53, %54, %cst_59 {dimension_numbers = #tpu.dot_dimension_numbers<[1], [0], [0], [1], [0, 0, 1, 1], [], []>} : vector<256x4xbf16>, vector<4x128xbf16>, vector<256x128xf32> -> vector<256x128xf32>
    %56 = arith.addf %51, %55 : vector<256x128xf32>
    %c2_60 = arith.constant 2 : index
    %c1_61 = arith.constant 1 : index
    %c0_62 = arith.constant 0 : index
    %57 = vector.load %arg10[%c2_60, %c1_61, %c0_62] : memref<18x18x4xbf16, #tpu.memory_space<vmem>>, vector<16x16x4xbf16>
    %58 = vector.shape_cast %57 : vector<16x16x4xbf16> to vector<256x4xbf16>
    %c28 = arith.constant 28 : index
    %c0_63 = arith.constant 0 : index
    %59 = vector.load %arg5[%c28, %c0_63] : memref<36x128xbf16, #tpu.memory_space<vmem>>, vector<4x128xbf16>
    %cst_64 = arith.constant dense<0.000000e+00> : vector<256x128xf32>
    %60 = tpu.matmul %58, %59, %cst_64 {dimension_numbers = #tpu.dot_dimension_numbers<[1], [0], [0], [1], [0, 0, 1, 1], [], []>} : vector<256x4xbf16>, vector<4x128xbf16>, vector<256x128xf32> -> vector<256x128xf32>
    %61 = arith.addf %56, %60 : vector<256x128xf32>
    %c2_65 = arith.constant 2 : index
    %c2_66 = arith.constant 2 : index
    %c0_67 = arith.constant 0 : index
    %62 = vector.load %arg10[%c2_65, %c2_66, %c0_67] : memref<18x18x4xbf16, #tpu.memory_space<vmem>>, vector<16x16x4xbf16>
    %63 = vector.shape_cast %62 : vector<16x16x4xbf16> to vector<256x4xbf16>
    %c32 = arith.constant 32 : index
    %c0_68 = arith.constant 0 : index
    %64 = vector.load %arg5[%c32, %c0_68] : memref<36x128xbf16, #tpu.memory_space<vmem>>, vector<4x128xbf16>
    %cst_69 = arith.constant dense<0.000000e+00> : vector<256x128xf32>
    %65 = tpu.matmul %63, %64, %cst_69 {dimension_numbers = #tpu.dot_dimension_numbers<[1], [0], [0], [1], [0, 0, 1, 1], [], []>} : vector<256x4xbf16>, vector<4x128xbf16>, vector<256x128xf32> -> vector<256x128xf32>
    %66 = arith.addf %61, %65 : vector<256x128xf32>
    %67 = vector.shape_cast %66 : vector<256x128xf32> to vector<16x16x128xf32>
    %68 = arith.truncf %67 : vector<16x16x128xf32> to vector<16x16x128xbf16>
    %c0_70 = arith.constant 0 : index
    %c0_71 = arith.constant 0 : index
    %c0_72 = arith.constant 0 : index
    %c0_73 = arith.constant 0 : index
    %69 = vector.load %arg8[%c0_70, %c0_71, %c0_72, %c0_73] : memref<1x16x16x128xbf16, #tpu.memory_space<vmem>>, vector<1x16x16x128xbf16>
    %70 = vector.shape_cast %69 : vector<1x16x16x128xbf16> to vector<16x16x128xbf16>
    %71 = vector.shape_cast %68 : vector<16x16x128xbf16> to vector<1x16x16x128xbf16>
    tpu.vector_store %arg8[%c0_70, %c0_71, %c0_72, %c0_73], %71 {strides = array<i32>} : memref<1x16x16x128xbf16, #tpu.memory_space<vmem>>, vector<1x16x16x128xbf16>,
    %cst_74 = arith.constant dense<0.000000e+00> : vector<128xf32>
    %72 = vector.multi_reduction <add>, %66, %cst_74 [0] : vector<256x128xf32> to vector<128xf32>
    %73 = vector.shape_cast %72 : vector<128xf32> to vector<1x128xf32>
    %74 = arith.mulf %66, %66 : vector<256x128xf32>
    %cst_75 = arith.constant dense<0.000000e+00> : vector<128xf32>
    %75 = vector.multi_reduction <add>, %74, %cst_75 [0] : vector<256x128xf32> to vector<128xf32>
    %76 = vector.shape_cast %75 : vector<128xf32> to vector<1x128xf32>
    %77 = tpu.concatenate %73, %76 in 0 : vector<1x128xf32>, vector<1x128xf32> -> vector<2x128xf32>
    %c0_76 = arith.constant 0 : index
    %c0_77 = arith.constant 0 : index
    %c0_78 = arith.constant 0 : index
    %c0_79 = arith.constant 0 : index
    %78 = vector.load %arg9[%c0_76, %c0_77, %c0_78, %c0_79] : memref<1x1x2x128xf32, #tpu.memory_space<vmem>>, vector<1x1x2x128xf32>
    %79 = vector.shape_cast %78 : vector<1x1x2x128xf32> to vector<2x128xf32>
    %80 = vector.shape_cast %77 : vector<2x128xf32> to vector<1x1x2x128xf32>
    tpu.vector_store %arg9[%c0_76, %c0_77, %c0_78, %c0_79], %80 {strides = array<i32>} : memref<1x1x2x128xf32, #tpu.memory_space<vmem>>, vector<1x1x2x128xf32>,
    return
  }
  func.func @transform_0(%arg0: i32, %arg1: i32) -> (i32, i32, i32, i32) {
    %c0_i32 = arith.constant 0 : i32
    %c0_i32_0 = arith.constant 0 : i32
    %c0_i32_1 = arith.constant 0 : i32
    return %arg0, %arg1, %c0_i32, %c0_i32_0 : i32, i32, i32, i32
  }
  func.func @transform_1(%arg0: i32, %arg1: i32) -> (i32, i32, i32, i32) {
    %c16_i32 = arith.constant 16 : i32
    %0 = arith.muli %arg1, %c16_i32 : i32
    %c1_i32 = arith.constant 1 : i32
    %1 = arith.subi %0, %c1_i32 : i32
    %c0_i32 = arith.constant 0 : i32
    %2 = arith.maxsi %1, %c0_i32 : i32
    %c0_i32_0 = arith.constant 0 : i32
    %c0_i32_1 = arith.constant 0 : i32
    %c0_i32_2 = arith.constant 0 : i32
    return %arg0, %2, %c0_i32_0, %c0_i32_1 : i32, i32, i32, i32
  }
  func.func @transform_2(%arg0: i32, %arg1: i32) -> (i32, i32, i32, i32) {
    %c1_i32 = arith.constant 1 : i32
    %0 = arith.addi %arg1, %c1_i32 : i32
    %c16_i32 = arith.constant 16 : i32
    %1 = arith.muli %0, %c16_i32 : i32
    %c15_i32 = arith.constant 15 : i32
    %2 = arith.minsi %1, %c15_i32 : i32
    %c0_i32 = arith.constant 0 : i32
    %c0_i32_0 = arith.constant 0 : i32
    %c0_i32_1 = arith.constant 0 : i32
    return %arg0, %2, %c0_i32, %c0_i32_0 : i32, i32, i32, i32
  }
  func.func @transform_3(%arg0: i32, %arg1: i32) -> (i32, i32) {
    %c0_i32 = arith.constant 0 : i32
    %c0_i32_0 = arith.constant 0 : i32
    %c0_i32_1 = arith.constant 0 : i32
    return %c0_i32, %c0_i32_0 : i32, i32
  }
  func.func @transform_4(%arg0: i32, %arg1: i32) -> (i32, i32) {
    %c0_i32 = arith.constant 0 : i32
    %c0_i32_0 = arith.constant 0 : i32
    %c0_i32_1 = arith.constant 0 : i32
    return %c0_i32, %c0_i32_0 : i32, i32
  }
  func.func @transform_5(%arg0: i32, %arg1: i32) -> (i32, i32) {
    %c0_i32 = arith.constant 0 : i32
    %c0_i32_0 = arith.constant 0 : i32
    %c0_i32_1 = arith.constant 0 : i32
    return %c0_i32, %c0_i32_0 : i32, i32
  }
  func.func @transform_6(%arg0: i32, %arg1: i32) -> (i32, i32, i32, i32) {
    %c0_i32 = arith.constant 0 : i32
    %c0_i32_0 = arith.constant 0 : i32
    %c0_i32_1 = arith.constant 0 : i32
    return %arg0, %arg1, %c0_i32, %c0_i32_0 : i32, i32, i32, i32
  }
  func.func @transform_7(%arg0: i32, %arg1: i32) -> (i32, i32, i32, i32) {
    %c0_i32 = arith.constant 0 : i32
    %c0_i32_0 = arith.constant 0 : i32
    %c0_i32_1 = arith.constant 0 : i32
    return %arg0, %arg1, %c0_i32, %c0_i32_0 : i32, i32, i32, i32
  }
}

module attributes {stable_mosaic.version = 11 : i64} {
  func.func @_conv_stats_kernel(%arg0: i32, %arg1: i32, %arg2: memref<1x16x16x128xbf16, #tpu.memory_space<vmem>>, %arg3: memref<1x1x16x128xbf16, #tpu.memory_space<vmem>>, %arg4: memref<1x1x16x128xbf16, #tpu.memory_space<vmem>>, %arg5: memref<1152x128xbf16, #tpu.memory_space<vmem>>, %arg6: memref<1x128xf32, #tpu.memory_space<vmem>>, %arg7: memref<1x128xf32, #tpu.memory_space<vmem>>, %arg8: memref<1x16x16x128xbf16, #tpu.memory_space<vmem>>, %arg9: memref<1x1x2x128xf32, #tpu.memory_space<vmem>>, %arg10: memref<18x18x128xbf16, #tpu.memory_space<vmem>>) attributes {dimension_semantics = [#tpu.dimension_semantics<parallel>, #tpu.dimension_semantics<parallel>], iteration_bounds = array<i64: 2, 1>, scalar_prefetch = 0 : i64, scratch_operands = 1 : i64, tpu.core_type = #tpu.core_type<tc>, window_params = [{transform_indices = @transform_0, window_bounds = array<i64: 1, 16, 16, 128>}, {transform_indices = @transform_1, window_bounds = array<i64: 1, 1, 16, 128>}, {transform_indices = @transform_2, window_bounds = array<i64: 1, 1, 16, 128>}, {pipeline_mode = #tpu.pipeline_mode<synchronous>, transform_indices = @transform_3, window_bounds = array<i64: 1152, 128>}, {pipeline_mode = #tpu.pipeline_mode<synchronous>, transform_indices = @transform_4, window_bounds = array<i64: 1, 128>}, {pipeline_mode = #tpu.pipeline_mode<synchronous>, transform_indices = @transform_5, window_bounds = array<i64: 1, 128>}, {transform_indices = @transform_6, window_bounds = array<i64: 1, 16, 16, 128>}, {transform_indices = @transform_7, window_bounds = array<i64: 1, 1, 2, 128>}]} {
    %c0 = arith.constant 0 : index
    %c0_0 = arith.constant 0 : index
    %c0_1 = arith.constant 0 : index
    %c0_2 = arith.constant 0 : index
    %0 = vector.load %arg2[%c0, %c0_0, %c0_1, %c0_2] : memref<1x16x16x128xbf16, #tpu.memory_space<vmem>>, vector<1x16x16x128xbf16>
    %1 = vector.shape_cast %0 : vector<1x16x16x128xbf16> to vector<16x16x128xbf16>
    %c0_3 = arith.constant 0 : index
    %c0_4 = arith.constant 0 : index
    %2 = vector.load %arg6[%c0_3, %c0_4] : memref<1x128xf32, #tpu.memory_space<vmem>>, vector<1x128xf32>
    %3 = vector.shape_cast %2 : vector<1x128xf32> to vector<1x1x128xf32>
    %c0_5 = arith.constant 0 : index
    %c0_6 = arith.constant 0 : index
    %4 = vector.load %arg7[%c0_5, %c0_6] : memref<1x128xf32, #tpu.memory_space<vmem>>, vector<1x128xf32>
    %5 = vector.shape_cast %4 : vector<1x128xf32> to vector<1x1x128xf32>
    %6 = arith.extf %1 : vector<16x16x128xbf16> to vector<16x16x128xf32>
    %7 = vector.broadcast %3 : vector<1x1x128xf32> to vector<16x16x128xf32>
    %8 = arith.mulf %6, %7 : vector<16x16x128xf32>
    %9 = vector.broadcast %5 : vector<1x1x128xf32> to vector<16x16x128xf32>
    %10 = arith.addf %8, %9 : vector<16x16x128xf32>
    %cst = arith.constant 0.000000e+00 : f32
    %11 = vector.broadcast %cst : f32 to vector<16x16x128xf32>
    %12 = arith.maximumf %10, %11 : vector<16x16x128xf32>
    %13 = arith.truncf %12 : vector<16x16x128xf32> to vector<16x16x128xbf16>
    %c0_7 = arith.constant 0 : index
    %c0_8 = arith.constant 0 : index
    %c0_9 = arith.constant 0 : index
    %c0_10 = arith.constant 0 : index
    %14 = vector.load %arg3[%c0_7, %c0_8, %c0_9, %c0_10] : memref<1x1x16x128xbf16, #tpu.memory_space<vmem>>, vector<1x1x16x128xbf16>
    %15 = vector.shape_cast %14 : vector<1x1x16x128xbf16> to vector<16x128xbf16>
    %c0_11 = arith.constant 0 : index
    %c0_12 = arith.constant 0 : index
    %16 = vector.load %arg6[%c0_11, %c0_12] : memref<1x128xf32, #tpu.memory_space<vmem>>, vector<1x128xf32>
    %c0_13 = arith.constant 0 : index
    %c0_14 = arith.constant 0 : index
    %17 = vector.load %arg7[%c0_13, %c0_14] : memref<1x128xf32, #tpu.memory_space<vmem>>, vector<1x128xf32>
    %18 = arith.extf %15 : vector<16x128xbf16> to vector<16x128xf32>
    %19 = vector.broadcast %16 : vector<1x128xf32> to vector<16x128xf32>
    %20 = arith.mulf %18, %19 : vector<16x128xf32>
    %21 = vector.broadcast %17 : vector<1x128xf32> to vector<16x128xf32>
    %22 = arith.addf %20, %21 : vector<16x128xf32>
    %cst_15 = arith.constant 0.000000e+00 : f32
    %23 = vector.broadcast %cst_15 : f32 to vector<16x128xf32>
    %24 = arith.maximumf %22, %23 : vector<16x128xf32>
    %25 = arith.truncf %24 : vector<16x128xf32> to vector<16x128xbf16>
    %c0_16 = arith.constant 0 : index
    %c0_17 = arith.constant 0 : index
    %c0_18 = arith.constant 0 : index
    %c0_19 = arith.constant 0 : index
    %26 = vector.load %arg4[%c0_16, %c0_17, %c0_18, %c0_19] : memref<1x1x16x128xbf16, #tpu.memory_space<vmem>>, vector<1x1x16x128xbf16>
    %27 = vector.shape_cast %26 : vector<1x1x16x128xbf16> to vector<16x128xbf16>
    %c0_20 = arith.constant 0 : index
    %c0_21 = arith.constant 0 : index
    %28 = vector.load %arg6[%c0_20, %c0_21] : memref<1x128xf32, #tpu.memory_space<vmem>>, vector<1x128xf32>
    %c0_22 = arith.constant 0 : index
    %c0_23 = arith.constant 0 : index
    %29 = vector.load %arg7[%c0_22, %c0_23] : memref<1x128xf32, #tpu.memory_space<vmem>>, vector<1x128xf32>
    %30 = arith.extf %27 : vector<16x128xbf16> to vector<16x128xf32>
    %31 = vector.broadcast %28 : vector<1x128xf32> to vector<16x128xf32>
    %32 = arith.mulf %30, %31 : vector<16x128xf32>
    %33 = vector.broadcast %29 : vector<1x128xf32> to vector<16x128xf32>
    %34 = arith.addf %32, %33 : vector<16x128xf32>
    %cst_24 = arith.constant 0.000000e+00 : f32
    %35 = vector.broadcast %cst_24 : f32 to vector<16x128xf32>
    %36 = arith.maximumf %34, %35 : vector<16x128xf32>
    %37 = arith.truncf %36 : vector<16x128xf32> to vector<16x128xbf16>
    %c0_i32 = arith.constant 0 : i32
    %38 = arith.cmpi eq, %arg1, %c0_i32 : i32
    %cst_25 = arith.constant 0.000000e+00 : bf16
    %39 = vector.broadcast %cst_25 : bf16 to vector<16x128xbf16>
    %40 = arith.select %38, %39, %25 : vector<16x128xbf16>
    %c0_i32_26 = arith.constant 0 : i32
    %41 = arith.cmpi eq, %arg1, %c0_i32_26 : i32
    %cst_27 = arith.constant 0.000000e+00 : bf16
    %42 = vector.broadcast %cst_27 : bf16 to vector<16x128xbf16>
    %43 = arith.select %41, %42, %37 : vector<16x128xbf16>
    %cst_28 = arith.constant 0.000000e+00 : bf16
    %44 = vector.broadcast %cst_28 : bf16 to vector<18x18x128xbf16>
    %c0_29 = arith.constant 0 : index
    %c0_30 = arith.constant 0 : index
    %c0_31 = arith.constant 0 : index
    %45 = vector.load %arg10[%c0_29, %c0_30, %c0_31] : memref<18x18x128xbf16, #tpu.memory_space<vmem>>, vector<18x18x128xbf16>
    tpu.vector_store %arg10[%c0_29, %c0_30, %c0_31], %44 {strides = array<i32>} : memref<18x18x128xbf16, #tpu.memory_space<vmem>>, vector<18x18x128xbf16>,
    %c1 = arith.constant 1 : index
    %c1_32 = arith.constant 1 : index
    %c0_33 = arith.constant 0 : index
    %46 = vector.load %arg10[%c1, %c1_32, %c0_33] : memref<18x18x128xbf16, #tpu.memory_space<vmem>>, vector<16x16x128xbf16>
    tpu.vector_store %arg10[%c1, %c1_32, %c0_33], %13 {strides = array<i32>} : memref<18x18x128xbf16, #tpu.memory_space<vmem>>, vector<16x16x128xbf16>,
    %c0_34 = arith.constant 0 : index
    %c1_35 = arith.constant 1 : index
    %c0_36 = arith.constant 0 : index
    %47 = vector.load %arg10[%c0_34, %c1_35, %c0_36] : memref<18x18x128xbf16, #tpu.memory_space<vmem>>, vector<1x16x128xbf16>
    %48 = vector.shape_cast %47 : vector<1x16x128xbf16> to vector<16x128xbf16>
    %49 = vector.shape_cast %40 : vector<16x128xbf16> to vector<1x16x128xbf16>
    tpu.vector_store %arg10[%c0_34, %c1_35, %c0_36], %49 {strides = array<i32>} : memref<18x18x128xbf16, #tpu.memory_space<vmem>>, vector<1x16x128xbf16>,
    %c17 = arith.constant 17 : index
    %c1_37 = arith.constant 1 : index
    %c0_38 = arith.constant 0 : index
    %50 = vector.load %arg10[%c17, %c1_37, %c0_38] : memref<18x18x128xbf16, #tpu.memory_space<vmem>>, vector<1x16x128xbf16>
    %51 = vector.shape_cast %50 : vector<1x16x128xbf16> to vector<16x128xbf16>
    %52 = vector.shape_cast %43 : vector<16x128xbf16> to vector<1x16x128xbf16>
    tpu.vector_store %arg10[%c17, %c1_37, %c0_38], %52 {strides = array<i32>} : memref<18x18x128xbf16, #tpu.memory_space<vmem>>, vector<1x16x128xbf16>,
    %c0_39 = arith.constant 0 : index
    %c0_40 = arith.constant 0 : index
    %c0_41 = arith.constant 0 : index
    %53 = vector.load %arg10[%c0_39, %c0_40, %c0_41] : memref<18x18x128xbf16, #tpu.memory_space<vmem>>, vector<16x16x128xbf16>
    %54 = vector.shape_cast %53 : vector<16x16x128xbf16> to vector<256x128xbf16>
    %c0_42 = arith.constant 0 : index
    %c1_43 = arith.constant 1 : index
    %c0_44 = arith.constant 0 : index
    %55 = vector.load %arg10[%c0_42, %c1_43, %c0_44] : memref<18x18x128xbf16, #tpu.memory_space<vmem>>, vector<16x16x128xbf16>
    %56 = vector.shape_cast %55 : vector<16x16x128xbf16> to vector<256x128xbf16>
    %c0_45 = arith.constant 0 : index
    %c2 = arith.constant 2 : index
    %c0_46 = arith.constant 0 : index
    %57 = vector.load %arg10[%c0_45, %c2, %c0_46] : memref<18x18x128xbf16, #tpu.memory_space<vmem>>, vector<16x16x128xbf16>
    %58 = vector.shape_cast %57 : vector<16x16x128xbf16> to vector<256x128xbf16>
    %c1_47 = arith.constant 1 : index
    %c0_48 = arith.constant 0 : index
    %c0_49 = arith.constant 0 : index
    %59 = vector.load %arg10[%c1_47, %c0_48, %c0_49] : memref<18x18x128xbf16, #tpu.memory_space<vmem>>, vector<16x16x128xbf16>
    %60 = vector.shape_cast %59 : vector<16x16x128xbf16> to vector<256x128xbf16>
    %c1_50 = arith.constant 1 : index
    %c1_51 = arith.constant 1 : index
    %c0_52 = arith.constant 0 : index
    %61 = vector.load %arg10[%c1_50, %c1_51, %c0_52] : memref<18x18x128xbf16, #tpu.memory_space<vmem>>, vector<16x16x128xbf16>
    %62 = vector.shape_cast %61 : vector<16x16x128xbf16> to vector<256x128xbf16>
    %c1_53 = arith.constant 1 : index
    %c2_54 = arith.constant 2 : index
    %c0_55 = arith.constant 0 : index
    %63 = vector.load %arg10[%c1_53, %c2_54, %c0_55] : memref<18x18x128xbf16, #tpu.memory_space<vmem>>, vector<16x16x128xbf16>
    %64 = vector.shape_cast %63 : vector<16x16x128xbf16> to vector<256x128xbf16>
    %c2_56 = arith.constant 2 : index
    %c0_57 = arith.constant 0 : index
    %c0_58 = arith.constant 0 : index
    %65 = vector.load %arg10[%c2_56, %c0_57, %c0_58] : memref<18x18x128xbf16, #tpu.memory_space<vmem>>, vector<16x16x128xbf16>
    %66 = vector.shape_cast %65 : vector<16x16x128xbf16> to vector<256x128xbf16>
    %c2_59 = arith.constant 2 : index
    %c1_60 = arith.constant 1 : index
    %c0_61 = arith.constant 0 : index
    %67 = vector.load %arg10[%c2_59, %c1_60, %c0_61] : memref<18x18x128xbf16, #tpu.memory_space<vmem>>, vector<16x16x128xbf16>
    %68 = vector.shape_cast %67 : vector<16x16x128xbf16> to vector<256x128xbf16>
    %c2_62 = arith.constant 2 : index
    %c2_63 = arith.constant 2 : index
    %c0_64 = arith.constant 0 : index
    %69 = vector.load %arg10[%c2_62, %c2_63, %c0_64] : memref<18x18x128xbf16, #tpu.memory_space<vmem>>, vector<16x16x128xbf16>
    %70 = vector.shape_cast %69 : vector<16x16x128xbf16> to vector<256x128xbf16>
    %71 = tpu.concatenate %54, %56, %58, %60, %62, %64, %66, %68, %70 in 1 : vector<256x128xbf16>, vector<256x128xbf16>, vector<256x128xbf16>, vector<256x128xbf16>, vector<256x128xbf16>, vector<256x128xbf16>, vector<256x128xbf16>, vector<256x128xbf16>, vector<256x128xbf16> -> vector<256x1152xbf16>
    %c0_65 = arith.constant 0 : index
    %c0_66 = arith.constant 0 : index
    %72 = vector.load %arg5[%c0_65, %c0_66] : memref<1152x128xbf16, #tpu.memory_space<vmem>>, vector<1152x128xbf16>
    %cst_67 = arith.constant dense<0.000000e+00> : vector<256x128xf32>
    %73 = tpu.matmul %71, %72, %cst_67 {dimension_numbers = #tpu.dot_dimension_numbers<[1], [0], [0], [1], [0, 0, 1, 1], [], []>} : vector<256x1152xbf16>, vector<1152x128xbf16>, vector<256x128xf32> -> vector<256x128xf32>
    %74 = vector.shape_cast %73 : vector<256x128xf32> to vector<16x16x128xf32>
    %75 = arith.truncf %74 : vector<16x16x128xf32> to vector<16x16x128xbf16>
    %c0_68 = arith.constant 0 : index
    %c0_69 = arith.constant 0 : index
    %c0_70 = arith.constant 0 : index
    %c0_71 = arith.constant 0 : index
    %76 = vector.load %arg8[%c0_68, %c0_69, %c0_70, %c0_71] : memref<1x16x16x128xbf16, #tpu.memory_space<vmem>>, vector<1x16x16x128xbf16>
    %77 = vector.shape_cast %76 : vector<1x16x16x128xbf16> to vector<16x16x128xbf16>
    %78 = vector.shape_cast %75 : vector<16x16x128xbf16> to vector<1x16x16x128xbf16>
    tpu.vector_store %arg8[%c0_68, %c0_69, %c0_70, %c0_71], %78 {strides = array<i32>} : memref<1x16x16x128xbf16, #tpu.memory_space<vmem>>, vector<1x16x16x128xbf16>,
    %cst_72 = arith.constant dense<0.000000e+00> : vector<128xf32>
    %79 = vector.multi_reduction <add>, %73, %cst_72 [0] : vector<256x128xf32> to vector<128xf32>
    %80 = vector.shape_cast %79 : vector<128xf32> to vector<1x128xf32>
    %81 = arith.mulf %73, %73 : vector<256x128xf32>
    %cst_73 = arith.constant dense<0.000000e+00> : vector<128xf32>
    %82 = vector.multi_reduction <add>, %81, %cst_73 [0] : vector<256x128xf32> to vector<128xf32>
    %83 = vector.shape_cast %82 : vector<128xf32> to vector<1x128xf32>
    %84 = tpu.concatenate %80, %83 in 0 : vector<1x128xf32>, vector<1x128xf32> -> vector<2x128xf32>
    %c0_74 = arith.constant 0 : index
    %c0_75 = arith.constant 0 : index
    %c0_76 = arith.constant 0 : index
    %c0_77 = arith.constant 0 : index
    %85 = vector.load %arg9[%c0_74, %c0_75, %c0_76, %c0_77] : memref<1x1x2x128xf32, #tpu.memory_space<vmem>>, vector<1x1x2x128xf32>
    %86 = vector.shape_cast %85 : vector<1x1x2x128xf32> to vector<2x128xf32>
    %87 = vector.shape_cast %84 : vector<2x128xf32> to vector<1x1x2x128xf32>
    tpu.vector_store %arg9[%c0_74, %c0_75, %c0_76, %c0_77], %87 {strides = array<i32>} : memref<1x1x2x128xf32, #tpu.memory_space<vmem>>, vector<1x1x2x128xf32>,
    return
  }
  func.func @transform_0(%arg0: i32, %arg1: i32) -> (i32, i32, i32, i32) {
    %c0_i32 = arith.constant 0 : i32
    %c0_i32_0 = arith.constant 0 : i32
    %c0_i32_1 = arith.constant 0 : i32
    return %arg0, %arg1, %c0_i32, %c0_i32_0 : i32, i32, i32, i32
  }
  func.func @transform_1(%arg0: i32, %arg1: i32) -> (i32, i32, i32, i32) {
    %c16_i32 = arith.constant 16 : i32
    %0 = arith.muli %arg1, %c16_i32 : i32
    %c1_i32 = arith.constant 1 : i32
    %1 = arith.subi %0, %c1_i32 : i32
    %c0_i32 = arith.constant 0 : i32
    %2 = arith.maxsi %1, %c0_i32 : i32
    %c0_i32_0 = arith.constant 0 : i32
    %c0_i32_1 = arith.constant 0 : i32
    %c0_i32_2 = arith.constant 0 : i32
    return %arg0, %2, %c0_i32_0, %c0_i32_1 : i32, i32, i32, i32
  }
  func.func @transform_2(%arg0: i32, %arg1: i32) -> (i32, i32, i32, i32) {
    %c1_i32 = arith.constant 1 : i32
    %0 = arith.addi %arg1, %c1_i32 : i32
    %c16_i32 = arith.constant 16 : i32
    %1 = arith.muli %0, %c16_i32 : i32
    %c15_i32 = arith.constant 15 : i32
    %2 = arith.minsi %1, %c15_i32 : i32
    %c0_i32 = arith.constant 0 : i32
    %c0_i32_0 = arith.constant 0 : i32
    %c0_i32_1 = arith.constant 0 : i32
    return %arg0, %2, %c0_i32, %c0_i32_0 : i32, i32, i32, i32
  }
  func.func @transform_3(%arg0: i32, %arg1: i32) -> (i32, i32) {
    %c0_i32 = arith.constant 0 : i32
    %c0_i32_0 = arith.constant 0 : i32
    %c0_i32_1 = arith.constant 0 : i32
    return %c0_i32, %c0_i32_0 : i32, i32
  }
  func.func @transform_4(%arg0: i32, %arg1: i32) -> (i32, i32) {
    %c0_i32 = arith.constant 0 : i32
    %c0_i32_0 = arith.constant 0 : i32
    %c0_i32_1 = arith.constant 0 : i32
    return %c0_i32, %c0_i32_0 : i32, i32
  }
  func.func @transform_5(%arg0: i32, %arg1: i32) -> (i32, i32) {
    %c0_i32 = arith.constant 0 : i32
    %c0_i32_0 = arith.constant 0 : i32
    %c0_i32_1 = arith.constant 0 : i32
    return %c0_i32, %c0_i32_0 : i32, i32
  }
  func.func @transform_6(%arg0: i32, %arg1: i32) -> (i32, i32, i32, i32) {
    %c0_i32 = arith.constant 0 : i32
    %c0_i32_0 = arith.constant 0 : i32
    %c0_i32_1 = arith.constant 0 : i32
    return %arg0, %arg1, %c0_i32, %c0_i32_0 : i32, i32, i32, i32
  }
  func.func @transform_7(%arg0: i32, %arg1: i32) -> (i32, i32, i32, i32) {
    %c0_i32 = arith.constant 0 : i32
    %c0_i32_0 = arith.constant 0 : i32
    %c0_i32_1 = arith.constant 0 : i32
    return %arg0, %arg1, %c0_i32, %c0_i32_0 : i32, i32, i32, i32
  }
}

module attributes {stable_mosaic.version = 11 : i64} {
  func.func @_bn_relu_kernel(%arg0: i32, %arg1: i32, %arg2: memref<1x16x16x128xbf16, #tpu.memory_space<vmem>>, %arg3: memref<1x128xf32, #tpu.memory_space<vmem>>, %arg4: memref<1x128xf32, #tpu.memory_space<vmem>>, %arg5: memref<1x16x16x8xf32, #tpu.memory_space<vmem>>) attributes {dimension_semantics = [#tpu.dimension_semantics<parallel>, #tpu.dimension_semantics<parallel>], iteration_bounds = array<i64: 2, 1>, scalar_prefetch = 0 : i64, scratch_operands = 0 : i64, tpu.core_type = #tpu.core_type<tc>, window_params = [{transform_indices = @transform_0, window_bounds = array<i64: 1, 16, 16, 128>}, {pipeline_mode = #tpu.pipeline_mode<synchronous>, transform_indices = @transform_1, window_bounds = array<i64: 1, 128>}, {pipeline_mode = #tpu.pipeline_mode<synchronous>, transform_indices = @transform_2, window_bounds = array<i64: 1, 128>}, {transform_indices = @transform_3, window_bounds = array<i64: 1, 16, 16, 8>}]} {
    %c0 = arith.constant 0 : index
    %c0_0 = arith.constant 0 : index
    %c0_1 = arith.constant 0 : index
    %c0_2 = arith.constant 0 : index
    %0 = vector.load %arg2[%c0, %c0_0, %c0_1, %c0_2] : memref<1x16x16x128xbf16, #tpu.memory_space<vmem>>, vector<1x16x16x128xbf16>
    %1 = arith.extf %0 : vector<1x16x16x128xbf16> to vector<1x16x16x128xf32>
    %c0_3 = arith.constant 0 : index
    %c0_4 = arith.constant 0 : index
    %2 = vector.load %arg3[%c0_3, %c0_4] : memref<1x128xf32, #tpu.memory_space<vmem>>, vector<1x128xf32>
    %3 = vector.shape_cast %2 : vector<1x128xf32> to vector<1x1x1x128xf32>
    %c0_5 = arith.constant 0 : index
    %c0_6 = arith.constant 0 : index
    %4 = vector.load %arg4[%c0_5, %c0_6] : memref<1x128xf32, #tpu.memory_space<vmem>>, vector<1x128xf32>
    %5 = vector.shape_cast %4 : vector<1x128xf32> to vector<1x1x1x128xf32>
    %6 = vector.broadcast %3 : vector<1x1x1x128xf32> to vector<1x16x16x128xf32>
    %7 = arith.mulf %1, %6 : vector<1x16x16x128xf32>
    %8 = vector.broadcast %5 : vector<1x1x1x128xf32> to vector<1x16x16x128xf32>
    %9 = arith.addf %7, %8 : vector<1x16x16x128xf32>
    %cst = arith.constant 0.000000e+00 : f32
    %10 = vector.broadcast %cst : f32 to vector<1x16x16x128xf32>
    %11 = arith.maximumf %9, %10 : vector<1x16x16x128xf32>
    %12 = vector.extract_strided_slice %11 {offsets = [0, 0, 0, 0], sizes = [1, 16, 16, 8], strides = [1, 1, 1, 1]} : vector<1x16x16x128xf32> to vector<1x16x16x8xf32>
    %c0_7 = arith.constant 0 : index
    %c0_8 = arith.constant 0 : index
    %c0_9 = arith.constant 0 : index
    %c0_10 = arith.constant 0 : index
    %13 = vector.load %arg5[%c0_7, %c0_8, %c0_9, %c0_10] : memref<1x16x16x8xf32, #tpu.memory_space<vmem>>, vector<1x16x16x8xf32>
    tpu.vector_store %arg5[%c0_7, %c0_8, %c0_9, %c0_10], %12 {strides = array<i32>} : memref<1x16x16x8xf32, #tpu.memory_space<vmem>>, vector<1x16x16x8xf32>,
    return
  }
  func.func @transform_0(%arg0: i32, %arg1: i32) -> (i32, i32, i32, i32) {
    %c0_i32 = arith.constant 0 : i32
    %c0_i32_0 = arith.constant 0 : i32
    %c0_i32_1 = arith.constant 0 : i32
    return %arg0, %arg1, %c0_i32, %c0_i32_0 : i32, i32, i32, i32
  }
  func.func @transform_1(%arg0: i32, %arg1: i32) -> (i32, i32) {
    %c0_i32 = arith.constant 0 : i32
    %c0_i32_0 = arith.constant 0 : i32
    %c0_i32_1 = arith.constant 0 : i32
    return %c0_i32, %c0_i32_0 : i32, i32
  }
  func.func @transform_2(%arg0: i32, %arg1: i32) -> (i32, i32) {
    %c0_i32 = arith.constant 0 : i32
    %c0_i32_0 = arith.constant 0 : i32
    %c0_i32_1 = arith.constant 0 : i32
    return %c0_i32, %c0_i32_0 : i32, i32
  }
  func.func @transform_3(%arg0: i32, %arg1: i32) -> (i32, i32, i32, i32) {
    %c0_i32 = arith.constant 0 : i32
    %c0_i32_0 = arith.constant 0 : i32
    %c0_i32_1 = arith.constant 0 : i32
    return %arg0, %arg1, %c0_i32, %c0_i32_0 : i32, i32, i32, i32
  }
}

</mosaic_0001>

<llo_original>
// kernel: double_conv_forward.5
$region0: #{double_conv_forward.5}
  #allocation0 [shape = 'u32[]', space=smem, size = 0x4, offset = 0x4, fixed_abs, tag = 'smem constant byte address 0x4 - core index']
  #allocation1 [shape = 'u32[144,128]{1,0:T(1,128)}', space=vmem, size = 0x12000, scoped, tag = 'internal scratch']
  %s0 = inlined_call_operand.vmem [shape: bf16[2,16,16,128], index: 0, kind: input, shape index: {}]
  %s1 = inlined_call_operand.vmem [shape: f32[1,128], index: 1, kind: input, shape index: {}]
  %s2 = inlined_call_operand.vmem [shape: f32[1,128], index: 2, kind: input, shape index: {}]
  %s3 = inlined_call_operand.vmem [shape: f32[2,16,16,8], index: 3, kind: output, shape index: {}]
  %s4 = sld [smem:[#allocation0]]
  $region45: #{double_conv_forward.5} parent=0
    _
  %s6 = ssub.s32 1, %s4
  %s7 = scalar_select 0, %s6, %s4
  loop: start=0, step=1, limit=4
  $region2: #{double_conv_forward.5} parent=0 // loop_pre_header
    _
  $region3: #{double_conv_forward.5} parent=0 // loop_header
    %s9 = sphi 0, %s13
    %p10 = scmp.ge.s32.totalorder %s9, 4
    %s16 = sphi 0, %s28
    %s17 = sphi 0, %s24
    %s18 = sphi 0, %s16
    %s19 = sphi 0, %s17
    %s20 = sphi 0, %s18
    %s21 = sphi 0, %s19
    %s33 = sphi 0, %s35
    %s36 = sphi 0, %s33
    %s37 = sphi 0, %s36
    %s53 = sphi 0, %s37
    %s57 = sphi 0, %s57
    %s59 = sphi 0, %s57
    %s60 = sphi 0, %s59
    %s74 = sphi 0, %s60
    %s78 = sphi 0, %s78
    %s80 = sphi 0, %s78
    %s81 = sphi 0, %s80
    %s95 = sphi 0, %s81
    %s103 = sphi 0, %s105
    %s106 = sphi 0, %s103
    %s107 = sphi 0, %s106
    %s123 = sphi 0, %s107
  $region4: #{double_conv_forward.5} parent=0 // loop_header_branch
    %12 = sbr.rel (%p10) target = $region8
  $region5: #{double_conv_forward.5} parent=0 // loop_body
    %s14 = ssub.s32 %s9, 1
    %s15 = ssub.s32 %s9, 2
    %s22 = sadd.s32 1, %s17
    %p23 = scmp.ge.s32.totalorder %s22, 1
    %s24 = scalar_select %p23, 0, %s22
    %s25 = sadd.s32 1, %s16
    %s26 = scalar_select %p23, %s25, %s16
    %p27 = scmp.ge.s32.totalorder %s26, 2
    %s28 = scalar_select %p27, 0, %s26
    %s29 = ssub.s32 %s16, %s28
    %s30 = ssub.s32 %s17, %s24
    %s31 = sor.u32 %s29, %s30
    %p32 = scmp.eq.s32.totalorder %s31, 0
    %s34 = sadd.s32 %s33, 1
    %s35 = scalar_select %p32, %s33, %s34
    %p38 = pneg %p32
    %p39 = scmp.eq.s32.totalorder %s9, 1
    %p40 = por %p38, %p39
    %p41 = scmp.ne.s32.totalorder %s33, %s36
    %p42 = scmp.eq.s32.totalorder %s9, 0
    %p43 = por %p41, %p42
    %p44 = scmp.ne.s32.totalorder %s33, %s36
    %p45 = scmp.eq.s32.totalorder %s14, 1
    %p46 = por %p44, %p45
    %p47 = scmp.ne.s32.totalorder %s36, %s37
    %p48 = scmp.eq.s32.totalorder %s14, 0
    %p49 = por %p47, %p48
    %p50 = scmp.ne.s32.totalorder %s36, %s37
    %p51 = scmp.eq.s32.totalorder %s15, 1
    %p52 = por %p50, %p51
    %p54 = scmp.ne.s32.totalorder %s37, %s53
    %p55 = scmp.eq.s32.totalorder %s15, 0
    %p56 = por %p54, %p55
    %s58 = sadd.s32 %s57, 1
    %p61 = scmp.eq.s32.totalorder %s9, 1
    %p62 = scmp.ne.s32.totalorder %s57, %s59
    %p63 = scmp.eq.s32.totalorder %s9, 0
    %p64 = por %p62, %p63
    %p65 = scmp.ne.s32.totalorder %s57, %s59
    %p66 = scmp.eq.s32.totalorder %s14, 1
    %p67 = por %p65, %p66
    %p68 = scmp.ne.s32.totalorder %s59, %s60
    %p69 = scmp.eq.s32.totalorder %s14, 0
    %p70 = por %p68, %p69
    %p71 = scmp.ne.s32.totalorder %s59, %s60
    %p72 = scmp.eq.s32.totalorder %s15, 1
    %p73 = por %p71, %p72
    %p75 = scmp.ne.s32.totalorder %s60, %s74
    %p76 = scmp.eq.s32.totalorder %s15, 0
    %p77 = por %p75, %p76
    %s79 = sadd.s32 %s78, 1
    %p82 = scmp.eq.s32.totalorder %s9, 1
    %p83 = scmp.ne.s32.totalorder %s78, %s80
    %p84 = scmp.eq.s32.totalorder %s9, 0
    %p85 = por %p83, %p84
    %p86 = scmp.ne.s32.totalorder %s78, %s80
    %p87 = scmp.eq.s32.totalorder %s14, 1
    %p88 = por %p86, %p87
    %p89 = scmp.ne.s32.totalorder %s80, %s81
    %p90 = scmp.eq.s32.totalorder %s14, 0
    %p91 = por %p89, %p90
    %p92 = scmp.ne.s32.totalorder %s80, %s81
    %p93 = scmp.eq.s32.totalorder %s15, 1
    %p94 = por %p92, %p93
    %p96 = scmp.ne.s32.totalorder %s81, %s95
    %p97 = scmp.eq.s32.totalorder %s15, 0
    %p98 = por %p96, %p97
    %s99 = ssub.s32 %s16, %s28
    %s100 = ssub.s32 %s17, %s24
    %s101 = sor.u32 %s99, %s100
    %p102 = scmp.eq.s32.totalorder %s101, 0
    %s104 = sadd.s32 %s103, 1
    %s105 = scalar_select %p102, %s103, %s104
    %p108 = pneg %p102
    %p109 = scmp.eq.s32.totalorder %s9, 1
    %p110 = por %p108, %p109
    %p111 = scmp.ne.s32.totalorder %s103, %s106
    %p112 = scmp.eq.s32.totalorder %s9, 0
    %p113 = por %p111, %p112
    %p114 = scmp.ne.s32.totalorder %s103, %s106
    %p115 = scmp.eq.s32.totalorder %s14, 1
    %p116 = por %p114, %p115
    %p117 = scmp.ne.s32.totalorder %s106, %s107
    %p118 = scmp.eq.s32.totalorder %s14, 0
    %p119 = por %p117, %p118
    %p120 = scmp.ne.s32.totalorder %s106, %s107
    %p121 = scmp.eq.s32.totalorder %s15, 1
    %p122 = por %p120, %p121
    %p124 = scmp.ne.s32.totalorder %s107, %s123
    %p125 = scmp.eq.s32.totalorder %s15, 0
    %p126 = por %p124, %p125
    %p127 = scmp.le.s32.totalorder 1, %s9
    %p128 = scmp.lt.s32.totalorder %s9, 3
    %p129 = pnand %p127, %p128
    %p130 = pneg %p129
    // Predicated region
    $region9: #{double_conv_forward.5} parent=5 // pred_check
      _
    $region10: #{double_conv_forward.5} parent=5 // pred_check_branch
      %132 = sbr.rel (%p129) target = $region12
    $region11: #{double_conv_forward.5} parent=5 // pred_region
      %s133 = ssub.s32 %s9, 1
      // Predicated region
      $region13: #{double_conv_forward.5} parent=11 // pred_check
        %p134 = pneg %p70
      $region14: #{double_conv_forward.5} parent=11 // pred_check_branch
        %136 = sbr.rel (%p134) target = $region16
      $region15: #{double_conv_forward.5} parent=11 // pred_region
        _
      $region16: #{double_conv_forward.5} parent=11 // pred_fallthru
        _
      // Predicated region
      $region17: #{double_conv_forward.5} parent=11 // pred_check
        %p137 = pneg %p91
      $region18: #{double_conv_forward.5} parent=11 // pred_check_branch
        %139 = sbr.rel (%p137) target = $region20
      $region19: #{double_conv_forward.5} parent=11 // pred_region
        _
      $region20: #{double_conv_forward.5} parent=11 // pred_fallthru
        _
    $region12: #{double_conv_forward.5} parent=5 // pred_fallthru
      _
    %p140 = scmp.lt.s32.totalorder %s9, 2
    // Predicated region
    $region21: #{double_conv_forward.5} parent=5 // pred_check
      %p141 = pneg %p140
    $region22: #{double_conv_forward.5} parent=5 // pred_check_branch
      %143 = sbr.rel (%p141) target = $region24
    $region23: #{double_conv_forward.5} parent=5 // pred_region
      // Predicated region
      $region25: #{double_conv_forward.5} parent=23 // pred_check
        %p144 = pneg %p43
      $region26: #{double_conv_forward.5} parent=23 // pred_check_branch
        %146 = sbr.rel (%p144) target = $region28
      $region27: #{double_conv_forward.5} parent=23 // pred_region
        %s147 = smul.u32 16, %s17
        %p148 = scmp.lt.s32.totalorder %s16, 1
        %s149 = scalar_select %p148, %s16, 1
        %p150 = scmp.lt.s32.totalorder %s147, 15
        %s151 = scalar_select %p150, %s147, 15
        %s152 = smul.addr %s151, 2
        %s153 = smul.addr %s149, 32
        %s154 = sadd.s32 %s152, %s153
        %s155 = smul.addr %s154, 4
        %s156 = scalar_lea.vmem %s0, %s155
        %s157 = smul.u32 16, %s17
      $region28: #{double_conv_forward.5} parent=23 // pred_fallthru
        _
    $region24: #{double_conv_forward.5} parent=5 // pred_fallthru
      _
    %p158 = scmp.le.s32.totalorder 1, %s9
    %p159 = scmp.lt.s32.totalorder %s9, 3
    %p160 = pnand %p158, %p159
    %p161 = pneg %p160
    // Predicated region
    $region29: #{double_conv_forward.5} parent=5 // pred_check
      _
    $region30: #{double_conv_forward.5} parent=5 // pred_check_branch
      %163 = sbr.rel (%p160) target = $region32
    $region31: #{double_conv_forward.5} parent=5 // pred_region
      %s164 = ssub.s32 %s9, 1
      %s165 = smul.u32 16, %s19
      %p166 = scmp.lt.s32.totalorder %s18, 1
      %s167 = scalar_select %p166, %s18, 1
      %p168 = scmp.lt.s32.totalorder %s165, 15
      %s169 = scalar_select %p168, %s165, 15
      %s170 = smul.addr %s169, 2
      %s171 = smul.addr %s167, 32
      %s172 = sadd.s32 %s170, %s171
      %s173 = smul.addr %s172, 4
      %s174 = scalar_lea.vmem %s0, %s173
      %p175 = pneg %p49
      %p176 = pneg %p46
      %p177 = pneg %p70
      %p178 = pneg %p67
      %p179 = pneg %p91
      %p180 = pneg %p88
      %p181 = pneg %p119
      %p182 = pneg %p116
      %s183 = smul.u32 16, %s19
      %p184 = scmp.lt.s32.totalorder %s18, 1
      %s185 = scalar_select %p184, %s18, 1
      %p186 = scmp.lt.s32.totalorder %s183, 15
      %s187 = scalar_select %p186, %s183, 15
      %s188 = smul.addr %s187, 2
      %s189 = smul.addr %s185, 32
      %s190 = sadd.s32 %s188, %s189
      %s191 = smul.addr %s190, 8
      %s192 = scalar_lea.vmem %s3, %s191
      %s193 = smul.u32 16, %s19
      %p194 = scmp.lt.s32.totalorder %s18, 1
      %s195 = scalar_select %p194, %s18, 1
      %p196 = scmp.lt.s32.totalorder %s193, 15
      %s197 = scalar_select %p196, %s193, 15
      %s198 = smul.addr %s197, 2
      %s199 = smul.addr %s195, 32
      %s200 = sadd.s32 %s198, %s199
      %s201 = smul.addr %s200, 4
      %s202 = scalar_lea.vmem %s0, %s201
      %s203 = smul.u32 16, %s19
      %s204 = smul.u32 16, %s19
      %p205 = scmp.lt.s32.totalorder %s18, 1
      %s206 = scalar_select %p205, %s18, 1
      %p207 = scmp.lt.s32.totalorder %s204, 15
      %s208 = scalar_select %p207, %s204, 15
      %s209 = smul.addr %s208, 2
      %s210 = smul.addr %s206, 32
      %s211 = sadd.s32 %s209, %s210
      %s212 = smul.addr %s211, 8
      %s213 = scalar_lea.vmem %s3, %s212
      %s214 = smul.u32 16, %s19
      %v215 = vld [vmem:[%s202] sm:$0xf]
      %v216 = vld [vmem:[%s202 + $0x4] sm:$0xf]
      %v217 = vld [vmem:[%s202 + $0x8] sm:$0xf]
      %v218 = vld [vmem:[%s202 + $0xc] sm:$0xf]
      %v219 = vld [vmem:[%s202 + $0x10] sm:$0xf]
      %v220 = vld [vmem:[%s202 + $0x14] sm:$0xf]
      %v221 = vld [vmem:[%s202 + $0x18] sm:$0xf]
      %v222 = vld [vmem:[%s202 + $0x1c] sm:$0xf]
      %v223 = vld [vmem:[%s202 + $0x20] sm:$0xf]
      %v224 = vld [vmem:[%s202 + $0x24] sm:$0xf]
      %v225 = vld [vmem:[%s202 + $0x28] sm:$0xf]
      %v226 = vld [vmem:[%s202 + $0x2c] sm:$0xf]
      %v227 = vld [vmem:[%s202 + $0x30] sm:$0xf]
      %v228 = vld [vmem:[%s202 + $0x34] sm:$0xf]
      %v229 = vld [vmem:[%s202 + $0x38] sm:$0xf]
      %v230 = vld [vmem:[%s202 + $0x3c] sm:$0xf]
      %v231 = vld [vmem:[%s202 + $0x40] sm:$0xf]
      %v232 = vld [vmem:[%s202 + $0x44] sm:$0xf]
      %v233 = vld [vmem:[%s202 + $0x48] sm:$0xf]
      %v234 = vld [vmem:[%s202 + $0x4c] sm:$0xf]
      %v235 = vld [vmem:[%s202 + $0x50] sm:$0xf]
      %v236 = vld [vmem:[%s202 + $0x54] sm:$0xf]
      %v237 = vld [vmem:[%s202 + $0x58] sm:$0xf]
      %v238 = vld [vmem:[%s202 + $0x5c] sm:$0xf]
      %v239 = vld [vmem:[%s202 + $0x60] sm:$0xf]
      %v240 = vld [vmem:[%s202 + $0x64] sm:$0xf]
      %v241 = vld [vmem:[%s202 + $0x68] sm:$0xf]
      %v242 = vld [vmem:[%s202 + $0x6c] sm:$0xf]
      %v243 = vld [vmem:[%s202 + $0x70] sm:$0xf]
      %v244 = vld [vmem:[%s202 + $0x74] sm:$0xf]
      %v245 = vld [vmem:[%s202 + $0x78] sm:$0xf]
      %v246 = vld [vmem:[%s202 + $0x7c] sm:$0xf]
      %v247 = vunpack.c.l.bf16 %v215
      %v248 = vunpack.c.l.bf16 %v216
      %v249 = vunpack.c.l.bf16 %v217
      %v250 = vunpack.c.l.bf16 %v218
      %v251 = vunpack.c.l.bf16 %v219
      %v252 = vunpack.c.l.bf16 %v220
      %v253 = vunpack.c.l.bf16 %v221
      %v254 = vunpack.c.l.bf16 %v222
      %v255 = vunpack.c.l.bf16 %v223
      %v256 = vunpack.c.l.bf16 %v224
      %v257 = vunpack.c.l.bf16 %v225
      %v258 = vunpack.c.l.bf16 %v226
      %v259 = vunpack.c.l.bf16 %v227
      %v260 = vunpack.c.l.bf16 %v228
      %v261 = vunpack.c.l.bf16 %v229
      %v262 = vunpack.c.l.bf16 %v230
      %v263 = vunpack.c.l.bf16 %v231
      %v264 = vunpack.c.l.bf16 %v232
      %v265 = vunpack.c.l.bf16 %v233
      %v266 = vunpack.c.l.bf16 %v234
      %v267 = vunpack.c.l.bf16 %v235
      %v268 = vunpack.c.l.bf16 %v236
      %v269 = vunpack.c.l.bf16 %v237
      %v270 = vunpack.c.l.bf16 %v238
      %v271 = vunpack.c.l.bf16 %v239
      %v272 = vunpack.c.l.bf16 %v240
      %v273 = vunpack.c.l.bf16 %v241
      %v274 = vunpack.c.l.bf16 %v242
      %v275 = vunpack.c.l.bf16 %v243
      %v276 = vunpack.c.l.bf16 %v244
      %v277 = vunpack.c.l.bf16 %v245
      %v278 = vunpack.c.l.bf16 %v246
      %v279 = vld [vmem:[%s1] sm:$0x1]
      %v280 = vld [vmem:[%s2] sm:$0x1]
      %v282 = vlaneseq
      %v283 = vshrl.u32 %v282, 7
      %v284 = vsub.s32 0, %v283
      %v285 = vrot.slane %v279, %v284
      %v287 = vmul.f32 %v247, %v285
      %v288 = vmul.f32 %v248, %v285
      %v289 = vmul.f32 %v249, %v285
      %v290 = vmul.f32 %v250, %v285
      %v291 = vmul.f32 %v251, %v285
      %v292 = vmul.f32 %v252, %v285
      %v293 = vmul.f32 %v253, %v285
      %v294 = vmul.f32 %v254, %v285
      %v295 = vmul.f32 %v255, %v285
      %v296 = vmul.f32 %v256, %v285
      %v297 = vmul.f32 %v257, %v285
      %v298 = vmul.f32 %v258, %v285
      %v299 = vmul.f32 %v259, %v285
      %v300 = vmul.f32 %v260, %v285
      %v301 = vmul.f32 %v261, %v285
      %v302 = vmul.f32 %v262, %v285
      %v303 = vmul.f32 %v263, %v285
      %v304 = vmul.f32 %v264, %v285
      %v305 = vmul.f32 %v265, %v285
      %v306 = vmul.f32 %v266, %v285
      %v307 = vmul.f32 %v267, %v285
      %v308 = vmul.f32 %v268, %v285
      %v309 = vmul.f32 %v269, %v285
      %v310 = vmul.f32 %v270, %v285
      %v311 = vmul.f32 %v271, %v285
      %v312 = vmul.f32 %v272, %v285
      %v313 = vmul.f32 %v273, %v285
      %v314 = vmul.f32 %v274, %v285
      %v315 = vmul.f32 %v275, %v285
      %v316 = vmul.f32 %v276, %v285
      %v317 = vmul.f32 %v277, %v285
      %v318 = vmul.f32 %v278, %v285
      %v320 = vlaneseq
      %v321 = vshrl.u32 %v320, 7
      %v322 = vsub.s32 0, %v321
      %v323 = vrot.slane %v280, %v322
      %v325 = vadd.f32 %v287, %v323
      %v326 = vadd.f32 %v288, %v323
      %v327 = vadd.f32 %v289, %v323
      %v328 = vadd.f32 %v290, %v323
      %v329 = vadd.f32 %v291, %v323
      %v330 = vadd.f32 %v292, %v323
      %v331 = vadd.f32 %v293, %v323
      %v332 = vadd.f32 %v294, %v323
      %v333 = vadd.f32 %v295, %v323
      %v334 = vadd.f32 %v296, %v323
      %v335 = vadd.f32 %v297, %v323
      %v336 = vadd.f32 %v298, %v323
      %v337 = vadd.f32 %v299, %v323
      %v338 = vadd.f32 %v300, %v323
      %v339 = vadd.f32 %v301, %v323
      %v340 = vadd.f32 %v302, %v323
      %v341 = vadd.f32 %v303, %v323
      %v342 = vadd.f32 %v304, %v323
      %v343 = vadd.f32 %v305, %v323
      %v344 = vadd.f32 %v306, %v323
      %v345 = vadd.f32 %v307, %v323
      %v346 = vadd.f32 %v308, %v323
      %v347 = vadd.f32 %v309, %v323
      %v348 = vadd.f32 %v310, %v323
      %v349 = vadd.f32 %v311, %v323
      %v350 = vadd.f32 %v312, %v323
      %v351 = vadd.f32 %v313, %v323
      %v352 = vadd.f32 %v314, %v323
      %v353 = vadd.f32 %v315, %v323
      %v354 = vadd.f32 %v316, %v323
      %v355 = vadd.f32 %v317, %v323
      %v356 = vadd.f32 %v318, %v323
      %v357 = vmax.f32 %v325, 0.0
      %v358 = vmax.f32 %v326, 0.0
      %v359 = vmax.f32 %v327, 0.0
      %v360 = vmax.f32 %v328, 0.0
      %v361 = vmax.f32 %v329, 0.0
      %v362 = vmax.f32 %v330, 0.0
      %v363 = vmax.f32 %v331, 0.0
      %v364 = vmax.f32 %v332, 0.0
      %v365 = vmax.f32 %v333, 0.0
      %v366 = vmax.f32 %v334, 0.0
      %v367 = vmax.f32 %v335, 0.0
      %v368 = vmax.f32 %v336, 0.0
      %v369 = vmax.f32 %v337, 0.0
      %v370 = vmax.f32 %v338, 0.0
      %v371 = vmax.f32 %v339, 0.0
      %v372 = vmax.f32 %v340, 0.0
      %v373 = vmax.f32 %v341, 0.0
      %v374 = vmax.f32 %v342, 0.0
      %v375 = vmax.f32 %v343, 0.0
      %v376 = vmax.f32 %v344, 0.0
      %v377 = vmax.f32 %v345, 0.0
      %v378 = vmax.f32 %v346, 0.0
      %v379 = vmax.f32 %v347, 0.0
      %v380 = vmax.f32 %v348, 0.0
      %v381 = vmax.f32 %v349, 0.0
      %v382 = vmax.f32 %v350, 0.0
      %v383 = vmax.f32 %v351, 0.0
      %v384 = vmax.f32 %v352, 0.0
      %v385 = vmax.f32 %v353, 0.0
      %v386 = vmax.f32 %v354, 0.0
      %v387 = vmax.f32 %v355, 0.0
      %v388 = vmax.f32 %v356, 0.0
      %vm389 = vcmask 64512
      %390 = vst.msk [vmem:[%s213] sm:$0xff] %vm389, %v357
      %391 = vst.msk [vmem:[%s213 + $0x8] sm:$0xff] %vm389, %v358
      %392 = vst.msk [vmem:[%s213 + $0x10] sm:$0xff] %vm389, %v359
      %393 = vst.msk [vmem:[%s213 + $0x18] sm:$0xff] %vm389, %v360
      %394 = vst.msk [vmem:[%s213 + $0x20] sm:$0xff] %vm389, %v361
      %395 = vst.msk [vmem:[%s213 + $0x28] sm:$0xff] %vm389, %v362
      %396 = vst.msk [vmem:[%s213 + $0x30] sm:$0xff] %vm389, %v363
      %397 = vst.msk [vmem:[%s213 + $0x38] sm:$0xff] %vm389, %v364
      %398 = vst.msk [vmem:[%s213 + $0x40] sm:$0xff] %vm389, %v365
      %399 = vst.msk [vmem:[%s213 + $0x48] sm:$0xff] %vm389, %v366
      %400 = vst.msk [vmem:[%s213 + $0x50] sm:$0xff] %vm389, %v367
      %401 = vst.msk [vmem:[%s213 + $0x58] sm:$0xff] %vm389, %v368
      %402 = vst.msk [vmem:[%s213 + $0x60] sm:$0xff] %vm389, %v369
      %403 = vst.msk [vmem:[%s213 + $0x68] sm:$0xff] %vm389, %v370
      %404 = vst.msk [vmem:[%s213 + $0x70] sm:$0xff] %vm389, %v371
      %405 = vst.msk [vmem:[%s213 + $0x78] sm:$0xff] %vm389, %v372
      %406 = vst.msk [vmem:[%s213 + $0x80] sm:$0xff] %vm389, %v373
      %407 = vst.msk [vmem:[%s213 + $0x88] sm:$0xff] %vm389, %v374
      %408 = vst.msk [vmem:[%s213 + $0x90] sm:$0xff] %vm389, %v375
      %409 = vst.msk [vmem:[%s213 + $0x98] sm:$0xff] %vm389, %v376
      %410 = vst.msk [vmem:[%s213 + $0xa0] sm:$0xff] %vm389, %v377
      %411 = vst.msk [vmem:[%s213 + $0xa8] sm:$0xff] %vm389, %v378
      %412 = vst.msk [vmem:[%s213 + $0xb0] sm:$0xff] %vm389, %v379
      %413 = vst.msk [vmem:[%s213 + $0xb8] sm:$0xff] %vm389, %v380
      %414 = vst.msk [vmem:[%s213 + $0xc0] sm:$0xff] %vm389, %v381
      %415 = vst.msk [vmem:[%s213 + $0xc8] sm:$0xff] %vm389, %v382
      %416 = vst.msk [vmem:[%s213 + $0xd0] sm:$0xff] %vm389, %v383
      %417 = vst.msk [vmem:[%s213 + $0xd8] sm:$0xff] %vm389, %v384
      %418 = vst.msk [vmem:[%s213 + $0xe0] sm:$0xff] %vm389, %v385
      %419 = vst.msk [vmem:[%s213 + $0xe8] sm:$0xff] %vm389, %v386
      %420 = vst.msk [vmem:[%s213 + $0xf0] sm:$0xff] %vm389, %v387
      %421 = vst.msk [vmem:[%s213 + $0xf8] sm:$0xff] %vm389, %v388
      %s422 = smul.u32 16, %s19
      %p423 = scmp.lt.s32.totalorder %s18, 1
      %s424 = scalar_select %p423, %s18, 1
      %p425 = scmp.lt.s32.totalorder %s422, 15
      %s426 = scalar_select %p425, %s422, 15
      %s427 = smul.addr %s426, 2
      %s428 = smul.addr %s424, 32
      %s429 = sadd.s32 %s427, %s428
      %s430 = smul.addr %s429, 8
      %s431 = scalar_lea.vmem %s3, %s430
      // Predicated region
      $region33: #{double_conv_forward.5} parent=31 // pred_check
        %p432 = pneg %p116
      $region34: #{double_conv_forward.5} parent=31 // pred_check_branch
        %434 = sbr.rel (%p432) target = $region36
      $region35: #{double_conv_forward.5} parent=31 // pred_region
        %s435 = smul.u32 16, %s19
      $region36: #{double_conv_forward.5} parent=31 // pred_fallthru
        _
    $region32: #{double_conv_forward.5} parent=5 // pred_fallthru
      _
    %p436 = scmp.le.s32.totalorder 2, %s9
    // Predicated region
    $region37: #{double_conv_forward.5} parent=5 // pred_check
      %p437 = pneg %p436
    $region38: #{double_conv_forward.5} parent=5 // pred_check_branch
      %439 = sbr.rel (%p437) target = $region40
    $region39: #{double_conv_forward.5} parent=5 // pred_region
      %s440 = ssub.s32 %s9, 2
      // Predicated region
      $region41: #{double_conv_forward.5} parent=39 // pred_check
        %p441 = pneg %p122
      $region42: #{double_conv_forward.5} parent=39 // pred_check_branch
        %443 = sbr.rel (%p441) target = $region44
      $region43: #{double_conv_forward.5} parent=39 // pred_region
        %s444 = smul.u32 16, %s21
        %p445 = scmp.lt.s32.totalorder %s20, 1
        %s446 = scalar_select %p445, %s20, 1
        %p447 = scmp.lt.s32.totalorder %s444, 15
        %s448 = scalar_select %p447, %s444, 15
        %s449 = smul.addr %s448, 2
        %s450 = smul.addr %s446, 32
        %s451 = sadd.s32 %s449, %s450
        %s452 = smul.addr %s451, 8
        %s453 = scalar_lea.vmem %s3, %s452
      $region44: #{double_conv_forward.5} parent=39 // pred_fallthru
        _
    $region40: #{double_conv_forward.5} parent=5 // pred_fallthru
      _
  $region6: #{double_conv_forward.5} parent=0 // loop_footer
    %s13 = sadd.s32 1, %s9
  $region7: #{double_conv_forward.5} parent=0 // loop_footer_branch
    %8 = sbr.rel target = $region3
  $region8: #{double_conv_forward.5} parent=0 // loop_exit
    _

// kernel: double_conv_forward.3
$region0: #{double_conv_forward.3}
  #allocation0 [shape = 'u32[]', space=smem, size = 0x4, offset = 0x4, fixed_abs, tag = 'smem constant byte address 0x4 - core index']
  #allocation1 [shape = 'u32[144,128]{1,0:T(1,128)}', space=vmem, size = 0x12000, scoped, tag = 'internal scratch']
  #allocation2 [shape = 'bf16[18,18,4]{2,1,0:T(8,128)(2,1)}', space=vmem, size = 0x1b000, scoped, tag = 'scratch operand']
  %s0 = inlined_call_operand.vmem [shape: bf16[2,16,16,4], index: 0, kind: input, shape index: {}, may-alias: {0,1,2}]
  %s1 = inlined_call_operand.vmem [shape: bf16[2,16,16,4], index: 1, kind: input, shape index: {}, may-alias: {0,1,2}]
  %s2 = inlined_call_operand.vmem [shape: bf16[2,16,16,4], index: 2, kind: input, shape index: {}, may-alias: {0,1,2}]
  %s3 = inlined_call_operand.vmem [shape: bf16[36,128], index: 3, kind: input, shape index: {}]
  %s4 = inlined_call_operand.vmem [shape: f32[1,4], index: 4, kind: input, shape index: {}, may-alias: {4,5}]
  %s5 = inlined_call_operand.vmem [shape: f32[1,4], index: 5, kind: input, shape index: {}, may-alias: {4,5}]
  %s6 = inlined_call_operand.vmem [shape: bf16[2,16,16,128], index: 6, kind: output, shape index: {0}]
  %s7 = inlined_call_operand.vmem [shape: f32[2,1,2,128], index: 7, kind: output, shape index: {1}]
  %8 = xla_tuple %s6, %s7
  %s9 = sld [smem:[#allocation0]]
  $region65: #{double_conv_forward.3} parent=0
    _
  %s11 = ssub.s32 1, %s9
  %s12 = scalar_select 0, %s11, %s9
  loop: start=0, step=1, limit=4
  $region2: #{double_conv_forward.3} parent=0 // loop_pre_header
    _
  $region3: #{double_conv_forward.3} parent=0 // loop_header
    %s14 = sphi 0, %s18
    %p15 = scmp.ge.s32.totalorder %s14, 4
    %s21 = sphi 0, %s33
    %s22 = sphi 0, %s29
    %s23 = sphi 0, %s21
    %s24 = sphi 0, %s22
    %s25 = sphi 0, %s23
    %s26 = sphi 0, %s24
    %s38 = sphi 0, %s40
    %s41 = sphi 0, %s38
    %s42 = sphi 0, %s41
    %s58 = sphi 0, %s42
    %s74 = sphi 0, %s76
    %s77 = sphi 0, %s74
    %s78 = sphi 0, %s77
    %s94 = sphi 0, %s78
    %s110 = sphi 0, %s112
    %s113 = sphi 0, %s110
    %s114 = sphi 0, %s113
    %s130 = sphi 0, %s114
    %s134 = sphi 0, %s134
    %s136 = sphi 0, %s134
    %s137 = sphi 0, %s136
    %s151 = sphi 0, %s137
    %s155 = sphi 0, %s155
    %s157 = sphi 0, %s155
    %s158 = sphi 0, %s157
    %s172 = sphi 0, %s158
    %s176 = sphi 0, %s176
    %s178 = sphi 0, %s176
    %s179 = sphi 0, %s178
    %s193 = sphi 0, %s179
    %s201 = sphi 0, %s203
    %s204 = sphi 0, %s201
    %s205 = sphi 0, %s204
    %s221 = sphi 0, %s205
    %s229 = sphi 0, %s231
    %s232 = sphi 0, %s229
    %s233 = sphi 0, %s232
    %s249 = sphi 0, %s233
  $region4: #{double_conv_forward.3} parent=0 // loop_header_branch
    %17 = sbr.rel (%p15) target = $region8
  $region5: #{double_conv_forward.3} parent=0 // loop_body
    %s19 = ssub.s32 %s14, 1
    %s20 = ssub.s32 %s14, 2
    %s27 = sadd.s32 1, %s22
    %p28 = scmp.ge.s32.totalorder %s27, 1
    %s29 = scalar_select %p28, 0, %s27
    %s30 = sadd.s32 1, %s21
    %s31 = scalar_select %p28, %s30, %s21
    %p32 = scmp.ge.s32.totalorder %s31, 2
    %s33 = scalar_select %p32, 0, %s31
    %s34 = ssub.s32 %s21, %s33
    %s35 = ssub.s32 %s22, %s29
    %s36 = sor.u32 %s34, %s35
    %p37 = scmp.eq.s32.totalorder %s36, 0
    %s39 = sadd.s32 %s38, 1
    %s40 = scalar_select %p37, %s38, %s39
    %p43 = pneg %p37
    %p44 = scmp.eq.s32.totalorder %s14, 1
    %p45 = por %p43, %p44
    %p46 = scmp.ne.s32.totalorder %s38, %s41
    %p47 = scmp.eq.s32.totalorder %s14, 0
    %p48 = por %p46, %p47
    %p49 = scmp.ne.s32.totalorder %s38, %s41
    %p50 = scmp.eq.s32.totalorder %s19, 1
    %p51 = por %p49, %p50
    %p52 = scmp.ne.s32.totalorder %s41, %s42
    %p53 = scmp.eq.s32.totalorder %s19, 0
    %p54 = por %p52, %p53
    %p55 = scmp.ne.s32.totalorder %s41, %s42
    %p56 = scmp.eq.s32.totalorder %s20, 1
    %p57 = por %p55, %p56
    %p59 = scmp.ne.s32.totalorder %s42, %s58
    %p60 = scmp.eq.s32.totalorder %s20, 0
    %p61 = por %p59, %p60
    %s62 = smul.u32 %s22, 16
    %s63 = ssub.s32 %s62, 1
    %p64 = scmp.gt.s32.totalorder %s63, 0
    %s65 = scalar_select %p64, %s63, 0
    %s66 = smul.u32 %s29, 16
    %s67 = ssub.s32 %s66, 1
    %p68 = scmp.gt.s32.totalorder %s67, 0
    %s69 = scalar_select %p68, %s67, 0
    %s70 = ssub.s32 %s21, %s33
    %s71 = ssub.s32 %s65, %s69
    %s72 = sor.u32 %s70, %s71
    %p73 = scmp.eq.s32.totalorder %s72, 0
    %s75 = sadd.s32 %s74, 1
    %s76 = scalar_select %p73, %s74, %s75
    %p79 = pneg %p73
    %p80 = scmp.eq.s32.totalorder %s14, 1
    %p81 = por %p79, %p80
    %p82 = scmp.ne.s32.totalorder %s74, %s77
    %p83 = scmp.eq.s32.totalorder %s14, 0
    %p84 = por %p82, %p83
    %p85 = scmp.ne.s32.totalorder %s74, %s77
    %p86 = scmp.eq.s32.totalorder %s19, 1
    %p87 = por %p85, %p86
    %p88 = scmp.ne.s32.totalorder %s77, %s78
    %p89 = scmp.eq.s32.totalorder %s19, 0
    %p90 = por %p88, %p89
    %p91 = scmp.ne.s32.totalorder %s77, %s78
    %p92 = scmp.eq.s32.totalorder %s20, 1
    %p93 = por %p91, %p92
    %p95 = scmp.ne.s32.totalorder %s78, %s94
    %p96 = scmp.eq.s32.totalorder %s20, 0
    %p97 = por %p95, %p96
    %s98 = sadd.s32 %s22, 1
    %s99 = smul.u32 %s98, 16
    %p100 = scmp.lt.s32.totalorder %s99, 15
    %s101 = scalar_select %p100, %s99, 15
    %s102 = sadd.s32 %s29, 1
    %s103 = smul.u32 %s102, 16
    %p104 = scmp.lt.s32.totalorder %s103, 15
    %s105 = scalar_select %p104, %s103, 15
    %s106 = ssub.s32 %s21, %s33
    %s107 = ssub.s32 %s101, %s105
    %s108 = sor.u32 %s106, %s107
    %p109 = scmp.eq.s32.totalorder %s108, 0
    %s111 = sadd.s32 %s110, 1
    %s112 = scalar_select %p109, %s110, %s111
    %p115 = pneg %p109
    %p116 = scmp.eq.s32.totalorder %s14, 1
    %p117 = por %p115, %p116
    %p118 = scmp.ne.s32.totalorder %s110, %s113
    %p119 = scmp.eq.s32.totalorder %s14, 0
    %p120 = por %p118, %p119
    %p121 = scmp.ne.s32.totalorder %s110, %s113
    %p122 = scmp.eq.s32.totalorder %s19, 1
    %p123 = por %p121, %p122
    %p124 = scmp.ne.s32.totalorder %s113, %s114
    %p125 = scmp.eq.s32.totalorder %s19, 0
    %p126 = por %p124, %p125
    %p127 = scmp.ne.s32.totalorder %s113, %s114
    %p128 = scmp.eq.s32.totalorder %s20, 1
    %p129 = por %p127, %p128
    %p131 = scmp.ne.s32.totalorder %s114, %s130
    %p132 = scmp.eq.s32.totalorder %s20, 0
    %p133 = por %p131, %p132
    %s135 = sadd.s32 %s134, 1
    %p138 = scmp.eq.s32.totalorder %s14, 1
    %p139 = scmp.ne.s32.totalorder %s134, %s136
    %p140 = scmp.eq.s32.totalorder %s14, 0
    %p141 = por %p139, %p140
    %p142 = scmp.ne.s32.totalorder %s134, %s136
    %p143 = scmp.eq.s32.totalorder %s19, 1
    %p144 = por %p142, %p143
    %p145 = scmp.ne.s32.totalorder %s136, %s137
    %p146 = scmp.eq.s32.totalorder %s19, 0
    %p147 = por %p145, %p146
    %p148 = scmp.ne.s32.totalorder %s136, %s137
    %p149 = scmp.eq.s32.totalorder %s20, 1
    %p150 = por %p148, %p149
    %p152 = scmp.ne.s32.totalorder %s137, %s151
    %p153 = scmp.eq.s32.totalorder %s20, 0
    %p154 = por %p152, %p153
    %s156 = sadd.s32 %s155, 1
    %p159 = scmp.eq.s32.totalorder %s14, 1
    %p160 = scmp.ne.s32.totalorder %s155, %s157
    %p161 = scmp.eq.s32.totalorder %s14, 0
    %p162 = por %p160, %p161
    %p163 = scmp.ne.s32.totalorder %s155, %s157
    %p164 = scmp.eq.s32.totalorder %s19, 1
    %p165 = por %p163, %p164
    %p166 = scmp.ne.s32.totalorder %s157, %s158
    %p167 = scmp.eq.s32.totalorder %s19, 0
    %p168 = por %p166, %p167
    %p169 = scmp.ne.s32.totalorder %s157, %s158
    %p170 = scmp.eq.s32.totalorder %s20, 1
    %p171 = por %p169, %p170
    %p173 = scmp.ne.s32.totalorder %s158, %s172
    %p174 = scmp.eq.s32.totalorder %s20, 0
    %p175 = por %p173, %p174
    %s177 = sadd.s32 %s176, 1
    %p180 = scmp.eq.s32.totalorder %s14, 1
    %p181 = scmp.ne.s32.totalorder %s176, %s178
    %p182 = scmp.eq.s32.totalorder %s14, 0
    %p183 = por %p181, %p182
    %p184 = scmp.ne.s32.totalorder %s176, %s178
    %p185 = scmp.eq.s32.totalorder %s19, 1
    %p186 = por %p184, %p185
    %p187 = scmp.ne.s32.totalorder %s178, %s179
    %p188 = scmp.eq.s32.totalorder %s19, 0
    %p189 = por %p187, %p188
    %p190 = scmp.ne.s32.totalorder %s178, %s179
    %p191 = scmp.eq.s32.totalorder %s20, 1
    %p192 = por %p190, %p191
    %p194 = scmp.ne.s32.totalorder %s179, %s193
    %p195 = scmp.eq.s32.totalorder %s20, 0
    %p196 = por %p194, %p195
    %s197 = ssub.s32 %s21, %s33
    %s198 = ssub.s32 %s22, %s29
    %s199 = sor.u32 %s197, %s198
    %p200 = scmp.eq.s32.totalorder %s199, 0
    %s202 = sadd.s32 %s201, 1
    %s203 = scalar_select %p200, %s201, %s202
    %p206 = pneg %p200
    %p207 = scmp.eq.s32.totalorder %s14, 1
    %p208 = por %p206, %p207
    %p209 = scmp.ne.s32.totalorder %s201, %s204
    %p210 = scmp.eq.s32.totalorder %s14, 0
    %p211 = por %p209, %p210
    %p212 = scmp.ne.s32.totalorder %s201, %s204
    %p213 = scmp.eq.s32.totalorder %s19, 1
    %p214 = por %p212, %p213
    %p215 = scmp.ne.s32.totalorder %s204, %s205
    %p216 = scmp.eq.s32.totalorder %s19, 0
    %p217 = por %p215, %p216
    %p218 = scmp.ne.s32.totalorder %s204, %s205
    %p219 = scmp.eq.s32.totalorder %s20, 1
    %p220 = por %p218, %p219
    %p222 = scmp.ne.s32.totalorder %s205, %s221
    %p223 = scmp.eq.s32.totalorder %s20, 0
    %p224 = por %p222, %p223
    %s225 = ssub.s32 %s21, %s33
    %s226 = ssub.s32 %s22, %s29
    %s227 = sor.u32 %s225, %s226
    %p228 = scmp.eq.s32.totalorder %s227, 0
    %s230 = sadd.s32 %s229, 1
    %s231 = scalar_select %p228, %s229, %s230
    %p234 = pneg %p228
    %p235 = scmp.eq.s32.totalorder %s14, 1
    %p236 = por %p234, %p235
    %p237 = scmp.ne.s32.totalorder %s229, %s232
    %p238 = scmp.eq.s32.totalorder %s14, 0
    %p239 = por %p237, %p238
    %p240 = scmp.ne.s32.totalorder %s229, %s232
    %p241 = scmp.eq.s32.totalorder %s19, 1
    %p242 = por %p240, %p241
    %p243 = scmp.ne.s32.totalorder %s232, %s233
    %p244 = scmp.eq.s32.totalorder %s19, 0
    %p245 = por %p243, %p244
    %p246 = scmp.ne.s32.totalorder %s232, %s233
    %p247 = scmp.eq.s32.totalorder %s20, 1
    %p248 = por %p246, %p247
    %p250 = scmp.ne.s32.totalorder %s233, %s249
    %p251 = scmp.eq.s32.totalorder %s20, 0
    %p252 = por %p250, %p251
    %p253 = scmp.le.s32.totalorder 1, %s14
    %p254 = scmp.lt.s32.totalorder %s14, 3
    %p255 = pnand %p253, %p254
    %p256 = pneg %p255
    // Predicated region
    $region9: #{double_conv_forward.3} parent=5 // pred_check
      _
    $region10: #{double_conv_forward.3} parent=5 // pred_check_branch
      %258 = sbr.rel (%p255) target = $region12
    $region11: #{double_conv_forward.3} parent=5 // pred_region
      %s259 = ssub.s32 %s14, 1
      // Predicated region
      $region13: #{double_conv_forward.3} parent=11 // pred_check
        %p260 = pneg %p147
      $region14: #{double_conv_forward.3} parent=11 // pred_check_branch
        %262 = sbr.rel (%p260) target = $region16
      $region15: #{double_conv_forward.3} parent=11 // pred_region
        _
      $region16: #{double_conv_forward.3} parent=11 // pred_fallthru
        _
      // Predicated region
      $region17: #{double_conv_forward.3} parent=11 // pred_check
        %p263 = pneg %p168
      $region18: #{double_conv_forward.3} parent=11 // pred_check_branch
        %265 = sbr.rel (%p263) target = $region20
      $region19: #{double_conv_forward.3} parent=11 // pred_region
        _
      $region20: #{double_conv_forward.3} parent=11 // pred_fallthru
        _
      // Predicated region
      $region21: #{double_conv_forward.3} parent=11 // pred_check
        %p266 = pneg %p189
      $region22: #{double_conv_forward.3} parent=11 // pred_check_branch
        %268 = sbr.rel (%p266) target = $region24
      $region23: #{double_conv_forward.3} parent=11 // pred_region
        _
      $region24: #{double_conv_forward.3} parent=11 // pred_fallthru
        _
    $region12: #{double_conv_forward.3} parent=5 // pred_fallthru
      _
    %p269 = scmp.lt.s32.totalorder %s14, 2
    // Predicated region
    $region25: #{double_conv_forward.3} parent=5 // pred_check
      %p270 = pneg %p269
    $region26: #{double_conv_forward.3} parent=5 // pred_check_branch
      %272 = sbr.rel (%p270) target = $region28
    $region27: #{double_conv_forward.3} parent=5 // pred_region
      // Predicated region
      $region29: #{double_conv_forward.3} parent=27 // pred_check
        %p273 = pneg %p48
      $region30: #{double_conv_forward.3} parent=27 // pred_check_branch
        %275 = sbr.rel (%p273) target = $region32
      $region31: #{double_conv_forward.3} parent=27 // pred_region
        %s276 = smul.u32 16, %s22
        %p277 = scmp.lt.s32.totalorder %s21, 1
        %s278 = scalar_select %p277, %s21, 1
        %p279 = scmp.lt.s32.totalorder %s276, 15
        %s280 = scalar_select %p279, %s276, 15
        %s281 = smul.addr %s280, 2
        %s282 = smul.addr %s278, 32
        %s283 = sadd.s32 %s281, %s282
        %s284 = smul.addr %s283, 4
        %s285 = scalar_lea.vmem %s0, %s284
        %s286 = smul.u32 16, %s22
      $region32: #{double_conv_forward.3} parent=27 // pred_fallthru
        _
      // Predicated region
      $region33: #{double_conv_forward.3} parent=27 // pred_check
        %p287 = pneg %p84
      $region34: #{double_conv_forward.3} parent=27 // pred_check_branch
        %289 = sbr.rel (%p287) target = $region36
      $region35: #{double_conv_forward.3} parent=27 // pred_region
        %s290 = smul.u32 %s22, 16
        %s291 = ssub.s32 %s290, 1
        %p292 = scmp.gt.s32.totalorder %s291, 0
        %s293 = scalar_select %p292, %s291, 0
        %p294 = scmp.lt.s32.totalorder %s21, 1
        %s295 = scalar_select %p294, %s21, 1
        %p296 = scmp.lt.s32.totalorder %s293, 15
        %s297 = scalar_select %p296, %s293, 15
        %s298 = smul.addr %s297, 2
        %s299 = smul.addr %s295, 32
        %s300 = sadd.s32 %s298, %s299
        %s301 = smul.addr %s300, 4
        %s302 = scalar_lea.vmem %s1, %s301
        %s303 = smul.u32 %s22, 16
        %s304 = ssub.s32 %s303, 1
        %p305 = scmp.gt.s32.totalorder %s304, 0
        %s306 = scalar_select %p305, %s304, 0
      $region36: #{double_conv_forward.3} parent=27 // pred_fallthru
        _
      // Predicated region
      $region37: #{double_conv_forward.3} parent=27 // pred_check
        %p307 = pneg %p120
      $region38: #{double_conv_forward.3} parent=27 // pred_check_branch
        %309 = sbr.rel (%p307) target = $region40
      $region39: #{double_conv_forward.3} parent=27 // pred_region
        %s310 = sadd.s32 %s22, 1
        %s311 = smul.u32 %s310, 16
        %p312 = scmp.lt.s32.totalorder %s311, 15
        %s313 = scalar_select %p312, %s311, 15
        %p314 = scmp.lt.s32.totalorder %s21, 1
        %s315 = scalar_select %p314, %s21, 1
        %p316 = scmp.lt.s32.totalorder %s313, 15
        %s317 = scalar_select %p316, %s313, 15
        %s318 = smul.addr %s317, 2
        %s319 = smul.addr %s315, 32
        %s320 = sadd.s32 %s318, %s319
        %s321 = smul.addr %s320, 4
        %s322 = scalar_lea.vmem %s2, %s321
        %s323 = sadd.s32 %s22, 1
        %s324 = smul.u32 %s323, 16
        %p325 = scmp.lt.s32.totalorder %s324, 15
        %s326 = scalar_select %p325, %s324, 15
      $region40: #{double_conv_forward.3} parent=27 // pred_fallthru
        _
    $region28: #{double_conv_forward.3} parent=5 // pred_fallthru
      _
    %p327 = scmp.le.s32.totalorder 1, %s14
    %p328 = scmp.lt.s32.totalorder %s14, 3
    %p329 = pnand %p327, %p328
    %p330 = pneg %p329
    // Predicated region
    $region41: #{double_conv_forward.3} parent=5 // pred_check
      _
    $region42: #{double_conv_forward.3} parent=5 // pred_check_branch
      %332 = sbr.rel (%p329) target = $region44
    $region43: #{double_conv_forward.3} parent=5 // pred_region
      %s333 = ssub.s32 %s14, 1
      %s334 = smul.u32 16, %s24
      %p335 = scmp.lt.s32.totalorder %s23, 1
      %s336 = scalar_select %p335, %s23, 1
      %p337 = scmp.lt.s32.totalorder %s334, 15
      %s338 = scalar_select %p337, %s334, 15
      %s339 = smul.addr %s338, 2
      %s340 = smul.addr %s336, 32
      %s341 = sadd.s32 %s339, %s340
      %s342 = smul.addr %s341, 4
      %s343 = scalar_lea.vmem %s0, %s342
      %p344 = pneg %p54
      %p345 = pneg %p51
      %s346 = smul.u32 %s24, 16
      %s347 = ssub.s32 %s346, 1
      %p348 = scmp.gt.s32.totalorder %s347, 0
      %s349 = scalar_select %p348, %s347, 0
      %p350 = scmp.lt.s32.totalorder %s23, 1
      %s351 = scalar_select %p350, %s23, 1
      %p352 = scmp.lt.s32.totalorder %s349, 15
      %s353 = scalar_select %p352, %s349, 15
      %s354 = smul.addr %s353, 2
      %s355 = smul.addr %s351, 32
      %s356 = sadd.s32 %s354, %s355
      %s357 = smul.addr %s356, 4
      %s358 = scalar_lea.vmem %s1, %s357
      %p359 = pneg %p90
      %p360 = pneg %p87
      %s361 = sadd.s32 %s24, 1
      %s362 = smul.u32 %s361, 16
      %p363 = scmp.lt.s32.totalorder %s362, 15
      %s364 = scalar_select %p363, %s362, 15
      %p365 = scmp.lt.s32.totalorder %s23, 1
      %s366 = scalar_select %p365, %s23, 1
      %p367 = scmp.lt.s32.totalorder %s364, 15
      %s368 = scalar_select %p367, %s364, 15
      %s369 = smul.addr %s368, 2
      %s370 = smul.addr %s366, 32
      %s371 = sadd.s32 %s369, %s370
      %s372 = smul.addr %s371, 4
      %s373 = scalar_lea.vmem %s2, %s372
      %p374 = pneg %p126
      %p375 = pneg %p123
      %p376 = pneg %p147
      %p377 = pneg %p144
      %p378 = pneg %p168
      %p379 = pneg %p165
      %p380 = pneg %p189
      %p381 = pneg %p186
      %p382 = pneg %p217
      %p383 = pneg %p214
      %s384 = smul.u32 16, %s24
      %p385 = scmp.lt.s32.totalorder %s23, 1
      %s386 = scalar_select %p385, %s23, 1
      %p387 = scmp.lt.s32.totalorder %s384, 15
      %s388 = scalar_select %p387, %s384, 15
      %s389 = smul.addr %s388, 2
      %s390 = smul.addr %s386, 32
      %s391 = sadd.s32 %s389, %s390
      %s392 = smul.addr %s391, 4
      %s393 = scalar_lea.vmem %s6, %s392
      %p394 = pneg %p245
      %p395 = pneg %p242
      %p396 = scmp.lt.s32.totalorder %s23, 1
      %s397 = scalar_select %p396, %s23, 1
      %p398 = scmp.lt.s32.totalorder %s24, 0
      %s399 = scalar_select %p398, %s24, 0
      %s400 = sadd.s32 %s399, %s397
      %s401 = smul.addr %s400, 2
      %s402 = scalar_lea.vmem %s7, %s401
      %s403 = smul.u32 16, %s24
      %p404 = scmp.lt.s32.totalorder %s23, 1
      %s405 = scalar_select %p404, %s23, 1
      %p406 = scmp.lt.s32.totalorder %s403, 15
      %s407 = scalar_select %p406, %s403, 15
      %s408 = smul.addr %s407, 2
      %s409 = smul.addr %s405, 32
      %s410 = sadd.s32 %s408, %s409
      %s411 = smul.addr %s410, 4
      %s412 = scalar_lea.vmem %s0, %s411
      %s413 = smul.u32 16, %s24
      %s414 = smul.u32 %s24, 16
      %s415 = ssub.s32 %s414, 1
      %p416 = scmp.gt.s32.totalorder %s415, 0
      %s417 = scalar_select %p416, %s415, 0
      %p418 = scmp.lt.s32.totalorder %s23, 1
      %s419 = scalar_select %p418, %s23, 1
      %p420 = scmp.lt.s32.totalorder %s417, 15
      %s421 = scalar_select %p420, %s417, 15
      %s422 = smul.addr %s421, 2
      %s423 = smul.addr %s419, 32
      %s424 = sadd.s32 %s422, %s423
      %s425 = smul.addr %s424, 4
      %s426 = scalar_lea.vmem %s1, %s425
      %s427 = smul.u32 %s24, 16
      %s428 = ssub.s32 %s427, 1
      %p429 = scmp.gt.s32.totalorder %s428, 0
      %s430 = scalar_select %p429, %s428, 0
      %s431 = sadd.s32 %s24, 1
      %s432 = smul.u32 %s431, 16
      %p433 = scmp.lt.s32.totalorder %s432, 15
      %s434 = scalar_select %p433, %s432, 15
      %p435 = scmp.lt.s32.totalorder %s23, 1
      %s436 = scalar_select %p435, %s23, 1
      %p437 = scmp.lt.s32.totalorder %s434, 15
      %s438 = scalar_select %p437, %s434, 15
      %s439 = smul.addr %s438, 2
      %s440 = smul.addr %s436, 32
      %s441 = sadd.s32 %s439, %s440
      %s442 = smul.addr %s441, 4
      %s443 = scalar_lea.vmem %s2, %s442
      %s444 = sadd.s32 %s24, 1
      %s445 = smul.u32 %s444, 16
      %p446 = scmp.lt.s32.totalorder %s445, 15
      %s447 = scalar_select %p446, %s445, 15
      %s448 = smul.u32 16, %s24
      %p449 = scmp.lt.s32.totalorder %s23, 1
      %s450 = scalar_select %p449, %s23, 1
      %p451 = scmp.lt.s32.totalorder %s448, 15
      %s452 = scalar_select %p451, %s448, 15
      %s453 = smul.addr %s452, 2
      %s454 = smul.addr %s450, 32
      %s455 = sadd.s32 %s453, %s454
      %s456 = smul.addr %s455, 4
      %s457 = scalar_lea.vmem %s6, %s456
      %s458 = smul.u32 16, %s24
      %p459 = scmp.lt.s32.totalorder %s23, 1
      %s460 = scalar_select %p459, %s23, 1
      %p461 = scmp.lt.s32.totalorder %s24, 0
      %s462 = scalar_select %p461, %s24, 0
      %s463 = sadd.s32 %s462, %s460
      %s464 = smul.addr %s463, 2
      %s465 = scalar_lea.vmem %s7, %s464
      %v467 = vld [vmem:[%s412] sm:$0xf]
      %v468 = vld [vmem:[%s412 + $0x4] sm:$0xf]
      %v469 = vld [vmem:[%s412 + $0x8] sm:$0xf]
      %v470 = vld [vmem:[%s412 + $0xc] sm:$0xf]
      %v471 = vld [vmem:[%s412 + $0x10] sm:$0xf]
      %v472 = vld [vmem:[%s412 + $0x14] sm:$0xf]
      %v473 = vld [vmem:[%s412 + $0x18] sm:$0xf]
      %v474 = vld [vmem:[%s412 + $0x1c] sm:$0xf]
      %v475 = vld [vmem:[%s412 + $0x20] sm:$0xf]
      %v476 = vld [vmem:[%s412 + $0x24] sm:$0xf]
      %v477 = vld [vmem:[%s412 + $0x28] sm:$0xf]
      %v478 = vld [vmem:[%s412 + $0x2c] sm:$0xf]
      %v479 = vld [vmem:[%s412 + $0x30] sm:$0xf]
      %v480 = vld [vmem:[%s412 + $0x34] sm:$0xf]
      %v481 = vld [vmem:[%s412 + $0x38] sm:$0xf]
      %v482 = vld [vmem:[%s412 + $0x3c] sm:$0xf]
      %v483 = vld [vmem:[%s412 + $0x40] sm:$0xf]
      %v484 = vld [vmem:[%s412 + $0x44] sm:$0xf]
      %v485 = vld [vmem:[%s412 + $0x48] sm:$0xf]
      %v486 = vld [vmem:[%s412 + $0x4c] sm:$0xf]
      %v487 = vld [vmem:[%s412 + $0x50] sm:$0xf]
      %v488 = vld [vmem:[%s412 + $0x54] sm:$0xf]
      %v489 = vld [vmem:[%s412 + $0x58] sm:$0xf]
      %v490 = vld [vmem:[%s412 + $0x5c] sm:$0xf]
      %v491 = vld [vmem:[%s412 + $0x60] sm:$0xf]
      %v492 = vld [vmem:[%s412 + $0x64] sm:$0xf]
      %v493 = vld [vmem:[%s412 + $0x68] sm:$0xf]
      %v494 = vld [vmem:[%s412 + $0x6c] sm:$0xf]
      %v495 = vld [vmem:[%s412 + $0x70] sm:$0xf]
      %v496 = vld [vmem:[%s412 + $0x74] sm:$0xf]
      %v497 = vld [vmem:[%s412 + $0x78] sm:$0xf]
      %v498 = vld [vmem:[%s412 + $0x7c] sm:$0xf]
      %v499 = vld [vmem:[%s426] sm:$0xf]
      %v500 = vld [vmem:[%s426 + $0x4] sm:$0xf]
      %v501 = vld [vmem:[%s443] sm:$0xf]
      %v502 = vld [vmem:[%s443 + $0x4] sm:$0xf]
      %p503 = scmp.eq.s32.totalorder %s24, 0
      %s504 = scalar_select %p503, 1, 0
      %v505 = vstv %s504
      %vm506 = vcmp.eq.s32.totalorder %v505, 1
      %v507 = vsel %vm506, 0, %v499
      %v508 = vsel %vm506, 0, %v500
      %v509 = vsel %vm506, 0, %v501
      %v510 = vsel %vm506, 0, %v502
      %vm511 = vcmask 27648
      %512 = vst.msk [vmem:[#allocation2] sm:$0xf] %vm511, 0
      %513 = vst.msk [vmem:[#allocation2 + $0x4] sm:$0xf] %vm511, 0
      %vm514 = vcmask 24576
      %515 = vst.msk [vmem:[#allocation2 + $0x8] sm:$0x1] %vm514, 0
      %516 = vst.msk [vmem:[#allocation2 + $0xc] sm:$0xf] %vm511, 0
      %517 = vst.msk [vmem:[#allocation2 + $0x10] sm:$0xf] %vm511, 0
      %518 = vst.msk [vmem:[#allocation2 + $0x14] sm:$0x1] %vm514, 0
      %519 = vst.msk [vmem:[#allocation2 + $0x18] sm:$0xf] %vm511, 0
      %520 = vst.msk [vmem:[#allocation2 + $0x1c] sm:$0xf] %vm511, 0
      %521 = vst.msk [vmem:[#allocation2 + $0x20] sm:$0x1] %vm514, 0
      %522 = vst.msk [vmem:[#allocation2 + $0x24] sm:$0xf] %vm511, 0
      %523 = vst.msk [vmem:[#allocation2 + $0x28] sm:$0xf] %vm511, 0
      %524 = vst.msk [vmem:[#allocation2 + $0x2c] sm:$0x1] %vm514, 0
      %525 = vst.msk [vmem:[#allocation2 + $0x30] sm:$0xf] %vm511, 0
      %526 = vst.msk [vmem:[#allocation2 + $0x34] sm:$0xf] %vm511, 0
      %527 = vst.msk [vmem:[#allocation2 + $0x38] sm:$0x1] %vm514, 0
      %528 = vst.msk [vmem:[#allocation2 + $0x3c] sm:$0xf] %vm511, 0
      %529 = vst.msk [vmem:[#allocation2 + $0x40] sm:$0xf] %vm511, 0
      %530 = vst.msk [vmem:[#allocation2 + $0x44] sm:$0x1] %vm514, 0
      %531 = vst.msk [vmem:[#allocation2 + $0x48] sm:$0xf] %vm511, 0
      %532 = vst.msk [vmem:[#allocation2 + $0x4c] sm:$0xf] %vm511, 0
      %533 = vst.msk [vmem:[#allocation2 + $0x50] sm:$0x1] %vm514, 0
      %534 = vst.msk [vmem:[#allocation2 + $0x54] sm:$0xf] %vm511, 0
      %535 = vst.msk [vmem:[#allocation2 + $0x58] sm:$0xf] %vm511, 0
      %536 = vst.msk [vmem:[#allocation2 + $0x5c] sm:$0x1] %vm514, 0
      %537 = vst.msk [vmem:[#allocation2 + $0x60] sm:$0xf] %vm511, 0
      %538 = vst.msk [vmem:[#allocation2 + $0x64] sm:$0xf] %vm511, 0
      %539 = vst.msk [vmem:[#allocation2 + $0x68] sm:$0x1] %vm514, 0
      %540 = vst.msk [vmem:[#allocation2 + $0x6c] sm:$0xf] %vm511, 0
      %541 = vst.msk [vmem:[#allocation2 + $0x70] sm:$0xf] %vm511, 0
      %542 = vst.msk [vmem:[#allocation2 + $0x74] sm:$0x1] %vm514, 0
      %543 = vst.msk [vmem:[#allocation2 + $0x78] sm:$0xf] %vm511, 0
      %544 = vst.msk [vmem:[#allocation2 + $0x7c] sm:$0xf] %vm511, 0
      %545 = vst.msk [vmem:[#allocation2 + $0x80] sm:$0x1] %vm514, 0
      %546 = vst.msk [vmem:[#allocation2 + $0x84] sm:$0xf] %vm511, 0
      %547 = vst.msk [vmem:[#allocation2 + $0x88] sm:$0xf] %vm511, 0
      %548 = vst.msk [vmem:[#allocation2 + $0x8c] sm:$0x1] %vm514, 0
      %549 = vst.msk [vmem:[#allocation2 + $0x90] sm:$0xf] %vm511, 0
      %550 = vst.msk [vmem:[#allocation2 + $0x94] sm:$0xf] %vm511, 0
      %551 = vst.msk [vmem:[#allocation2 + $0x98] sm:$0x1] %vm514, 0
      %552 = vst.msk [vmem:[#allocation2 + $0x9c] sm:$0xf] %vm511, 0
      %553 = vst.msk [vmem:[#allocation2 + $0xa0] sm:$0xf] %vm511, 0
      %554 = vst.msk [vmem:[#allocation2 + $0xa4] sm:$0x1] %vm514, 0
      %555 = vst.msk [vmem:[#allocation2 + $0xa8] sm:$0xf] %vm511, 0
      %556 = vst.msk [vmem:[#allocation2 + $0xac] sm:$0xf] %vm511, 0
      %557 = vst.msk [vmem:[#allocation2 + $0xb0] sm:$0x1] %vm514, 0
      %558 = vst.msk [vmem:[#allocation2 + $0xb4] sm:$0xf] %vm511, 0
      %559 = vst.msk [vmem:[#allocation2 + $0xb8] sm:$0xf] %vm511, 0
      %560 = vst.msk [vmem:[#allocation2 + $0xbc] sm:$0x1] %vm514, 0
      %561 = vst.msk [vmem:[#allocation2 + $0xc0] sm:$0xf] %vm511, 0
      %562 = vst.msk [vmem:[#allocation2 + $0xc4] sm:$0xf] %vm511, 0
      %563 = vst.msk [vmem:[#allocation2 + $0xc8] sm:$0x1] %vm514, 0
      %564 = vst.msk [vmem:[#allocation2 + $0xcc] sm:$0xf] %vm511, 0
      %565 = vst.msk [vmem:[#allocation2 + $0xd0] sm:$0xf] %vm511, 0
      %566 = vst.msk [vmem:[#allocation2 + $0xd4] sm:$0x1] %vm514, 0
      %vm567 = vsmask.f32 256
      %vm568 = vsmask.f32 4368
      %vm569 = vmor %vm567, %vm568
      %v571 = vshrl.u32 %v467, 16
      %v573 = vrot.slane %v571, 7
      %v574 = vshll.u32 %v467, 16
      %v576 = vor.u32 %v573, %v574
      %v577 = vrot.slane %v573, 4
      %v579 = vshrl.u32 %v468, 16
      %v581 = vrot.slane %v579, 7
      %v582 = vshll.u32 %v468, 16
      %v584 = vor.u32 %v581, %v582
      %v585 = vsel %vm569, %v577, %v584
      %v586 = vrot.slane %v581, 4
      %v588 = vshrl.u32 %v469, 16
      %v590 = vrot.slane %v588, 7
      %v591 = vshll.u32 %v469, 16
      %v593 = vor.u32 %v590, %v591
      %v594 = vrot.slane %v590, 4
      %v596 = vshrl.u32 %v470, 16
      %v598 = vrot.slane %v596, 7
      %v599 = vshll.u32 %v470, 16
      %v601 = vor.u32 %v598, %v599
      %v602 = vsel %vm569, %v594, %v601
      %v603 = vrot.slane %v598, 4
      %v605 = vshrl.u32 %v471, 16
      %v607 = vrot.slane %v605, 7
      %v608 = vshll.u32 %v471, 16
      %v610 = vor.u32 %v607, %v608
      %v611 = vrot.slane %v607, 4
      %v613 = vshrl.u32 %v472, 16
      %v615 = vrot.slane %v613, 7
      %v616 = vshll.u32 %v472, 16
      %v618 = vor.u32 %v615, %v616
      %v619 = vsel %vm569, %v611, %v618
      %v620 = vrot.slane %v615, 4
      %v622 = vshrl.u32 %v473, 16
      %v624 = vrot.slane %v622, 7
      %v625 = vshll.u32 %v473, 16
      %v627 = vor.u32 %v624, %v625
      %v628 = vrot.slane %v624, 4
      %v630 = vshrl.u32 %v474, 16
      %v632 = vrot.slane %v630, 7
      %v633 = vshll.u32 %v474, 16
      %v635 = vor.u32 %v632, %v633
      %v636 = vsel %vm569, %v628, %v635
      %v637 = vrot.slane %v632, 4
      %v639 = vshrl.u32 %v475, 16
      %v641 = vrot.slane %v639, 7
      %v642 = vshll.u32 %v475, 16
      %v644 = vor.u32 %v641, %v642
      %v645 = vrot.slane %v641, 4
      %v647 = vshrl.u32 %v476, 16
      %v649 = vrot.slane %v647, 7
      %v650 = vshll.u32 %v476, 16
      %v652 = vor.u32 %v649, %v650
      %v653 = vsel %vm569, %v645, %v652
      %v654 = vrot.slane %v649, 4
      %v656 = vshrl.u32 %v477, 16
      %v658 = vrot.slane %v656, 7
      %v659 = vshll.u32 %v477, 16
      %v661 = vor.u32 %v658, %v659
      %v662 = vrot.slane %v658, 4
      %v664 = vshrl.u32 %v478, 16
      %v666 = vrot.slane %v664, 7
      %v667 = vshll.u32 %v478, 16
      %v669 = vor.u32 %v666, %v667
      %v670 = vsel %vm569, %v662, %v669
      %v671 = vrot.slane %v666, 4
      %v673 = vshrl.u32 %v479, 16
      %v675 = vrot.slane %v673, 7
      %v676 = vshll.u32 %v479, 16
      %v678 = vor.u32 %v675, %v676
      %v679 = vrot.slane %v675, 4
      %v681 = vshrl.u32 %v480, 16
      %v683 = vrot.slane %v681, 7
      %v684 = vshll.u32 %v480, 16
      %v686 = vor.u32 %v683, %v684
      %v687 = vsel %vm569, %v679, %v686
      %v688 = vrot.slane %v683, 4
      %v690 = vshrl.u32 %v481, 16
      %v692 = vrot.slane %v690, 7
      %v693 = vshll.u32 %v481, 16
      %v695 = vor.u32 %v692, %v693
      %v696 = vrot.slane %v692, 4
      %v698 = vshrl.u32 %v482, 16
      %v700 = vrot.slane %v698, 7
      %v701 = vshll.u32 %v482, 16
      %v703 = vor.u32 %v700, %v701
      %v704 = vsel %vm569, %v696, %v703
      %v705 = vrot.slane %v700, 4
      %v707 = vshrl.u32 %v483, 16
      %v709 = vrot.slane %v707, 7
      %v710 = vshll.u32 %v483, 16
      %v712 = vor.u32 %v709, %v710
      %v713 = vrot.slane %v709, 4
      %v715 = vshrl.u32 %v484, 16
      %v717 = vrot.slane %v715, 7
      %v718 = vshll.u32 %v484, 16
      %v720 = vor.u32 %v717, %v718
      %v721 = vsel %vm569, %v713, %v720
      %v722 = vrot.slane %v717, 4
      %v724 = vshrl.u32 %v485, 16
      %v726 = vrot.slane %v724, 7
      %v727 = vshll.u32 %v485, 16
      %v729 = vor.u32 %v726, %v727
      %v730 = vrot.slane %v726, 4
      %v732 = vshrl.u32 %v486, 16
      %v734 = vrot.slane %v732, 7
      %v735 = vshll.u32 %v486, 16
      %v737 = vor.u32 %v734, %v735
      %v738 = vsel %vm569, %v730, %v737
      %v739 = vrot.slane %v734, 4
      %v741 = vshrl.u32 %v487, 16
      %v743 = vrot.slane %v741, 7
      %v744 = vshll.u32 %v487, 16
      %v746 = vor.u32 %v743, %v744
      %v747 = vrot.slane %v743, 4
      %v749 = vshrl.u32 %v488, 16
      %v751 = vrot.slane %v749, 7
      %v752 = vshll.u32 %v488, 16
      %v754 = vor.u32 %v751, %v752
      %v755 = vsel %vm569, %v747, %v754
      %v756 = vrot.slane %v751, 4
      %v758 = vshrl.u32 %v489, 16
      %v760 = vrot.slane %v758, 7
      %v761 = vshll.u32 %v489, 16
      %v763 = vor.u32 %v760, %v761
      %v764 = vrot.slane %v760, 4
      %v766 = vshrl.u32 %v490, 16
      %v768 = vrot.slane %v766, 7
      %v769 = vshll.u32 %v490, 16
      %v771 = vor.u32 %v768, %v769
      %v772 = vsel %vm569, %v764, %v771
      %v773 = vrot.slane %v768, 4
      %v775 = vshrl.u32 %v491, 16
      %v777 = vrot.slane %v775, 7
      %v778 = vshll.u32 %v491, 16
      %v780 = vor.u32 %v777, %v778
      %v781 = vrot.slane %v777, 4
      %v783 = vshrl.u32 %v492, 16
      %v785 = vrot.slane %v783, 7
      %v786 = vshll.u32 %v492, 16
      %v788 = vor.u32 %v785, %v786
      %v789 = vsel %vm569, %v781, %v788
      %v790 = vrot.slane %v785, 4
      %v792 = vshrl.u32 %v493, 16
      %v794 = vrot.slane %v792, 7
      %v795 = vshll.u32 %v493, 16
      %v797 = vor.u32 %v794, %v795
      %v798 = vrot.slane %v794, 4
      %v800 = vshrl.u32 %v494, 16
      %v802 = vrot.slane %v800, 7
      %v803 = vshll.u32 %v494, 16
      %v805 = vor.u32 %v802, %v803
      %v806 = vsel %vm569, %v798, %v805
      %v807 = vrot.slane %v802, 4
      %v809 = vshrl.u32 %v495, 16
      %v811 = vrot.slane %v809, 7
      %v812 = vshll.u32 %v495, 16
      %v814 = vor.u32 %v811, %v812
      %v815 = vrot.slane %v811, 4
      %v817 = vshrl.u32 %v496, 16
      %v819 = vrot.slane %v817, 7
      %v820 = vshll.u32 %v496, 16
      %v822 = vor.u32 %v819, %v820
      %v823 = vsel %vm569, %v815, %v822
      %v824 = vrot.slane %v819, 4
      %v826 = vshrl.u32 %v497, 16
      %v828 = vrot.slane %v826, 7
      %v829 = vshll.u32 %v497, 16
      %v831 = vor.u32 %v828, %v829
      %v832 = vrot.slane %v828, 4
      %v834 = vshrl.u32 %v498, 16
      %v836 = vrot.slane %v834, 7
      %v837 = vshll.u32 %v498, 16
      %v839 = vor.u32 %v836, %v837
      %v840 = vsel %vm569, %v832, %v839
      %v841 = vrot.slane %v836, 4
      %s890 = scalar_lea.vmem [#allocation2], 12
      %vm891 = vcmask 27648
      %vm892 = vsmask.f32 7938
      %vm893 = vmand %vm891, %vm892
      %v894 = vld [vmem:[%s890] sm:$0xf]
      %v895 = vsel %vm893, %v576, %v894
      %896 = vst [vmem:[%s890] sm:$0xf] %v895
      %897 = vst.msk [vmem:[%s890 + $0x4] sm:$0xf] %vm511, %v585
      %vm898 = vcmask 24576
      %vm899 = vmand %vm898, %vm567
      %v900 = vld [vmem:[%s890 + $0x8] sm:$0x1]
      %v901 = vsel %vm899, %v586, %v900
      %902 = vst [vmem:[%s890 + $0x8] sm:$0x1] %v901
      %v903 = vld [vmem:[%s890 + $0xc] sm:$0xf]
      %v904 = vsel %vm893, %v593, %v903
      %905 = vst [vmem:[%s890 + $0xc] sm:$0xf] %v904
      %906 = vst.msk [vmem:[%s890 + $0x10] sm:$0xf] %vm511, %v602
      %v907 = vld [vmem:[%s890 + $0x14] sm:$0x1]
      %v908 = vsel %vm899, %v603, %v907
      %909 = vst [vmem:[%s890 + $0x14] sm:$0x1] %v908
      %v910 = vld [vmem:[%s890 + $0x18] sm:$0xf]
      %v911 = vsel %vm893, %v610, %v910
      %912 = vst [vmem:[%s890 + $0x18] sm:$0xf] %v911
      %913 = vst.msk [vmem:[%s890 + $0x1c] sm:$0xf] %vm511, %v619
      %v914 = vld [vmem:[%s890 + $0x20] sm:$0x1]
      %v915 = vsel %vm899, %v620, %v914
      %916 = vst [vmem:[%s890 + $0x20] sm:$0x1] %v915
      %v917 = vld [vmem:[%s890 + $0x24] sm:$0xf]
      %v918 = vsel %vm893, %v627, %v917
      %919 = vst [vmem:[%s890 + $0x24] sm:$0xf] %v918
      %920 = vst.msk [vmem:[%s890 + $0x28] sm:$0xf] %vm511, %v636
      %v921 = vld [vmem:[%s890 + $0x2c] sm:$0x1]
      %v922 = vsel %vm899, %v637, %v921
      %923 = vst [vmem:[%s890 + $0x2c] sm:$0x1] %v922
      %v924 = vld [vmem:[%s890 + $0x30] sm:$0xf]
      %v925 = vsel %vm893, %v644, %v924
      %926 = vst [vmem:[%s890 + $0x30] sm:$0xf] %v925
      %927 = vst.msk [vmem:[%s890 + $0x34] sm:$0xf] %vm511, %v653
      %v928 = vld [vmem:[%s890 + $0x38] sm:$0x1]
      %v929 = vsel %vm899, %v654, %v928
      %930 = vst [vmem:[%s890 + $0x38] sm:$0x1] %v929
      %v931 = vld [vmem:[%s890 + $0x3c] sm:$0xf]
      %v932 = vsel %vm893, %v661, %v931
      %933 = vst [vmem:[%s890 + $0x3c] sm:$0xf] %v932
      %934 = vst.msk [vmem:[%s890 + $0x40] sm:$0xf] %vm511, %v670
      %v935 = vld [vmem:[%s890 + $0x44] sm:$0x1]
      %v936 = vsel %vm899, %v671, %v935
      %937 = vst [vmem:[%s890 + $0x44] sm:$0x1] %v936
      %v938 = vld [vmem:[%s890 + $0x48] sm:$0xf]
      %v939 = vsel %vm893, %v678, %v938
      %940 = vst [vmem:[%s890 + $0x48] sm:$0xf] %v939
      %941 = vst.msk [vmem:[%s890 + $0x4c] sm:$0xf] %vm511, %v687
      %v942 = vld [vmem:[%s890 + $0x50] sm:$0x1]
      %v943 = vsel %vm899, %v688, %v942
      %944 = vst [vmem:[%s890 + $0x50] sm:$0x1] %v943
      %v945 = vld [vmem:[%s890 + $0x54] sm:$0xf]
      %v946 = vsel %vm893, %v695, %v945
      %947 = vst [vmem:[%s890 + $0x54] sm:$0xf] %v946
      %948 = vst.msk [vmem:[%s890 + $0x58] sm:$0xf] %vm511, %v704
      %v949 = vld [vmem:[%s890 + $0x5c] sm:$0x1]
      %v950 = vsel %vm899, %v705, %v949
      %951 = vst [vmem:[%s890 + $0x5c] sm:$0x1] %v950
      %v952 = vld [vmem:[%s890 + $0x60] sm:$0xf]
      %v953 = vsel %vm893, %v712, %v952
      %954 = vst [vmem:[%s890 + $0x60] sm:$0xf] %v953
      %955 = vst.msk [vmem:[%s890 + $0x64] sm:$0xf] %vm511, %v721
      %v956 = vld [vmem:[%s890 + $0x68] sm:$0x1]
      %v957 = vsel %vm899, %v722, %v956
      %958 = vst [vmem:[%s890 + $0x68] sm:$0x1] %v957
      %v959 = vld [vmem:[%s890 + $0x6c] sm:$0xf]
      %v960 = vsel %vm893, %v729, %v959
      %961 = vst [vmem:[%s890 + $0x6c] sm:$0xf] %v960
      %962 = vst.msk [vmem:[%s890 + $0x70] sm:$0xf] %vm511, %v738
      %v963 = vld [vmem:[%s890 + $0x74] sm:$0x1]
      %v964 = vsel %vm899, %v739, %v963
      %965 = vst [vmem:[%s890 + $0x74] sm:$0x1] %v964
      %v966 = vld [vmem:[%s890 + $0x78] sm:$0xf]
      %v967 = vsel %vm893, %v746, %v966
      %968 = vst [vmem:[%s890 + $0x78] sm:$0xf] %v967
      %969 = vst.msk [vmem:[%s890 + $0x7c] sm:$0xf] %vm511, %v755
      %v970 = vld [vmem:[%s890 + $0x80] sm:$0x1]
      %v971 = vsel %vm899, %v756, %v970
      %972 = vst [vmem:[%s890 + $0x80] sm:$0x1] %v971
      %v973 = vld [vmem:[%s890 + $0x84] sm:$0xf]
      %v974 = vsel %vm893, %v763, %v973
      %975 = vst [vmem:[%s890 + $0x84] sm:$0xf] %v974
      %976 = vst.msk [vmem:[%s890 + $0x88] sm:$0xf] %vm511, %v772
      %v977 = vld [vmem:[%s890 + $0x8c] sm:$0x1]
      %v978 = vsel %vm899, %v773, %v977
      %979 = vst [vmem:[%s890 + $0x8c] sm:$0x1] %v978
      %v980 = vld [vmem:[%s890 + $0x90] sm:$0xf]
      %v981 = vsel %vm893, %v780, %v980
      %982 = vst [vmem:[%s890 + $0x90] sm:$0xf] %v981
      %983 = vst.msk [vmem:[%s890 + $0x94] sm:$0xf] %vm511, %v789
      %v984 = vld [vmem:[%s890 + $0x98] sm:$0x1]
      %v985 = vsel %vm899, %v790, %v984
      %986 = vst [vmem:[%s890 + $0x98] sm:$0x1] %v985
      %v987 = vld [vmem:[%s890 + $0x9c] sm:$0xf]
      %v988 = vsel %vm893, %v797, %v987
      %989 = vst [vmem:[%s890 + $0x9c] sm:$0xf] %v988
      %990 = vst.msk [vmem:[%s890 + $0xa0] sm:$0xf] %vm511, %v806
      %v991 = vld [vmem:[%s890 + $0xa4] sm:$0x1]
      %v992 = vsel %vm899, %v807, %v991
      %993 = vst [vmem:[%s890 + $0xa4] sm:$0x1] %v992
      %v994 = vld [vmem:[%s890 + $0xa8] sm:$0xf]
      %v995 = vsel %vm893, %v814, %v994
      %996 = vst [vmem:[%s890 + $0xa8] sm:$0xf] %v995
      %997 = vst.msk [vmem:[%s890 + $0xac] sm:$0xf] %vm511, %v823
      %v998 = vld [vmem:[%s890 + $0xb0] sm:$0x1]
      %v999 = vsel %vm899, %v824, %v998
      %1000 = vst [vmem:[%s890 + $0xb0] sm:$0x1] %v999
      %v1001 = vld [vmem:[%s890 + $0xb4] sm:$0xf]
      %v1002 = vsel %vm893, %v831, %v1001
      %1003 = vst [vmem:[%s890 + $0xb4] sm:$0xf] %v1002
      %1004 = vst.msk [vmem:[%s890 + $0xb8] sm:$0xf] %vm511, %v840
      %v1005 = vld [vmem:[%s890 + $0xbc] sm:$0x1]
      %v1006 = vsel %vm899, %v841, %v1005
      %1007 = vst [vmem:[%s890 + $0xbc] sm:$0x1] %v1006
      %v1009 = vshrl.u32 %v507, 16
      %v1011 = vrot.slane %v1009, 7
      %v1012 = vshll.u32 %v507, 16
      %v1014 = vor.u32 %v1011, %v1012
      %v1015 = vrot.slane %v1011, 4
      %v1017 = vshrl.u32 %v508, 16
      %v1019 = vrot.slane %v1017, 7
      %v1020 = vshll.u32 %v508, 16
      %v1022 = vor.u32 %v1019, %v1020
      %v1023 = vsel %vm569, %v1015, %v1022
      %v1024 = vrot.slane %v1019, 4
      %v1028 = vld [vmem:[#allocation2] sm:$0xf]
      %v1029 = vsel %vm893, %v1014, %v1028
      %1030 = vst [vmem:[#allocation2] sm:$0xf] %v1029
      %1031 = vst.msk [vmem:[#allocation2 + $0x4] sm:$0xf] %vm511, %v1023
      %v1032 = vld [vmem:[#allocation2 + $0x8] sm:$0x1]
      %v1033 = vsel %vm899, %v1024, %v1032
      %1034 = vst [vmem:[#allocation2 + $0x8] sm:$0x1] %v1033
      %v1036 = vshrl.u32 %v509, 16
      %v1038 = vrot.slane %v1036, 7
      %v1039 = vshll.u32 %v509, 16
      %v1041 = vor.u32 %v1038, %v1039
      %v1042 = vrot.slane %v1038, 4
      %v1044 = vshrl.u32 %v510, 16
      %v1046 = vrot.slane %v1044, 7
      %v1047 = vshll.u32 %v510, 16
      %v1049 = vor.u32 %v1046, %v1047
      %v1050 = vsel %vm569, %v1042, %v1049
      %v1051 = vrot.slane %v1046, 4
      %s1055 = scalar_lea.vmem [#allocation2], 204
      %v1056 = vld [vmem:[%s1055] sm:$0xf]
      %v1057 = vsel %vm893, %v1041, %v1056
      %1058 = vst [vmem:[%s1055] sm:$0xf] %v1057
      %1059 = vst.msk [vmem:[%s1055 + $0x4] sm:$0xf] %vm511, %v1050
      %v1060 = vld [vmem:[%s1055 + $0x8] sm:$0x1]
      %v1061 = vsel %vm899, %v1051, %v1060
      %1062 = vst [vmem:[%s1055 + $0x8] sm:$0x1] %v1061
      %v1063 = vld [vmem:[#allocation2] sm:$0xf]
      %v1064 = vld [vmem:[#allocation2 + $0x4] sm:$0xf]
      %v1065 = vld [vmem:[#allocation2 + $0xc] sm:$0xf]
      %v1066 = vld [vmem:[#allocation2 + $0x10] sm:$0xf]
      %v1067 = vld [vmem:[#allocation2 + $0x18] sm:$0xf]
      %v1068 = vld [vmem:[#allocation2 + $0x1c] sm:$0xf]
      %v1069 = vld [vmem:[#allocation2 + $0x24] sm:$0xf]
      %v1070 = vld [vmem:[#allocation2 + $0x28] sm:$0xf]
      %v1071 = vld [vmem:[#allocation2 + $0x30] sm:$0xf]
      %v1072 = vld [vmem:[#allocation2 + $0x34] sm:$0xf]
      %v1073 = vld [vmem:[#allocation2 + $0x3c] sm:$0xf]
      %v1074 = vld [vmem:[#allocation2 + $0x40] sm:$0xf]
      %v1075 = vld [vmem:[#allocation2 + $0x48] sm:$0xf]
      %v1076 = vld [vmem:[#allocation2 + $0x4c] sm:$0xf]
      %v1077 = vld [vmem:[#allocation2 + $0x54] sm:$0xf]
      %v1078 = vld [vmem:[#allocation2 + $0x58] sm:$0xf]
      %v1079 = vld [vmem:[#allocation2 + $0x60] sm:$0xf]
      %v1080 = vld [vmem:[#allocation2 + $0x64] sm:$0xf]
      %v1081 = vld [vmem:[#allocation2 + $0x6c] sm:$0xf]
      %v1082 = vld [vmem:[#allocation2 + $0x70] sm:$0xf]
      %v1083 = vld [vmem:[#allocation2 + $0x78] sm:$0xf]
      %v1084 = vld [vmem:[#allocation2 + $0x7c] sm:$0xf]
      %v1085 = vld [vmem:[#allocation2 + $0x84] sm:$0xf]
      %v1086 = vld [vmem:[#allocation2 + $0x88] sm:$0xf]
      %v1087 = vld [vmem:[#allocation2 + $0x90] sm:$0xf]
      %v1088 = vld [vmem:[#allocation2 + $0x94] sm:$0xf]
      %v1089 = vld [vmem:[#allocation2 + $0x9c] sm:$0xf]
      %v1090 = vld [vmem:[#allocation2 + $0xa0] sm:$0xf]
      %v1091 = vld [vmem:[#allocation2 + $0xa8] sm:$0xf]
      %v1092 = vld [vmem:[#allocation2 + $0xac] sm:$0xf]
      %v1093 = vld [vmem:[#allocation2 + $0xb4] sm:$0xf]
      %v1094 = vld [vmem:[#allocation2 + $0xb8] sm:$0xf]
      %v1095 = vld [vmem:[%s3] sm:$0x3]
      %v1096 = vld [vmem:[#allocation2 + $0x8] sm:$0x1]
      %v1097 = vld [vmem:[#allocation2 + $0x14] sm:$0x1]
      %v1098 = vld [vmem:[#allocation2 + $0x20] sm:$0x1]
      %v1099 = vld [vmem:[#allocation2 + $0x2c] sm:$0x1]
      %v1100 = vld [vmem:[#allocation2 + $0x38] sm:$0x1]
      %v1101 = vld [vmem:[#allocation2 + $0x44] sm:$0x1]
      %v1102 = vld [vmem:[#allocation2 + $0x50] sm:$0x1]
      %v1103 = vld [vmem:[#allocation2 + $0x5c] sm:$0x1]
      %v1104 = vld [vmem:[#allocation2 + $0x68] sm:$0x1]
      %v1105 = vld [vmem:[#allocation2 + $0x74] sm:$0x1]
      %v1106 = vld [vmem:[#allocation2 + $0x80] sm:$0x1]
      %v1107 = vld [vmem:[#allocation2 + $0x8c] sm:$0x1]
      %v1108 = vld [vmem:[#allocation2 + $0x98] sm:$0x1]
      %v1109 = vld [vmem:[#allocation2 + $0xa4] sm:$0x1]
      %v1110 = vld [vmem:[#allocation2 + $0xb0] sm:$0x1]
      %v1111 = vld [vmem:[#allocation2 + $0xbc] sm:$0x1]
      %vm1112 = vsmask.f32 3328
      %vm1113 = vsmask.f32 7440
      %vm1114 = vmor %vm1112, %vm1113
      %v1116 = vshrl.u32 %v1063, 16
      %v1118 = vrot.slane %v1116, 4
      %v1119 = vshll.u32 %v1063, 16
      %v1121 = vrot.slane %v1119, 5
      %v1122 = vor.u32 %v1118, %v1121
      %v1123 = vrot.slane %v1122, 4
      %v1125 = vshll.u32 %v1064, 16
      %v1127 = vrot.slane %v1125, 5
      %v1128 = vsel %vm1114, %v1123, %v1127
      %v1129 = vshrl.u32 %v1064, 16
      %v1131 = vrot.slane %v1129, 4
      %v1132 = vor.u32 %v1131, %v1127
      %v1133 = vrot.slane %v1132, 4
      %v1135 = vshll.u32 %v1096, 16
      %v1137 = vrot.slane %v1135, 5
      %v1138 = vsel %vm1114, %v1133, %v1137
      %v1140 = vshrl.u32 %v1065, 16
      %v1142 = vrot.slane %v1140, 4
      %v1143 = vshll.u32 %v1065, 16
      %v1145 = vrot.slane %v1143, 5
      %v1146 = vor.u32 %v1142, %v1145
      %v1147 = vrot.slane %v1146, 4
      %v1149 = vshll.u32 %v1066, 16
      %v1151 = vrot.slane %v1149, 5
      %v1152 = vsel %vm1114, %v1147, %v1151
      %v1153 = vshrl.u32 %v1066, 16
      %v1155 = vrot.slane %v1153, 4
      %v1156 = vor.u32 %v1155, %v1151
      %v1157 = vrot.slane %v1156, 4
      %v1159 = vshll.u32 %v1097, 16
      %v1161 = vrot.slane %v1159, 5
      %v1162 = vsel %vm1114, %v1157, %v1161
      %v1164 = vshrl.u32 %v1067, 16
      %v1166 = vrot.slane %v1164, 4
      %v1167 = vshll.u32 %v1067, 16
      %v1169 = vrot.slane %v1167, 5
      %v1170 = vor.u32 %v1166, %v1169
      %v1171 = vrot.slane %v1170, 4
      %v1173 = vshll.u32 %v1068, 16
      %v1175 = vrot.slane %v1173, 5
      %v1176 = vsel %vm1114, %v1171, %v1175
      %v1177 = vshrl.u32 %v1068, 16
      %v1179 = vrot.slane %v1177, 4
      %v1180 = vor.u32 %v1179, %v1175
      %v1181 = vrot.slane %v1180, 4
      %v1183 = vshll.u32 %v1098, 16
      %v1185 = vrot.slane %v1183, 5
      %v1186 = vsel %vm1114, %v1181, %v1185
      %v1188 = vshrl.u32 %v1069, 16
      %v1190 = vrot.slane %v1188, 4
      %v1191 = vshll.u32 %v1069, 16
      %v1193 = vrot.slane %v1191, 5
      %v1194 = vor.u32 %v1190, %v1193
      %v1195 = vrot.slane %v1194, 4
      %v1197 = vshll.u32 %v1070, 16
      %v1199 = vrot.slane %v1197, 5
      %v1200 = vsel %vm1114, %v1195, %v1199
      %v1201 = vshrl.u32 %v1070, 16
      %v1203 = vrot.slane %v1201, 4
      %v1204 = vor.u32 %v1203, %v1199
      %v1205 = vrot.slane %v1204, 4
      %v1207 = vshll.u32 %v1099, 16
      %v1209 = vrot.slane %v1207, 5
      %v1210 = vsel %vm1114, %v1205, %v1209
      %v1212 = vshrl.u32 %v1071, 16
      %v1214 = vrot.slane %v1212, 4
      %v1215 = vshll.u32 %v1071, 16
      %v1217 = vrot.slane %v1215, 5
      %v1218 = vor.u32 %v1214, %v1217
      %v1219 = vrot.slane %v1218, 4
      %v1221 = vshll.u32 %v1072, 16
      %v1223 = vrot.slane %v1221, 5
      %v1224 = vsel %vm1114, %v1219, %v1223
      %v1225 = vshrl.u32 %v1072, 16
      %v1227 = vrot.slane %v1225, 4
      %v1228 = vor.u32 %v1227, %v1223
      %v1229 = vrot.slane %v1228, 4
      %v1231 = vshll.u32 %v1100, 16
      %v1233 = vrot.slane %v1231, 5
      %v1234 = vsel %vm1114, %v1229, %v1233
      %v1236 = vshrl.u32 %v1073, 16
      %v1238 = vrot.slane %v1236, 4
      %v1239 = vshll.u32 %v1073, 16
      %v1241 = vrot.slane %v1239, 5
      %v1242 = vor.u32 %v1238, %v1241
      %v1243 = vrot.slane %v1242, 4
      %v1245 = vshll.u32 %v1074, 16
      %v1247 = vrot.slane %v1245, 5
      %v1248 = vsel %vm1114, %v1243, %v1247
      %v1249 = vshrl.u32 %v1074, 16
      %v1251 = vrot.slane %v1249, 4
      %v1252 = vor.u32 %v1251, %v1247
      %v1253 = vrot.slane %v1252, 4
      %v1255 = vshll.u32 %v1101, 16
      %v1257 = vrot.slane %v1255, 5
      %v1258 = vsel %vm1114, %v1253, %v1257
      %v1260 = vshrl.u32 %v1075, 16
      %v1262 = vrot.slane %v1260, 4
      %v1263 = vshll.u32 %v1075, 16
      %v1265 = vrot.slane %v1263, 5
      %v1266 = vor.u32 %v1262, %v1265
      %v1267 = vrot.slane %v1266, 4
      %v1269 = vshll.u32 %v1076, 16
      %v1271 = vrot.slane %v1269, 5
      %v1272 = vsel %vm1114, %v1267, %v1271
      %v1273 = vshrl.u32 %v1076, 16
      %v1275 = vrot.slane %v1273, 4
      %v1276 = vor.u32 %v1275, %v1271
      %v1277 = vrot.slane %v1276, 4
      %v1279 = vshll.u32 %v1102, 16
      %v1281 = vrot.slane %v1279, 5
      %v1282 = vsel %vm1114, %v1277, %v1281
      %v1284 = vshrl.u32 %v1077, 16
      %v1286 = vrot.slane %v1284, 4
      %v1287 = vshll.u32 %v1077, 16
      %v1289 = vrot.slane %v1287, 5
      %v1290 = vor.u32 %v1286, %v1289
      %v1291 = vrot.slane %v1290, 4
      %v1293 = vshll.u32 %v1078, 16
      %v1295 = vrot.slane %v1293, 5
      %v1296 = vsel %vm1114, %v1291, %v1295
      %v1297 = vshrl.u32 %v1078, 16
      %v1299 = vrot.slane %v1297, 4
      %v1300 = vor.u32 %v1299, %v1295
      %v1301 = vrot.slane %v1300, 4
      %v1303 = vshll.u32 %v1103, 16
      %v1305 = vrot.slane %v1303, 5
      %v1306 = vsel %vm1114, %v1301, %v1305
      %v1308 = vshrl.u32 %v1079, 16
      %v1310 = vrot.slane %v1308, 4
      %v1311 = vshll.u32 %v1079, 16
      %v1313 = vrot.slane %v1311, 5
      %v1314 = vor.u32 %v1310, %v1313
      %v1315 = vrot.slane %v1314, 4
      %v1317 = vshll.u32 %v1080, 16
      %v1319 = vrot.slane %v1317, 5
      %v1320 = vsel %vm1114, %v1315, %v1319
      %v1321 = vshrl.u32 %v1080, 16
      %v1323 = vrot.slane %v1321, 4
      %v1324 = vor.u32 %v1323, %v1319
      %v1325 = vrot.slane %v1324, 4
      %v1327 = vshll.u32 %v1104, 16
      %v1329 = vrot.slane %v1327, 5
      %v1330 = vsel %vm1114, %v1325, %v1329
      %v1332 = vshrl.u32 %v1081, 16
      %v1334 = vrot.slane %v1332, 4
      %v1335 = vshll.u32 %v1081, 16
      %v1337 = vrot.slane %v1335, 5
      %v1338 = vor.u32 %v1334, %v1337
      %v1339 = vrot.slane %v1338, 4
      %v1341 = vshll.u32 %v1082, 16
      %v1343 = vrot.slane %v1341, 5
      %v1344 = vsel %vm1114, %v1339, %v1343
      %v1345 = vshrl.u32 %v1082, 16
      %v1347 = vrot.slane %v1345, 4
      %v1348 = vor.u32 %v1347, %v1343
      %v1349 = vrot.slane %v1348, 4
      %v1351 = vshll.u32 %v1105, 16
      %v1353 = vrot.slane %v1351, 5
      %v1354 = vsel %vm1114, %v1349, %v1353
      %v1356 = vshrl.u32 %v1083, 16
      %v1358 = vrot.slane %v1356, 4
      %v1359 = vshll.u32 %v1083, 16
      %v1361 = vrot.slane %v1359, 5
      %v1362 = vor.u32 %v1358, %v1361
      %v1363 = vrot.slane %v1362, 4
      %v1365 = vshll.u32 %v1084, 16
      %v1367 = vrot.slane %v1365, 5
      %v1368 = vsel %vm1114, %v1363, %v1367
      %v1369 = vshrl.u32 %v1084, 16
      %v1371 = vrot.slane %v1369, 4
      %v1372 = vor.u32 %v1371, %v1367
      %v1373 = vrot.slane %v1372, 4
      %v1375 = vshll.u32 %v1106, 16
      %v1377 = vrot.slane %v1375, 5
      %v1378 = vsel %vm1114, %v1373, %v1377
      %v1380 = vshrl.u32 %v1085, 16
      %v1382 = vrot.slane %v1380, 4
      %v1383 = vshll.u32 %v1085, 16
      %v1385 = vrot.slane %v1383, 5
      %v1386 = vor.u32 %v1382, %v1385
      %v1387 = vrot.slane %v1386, 4
      %v1389 = vshll.u32 %v1086, 16
      %v1391 = vrot.slane %v1389, 5
      %v1392 = vsel %vm1114, %v1387, %v1391
      %v1393 = vshrl.u32 %v1086, 16
      %v1395 = vrot.slane %v1393, 4
      %v1396 = vor.u32 %v1395, %v1391
      %v1397 = vrot.slane %v1396, 4
      %v1399 = vshll.u32 %v1107, 16
      %v1401 = vrot.slane %v1399, 5
      %v1402 = vsel %vm1114, %v1397, %v1401
      %v1404 = vshrl.u32 %v1087, 16
      %v1406 = vrot.slane %v1404, 4
      %v1407 = vshll.u32 %v1087, 16
      %v1409 = vrot.slane %v1407, 5
      %v1410 = vor.u32 %v1406, %v1409
      %v1411 = vrot.slane %v1410, 4
      %v1413 = vshll.u32 %v1088, 16
      %v1415 = vrot.slane %v1413, 5
      %v1416 = vsel %vm1114, %v1411, %v1415
      %v1417 = vshrl.u32 %v1088, 16
      %v1419 = vrot.slane %v1417, 4
      %v1420 = vor.u32 %v1419, %v1415
      %v1421 = vrot.slane %v1420, 4
      %v1423 = vshll.u32 %v1108, 16
      %v1425 = vrot.slane %v1423, 5
      %v1426 = vsel %vm1114, %v1421, %v1425
      %v1428 = vshrl.u32 %v1089, 16
      %v1430 = vrot.slane %v1428, 4
      %v1431 = vshll.u32 %v1089, 16
      %v1433 = vrot.slane %v1431, 5
      %v1434 = vor.u32 %v1430, %v1433
      %v1435 = vrot.slane %v1434, 4
      %v1437 = vshll.u32 %v1090, 16
      %v1439 = vrot.slane %v1437, 5
      %v1440 = vsel %vm1114, %v1435, %v1439
      %v1441 = vshrl.u32 %v1090, 16
      %v1443 = vrot.slane %v1441, 4
      %v1444 = vor.u32 %v1443, %v1439
      %v1445 = vrot.slane %v1444, 4
      %v1447 = vshll.u32 %v1109, 16
      %v1449 = vrot.slane %v1447, 5
      %v1450 = vsel %vm1114, %v1445, %v1449
      %v1452 = vshrl.u32 %v1091, 16
      %v1454 = vrot.slane %v1452, 4
      %v1455 = vshll.u32 %v1091, 16
      %v1457 = vrot.slane %v1455, 5
      %v1458 = vor.u32 %v1454, %v1457
      %v1459 = vrot.slane %v1458, 4
      %v1461 = vshll.u32 %v1092, 16
      %v1463 = vrot.slane %v1461, 5
      %v1464 = vsel %vm1114, %v1459, %v1463
      %v1465 = vshrl.u32 %v1092, 16
      %v1467 = vrot.slane %v1465, 4
      %v1468 = vor.u32 %v1467, %v1463
      %v1469 = vrot.slane %v1468, 4
      %v1471 = vshll.u32 %v1110, 16
      %v1473 = vrot.slane %v1471, 5
      %v1474 = vsel %vm1114, %v1469, %v1473
      %v1476 = vshrl.u32 %v1093, 16
      %v1478 = vrot.slane %v1476, 4
      %v1479 = vshll.u32 %v1093, 16
      %v1481 = vrot.slane %v1479, 5
      %v1482 = vor.u32 %v1478, %v1481
      %v1483 = vrot.slane %v1482, 4
      %v1485 = vshll.u32 %v1094, 16
      %v1487 = vrot.slane %v1485, 5
      %v1488 = vsel %vm1114, %v1483, %v1487
      %v1489 = vshrl.u32 %v1094, 16
      %v1491 = vrot.slane %v1489, 4
      %v1492 = vor.u32 %v1491, %v1487
      %v1493 = vrot.slane %v1492, 4
      %v1495 = vshll.u32 %v1111, 16
      %v1497 = vrot.slane %v1495, 5
      %v1498 = vsel %vm1114, %v1493, %v1497
      %v1499 = vld [vmem:[%s3] sm:$0xc]
      %v1500 = vunpack.c.l.b16 %v1128
      %v1501 = vunpack.c.l.b16 %v1138
      %v1502 = vunpack.c.l.b16 %v1152
      %v1503 = vunpack.c.l.b16 %v1162
      %v1504 = vunpack.c.l.b16 %v1176
      %v1505 = vunpack.c.l.b16 %v1186
      %v1506 = vunpack.c.l.b16 %v1200
      %v1507 = vunpack.c.l.b16 %v1210
      %v1508 = vunpack.c.l.b16 %v1224
      %v1509 = vunpack.c.l.b16 %v1234
      %v1510 = vunpack.c.l.b16 %v1248
      %v1511 = vunpack.c.l.b16 %v1258
      %v1512 = vunpack.c.l.b16 %v1272
      %v1513 = vunpack.c.l.b16 %v1282
      %v1514 = vunpack.c.l.b16 %v1296
      %v1515 = vunpack.c.l.b16 %v1306
      %v1516 = vunpack.c.l.b16 %v1320
      %v1517 = vunpack.c.l.b16 %v1330
      %v1518 = vunpack.c.l.b16 %v1344
      %v1519 = vunpack.c.l.b16 %v1354
      %v1520 = vunpack.c.l.b16 %v1368
      %v1521 = vunpack.c.l.b16 %v1378
      %v1522 = vunpack.c.l.b16 %v1392
      %v1523 = vunpack.c.l.b16 %v1402
      %v1524 = vunpack.c.l.b16 %v1416
      %v1525 = vunpack.c.l.b16 %v1426
      %v1526 = vunpack.c.l.b16 %v1440
      %v1527 = vunpack.c.l.b16 %v1450
      %v1528 = vunpack.c.l.b16 %v1464
      %v1529 = vunpack.c.l.b16 %v1474
      %v1530 = vunpack.c.l.b16 %v1488
      %v1531 = vunpack.c.l.b16 %v1498
      %v1532 = vpack.c.b16 %v1501, %v1500
      %v1533 = vpack.c.b16 %v1503, %v1502
      %v1534 = vpack.c.b16 %v1505, %v1504
      %v1535 = vpack.c.b16 %v1507, %v1506
      %v1536 = vpack.c.b16 %v1509, %v1508
      %v1537 = vpack.c.b16 %v1511, %v1510
      %v1538 = vpack.c.b16 %v1513, %v1512
      %v1539 = vpack.c.b16 %v1515, %v1514
      %v1540 = vpack.c.b16 %v1517, %v1516
      %v1541 = vpack.c.b16 %v1519, %v1518
      %v1542 = vpack.c.b16 %v1521, %v1520
      %v1543 = vpack.c.b16 %v1523, %v1522
      %v1544 = vpack.c.b16 %v1525, %v1524
      %v1545 = vpack.c.b16 %v1527, %v1526
      %v1546 = vpack.c.b16 %v1529, %v1528
      %v1547 = vpack.c.b16 %v1531, %v1530
      %v1549 = vunpack.c.l.b16 %v1499
      %v1550 = vpack.c.b16 %v1549, %v1549
      %v1551 = vrot.slane %v1550, 2
      %vm1552 = vcmask 31744
      %v1554 = vsel %vm1552, %v1532, 0
      %v1557 = vsel %vm1552, %v1533, 0
      %v1560 = vsel %vm1552, %v1534, 0
      %v1563 = vsel %vm1552, %v1535, 0
      %v1566 = vsel %vm1552, %v1536, 0
      %v1569 = vsel %vm1552, %v1537, 0
      %v1572 = vsel %vm1552, %v1538, 0
      %v1575 = vsel %vm1552, %v1539, 0
      %v1578 = vsel %vm1552, %v1540, 0
      %v1581 = vsel %vm1552, %v1541, 0
      %v1584 = vsel %vm1552, %v1542, 0
      %v1587 = vsel %vm1552, %v1543, 0
      %v1590 = vsel %vm1552, %v1544, 0
      %v1593 = vsel %vm1552, %v1545, 0
      %v1596 = vsel %vm1552, %v1546, 0
      %v1599 = vsel %vm1552, %v1547, 0
      %vm1601 = vcmask 1041408
      %v1603 = vsel %vm1601, %v1551, 0
      %1605 = vmatprep.subr.bf16.mxu0 0
      %1606 = vmatpush1.bf16.msra.mxu0 0
      %1607 = vmatprep.subr.bf16.mxu0 0
      %1608 = vmatpush1.bf16.msra.mxu0 0
      %1609 = vmatprep.subr.bf16.mxu0 0
      %1610 = vmatpush1.bf16.msra.mxu0 0
      %1611 = vmatprep.subr.bf16.mxu0 0
      %1612 = vmatpush1.bf16.msra.mxu0 0
      %1613 = vmatprep.subr.bf16.mxu0 0
      %1614 = vmatpush1.bf16.msra.mxu0 0
      %1615 = vmatprep.subr.bf16.mxu0 0
      %1616 = vmatpush1.bf16.msra.mxu0 0
      %1617 = vmatprep.subr.bf16.mxu0 0
      %1618 = vmatpush1.bf16.msra.mxu0 0
      %1619 = vmatprep.subr.bf16.mxu0 0
      %1620 = vmatpush1.bf16.msra.mxu0 %v1603
      %1621 = vmatprep.subr.bf16.mxu0 0
      %1622 = vmatpush2.bf16.msra.mxu0 0
      %1623 = vmatprep.subr.bf16.mxu0 0
      %1624 = vmatpush2.bf16.msra.mxu0 0
      %1625 = vmatprep.subr.bf16.mxu0 0
      %1626 = vmatpush2.bf16.msra.mxu0 0
      %1627 = vmatprep.subr.bf16.mxu0 0
      %1628 = vmatpush2.bf16.msra.mxu0 0
      %1629 = vmatprep.subr.bf16.mxu0 0
      %1630 = vmatpush2.bf16.msra.mxu0 0
      %1631 = vmatprep.subr.bf16.mxu0 0
      %1632 = vmatpush2.bf16.msra.mxu0 0
      %1633 = vmatprep.subr.bf16.mxu0 0
      %1634 = vmatpush2.bf16.msra.mxu0 0
      %1635 = vmatprep.subr.bf16.mxu0 0
      %1636 = vmatpush2.bf16.msra.mxu0 0
      %1637 = vmatprep.mubr.bf16.mxu0 0
      %1638 = vmatmul.mubr.bf16.gmra.mxu0 %v1554
      %v1639 = vpop.f32.mrf.mxu0
      %v1640 = vadd.f32 0.0, %v1639
      %v1641 = vpop.f32.mrf.mxu0
      %v1642 = vpop.f32.mrf.mxu0
      %v1643 = vadd.f32 0.0, %v1642
      %v1644 = vpop.f32.mrf.mxu0
      %1645 = vmatprep.mubr.bf16.mxu0 0
      %1646 = vmatmul.mubr.bf16.gmra.mxu0 %v1557
      %v1647 = vpop.f32.mrf.mxu0
      %v1648 = vadd.f32 0.0, %v1647
      %v1649 = vpop.f32.mrf.mxu0
      %v1650 = vpop.f32.mrf.mxu0
      %v1651 = vadd.f32 0.0, %v1650
      %v1652 = vpop.f32.mrf.mxu0
      %1653 = vmatprep.mubr.bf16.mxu0 0
      %1654 = vmatmul.mubr.bf16.gmra.mxu0 %v1560
      %v1655 = vpop.f32.mrf.mxu0
      %v1656 = vadd.f32 0.0, %v1655
      %v1657 = vpop.f32.mrf.mxu0
      %v1658 = vpop.f32.mrf.mxu0
      %v1659 = vadd.f32 0.0, %v1658
      %v1660 = vpop.f32.mrf.mxu0
      %1661 = vmatprep.mubr.bf16.mxu0 0
      %1662 = vmatmul.mubr.bf16.gmra.mxu0 %v1563
      %v1663 = vpop.f32.mrf.mxu0
      %v1664 = vadd.f32 0.0, %v1663
      %v1665 = vpop.f32.mrf.mxu0
      %v1666 = vpop.f32.mrf.mxu0
      %v1667 = vadd.f32 0.0, %v1666
      %v1668 = vpop.f32.mrf.mxu0
      %1669 = vmatprep.mubr.bf16.mxu0 0
      %1670 = vmatmul.mubr.bf16.gmra.mxu0 %v1566
      %v1671 = vpop.f32.mrf.mxu0
      %v1672 = vadd.f32 0.0, %v1671
      %v1673 = vpop.f32.mrf.mxu0
      %v1674 = vpop.f32.mrf.mxu0
      %v1675 = vadd.f32 0.0, %v1674
      %v1676 = vpop.f32.mrf.mxu0
      %1677 = vmatprep.mubr.bf16.mxu0 0
      %1678 = vmatmul.mubr.bf16.gmra.mxu0 %v1569
      %v1679 = vpop.f32.mrf.mxu0
      %v1680 = vadd.f32 0.0, %v1679
      %v1681 = vpop.f32.mrf.mxu0
      %v1682 = vpop.f32.mrf.mxu0
      %v1683 = vadd.f32 0.0, %v1682
      %v1684 = vpop.f32.mrf.mxu0
      %1685 = vmatprep.mubr.bf16.mxu0 0
      %1686 = vmatmul.mubr.bf16.gmra.mxu0 %v1572
      %v1687 = vpop.f32.mrf.mxu0
      %v1688 = vadd.f32 0.0, %v1687
      %v1689 = vpop.f32.mrf.mxu0
      %v1690 = vpop.f32.mrf.mxu0
      %v1691 = vadd.f32 0.0, %v1690
      %v1692 = vpop.f32.mrf.mxu0
      %1693 = vmatprep.mubr.bf16.mxu0 0
      %1694 = vmatmul.mubr.bf16.gmra.mxu0 %v1575
      %v1695 = vpop.f32.mrf.mxu0
      %v1696 = vadd.f32 0.0, %v1695
      %v1697 = vpop.f32.mrf.mxu0
      %v1698 = vpop.f32.mrf.mxu0
      %v1699 = vadd.f32 0.0, %v1698
      %v1700 = vpop.f32.mrf.mxu0
      %1701 = vmatprep.mubr.bf16.mxu0 0
      %1702 = vmatmul.mubr.bf16.gmra.mxu0 %v1578
      %v1703 = vpop.f32.mrf.mxu0
      %v1704 = vadd.f32 0.0, %v1703
      %v1705 = vpop.f32.mrf.mxu0
      %v1706 = vpop.f32.mrf.mxu0
      %v1707 = vadd.f32 0.0, %v1706
      %v1708 = vpop.f32.mrf.mxu0
      %1709 = vmatprep.mubr.bf16.mxu0 0
      %1710 = vmatmul.mubr.bf16.gmra.mxu0 %v1581
      %v1711 = vpop.f32.mrf.mxu0
      %v1712 = vadd.f32 0.0, %v1711
      %v1713 = vpop.f32.mrf.mxu0
      %v1714 = vpop.f32.mrf.mxu0
      %v1715 = vadd.f32 0.0, %v1714
      %v1716 = vpop.f32.mrf.mxu0
      %1717 = vmatprep.mubr.bf16.mxu0 0
      %1718 = vmatmul.mubr.bf16.gmra.mxu0 %v1584
      %v1719 = vpop.f32.mrf.mxu0
      %v1720 = vadd.f32 0.0, %v1719
      %v1721 = vpop.f32.mrf.mxu0
      %v1722 = vpop.f32.mrf.mxu0
      %v1723 = vadd.f32 0.0, %v1722
      %v1724 = vpop.f32.mrf.mxu0
      %1725 = vmatprep.mubr.bf16.mxu0 0
      %1726 = vmatmul.mubr.bf16.gmra.mxu0 %v1587
      %v1727 = vpop.f32.mrf.mxu0
      %v1728 = vadd.f32 0.0, %v1727
      %v1729 = vpop.f32.mrf.mxu0
      %v1730 = vpop.f32.mrf.mxu0
      %v1731 = vadd.f32 0.0, %v1730
      %v1732 = vpop.f32.mrf.mxu0
      %1733 = vmatprep.mubr.bf16.mxu0 0
      %1734 = vmatmul.mubr.bf16.gmra.mxu0 %v1590
      %v1735 = vpop.f32.mrf.mxu0
      %v1736 = vadd.f32 0.0, %v1735
      %v1737 = vpop.f32.mrf.mxu0
      %v1738 = vpop.f32.mrf.mxu0
      %v1739 = vadd.f32 0.0, %v1738
      %v1740 = vpop.f32.mrf.mxu0
      %1741 = vmatprep.mubr.bf16.mxu0 0
      %1742 = vmatmul.mubr.bf16.gmra.mxu0 %v1593
      %v1743 = vpop.f32.mrf.mxu0
      %v1744 = vadd.f32 0.0, %v1743
      %v1745 = vpop.f32.mrf.mxu0
      %v1746 = vpop.f32.mrf.mxu0
      %v1747 = vadd.f32 0.0, %v1746
      %v1748 = vpop.f32.mrf.mxu0
      %1749 = vmatprep.mubr.bf16.mxu0 0
      %1750 = vmatmul.mubr.bf16.gmra.mxu0 %v1596
      %v1751 = vpop.f32.mrf.mxu0
      %v1752 = vadd.f32 0.0, %v1751
      %v1753 = vpop.f32.mrf.mxu0
      %v1754 = vpop.f32.mrf.mxu0
      %v1755 = vadd.f32 0.0, %v1754
      %v1756 = vpop.f32.mrf.mxu0
      %1757 = vmatprep.mubr.bf16.mxu0 0
      %1758 = vmatmul.mubr.bf16.gmra.mxu0 %v1599
      %v1759 = vpop.f32.mrf.mxu0
      %v1760 = vadd.f32 0.0, %v1759
      %v1761 = vpop.f32.mrf.mxu0
      %v1762 = vpop.f32.mrf.mxu0
      %v1763 = vadd.f32 0.0, %v1762
      %v1764 = vpop.f32.mrf.mxu0
      %1765 = vdwg.mxu0
      %v1798 = vunpack.c.l.b16 %v1063
      %v1799 = vunpack.c.l.b16 %v1064
      %v1800 = vunpack.c.l.b16 %v1065
      %v1801 = vunpack.c.l.b16 %v1066
      %v1802 = vunpack.c.l.b16 %v1067
      %v1803 = vunpack.c.l.b16 %v1068
      %v1804 = vunpack.c.l.b16 %v1069
      %v1805 = vunpack.c.l.b16 %v1070
      %v1806 = vunpack.c.l.b16 %v1071
      %v1807 = vunpack.c.l.b16 %v1072
      %v1808 = vunpack.c.l.b16 %v1073
      %v1809 = vunpack.c.l.b16 %v1074
      %v1810 = vunpack.c.l.b16 %v1075
      %v1811 = vunpack.c.l.b16 %v1076
      %v1812 = vunpack.c.l.b16 %v1077
      %v1813 = vunpack.c.l.b16 %v1078
      %v1814 = vunpack.c.l.b16 %v1079
      %v1815 = vunpack.c.l.b16 %v1080
      %v1816 = vunpack.c.l.b16 %v1081
      %v1817 = vunpack.c.l.b16 %v1082
      %v1818 = vunpack.c.l.b16 %v1083
      %v1819 = vunpack.c.l.b16 %v1084
      %v1820 = vunpack.c.l.b16 %v1085
      %v1821 = vunpack.c.l.b16 %v1086
      %v1822 = vunpack.c.l.b16 %v1087
      %v1823 = vunpack.c.l.b16 %v1088
      %v1824 = vunpack.c.l.b16 %v1089
      %v1825 = vunpack.c.l.b16 %v1090
      %v1826 = vunpack.c.l.b16 %v1091
      %v1827 = vunpack.c.l.b16 %v1092
      %v1828 = vunpack.c.l.b16 %v1093
      %v1829 = vunpack.c.l.b16 %v1094
      %v1830 = vpack.c.b16 %v1799, %v1798
      %v1831 = vpack.c.b16 %v1801, %v1800
      %v1832 = vpack.c.b16 %v1803, %v1802
      %v1833 = vpack.c.b16 %v1805, %v1804
      %v1834 = vpack.c.b16 %v1807, %v1806
      %v1835 = vpack.c.b16 %v1809, %v1808
      %v1836 = vpack.c.b16 %v1811, %v1810
      %v1837 = vpack.c.b16 %v1813, %v1812
      %v1838 = vpack.c.b16 %v1815, %v1814
      %v1839 = vpack.c.b16 %v1817, %v1816
      %v1840 = vpack.c.b16 %v1819, %v1818
      %v1841 = vpack.c.b16 %v1821, %v1820
      %v1842 = vpack.c.b16 %v1823, %v1822
      %v1843 = vpack.c.b16 %v1825, %v1824
      %v1844 = vpack.c.b16 %v1827, %v1826
      %v1845 = vpack.c.b16 %v1829, %v1828
      %v1847 = vsel %vm1552, %v1830, 0
      %v1850 = vsel %vm1552, %v1831, 0
      %v1853 = vsel %vm1552, %v1832, 0
      %v1856 = vsel %vm1552, %v1833, 0
      %v1859 = vsel %vm1552, %v1834, 0
      %v1862 = vsel %vm1552, %v1835, 0
      %v1865 = vsel %vm1552, %v1836, 0
      %v1868 = vsel %vm1552, %v1837, 0
      %v1871 = vsel %vm1552, %v1838, 0
      %v1874 = vsel %vm1552, %v1839, 0
      %v1877 = vsel %vm1552, %v1840, 0
      %v1880 = vsel %vm1552, %v1841, 0
      %v1883 = vsel %vm1552, %v1842, 0
      %v1886 = vsel %vm1552, %v1843, 0
      %v1889 = vsel %vm1552, %v1844, 0
      %v1892 = vsel %vm1552, %v1845, 0
      %v1895 = vsel %vm1601, %v1095, 0
      %1897 = vmatprep.subr.bf16.mxu0 0
      %1898 = vmatpush1.bf16.msra.mxu0 0
      %1899 = vmatprep.subr.bf16.mxu0 0
      %1900 = vmatpush1.bf16.msra.mxu0 0
      %1901 = vmatprep.subr.bf16.mxu0 0
      %1902 = vmatpush1.bf16.msra.mxu0 0
      %1903 = vmatprep.subr.bf16.mxu0 0
      %1904 = vmatpush1.bf16.msra.mxu0 0
      %1905 = vmatprep.subr.bf16.mxu0 0
      %1906 = vmatpush1.bf16.msra.mxu0 0
      %1907 = vmatprep.subr.bf16.mxu0 0
      %1908 = vmatpush1.bf16.msra.mxu0 0
      %1909 = vmatprep.subr.bf16.mxu0 0
      %1910 = vmatpush1.bf16.msra.mxu0 0
      %1911 = vmatprep.subr.bf16.mxu0 0
      %1912 = vmatpush1.bf16.msra.mxu0 %v1895
      %1913 = vmatprep.subr.bf16.mxu0 0
      %1914 = vmatpush2.bf16.msra.mxu0 0
      %1915 = vmatprep.subr.bf16.mxu0 0
      %1916 = vmatpush2.bf16.msra.mxu0 0
      %1917 = vmatprep.subr.bf16.mxu0 0
      %1918 = vmatpush2.bf16.msra.mxu0 0
      %1919 = vmatprep.subr.bf16.mxu0 0
      %1920 = vmatpush2.bf16.msra.mxu0 0
      %1921 = vmatprep.subr.bf16.mxu0 0
      %1922 = vmatpush2.bf16.msra.mxu0 0
      %1923 = vmatprep.subr.bf16.mxu0 0
      %1924 = vmatpush2.bf16.msra.mxu0 0
      %1925 = vmatprep.subr.bf16.mxu0 0
      %1926 = vmatpush2.bf16.msra.mxu0 0
      %1927 = vmatprep.subr.bf16.mxu0 0
      %1928 = vmatpush2.bf16.msra.mxu0 0
      %1929 = vmatprep.mubr.bf16.mxu0 0
      %1930 = vmatmul.mubr.bf16.gmra.mxu0 %v1847
      %v1931 = vpop.f32.mrf.mxu0
      %v1932 = vadd.f32 %v1640, %v1931
      %v1933 = vpop.f32.mrf.mxu0
      %v1934 = vpop.f32.mrf.mxu0
      %v1935 = vadd.f32 %v1643, %v1934
      %v1936 = vpop.f32.mrf.mxu0
      %1937 = vmatprep.mubr.bf16.mxu0 0
      %1938 = vmatmul.mubr.bf16.gmra.mxu0 %v1850
      %v1939 = vpop.f32.mrf.mxu0
      %v1940 = vadd.f32 %v1648, %v1939
      %v1941 = vpop.f32.mrf.mxu0
      %v1942 = vpop.f32.mrf.mxu0
      %v1943 = vadd.f32 %v1651, %v1942
      %v1944 = vpop.f32.mrf.mxu0
      %1945 = vmatprep.mubr.bf16.mxu0 0
      %1946 = vmatmul.mubr.bf16.gmra.mxu0 %v1853
      %v1947 = vpop.f32.mrf.mxu0
      %v1948 = vadd.f32 %v1656, %v1947
      %v1949 = vpop.f32.mrf.mxu0
      %v1950 = vpop.f32.mrf.mxu0
      %v1951 = vadd.f32 %v1659, %v1950
      %v1952 = vpop.f32.mrf.mxu0
      %1953 = vmatprep.mubr.bf16.mxu0 0
      %1954 = vmatmul.mubr.bf16.gmra.mxu0 %v1856
      %v1955 = vpop.f32.mrf.mxu0
      %v1956 = vadd.f32 %v1664, %v1955
      %v1957 = vpop.f32.mrf.mxu0
      %v1958 = vpop.f32.mrf.mxu0
      %v1959 = vadd.f32 %v1667, %v1958
      %v1960 = vpop.f32.mrf.mxu0
      %1961 = vmatprep.mubr.bf16.mxu0 0
      %1962 = vmatmul.mubr.bf16.gmra.mxu0 %v1859
      %v1963 = vpop.f32.mrf.mxu0
      %v1964 = vadd.f32 %v1672, %v1963
      %v1965 = vpop.f32.mrf.mxu0
      %v1966 = vpop.f32.mrf.mxu0
      %v1967 = vadd.f32 %v1675, %v1966
      %v1968 = vpop.f32.mrf.mxu0
      %1969 = vmatprep.mubr.bf16.mxu0 0
      %1970 = vmatmul.mubr.bf16.gmra.mxu0 %v1862
      %v1971 = vpop.f32.mrf.mxu0
      %v1972 = vadd.f32 %v1680, %v1971
      %v1973 = vpop.f32.mrf.mxu0
      %v1974 = vpop.f32.mrf.mxu0
      %v1975 = vadd.f32 %v1683, %v1974
      %v1976 = vpop.f32.mrf.mxu0
      %1977 = vmatprep.mubr.bf16.mxu0 0
      %1978 = vmatmul.mubr.bf16.gmra.mxu0 %v1865
      %v1979 = vpop.f32.mrf.mxu0
      %v1980 = vadd.f32 %v1688, %v1979
      %v1981 = vpop.f32.mrf.mxu0
      %v1982 = vpop.f32.mrf.mxu0
      %v1983 = vadd.f32 %v1691, %v1982
      %v1984 = vpop.f32.mrf.mxu0
      %1985 = vmatprep.mubr.bf16.mxu0 0
      %1986 = vmatmul.mubr.bf16.gmra.mxu0 %v1868
      %v1987 = vpop.f32.mrf.mxu0
      %v1988 = vadd.f32 %v1696, %v1987
      %v1989 = vpop.f32.mrf.mxu0
      %v1990 = vpop.f32.mrf.mxu0
      %v1991 = vadd.f32 %v1699, %v1990
      %v1992 = vpop.f32.mrf.mxu0
      %1993 = vmatprep.mubr.bf16.mxu0 0
      %1994 = vmatmul.mubr.bf16.gmra.mxu0 %v1871
      %v1995 = vpop.f32.mrf.mxu0
      %v1996 = vadd.f32 %v1704, %v1995
      %v1997 = vpop.f32.mrf.mxu0
      %v1998 = vpop.f32.mrf.mxu0
      %v1999 = vadd.f32 %v1707, %v1998
      %v2000 = vpop.f32.mrf.mxu0
      %2001 = vmatprep.mubr.bf16.mxu0 0
      %2002 = vmatmul.mubr.bf16.gmra.mxu0 %v1874
      %v2003 = vpop.f32.mrf.mxu0
      %v2004 = vadd.f32 %v1712, %v2003
      %v2005 = vpop.f32.mrf.mxu0
      %v2006 = vpop.f32.mrf.mxu0
      %v2007 = vadd.f32 %v1715, %v2006
      %v2008 = vpop.f32.mrf.mxu0
      %2009 = vmatprep.mubr.bf16.mxu0 0
      %2010 = vmatmul.mubr.bf16.gmra.mxu0 %v1877
      %v2011 = vpop.f32.mrf.mxu0
      %v2012 = vadd.f32 %v1720, %v2011
      %v2013 = vpop.f32.mrf.mxu0
      %v2014 = vpop.f32.mrf.mxu0
      %v2015 = vadd.f32 %v1723, %v2014
      %v2016 = vpop.f32.mrf.mxu0
      %2017 = vmatprep.mubr.bf16.mxu0 0
      %2018 = vmatmul.mubr.bf16.gmra.mxu0 %v1880
      %v2019 = vpop.f32.mrf.mxu0
      %v2020 = vadd.f32 %v1728, %v2019
      %v2021 = vpop.f32.mrf.mxu0
      %v2022 = vpop.f32.mrf.mxu0
      %v2023 = vadd.f32 %v1731, %v2022
      %v2024 = vpop.f32.mrf.mxu0
      %2025 = vmatprep.mubr.bf16.mxu0 0
      %2026 = vmatmul.mubr.bf16.gmra.mxu0 %v1883
      %v2027 = vpop.f32.mrf.mxu0
      %v2028 = vadd.f32 %v1736, %v2027
      %v2029 = vpop.f32.mrf.mxu0
      %v2030 = vpop.f32.mrf.mxu0
      %v2031 = vadd.f32 %v1739, %v2030
      %v2032 = vpop.f32.mrf.mxu0
      %2033 = vmatprep.mubr.bf16.mxu0 0
      %2034 = vmatmul.mubr.bf16.gmra.mxu0 %v1886
      %v2035 = vpop.f32.mrf.mxu0
      %v2036 = vadd.f32 %v1744, %v2035
      %v2037 = vpop.f32.mrf.mxu0
      %v2038 = vpop.f32.mrf.mxu0
      %v2039 = vadd.f32 %v1747, %v2038
      %v2040 = vpop.f32.mrf.mxu0
      %2041 = vmatprep.mubr.bf16.mxu0 0
      %2042 = vmatmul.mubr.bf16.gmra.mxu0 %v1889
      %v2043 = vpop.f32.mrf.mxu0
      %v2044 = vadd.f32 %v1752, %v2043
      %v2045 = vpop.f32.mrf.mxu0
      %v2046 = vpop.f32.mrf.mxu0
      %v2047 = vadd.f32 %v1755, %v2046
      %v2048 = vpop.f32.mrf.mxu0
      %2049 = vmatprep.mubr.bf16.mxu0 0
      %2050 = vmatmul.mubr.bf16.gmra.mxu0 %v1892
      %v2051 = vpop.f32.mrf.mxu0
      %v2052 = vadd.f32 %v1760, %v2051
      %v2053 = vpop.f32.mrf.mxu0
      %v2054 = vpop.f32.mrf.mxu0
      %v2055 = vadd.f32 %v1763, %v2054
      %v2056 = vpop.f32.mrf.mxu0
      %2057 = vdwg.mxu0
      %v2058 = vld [vmem:[#allocation2] sm:$0xe]
      %v2059 = vld [vmem:[#allocation2 + $0xc] sm:$0xe]
      %v2060 = vld [vmem:[#allocation2 + $0x18] sm:$0xe]
      %v2061 = vld [vmem:[#allocation2 + $0x24] sm:$0xe]
      %v2062 = vld [vmem:[#allocation2 + $0x30] sm:$0xe]
      %v2063 = vld [vmem:[#allocation2 + $0x3c] sm:$0xe]
      %v2064 = vld [vmem:[#allocation2 + $0x48] sm:$0xe]
      %v2065 = vld [vmem:[#allocation2 + $0x54] sm:$0xe]
      %v2066 = vld [vmem:[#allocation2 + $0x60] sm:$0xe]
      %v2067 = vld [vmem:[#allocation2 + $0x6c] sm:$0xe]
      %v2068 = vld [vmem:[#allocation2 + $0x78] sm:$0xe]
      %v2069 = vld [vmem:[#allocation2 + $0x84] sm:$0xe]
      %v2070 = vld [vmem:[#allocation2 + $0x90] sm:$0xe]
      %v2071 = vld [vmem:[#allocation2 + $0x9c] sm:$0xe]
      %v2072 = vld [vmem:[#allocation2 + $0xa8] sm:$0xe]
      %v2073 = vld [vmem:[#allocation2 + $0xb4] sm:$0xe]
      %vm2106 = vcmask 1042432
      %vm2107 = vcmask 1046532
      %vm2108 = vmor %vm2106, %vm2107
      %v2109 = vrot.slane %v2058, 5
      %v2110 = vrot.slane %v2109, 4
      %v2111 = vrot.slane %v1064, 5
      %v2112 = vsel %vm2108, %v2110, %v2111
      %v2113 = vrot.slane %v2111, 4
      %v2114 = vrot.slane %v1096, 5
      %v2115 = vsel %vm2108, %v2113, %v2114
      %v2116 = vrot.slane %v2059, 5
      %v2117 = vrot.slane %v2116, 4
      %v2118 = vrot.slane %v1066, 5
      %v2119 = vsel %vm2108, %v2117, %v2118
      %v2120 = vrot.slane %v2118, 4
      %v2121 = vrot.slane %v1097, 5
      %v2122 = vsel %vm2108, %v2120, %v2121
      %v2123 = vrot.slane %v2060, 5
      %v2124 = vrot.slane %v2123, 4
      %v2125 = vrot.slane %v1068, 5
      %v2126 = vsel %vm2108, %v2124, %v2125
      %v2127 = vrot.slane %v2125, 4
      %v2128 = vrot.slane %v1098, 5
      %v2129 = vsel %vm2108, %v2127, %v2128
      %v2130 = vrot.slane %v2061, 5
      %v2131 = vrot.slane %v2130, 4
      %v2132 = vrot.slane %v1070, 5
      %v2133 = vsel %vm2108, %v2131, %v2132
      %v2134 = vrot.slane %v2132, 4
      %v2135 = vrot.slane %v1099, 5
      %v2136 = vsel %vm2108, %v2134, %v2135
      %v2137 = vrot.slane %v2062, 5
      %v2138 = vrot.slane %v2137, 4
      %v2139 = vrot.slane %v1072, 5
      %v2140 = vsel %vm2108, %v2138, %v2139
      %v2141 = vrot.slane %v2139, 4
      %v2142 = vrot.slane %v1100, 5
      %v2143 = vsel %vm2108, %v2141, %v2142
      %v2144 = vrot.slane %v2063, 5
      %v2145 = vrot.slane %v2144, 4
      %v2146 = vrot.slane %v1074, 5
      %v2147 = vsel %vm2108, %v2145, %v2146
      %v2148 = vrot.slane %v2146, 4
      %v2149 = vrot.slane %v1101, 5
      %v2150 = vsel %vm2108, %v2148, %v2149
      %v2151 = vrot.slane %v2064, 5
      %v2152 = vrot.slane %v2151, 4
      %v2153 = vrot.slane %v1076, 5
      %v2154 = vsel %vm2108, %v2152, %v2153
      %v2155 = vrot.slane %v2153, 4
      %v2156 = vrot.slane %v1102, 5
      %v2157 = vsel %vm2108, %v2155, %v2156
      %v2158 = vrot.slane %v2065, 5
      %v2159 = vrot.slane %v2158, 4
      %v2160 = vrot.slane %v1078, 5
      %v2161 = vsel %vm2108, %v2159, %v2160
      %v2162 = vrot.slane %v2160, 4
      %v2163 = vrot.slane %v1103, 5
      %v2164 = vsel %vm2108, %v2162, %v2163
      %v2165 = vrot.slane %v2066, 5
      %v2166 = vrot.slane %v2165, 4
      %v2167 = vrot.slane %v1080, 5
      %v2168 = vsel %vm2108, %v2166, %v2167
      %v2169 = vrot.slane %v2167, 4
      %v2170 = vrot.slane %v1104, 5
      %v2171 = vsel %vm2108, %v2169, %v2170
      %v2172 = vrot.slane %v2067, 5
      %v2173 = vrot.slane %v2172, 4
      %v2174 = vrot.slane %v1082, 5
      %v2175 = vsel %vm2108, %v2173, %v2174
      %v2176 = vrot.slane %v2174, 4
      %v2177 = vrot.slane %v1105, 5
      %v2178 = vsel %vm2108, %v2176, %v2177
      %v2179 = vrot.slane %v2068, 5
      %v2180 = vrot.slane %v2179, 4
      %v2181 = vrot.slane %v1084, 5
      %v2182 = vsel %vm2108, %v2180, %v2181
      %v2183 = vrot.slane %v2181, 4
      %v2184 = vrot.slane %v1106, 5
      %v2185 = vsel %vm2108, %v2183, %v2184
      %v2186 = vrot.slane %v2069, 5
      %v2187 = vrot.slane %v2186, 4
      %v2188 = vrot.slane %v1086, 5
      %v2189 = vsel %vm2108, %v2187, %v2188
      %v2190 = vrot.slane %v2188, 4
      %v2191 = vrot.slane %v1107, 5
      %v2192 = vsel %vm2108, %v2190, %v2191
      %v2193 = vrot.slane %v2070, 5
      %v2194 = vrot.slane %v2193, 4
      %v2195 = vrot.slane %v1088, 5
      %v2196 = vsel %vm2108, %v2194, %v2195
      %v2197 = vrot.slane %v2195, 4
      %v2198 = vrot.slane %v1108, 5
      %v2199 = vsel %vm2108, %v2197, %v2198
      %v2200 = vrot.slane %v2071, 5
      %v2201 = vrot.slane %v2200, 4
      %v2202 = vrot.slane %v1090, 5
      %v2203 = vsel %vm2108, %v2201, %v2202
      %v2204 = vrot.slane %v2202, 4
      %v2205 = vrot.slane %v1109, 5
      %v2206 = vsel %vm2108, %v2204, %v2205
      %v2207 = vrot.slane %v2072, 5
      %v2208 = vrot.slane %v2207, 4
      %v2209 = vrot.slane %v1092, 5
      %v2210 = vsel %vm2108, %v2208, %v2209
      %v2211 = vrot.slane %v2209, 4
      %v2212 = vrot.slane %v1110, 5
      %v2213 = vsel %vm2108, %v2211, %v2212
      %v2214 = vrot.slane %v2073, 5
      %v2215 = vrot.slane %v2214, 4
      %v2216 = vrot.slane %v1094, 5
      %v2217 = vsel %vm2108, %v2215, %v2216
      %v2218 = vrot.slane %v2216, 4
      %v2219 = vrot.slane %v1111, 5
      %v2220 = vsel %vm2108, %v2218, %v2219
      %v2221 = vld [vmem:[%s3 + $0x4] sm:$0x3]
      %v2222 = vunpack.c.l.b16 %v2112
      %v2223 = vunpack.c.l.b16 %v2115
      %v2224 = vunpack.c.l.b16 %v2119
      %v2225 = vunpack.c.l.b16 %v2122
      %v2226 = vunpack.c.l.b16 %v2126
      %v2227 = vunpack.c.l.b16 %v2129
      %v2228 = vunpack.c.l.b16 %v2133
      %v2229 = vunpack.c.l.b16 %v2136
      %v2230 = vunpack.c.l.b16 %v2140
      %v2231 = vunpack.c.l.b16 %v2143
      %v2232 = vunpack.c.l.b16 %v2147
      %v2233 = vunpack.c.l.b16 %v2150
      %v2234 = vunpack.c.l.b16 %v2154
      %v2235 = vunpack.c.l.b16 %v2157
      %v2236 = vunpack.c.l.b16 %v2161
      %v2237 = vunpack.c.l.b16 %v2164
      %v2238 = vunpack.c.l.b16 %v2168
      %v2239 = vunpack.c.l.b16 %v2171
      %v2240 = vunpack.c.l.b16 %v2175
      %v2241 = vunpack.c.l.b16 %v2178
      %v2242 = vunpack.c.l.b16 %v2182
      %v2243 = vunpack.c.l.b16 %v2185
      %v2244 = vunpack.c.l.b16 %v2189
      %v2245 = vunpack.c.l.b16 %v2192
      %v2246 = vunpack.c.l.b16 %v2196
      %v2247 = vunpack.c.l.b16 %v2199
      %v2248 = vunpack.c.l.b16 %v2203
      %v2249 = vunpack.c.l.b16 %v2206
      %v2250 = vunpack.c.l.b16 %v2210
      %v2251 = vunpack.c.l.b16 %v2213
      %v2252 = vunpack.c.l.b16 %v2217
      %v2253 = vunpack.c.l.b16 %v2220
      %v2254 = vpack.c.b16 %v2223, %v2222
      %v2255 = vpack.c.b16 %v2225, %v2224
      %v2256 = vpack.c.b16 %v2227, %v2226
      %v2257 = vpack.c.b16 %v2229, %v2228
      %v2258 = vpack.c.b16 %v2231, %v2230
      %v2259 = vpack.c.b16 %v2233, %v2232
      %v2260 = vpack.c.b16 %v2235, %v2234
      %v2261 = vpack.c.b16 %v2237, %v2236
      %v2262 = vpack.c.b16 %v2239, %v2238
      %v2263 = vpack.c.b16 %v2241, %v2240
      %v2264 = vpack.c.b16 %v2243, %v2242
      %v2265 = vpack.c.b16 %v2245, %v2244
      %v2266 = vpack.c.b16 %v2247, %v2246
      %v2267 = vpack.c.b16 %v2249, %v2248
      %v2268 = vpack.c.b16 %v2251, %v2250
      %v2269 = vpack.c.b16 %v2253, %v2252
      %v2271 = vsel %vm1552, %v2254, 0
      %v2274 = vsel %vm1552, %v2255, 0
      %v2277 = vsel %vm1552, %v2256, 0
      %v2280 = vsel %vm1552, %v2257, 0
      %v2283 = vsel %vm1552, %v2258, 0
      %v2286 = vsel %vm1552, %v2259, 0
      %v2289 = vsel %vm1552, %v2260, 0
      %v2292 = vsel %vm1552, %v2261, 0
      %v2295 = vsel %vm1552, %v2262, 0
      %v2298 = vsel %vm1552, %v2263, 0
      %v2301 = vsel %vm1552, %v2264, 0
      %v2304 = vsel %vm1552, %v2265, 0
      %v2307 = vsel %vm1552, %v2266, 0
      %v2310 = vsel %vm1552, %v2267, 0
      %v2313 = vsel %vm1552, %v2268, 0
      %v2316 = vsel %vm1552, %v2269, 0
      %v2319 = vsel %vm1601, %v2221, 0
      %2321 = vmatprep.subr.bf16.mxu0 0
      %2322 = vmatpush1.bf16.msra.mxu0 0
      %2323 = vmatprep.subr.bf16.mxu0 0
      %2324 = vmatpush1.bf16.msra.mxu0 0
      %2325 = vmatprep.subr.bf16.mxu0 0
      %2326 = vmatpush1.bf16.msra.mxu0 0
      %2327 = vmatprep.subr.bf16.mxu0 0
      %2328 = vmatpush1.bf16.msra.mxu0 0
      %2329 = vmatprep.subr.bf16.mxu0 0
      %2330 = vmatpush1.bf16.msra.mxu0 0
      %2331 = vmatprep.subr.bf16.mxu0 0
      %2332 = vmatpush1.bf16.msra.mxu0 0
      %2333 = vmatprep.subr.bf16.mxu0 0
      %2334 = vmatpush1.bf16.msra.mxu0 0
      %2335 = vmatprep.subr.bf16.mxu0 0
      %2336 = vmatpush1.bf16.msra.mxu0 %v2319
      %2337 = vmatprep.subr.bf16.mxu0 0
      %2338 = vmatpush2.bf16.msra.mxu0 0
      %2339 = vmatprep.subr.bf16.mxu0 0
      %2340 = vmatpush2.bf16.msra.mxu0 0
      %2341 = vmatprep.subr.bf16.mxu0 0
      %2342 = vmatpush2.bf16.msra.mxu0 0
      %2343 = vmatprep.subr.bf16.mxu0 0
      %2344 = vmatpush2.bf16.msra.mxu0 0
      %2345 = vmatprep.subr.bf16.mxu0 0
      %2346 = vmatpush2.bf16.msra.mxu0 0
      %2347 = vmatprep.subr.bf16.mxu0 0
      %2348 = vmatpush2.bf16.msra.mxu0 0
      %2349 = vmatprep.subr.bf16.mxu0 0
      %2350 = vmatpush2.bf16.msra.mxu0 0
      %2351 = vmatprep.subr.bf16.mxu0 0
      %2352 = vmatpush2.bf16.msra.mxu0 0
      %2353 = vmatprep.mubr.bf16.mxu0 0
      %2354 = vmatmul.mubr.bf16.gmra.mxu0 %v2271
      %v2355 = vpop.f32.mrf.mxu0
      %v2356 = vadd.f32 0.0, %v2355
      %v2357 = vpop.f32.mrf.mxu0
      %v2358 = vpop.f32.mrf.mxu0
      %v2359 = vadd.f32 0.0, %v2358
      %v2360 = vpop.f32.mrf.mxu0
      %2361 = vmatprep.mubr.bf16.mxu0 0
      %2362 = vmatmul.mubr.bf16.gmra.mxu0 %v2274
      %v2363 = vpop.f32.mrf.mxu0
      %v2364 = vadd.f32 0.0, %v2363
      %v2365 = vpop.f32.mrf.mxu0
      %v2366 = vpop.f32.mrf.mxu0
      %v2367 = vadd.f32 0.0, %v2366
      %v2368 = vpop.f32.mrf.mxu0
      %2369 = vmatprep.mubr.bf16.mxu0 0
      %2370 = vmatmul.mubr.bf16.gmra.mxu0 %v2277
      %v2371 = vpop.f32.mrf.mxu0
      %v2372 = vadd.f32 0.0, %v2371
      %v2373 = vpop.f32.mrf.mxu0
      %v2374 = vpop.f32.mrf.mxu0
      %v2375 = vadd.f32 0.0, %v2374
      %v2376 = vpop.f32.mrf.mxu0
      %2377 = vmatprep.mubr.bf16.mxu0 0
      %2378 = vmatmul.mubr.bf16.gmra.mxu0 %v2280
      %v2379 = vpop.f32.mrf.mxu0
      %v2380 = vadd.f32 0.0, %v2379
      %v2381 = vpop.f32.mrf.mxu0
      %v2382 = vpop.f32.mrf.mxu0
      %v2383 = vadd.f32 0.0, %v2382
      %v2384 = vpop.f32.mrf.mxu0
      %2385 = vmatprep.mubr.bf16.mxu0 0
      %2386 = vmatmul.mubr.bf16.gmra.mxu0 %v2283
      %v2387 = vpop.f32.mrf.mxu0
      %v2388 = vadd.f32 0.0, %v2387
      %v2389 = vpop.f32.mrf.mxu0
      %v2390 = vpop.f32.mrf.mxu0
      %v2391 = vadd.f32 0.0, %v2390
      %v2392 = vpop.f32.mrf.mxu0
      %2393 = vmatprep.mubr.bf16.mxu0 0
      %2394 = vmatmul.mubr.bf16.gmra.mxu0 %v2286
      %v2395 = vpop.f32.mrf.mxu0
      %v2396 = vadd.f32 0.0, %v2395
      %v2397 = vpop.f32.mrf.mxu0
      %v2398 = vpop.f32.mrf.mxu0
      %v2399 = vadd.f32 0.0, %v2398
      %v2400 = vpop.f32.mrf.mxu0
      %2401 = vmatprep.mubr.bf16.mxu0 0
      %2402 = vmatmul.mubr.bf16.gmra.mxu0 %v2289
      %v2403 = vpop.f32.mrf.mxu0
      %v2404 = vadd.f32 0.0, %v2403
      %v2405 = vpop.f32.mrf.mxu0
      %v2406 = vpop.f32.mrf.mxu0
      %v2407 = vadd.f32 0.0, %v2406
      %v2408 = vpop.f32.mrf.mxu0
      %2409 = vmatprep.mubr.bf16.mxu0 0
      %2410 = vmatmul.mubr.bf16.gmra.mxu0 %v2292
      %v2411 = vpop.f32.mrf.mxu0
      %v2412 = vadd.f32 0.0, %v2411
      %v2413 = vpop.f32.mrf.mxu0
      %v2414 = vpop.f32.mrf.mxu0
      %v2415 = vadd.f32 0.0, %v2414
      %v2416 = vpop.f32.mrf.mxu0
      %2417 = vmatprep.mubr.bf16.mxu0 0
      %2418 = vmatmul.mubr.bf16.gmra.mxu0 %v2295
      %v2419 = vpop.f32.mrf.mxu0
      %v2420 = vadd.f32 0.0, %v2419
      %v2421 = vpop.f32.mrf.mxu0
      %v2422 = vpop.f32.mrf.mxu0
      %v2423 = vadd.f32 0.0, %v2422
      %v2424 = vpop.f32.mrf.mxu0
      %2425 = vmatprep.mubr.bf16.mxu0 0
      %2426 = vmatmul.mubr.bf16.gmra.mxu0 %v2298
      %v2427 = vpop.f32.mrf.mxu0
      %v2428 = vadd.f32 0.0, %v2427
      %v2429 = vpop.f32.mrf.mxu0
      %v2430 = vpop.f32.mrf.mxu0
      %v2431 = vadd.f32 0.0, %v2430
      %v2432 = vpop.f32.mrf.mxu0
      %2433 = vmatprep.mubr.bf16.mxu0 0
      %2434 = vmatmul.mubr.bf16.gmra.mxu0 %v2301
      %v2435 = vpop.f32.mrf.mxu0
      %v2436 = vadd.f32 0.0, %v2435
      %v2437 = vpop.f32.mrf.mxu0
      %v2438 = vpop.f32.mrf.mxu0
      %v2439 = vadd.f32 0.0, %v2438
      %v2440 = vpop.f32.mrf.mxu0
      %2441 = vmatprep.mubr.bf16.mxu0 0
      %2442 = vmatmul.mubr.bf16.gmra.mxu0 %v2304
      %v2443 = vpop.f32.mrf.mxu0
      %v2444 = vadd.f32 0.0, %v2443
      %v2445 = vpop.f32.mrf.mxu0
      %v2446 = vpop.f32.mrf.mxu0
      %v2447 = vadd.f32 0.0, %v2446
      %v2448 = vpop.f32.mrf.mxu0
      %2449 = vmatprep.mubr.bf16.mxu0 0
      %2450 = vmatmul.mubr.bf16.gmra.mxu0 %v2307
      %v2451 = vpop.f32.mrf.mxu0
      %v2452 = vadd.f32 0.0, %v2451
      %v2453 = vpop.f32.mrf.mxu0
      %v2454 = vpop.f32.mrf.mxu0
      %v2455 = vadd.f32 0.0, %v2454
      %v2456 = vpop.f32.mrf.mxu0
      %2457 = vmatprep.mubr.bf16.mxu0 0
      %2458 = vmatmul.mubr.bf16.gmra.mxu0 %v2310
      %v2459 = vpop.f32.mrf.mxu0
      %v2460 = vadd.f32 0.0, %v2459
      %v2461 = vpop.f32.mrf.mxu0
      %v2462 = vpop.f32.mrf.mxu0
      %v2463 = vadd.f32 0.0, %v2462
      %v2464 = vpop.f32.mrf.mxu0
      %2465 = vmatprep.mubr.bf16.mxu0 0
      %2466 = vmatmul.mubr.bf16.gmra.mxu0 %v2313
      %v2467 = vpop.f32.mrf.mxu0
      %v2468 = vadd.f32 0.0, %v2467
      %v2469 = vpop.f32.mrf.mxu0
      %v2470 = vpop.f32.mrf.mxu0
      %v2471 = vadd.f32 0.0, %v2470
      %v2472 = vpop.f32.mrf.mxu0
      %2473 = vmatprep.mubr.bf16.mxu0 0
      %2474 = vmatmul.mubr.bf16.gmra.mxu0 %v2316
      %v2475 = vpop.f32.mrf.mxu0
      %v2476 = vadd.f32 0.0, %v2475
      %v2477 = vpop.f32.mrf.mxu0
      %v2478 = vpop.f32.mrf.mxu0
      %v2479 = vadd.f32 0.0, %v2478
      %v2480 = vpop.f32.mrf.mxu0
      %2481 = vdwg.mxu0
      %v2482 = vadd.f32 %v1932, %v2356
      %v2483 = vadd.f32 %v1935, %v2359
      %v2484 = vadd.f32 %v1940, %v2364
      %v2485 = vadd.f32 %v1943, %v2367
      %v2486 = vadd.f32 %v1948, %v2372
      %v2487 = vadd.f32 %v1951, %v2375
      %v2488 = vadd.f32 %v1956, %v2380
      %v2489 = vadd.f32 %v1959, %v2383
      %v2490 = vadd.f32 %v1964, %v2388
      %v2491 = vadd.f32 %v1967, %v2391
      %v2492 = vadd.f32 %v1972, %v2396
      %v2493 = vadd.f32 %v1975, %v2399
      %v2494 = vadd.f32 %v1980, %v2404
      %v2495 = vadd.f32 %v1983, %v2407
      %v2496 = vadd.f32 %v1988, %v2412
      %v2497 = vadd.f32 %v1991, %v2415
      %v2498 = vadd.f32 %v1996, %v2420
      %v2499 = vadd.f32 %v1999, %v2423
      %v2500 = vadd.f32 %v2004, %v2428
      %v2501 = vadd.f32 %v2007, %v2431
      %v2502 = vadd.f32 %v2012, %v2436
      %v2503 = vadd.f32 %v2015, %v2439
      %v2504 = vadd.f32 %v2020, %v2444
      %v2505 = vadd.f32 %v2023, %v2447
      %v2506 = vadd.f32 %v2028, %v2452
      %v2507 = vadd.f32 %v2031, %v2455
      %v2508 = vadd.f32 %v2036, %v2460
      %v2509 = vadd.f32 %v2039, %v2463
      %v2510 = vadd.f32 %v2044, %v2468
      %v2511 = vadd.f32 %v2047, %v2471
      %v2512 = vadd.f32 %v2052, %v2476
      %v2513 = vadd.f32 %v2055, %v2479
      %v2514 = vld [vmem:[%s890] sm:$0xf]
      %v2515 = vld [vmem:[%s890 + $0x4] sm:$0xf]
      %v2516 = vld [vmem:[%s890 + $0xc] sm:$0xf]
      %v2517 = vld [vmem:[%s890 + $0x10] sm:$0xf]
      %v2518 = vld [vmem:[%s890 + $0x18] sm:$0xf]
      %v2519 = vld [vmem:[%s890 + $0x1c] sm:$0xf]
      %v2520 = vld [vmem:[%s890 + $0x24] sm:$0xf]
      %v2521 = vld [vmem:[%s890 + $0x28] sm:$0xf]
      %v2522 = vld [vmem:[%s890 + $0x30] sm:$0xf]
      %v2523 = vld [vmem:[%s890 + $0x34] sm:$0xf]
      %v2524 = vld [vmem:[%s890 + $0x3c] sm:$0xf]
      %v2525 = vld [vmem:[%s890 + $0x40] sm:$0xf]
      %v2526 = vld [vmem:[%s890 + $0x48] sm:$0xf]
      %v2527 = vld [vmem:[%s890 + $0x4c] sm:$0xf]
      %v2528 = vld [vmem:[%s890 + $0x54] sm:$0xf]
      %v2529 = vld [vmem:[%s890 + $0x58] sm:$0xf]
      %v2530 = vld [vmem:[%s890 + $0x60] sm:$0xf]
      %v2531 = vld [vmem:[%s890 + $0x64] sm:$0xf]
      %v2532 = vld [vmem:[%s890 + $0x6c] sm:$0xf]
      %v2533 = vld [vmem:[%s890 + $0x70] sm:$0xf]
      %v2534 = vld [vmem:[%s890 + $0x78] sm:$0xf]
      %v2535 = vld [vmem:[%s890 + $0x7c] sm:$0xf]
      %v2536 = vld [vmem:[%s890 + $0x84] sm:$0xf]
      %v2537 = vld [vmem:[%s890 + $0x88] sm:$0xf]
      %v2538 = vld [vmem:[%s890 + $0x90] sm:$0xf]
      %v2539 = vld [vmem:[%s890 + $0x94] sm:$0xf]
      %v2540 = vld [vmem:[%s890 + $0x9c] sm:$0xf]
      %v2541 = vld [vmem:[%s890 + $0xa0] sm:$0xf]
      %v2542 = vld [vmem:[%s890 + $0xa8] sm:$0xf]
      %v2543 = vld [vmem:[%s890 + $0xac] sm:$0xf]
      %v2544 = vld [vmem:[%s890 + $0xb4] sm:$0xf]
      %v2545 = vld [vmem:[%s890 + $0xb8] sm:$0xf]
      %v2546 = vld [vmem:[%s3 + $0x4] sm:$0xc]
      %v2579 = vunpack.c.l.b16 %v2514
      %v2580 = vunpack.c.l.b16 %v2515
      %v2581 = vunpack.c.l.b16 %v2516
      %v2582 = vunpack.c.l.b16 %v2517
      %v2583 = vunpack.c.l.b16 %v2518
      %v2584 = vunpack.c.l.b16 %v2519
      %v2585 = vunpack.c.l.b16 %v2520
      %v2586 = vunpack.c.l.b16 %v2521
      %v2587 = vunpack.c.l.b16 %v2522
      %v2588 = vunpack.c.l.b16 %v2523
      %v2589 = vunpack.c.l.b16 %v2524
      %v2590 = vunpack.c.l.b16 %v2525
      %v2591 = vunpack.c.l.b16 %v2526
      %v2592 = vunpack.c.l.b16 %v2527
      %v2593 = vunpack.c.l.b16 %v2528
      %v2594 = vunpack.c.l.b16 %v2529
      %v2595 = vunpack.c.l.b16 %v2530
      %v2596 = vunpack.c.l.b16 %v2531
      %v2597 = vunpack.c.l.b16 %v2532
      %v2598 = vunpack.c.l.b16 %v2533
      %v2599 = vunpack.c.l.b16 %v2534
      %v2600 = vunpack.c.l.b16 %v2535
      %v2601 = vunpack.c.l.b16 %v2536
      %v2602 = vunpack.c.l.b16 %v2537
      %v2603 = vunpack.c.l.b16 %v2538
      %v2604 = vunpack.c.l.b16 %v2539
      %v2605 = vunpack.c.l.b16 %v2540
      %v2606 = vunpack.c.l.b16 %v2541
      %v2607 = vunpack.c.l.b16 %v2542
      %v2608 = vunpack.c.l.b16 %v2543
      %v2609 = vunpack.c.l.b16 %v2544
      %v2610 = vunpack.c.l.b16 %v2545
      %v2611 = vpack.c.b16 %v2580, %v2579
      %v2612 = vpack.c.b16 %v2582, %v2581
      %v2613 = vpack.c.b16 %v2584, %v2583
      %v2614 = vpack.c.b16 %v2586, %v2585
      %v2615 = vpack.c.b16 %v2588, %v2587
      %v2616 = vpack.c.b16 %v2590, %v2589
      %v2617 = vpack.c.b16 %v2592, %v2591
      %v2618 = vpack.c.b16 %v2594, %v2593
      %v2619 = vpack.c.b16 %v2596, %v2595
      %v2620 = vpack.c.b16 %v2598, %v2597
      %v2621 = vpack.c.b16 %v2600, %v2599
      %v2622 = vpack.c.b16 %v2602, %v2601
      %v2623 = vpack.c.b16 %v2604, %v2603
      %v2624 = vpack.c.b16 %v2606, %v2605
      %v2625 = vpack.c.b16 %v2608, %v2607
      %v2626 = vpack.c.b16 %v2610, %v2609
      %v2628 = vunpack.c.l.b16 %v2546
      %v2629 = vpack.c.b16 %v2628, %v2628
      %v2630 = vrot.slane %v2629, 2
      %v2632 = vsel %vm1552, %v2611, 0
      %v2635 = vsel %vm1552, %v2612, 0
      %v2638 = vsel %vm1552, %v2613, 0
      %v2641 = vsel %vm1552, %v2614, 0
      %v2644 = vsel %vm1552, %v2615, 0
      %v2647 = vsel %vm1552, %v2616, 0
      %v2650 = vsel %vm1552, %v2617, 0
      %v2653 = vsel %vm1552, %v2618, 0
      %v2656 = vsel %vm1552, %v2619, 0
      %v2659 = vsel %vm1552, %v2620, 0
      %v2662 = vsel %vm1552, %v2621, 0
      %v2665 = vsel %vm1552, %v2622, 0
      %v2668 = vsel %vm1552, %v2623, 0
      %v2671 = vsel %vm1552, %v2624, 0
      %v2674 = vsel %vm1552, %v2625, 0
      %v2677 = vsel %vm1552, %v2626, 0
      %v2680 = vsel %vm1601, %v2630, 0
      %2682 = vmatprep.subr.bf16.mxu0 0
      %2683 = vmatpush1.bf16.msra.mxu0 0
      %2684 = vmatprep.subr.bf16.mxu0 0
      %2685 = vmatpush1.bf16.msra.mxu0 0
      %2686 = vmatprep.subr.bf16.mxu0 0
      %2687 = vmatpush1.bf16.msra.mxu0 0
      %2688 = vmatprep.subr.bf16.mxu0 0
      %2689 = vmatpush1.bf16.msra.mxu0 0
      %2690 = vmatprep.subr.bf16.mxu0 0
      %2691 = vmatpush1.bf16.msra.mxu0 0
      %2692 = vmatprep.subr.bf16.mxu0 0
      %2693 = vmatpush1.bf16.msra.mxu0 0
      %2694 = vmatprep.subr.bf16.mxu0 0
      %2695 = vmatpush1.bf16.msra.mxu0 0
      %2696 = vmatprep.subr.bf16.mxu0 0
      %2697 = vmatpush1.bf16.msra.mxu0 %v2680
      %2698 = vmatprep.subr.bf16.mxu0 0
      %2699 = vmatpush2.bf16.msra.mxu0 0
      %2700 = vmatprep.subr.bf16.mxu0 0
      %2701 = vmatpush2.bf16.msra.mxu0 0
      %2702 = vmatprep.subr.bf16.mxu0 0
      %2703 = vmatpush2.bf16.msra.mxu0 0
      %2704 = vmatprep.subr.bf16.mxu0 0
      %2705 = vmatpush2.bf16.msra.mxu0 0
      %2706 = vmatprep.subr.bf16.mxu0 0
      %2707 = vmatpush2.bf16.msra.mxu0 0
      %2708 = vmatprep.subr.bf16.mxu0 0
      %2709 = vmatpush2.bf16.msra.mxu0 0
      %2710 = vmatprep.subr.bf16.mxu0 0
      %2711 = vmatpush2.bf16.msra.mxu0 0
      %2712 = vmatprep.subr.bf16.mxu0 0
      %2713 = vmatpush2.bf16.msra.mxu0 0
      %2714 = vmatprep.mubr.bf16.mxu0 0
      %2715 = vmatmul.mubr.bf16.gmra.mxu0 %v2632
      %v2716 = vpop.f32.mrf.mxu0
      %v2717 = vadd.f32 0.0, %v2716
      %v2718 = vpop.f32.mrf.mxu0
      %v2719 = vpop.f32.mrf.mxu0
      %v2720 = vadd.f32 0.0, %v2719
      %v2721 = vpop.f32.mrf.mxu0
      %2722 = vmatprep.mubr.bf16.mxu0 0
      %2723 = vmatmul.mubr.bf16.gmra.mxu0 %v2635
      %v2724 = vpop.f32.mrf.mxu0
      %v2725 = vadd.f32 0.0, %v2724
      %v2726 = vpop.f32.mrf.mxu0
      %v2727 = vpop.f32.mrf.mxu0
      %v2728 = vadd.f32 0.0, %v2727
      %v2729 = vpop.f32.mrf.mxu0
      %2730 = vmatprep.mubr.bf16.mxu0 0
      %2731 = vmatmul.mubr.bf16.gmra.mxu0 %v2638
      %v2732 = vpop.f32.mrf.mxu0
      %v2733 = vadd.f32 0.0, %v2732
      %v2734 = vpop.f32.mrf.mxu0
      %v2735 = vpop.f32.mrf.mxu0
      %v2736 = vadd.f32 0.0, %v2735
      %v2737 = vpop.f32.mrf.mxu0
      %2738 = vmatprep.mubr.bf16.mxu0 0
      %2739 = vmatmul.mubr.bf16.gmra.mxu0 %v2641
      %v2740 = vpop.f32.mrf.mxu0
      %v2741 = vadd.f32 0.0, %v2740
      %v2742 = vpop.f32.mrf.mxu0
      %v2743 = vpop.f32.mrf.mxu0
      %v2744 = vadd.f32 0.0, %v2743
      %v2745 = vpop.f32.mrf.mxu0
      %2746 = vmatprep.mubr.bf16.mxu0 0
      %2747 = vmatmul.mubr.bf16.gmra.mxu0 %v2644
      %v2748 = vpop.f32.mrf.mxu0
      %v2749 = vadd.f32 0.0, %v2748
      %v2750 = vpop.f32.mrf.mxu0
      %v2751 = vpop.f32.mrf.mxu0
      %v2752 = vadd.f32 0.0, %v2751
      %v2753 = vpop.f32.mrf.mxu0
      %2754 = vmatprep.mubr.bf16.mxu0 0
      %2755 = vmatmul.mubr.bf16.gmra.mxu0 %v2647
      %v2756 = vpop.f32.mrf.mxu0
      %v2757 = vadd.f32 0.0, %v2756
      %v2758 = vpop.f32.mrf.mxu0
      %v2759 = vpop.f32.mrf.mxu0
      %v2760 = vadd.f32 0.0, %v2759
      %v2761 = vpop.f32.mrf.mxu0
      %2762 = vmatprep.mubr.bf16.mxu0 0
      %2763 = vmatmul.mubr.bf16.gmra.mxu0 %v2650
      %v2764 = vpop.f32.mrf.mxu0
      %v2765 = vadd.f32 0.0, %v2764
      %v2766 = vpop.f32.mrf.mxu0
      %v2767 = vpop.f32.mrf.mxu0
      %v2768 = vadd.f32 0.0, %v2767
      %v2769 = vpop.f32.mrf.mxu0
      %2770 = vmatprep.mubr.bf16.mxu0 0
      %2771 = vmatmul.mubr.bf16.gmra.mxu0 %v2653
      %v2772 = vpop.f32.mrf.mxu0
      %v2773 = vadd.f32 0.0, %v2772
      %v2774 = vpop.f32.mrf.mxu0
      %v2775 = vpop.f32.mrf.mxu0
      %v2776 = vadd.f32 0.0, %v2775
      %v2777 = vpop.f32.mrf.mxu0
      %2778 = vmatprep.mubr.bf16.mxu0 0
      %2779 = vmatmul.mubr.bf16.gmra.mxu0 %v2656
      %v2780 = vpop.f32.mrf.mxu0
      %v2781 = vadd.f32 0.0, %v2780
      %v2782 = vpop.f32.mrf.mxu0
      %v2783 = vpop.f32.mrf.mxu0
      %v2784 = vadd.f32 0.0, %v2783
      %v2785 = vpop.f32.mrf.mxu0
      %2786 = vmatprep.mubr.bf16.mxu0 0
      %2787 = vmatmul.mubr.bf16.gmra.mxu0 %v2659
      %v2788 = vpop.f32.mrf.mxu0
      %v2789 = vadd.f32 0.0, %v2788
      %v2790 = vpop.f32.mrf.mxu0
      %v2791 = vpop.f32.mrf.mxu0
      %v2792 = vadd.f32 0.0, %v2791
      %v2793 = vpop.f32.mrf.mxu0
      %2794 = vmatprep.mubr.bf16.mxu0 0
      %2795 = vmatmul.mubr.bf16.gmra.mxu0 %v2662
      %v2796 = vpop.f32.mrf.mxu0
      %v2797 = vadd.f32 0.0, %v2796
      %v2798 = vpop.f32.mrf.mxu0
      %v2799 = vpop.f32.mrf.mxu0
      %v2800 = vadd.f32 0.0, %v2799
      %v2801 = vpop.f32.mrf.mxu0
      %2802 = vmatprep.mubr.bf16.mxu0 0
      %2803 = vmatmul.mubr.bf16.gmra.mxu0 %v2665
      %v2804 = vpop.f32.mrf.mxu0
      %v2805 = vadd.f32 0.0, %v2804
      %v2806 = vpop.f32.mrf.mxu0
      %v2807 = vpop.f32.mrf.mxu0
      %v2808 = vadd.f32 0.0, %v2807
      %v2809 = vpop.f32.mrf.mxu0
      %2810 = vmatprep.mubr.bf16.mxu0 0
      %2811 = vmatmul.mubr.bf16.gmra.mxu0 %v2668
      %v2812 = vpop.f32.mrf.mxu0
      %v2813 = vadd.f32 0.0, %v2812
      %v2814 = vpop.f32.mrf.mxu0
      %v2815 = vpop.f32.mrf.mxu0
      %v2816 = vadd.f32 0.0, %v2815
      %v2817 = vpop.f32.mrf.mxu0
      %2818 = vmatprep.mubr.bf16.mxu0 0
      %2819 = vmatmul.mubr.bf16.gmra.mxu0 %v2671
      %v2820 = vpop.f32.mrf.mxu0
      %v2821 = vadd.f32 0.0, %v2820
      %v2822 = vpop.f32.mrf.mxu0
      %v2823 = vpop.f32.mrf.mxu0
      %v2824 = vadd.f32 0.0, %v2823
      %v2825 = vpop.f32.mrf.mxu0
      %2826 = vmatprep.mubr.bf16.mxu0 0
      %2827 = vmatmul.mubr.bf16.gmra.mxu0 %v2674
      %v2828 = vpop.f32.mrf.mxu0
      %v2829 = vadd.f32 0.0, %v2828
      %v2830 = vpop.f32.mrf.mxu0
      %v2831 = vpop.f32.mrf.mxu0
      %v2832 = vadd.f32 0.0, %v2831
      %v2833 = vpop.f32.mrf.mxu0
      %2834 = vmatprep.mubr.bf16.mxu0 0
      %2835 = vmatmul.mubr.bf16.gmra.mxu0 %v2677
      %v2836 = vpop.f32.mrf.mxu0
      %v2837 = vadd.f32 0.0, %v2836
      %v2838 = vpop.f32.mrf.mxu0
      %v2839 = vpop.f32.mrf.mxu0
      %v2840 = vadd.f32 0.0, %v2839
      %v2841 = vpop.f32.mrf.mxu0
      %2842 = vdwg.mxu0
      %v2843 = vadd.f32 %v2482, %v2717
      %v2844 = vadd.f32 %v2483, %v2720
      %v2845 = vadd.f32 %v2484, %v2725
      %v2846 = vadd.f32 %v2485, %v2728
      %v2847 = vadd.f32 %v2486, %v2733
      %v2848 = vadd.f32 %v2487, %v2736
      %v2849 = vadd.f32 %v2488, %v2741
      %v2850 = vadd.f32 %v2489, %v2744
      %v2851 = vadd.f32 %v2490, %v2749
      %v2852 = vadd.f32 %v2491, %v2752
      %v2853 = vadd.f32 %v2492, %v2757
      %v2854 = vadd.f32 %v2493, %v2760
      %v2855 = vadd.f32 %v2494, %v2765
      %v2856 = vadd.f32 %v2495, %v2768
      %v2857 = vadd.f32 %v2496, %v2773
      %v2858 = vadd.f32 %v2497, %v2776
      %v2859 = vadd.f32 %v2498, %v2781
      %v2860 = vadd.f32 %v2499, %v2784
      %v2861 = vadd.f32 %v2500, %v2789
      %v2862 = vadd.f32 %v2501, %v2792
      %v2863 = vadd.f32 %v2502, %v2797
      %v2864 = vadd.f32 %v2503, %v2800
      %v2865 = vadd.f32 %v2504, %v2805
      %v2866 = vadd.f32 %v2505, %v2808
      %v2867 = vadd.f32 %v2506, %v2813
      %v2868 = vadd.f32 %v2507, %v2816
      %v2869 = vadd.f32 %v2508, %v2821
      %v2870 = vadd.f32 %v2509, %v2824
      %v2871 = vadd.f32 %v2510, %v2829
      %v2872 = vadd.f32 %v2511, %v2832
      %v2873 = vadd.f32 %v2512, %v2837
      %v2874 = vadd.f32 %v2513, %v2840
      %v2875 = vld [vmem:[%s890] sm:$0xf]
      %v2876 = vld [vmem:[%s890 + $0x4] sm:$0xf]
      %v2877 = vld [vmem:[%s890 + $0x8] sm:$0x1]
      %v2878 = vld [vmem:[%s890 + $0xc] sm:$0xf]
      %v2879 = vld [vmem:[%s890 + $0x10] sm:$0xf]
      %v2880 = vld [vmem:[%s890 + $0x14] sm:$0x1]
      %v2881 = vld [vmem:[%s890 + $0x18] sm:$0xf]
      %v2882 = vld [vmem:[%s890 + $0x1c] sm:$0xf]
      %v2883 = vld [vmem:[%s890 + $0x20] sm:$0x1]
      %v2884 = vld [vmem:[%s890 + $0x24] sm:$0xf]
      %v2885 = vld [vmem:[%s890 + $0x28] sm:$0xf]
      %v2886 = vld [vmem:[%s890 + $0x2c] sm:$0x1]
      %v2887 = vld [vmem:[%s890 + $0x30] sm:$0xf]
      %v2888 = vld [vmem:[%s890 + $0x34] sm:$0xf]
      %v2889 = vld [vmem:[%s890 + $0x38] sm:$0x1]
      %v2890 = vld [vmem:[%s890 + $0x3c] sm:$0xf]
      %v2891 = vld [vmem:[%s890 + $0x40] sm:$0xf]
      %v2892 = vld [vmem:[%s890 + $0x44] sm:$0x1]
      %v2893 = vld [vmem:[%s890 + $0x48] sm:$0xf]
      %v2894 = vld [vmem:[%s890 + $0x4c] sm:$0xf]
      %v2895 = vld [vmem:[%s890 + $0x50] sm:$0x1]
      %v2896 = vld [vmem:[%s890 + $0x54] sm:$0xf]
      %v2897 = vld [vmem:[%s890 + $0x58] sm:$0xf]
      %v2898 = vld [vmem:[%s890 + $0x5c] sm:$0x1]
      %v2899 = vld [vmem:[%s890 + $0x60] sm:$0xf]
      %v2900 = vld [vmem:[%s890 + $0x64] sm:$0xf]
      %v2901 = vld [vmem:[%s890 + $0x68] sm:$0x1]
      %v2902 = vld [vmem:[%s890 + $0x6c] sm:$0xf]
      %v2903 = vld [vmem:[%s890 + $0x70] sm:$0xf]
      %v2904 = vld [vmem:[%s890 + $0x74] sm:$0x1]
      %v2905 = vld [vmem:[%s890 + $0x78] sm:$0xf]
      %v2906 = vld [vmem:[%s890 + $0x7c] sm:$0xf]
      %v2907 = vld [vmem:[%s890 + $0x80] sm:$0x1]
      %v2908 = vld [vmem:[%s890 + $0x84] sm:$0xf]
      %v2909 = vld [vmem:[%s890 + $0x88] sm:$0xf]
      %v2910 = vld [vmem:[%s890 + $0x8c] sm:$0x1]
      %v2911 = vld [vmem:[%s890 + $0x90] sm:$0xf]
      %v2912 = vld [vmem:[%s890 + $0x94] sm:$0xf]
      %v2913 = vld [vmem:[%s890 + $0x98] sm:$0x1]
      %v2914 = vld [vmem:[%s890 + $0x9c] sm:$0xf]
      %v2915 = vld [vmem:[%s890 + $0xa0] sm:$0xf]
      %v2916 = vld [vmem:[%s890 + $0xa4] sm:$0x1]
      %v2917 = vld [vmem:[%s890 + $0xa8] sm:$0xf]
      %v2918 = vld [vmem:[%s890 + $0xac] sm:$0xf]
      %v2919 = vld [vmem:[%s890 + $0xb0] sm:$0x1]
      %v2920 = vld [vmem:[%s890 + $0xb4] sm:$0xf]
      %v2921 = vld [vmem:[%s890 + $0xb8] sm:$0xf]
      %v2922 = vld [vmem:[%s890 + $0xbc] sm:$0x1]
      %v2924 = vshrl.u32 %v2875, 16
      %v2926 = vrot.slane %v2924, 4
      %v2927 = vshll.u32 %v2875, 16
      %v2929 = vrot.slane %v2927, 5
      %v2930 = vor.u32 %v2926, %v2929
      %v2931 = vrot.slane %v2930, 4
      %v2933 = vshll.u32 %v2876, 16
      %v2935 = vrot.slane %v2933, 5
      %v2936 = vsel %vm1114, %v2931, %v2935
      %v2937 = vshrl.u32 %v2876, 16
      %v2939 = vrot.slane %v2937, 4
      %v2940 = vor.u32 %v2939, %v2935
      %v2941 = vrot.slane %v2940, 4
      %v2943 = vshll.u32 %v2877, 16
      %v2945 = vrot.slane %v2943, 5
      %v2946 = vsel %vm1114, %v2941, %v2945
      %v2948 = vshrl.u32 %v2878, 16
      %v2950 = vrot.slane %v2948, 4
      %v2951 = vshll.u32 %v2878, 16
      %v2953 = vrot.slane %v2951, 5
      %v2954 = vor.u32 %v2950, %v2953
      %v2955 = vrot.slane %v2954, 4
      %v2957 = vshll.u32 %v2879, 16
      %v2959 = vrot.slane %v2957, 5
      %v2960 = vsel %vm1114, %v2955, %v2959
      %v2961 = vshrl.u32 %v2879, 16
      %v2963 = vrot.slane %v2961, 4
      %v2964 = vor.u32 %v2963, %v2959
      %v2965 = vrot.slane %v2964, 4
      %v2967 = vshll.u32 %v2880, 16
      %v2969 = vrot.slane %v2967, 5
      %v2970 = vsel %vm1114, %v2965, %v2969
      %v2972 = vshrl.u32 %v2881, 16
      %v2974 = vrot.slane %v2972, 4
      %v2975 = vshll.u32 %v2881, 16
      %v2977 = vrot.slane %v2975, 5
      %v2978 = vor.u32 %v2974, %v2977
      %v2979 = vrot.slane %v2978, 4
      %v2981 = vshll.u32 %v2882, 16
      %v2983 = vrot.slane %v2981, 5
      %v2984 = vsel %vm1114, %v2979, %v2983
      %v2985 = vshrl.u32 %v2882, 16
      %v2987 = vrot.slane %v2985, 4
      %v2988 = vor.u32 %v2987, %v2983
      %v2989 = vrot.slane %v2988, 4
      %v2991 = vshll.u32 %v2883, 16
      %v2993 = vrot.slane %v2991, 5
      %v2994 = vsel %vm1114, %v2989, %v2993
      %v2996 = vshrl.u32 %v2884, 16
      %v2998 = vrot.slane %v2996, 4
      %v2999 = vshll.u32 %v2884, 16
      %v3001 = vrot.slane %v2999, 5
      %v3002 = vor.u32 %v2998, %v3001
      %v3003 = vrot.slane %v3002, 4
      %v3005 = vshll.u32 %v2885, 16
      %v3007 = vrot.slane %v3005, 5
      %v3008 = vsel %vm1114, %v3003, %v3007
      %v3009 = vshrl.u32 %v2885, 16
      %v3011 = vrot.slane %v3009, 4
      %v3012 = vor.u32 %v3011, %v3007
      %v3013 = vrot.slane %v3012, 4
      %v3015 = vshll.u32 %v2886, 16
      %v3017 = vrot.slane %v3015, 5
      %v3018 = vsel %vm1114, %v3013, %v3017
      %v3020 = vshrl.u32 %v2887, 16
      %v3022 = vrot.slane %v3020, 4
      %v3023 = vshll.u32 %v2887, 16
      %v3025 = vrot.slane %v3023, 5
      %v3026 = vor.u32 %v3022, %v3025
      %v3027 = vrot.slane %v3026, 4
      %v3029 = vshll.u32 %v2888, 16
      %v3031 = vrot.slane %v3029, 5
      %v3032 = vsel %vm1114, %v3027, %v3031
      %v3033 = vshrl.u32 %v2888, 16
      %v3035 = vrot.slane %v3033, 4
      %v3036 = vor.u32 %v3035, %v3031
      %v3037 = vrot.slane %v3036, 4
      %v3039 = vshll.u32 %v2889, 16
      %v3041 = vrot.slane %v3039, 5
      %v3042 = vsel %vm1114, %v3037, %v3041
      %v3044 = vshrl.u32 %v2890, 16
      %v3046 = vrot.slane %v3044, 4
      %v3047 = vshll.u32 %v2890, 16
      %v3049 = vrot.slane %v3047, 5
      %v3050 = vor.u32 %v3046, %v3049
      %v3051 = vrot.slane %v3050, 4
      %v3053 = vshll.u32 %v2891, 16
      %v3055 = vrot.slane %v3053, 5
      %v3056 = vsel %vm1114, %v3051, %v3055
      %v3057 = vshrl.u32 %v2891, 16
      %v3059 = vrot.slane %v3057, 4
      %v3060 = vor.u32 %v3059, %v3055
      %v3061 = vrot.slane %v3060, 4
      %v3063 = vshll.u32 %v2892, 16
      %v3065 = vrot.slane %v3063, 5
      %v3066 = vsel %vm1114, %v3061, %v3065
      %v3068 = vshrl.u32 %v2893, 16
      %v3070 = vrot.slane %v3068, 4
      %v3071 = vshll.u32 %v2893, 16
      %v3073 = vrot.slane %v3071, 5
      %v3074 = vor.u32 %v3070, %v3073
      %v3075 = vrot.slane %v3074, 4
      %v3077 = vshll.u32 %v2894, 16
      %v3079 = vrot.slane %v3077, 5
      %v3080 = vsel %vm1114, %v3075, %v3079
      %v3081 = vshrl.u32 %v2894, 16
      %v3083 = vrot.slane %v3081, 4
      %v3084 = vor.u32 %v3083, %v3079
      %v3085 = vrot.slane %v3084, 4
      %v3087 = vshll.u32 %v2895, 16
      %v3089 = vrot.slane %v3087, 5
      %v3090 = vsel %vm1114, %v3085, %v3089
      %v3092 = vshrl.u32 %v2896, 16
      %v3094 = vrot.slane %v3092, 4
      %v3095 = vshll.u32 %v2896, 16
      %v3097 = vrot.slane %v3095, 5
      %v3098 = vor.u32 %v3094, %v3097
      %v3099 = vrot.slane %v3098, 4
      %v3101 = vshll.u32 %v2897, 16
      %v3103 = vrot.slane %v3101, 5
      %v3104 = vsel %vm1114, %v3099, %v3103
      %v3105 = vshrl.u32 %v2897, 16
      %v3107 = vrot.slane %v3105, 4
      %v3108 = vor.u32 %v3107, %v3103
      %v3109 = vrot.slane %v3108, 4
      %v3111 = vshll.u32 %v2898, 16
      %v3113 = vrot.slane %v3111, 5
      %v3114 = vsel %vm1114, %v3109, %v3113
      %v3116 = vshrl.u32 %v2899, 16
      %v3118 = vrot.slane %v3116, 4
      %v3119 = vshll.u32 %v2899, 16
      %v3121 = vrot.slane %v3119, 5
      %v3122 = vor.u32 %v3118, %v3121
      %v3123 = vrot.slane %v3122, 4
      %v3125 = vshll.u32 %v2900, 16
      %v3127 = vrot.slane %v3125, 5
      %v3128 = vsel %vm1114, %v3123, %v3127
      %v3129 = vshrl.u32 %v2900, 16
      %v3131 = vrot.slane %v3129, 4
      %v3132 = vor.u32 %v3131, %v3127
      %v3133 = vrot.slane %v3132, 4
      %v3135 = vshll.u32 %v2901, 16
      %v3137 = vrot.slane %v3135, 5
      %v3138 = vsel %vm1114, %v3133, %v3137
      %v3140 = vshrl.u32 %v2902, 16
      %v3142 = vrot.slane %v3140, 4
      %v3143 = vshll.u32 %v2902, 16
      %v3145 = vrot.slane %v3143, 5
      %v3146 = vor.u32 %v3142, %v3145
      %v3147 = vrot.slane %v3146, 4
      %v3149 = vshll.u32 %v2903, 16
      %v3151 = vrot.slane %v3149, 5
      %v3152 = vsel %vm1114, %v3147, %v3151
      %v3153 = vshrl.u32 %v2903, 16
      %v3155 = vrot.slane %v3153, 4
      %v3156 = vor.u32 %v3155, %v3151
      %v3157 = vrot.slane %v3156, 4
      %v3159 = vshll.u32 %v2904, 16
      %v3161 = vrot.slane %v3159, 5
      %v3162 = vsel %vm1114, %v3157, %v3161
      %v3164 = vshrl.u32 %v2905, 16
      %v3166 = vrot.slane %v3164, 4
      %v3167 = vshll.u32 %v2905, 16
      %v3169 = vrot.slane %v3167, 5
      %v3170 = vor.u32 %v3166, %v3169
      %v3171 = vrot.slane %v3170, 4
      %v3173 = vshll.u32 %v2906, 16
      %v3175 = vrot.slane %v3173, 5
      %v3176 = vsel %vm1114, %v3171, %v3175
      %v3177 = vshrl.u32 %v2906, 16
      %v3179 = vrot.slane %v3177, 4
      %v3180 = vor.u32 %v3179, %v3175
      %v3181 = vrot.slane %v3180, 4
      %v3183 = vshll.u32 %v2907, 16
      %v3185 = vrot.slane %v3183, 5
      %v3186 = vsel %vm1114, %v3181, %v3185
      %v3188 = vshrl.u32 %v2908, 16
      %v3190 = vrot.slane %v3188, 4
      %v3191 = vshll.u32 %v2908, 16
      %v3193 = vrot.slane %v3191, 5
      %v3194 = vor.u32 %v3190, %v3193
      %v3195 = vrot.slane %v3194, 4
      %v3197 = vshll.u32 %v2909, 16
      %v3199 = vrot.slane %v3197, 5
      %v3200 = vsel %vm1114, %v3195, %v3199
      %v3201 = vshrl.u32 %v2909, 16
      %v3203 = vrot.slane %v3201, 4
      %v3204 = vor.u32 %v3203, %v3199
      %v3205 = vrot.slane %v3204, 4
      %v3207 = vshll.u32 %v2910, 16
      %v3209 = vrot.slane %v3207, 5
      %v3210 = vsel %vm1114, %v3205, %v3209
      %v3212 = vshrl.u32 %v2911, 16
      %v3214 = vrot.slane %v3212, 4
      %v3215 = vshll.u32 %v2911, 16
      %v3217 = vrot.slane %v3215, 5
      %v3218 = vor.u32 %v3214, %v3217
      %v3219 = vrot.slane %v3218, 4
      %v3221 = vshll.u32 %v2912, 16
      %v3223 = vrot.slane %v3221, 5
      %v3224 = vsel %vm1114, %v3219, %v3223
      %v3225 = vshrl.u32 %v2912, 16
      %v3227 = vrot.slane %v3225, 4
      %v3228 = vor.u32 %v3227, %v3223
      %v3229 = vrot.slane %v3228, 4
      %v3231 = vshll.u32 %v2913, 16
      %v3233 = vrot.slane %v3231, 5
      %v3234 = vsel %vm1114, %v3229, %v3233
      %v3236 = vshrl.u32 %v2914, 16
      %v3238 = vrot.slane %v3236, 4
      %v3239 = vshll.u32 %v2914, 16
      %v3241 = vrot.slane %v3239, 5
      %v3242 = vor.u32 %v3238, %v3241
      %v3243 = vrot.slane %v3242, 4
      %v3245 = vshll.u32 %v2915, 16
      %v3247 = vrot.slane %v3245, 5
      %v3248 = vsel %vm1114, %v3243, %v3247
      %v3249 = vshrl.u32 %v2915, 16
      %v3251 = vrot.slane %v3249, 4
      %v3252 = vor.u32 %v3251, %v3247
      %v3253 = vrot.slane %v3252, 4
      %v3255 = vshll.u32 %v2916, 16
      %v3257 = vrot.slane %v3255, 5
      %v3258 = vsel %vm1114, %v3253, %v3257
      %v3260 = vshrl.u32 %v2917, 16
      %v3262 = vrot.slane %v3260, 4
      %v3263 = vshll.u32 %v2917, 16
      %v3265 = vrot.slane %v3263, 5
      %v3266 = vor.u32 %v3262, %v3265
      %v3267 = vrot.slane %v3266, 4
      %v3269 = vshll.u32 %v2918, 16
      %v3271 = vrot.slane %v3269, 5
      %v3272 = vsel %vm1114, %v3267, %v3271
      %v3273 = vshrl.u32 %v2918, 16
      %v3275 = vrot.slane %v3273, 4
      %v3276 = vor.u32 %v3275, %v3271
      %v3277 = vrot.slane %v3276, 4
      %v3279 = vshll.u32 %v2919, 16
      %v3281 = vrot.slane %v3279, 5
      %v3282 = vsel %vm1114, %v3277, %v3281
      %v3284 = vshrl.u32 %v2920, 16
      %v3286 = vrot.slane %v3284, 4
      %v3287 = vshll.u32 %v2920, 16
      %v3289 = vrot.slane %v3287, 5
      %v3290 = vor.u32 %v3286, %v3289
      %v3291 = vrot.slane %v3290, 4
      %v3293 = vshll.u32 %v2921, 16
      %v3295 = vrot.slane %v3293, 5
      %v3296 = vsel %vm1114, %v3291, %v3295
      %v3297 = vshrl.u32 %v2921, 16
      %v3299 = vrot.slane %v3297, 4
      %v3300 = vor.u32 %v3299, %v3295
      %v3301 = vrot.slane %v3300, 4
      %v3303 = vshll.u32 %v2922, 16
      %v3305 = vrot.slane %v3303, 5
      %v3306 = vsel %vm1114, %v3301, %v3305
      %v3307 = vld [vmem:[%s3 + $0x8] sm:$0x3]
      %v3308 = vunpack.c.l.b16 %v2936
      %v3309 = vunpack.c.l.b16 %v2946
      %v3310 = vunpack.c.l.b16 %v2960
      %v3311 = vunpack.c.l.b16 %v2970
      %v3312 = vunpack.c.l.b16 %v2984
      %v3313 = vunpack.c.l.b16 %v2994
      %v3314 = vunpack.c.l.b16 %v3008
      %v3315 = vunpack.c.l.b16 %v3018
      %v3316 = vunpack.c.l.b16 %v3032
      %v3317 = vunpack.c.l.b16 %v3042
      %v3318 = vunpack.c.l.b16 %v3056
      %v3319 = vunpack.c.l.b16 %v3066
      %v3320 = vunpack.c.l.b16 %v3080
      %v3321 = vunpack.c.l.b16 %v3090
      %v3322 = vunpack.c.l.b16 %v3104
      %v3323 = vunpack.c.l.b16 %v3114
      %v3324 = vunpack.c.l.b16 %v3128
      %v3325 = vunpack.c.l.b16 %v3138
      %v3326 = vunpack.c.l.b16 %v3152
      %v3327 = vunpack.c.l.b16 %v3162
      %v3328 = vunpack.c.l.b16 %v3176
      %v3329 = vunpack.c.l.b16 %v3186
      %v3330 = vunpack.c.l.b16 %v3200
      %v3331 = vunpack.c.l.b16 %v3210
      %v3332 = vunpack.c.l.b16 %v3224
      %v3333 = vunpack.c.l.b16 %v3234
      %v3334 = vunpack.c.l.b16 %v3248
      %v3335 = vunpack.c.l.b16 %v3258
      %v3336 = vunpack.c.l.b16 %v3272
      %v3337 = vunpack.c.l.b16 %v3282
      %v3338 = vunpack.c.l.b16 %v3296
      %v3339 = vunpack.c.l.b16 %v3306
      %v3340 = vpack.c.b16 %v3309, %v3308
      %v3341 = vpack.c.b16 %v3311, %v3310
      %v3342 = vpack.c.b16 %v3313, %v3312
      %v3343 = vpack.c.b16 %v3315, %v3314
      %v3344 = vpack.c.b16 %v3317, %v3316
      %v3345 = vpack.c.b16 %v3319, %v3318
      %v3346 = vpack.c.b16 %v3321, %v3320
      %v3347 = vpack.c.b16 %v3323, %v3322
      %v3348 = vpack.c.b16 %v3325, %v3324
      %v3349 = vpack.c.b16 %v3327, %v3326
      %v3350 = vpack.c.b16 %v3329, %v3328
      %v3351 = vpack.c.b16 %v3331, %v3330
      %v3352 = vpack.c.b16 %v3333, %v3332
      %v3353 = vpack.c.b16 %v3335, %v3334
      %v3354 = vpack.c.b16 %v3337, %v3336
      %v3355 = vpack.c.b16 %v3339, %v3338
      %v3357 = vsel %vm1552, %v3340, 0
      %v3360 = vsel %vm1552, %v3341, 0
      %v3363 = vsel %vm1552, %v3342, 0
      %v3366 = vsel %vm1552, %v3343, 0
      %v3369 = vsel %vm1552, %v3344, 0
      %v3372 = vsel %vm1552, %v3345, 0
      %v3375 = vsel %vm1552, %v3346, 0
      %v3378 = vsel %vm1552, %v3347, 0
      %v3381 = vsel %vm1552, %v3348, 0
      %v3384 = vsel %vm1552, %v3349, 0
      %v3387 = vsel %vm1552, %v3350, 0
      %v3390 = vsel %vm1552, %v3351, 0
      %v3393 = vsel %vm1552, %v3352, 0
      %v3396 = vsel %vm1552, %v3353, 0
      %v3399 = vsel %vm1552, %v3354, 0
      %v3402 = vsel %vm1552, %v3355, 0
      %v3405 = vsel %vm1601, %v3307, 0
      %3407 = vmatprep.subr.bf16.mxu0 0
      %3408 = vmatpush1.bf16.msra.mxu0 0
      %3409 = vmatprep.subr.bf16.mxu0 0
      %3410 = vmatpush1.bf16.msra.mxu0 0
      %3411 = vmatprep.subr.bf16.mxu0 0
      %3412 = vmatpush1.bf16.msra.mxu0 0
      %3413 = vmatprep.subr.bf16.mxu0 0
      %3414 = vmatpush1.bf16.msra.mxu0 0
      %3415 = vmatprep.subr.bf16.mxu0 0
      %3416 = vmatpush1.bf16.msra.mxu0 0
      %3417 = vmatprep.subr.bf16.mxu0 0
      %3418 = vmatpush1.bf16.msra.mxu0 0
      %3419 = vmatprep.subr.bf16.mxu0 0
      %3420 = vmatpush1.bf16.msra.mxu0 0
      %3421 = vmatprep.subr.bf16.mxu0 0
      %3422 = vmatpush1.bf16.msra.mxu0 %v3405
      %3423 = vmatprep.subr.bf16.mxu0 0
      %3424 = vmatpush2.bf16.msra.mxu0 0
      %3425 = vmatprep.subr.bf16.mxu0 0
      %3426 = vmatpush2.bf16.msra.mxu0 0
      %3427 = vmatprep.subr.bf16.mxu0 0
      %3428 = vmatpush2.bf16.msra.mxu0 0
      %3429 = vmatprep.subr.bf16.mxu0 0
      %3430 = vmatpush2.bf16.msra.mxu0 0
      %3431 = vmatprep.subr.bf16.mxu0 0
      %3432 = vmatpush2.bf16.msra.mxu0 0
      %3433 = vmatprep.subr.bf16.mxu0 0
      %3434 = vmatpush2.bf16.msra.mxu0 0
      %3435 = vmatprep.subr.bf16.mxu0 0
      %3436 = vmatpush2.bf16.msra.mxu0 0
      %3437 = vmatprep.subr.bf16.mxu0 0
      %3438 = vmatpush2.bf16.msra.mxu0 0
      %3439 = vmatprep.mubr.bf16.mxu0 0
      %3440 = vmatmul.mubr.bf16.gmra.mxu0 %v3357
      %v3441 = vpop.f32.mrf.mxu0
      %v3442 = vadd.f32 0.0, %v3441
      %v3443 = vpop.f32.mrf.mxu0
      %v3444 = vpop.f32.mrf.mxu0
      %v3445 = vadd.f32 0.0, %v3444
      %v3446 = vpop.f32.mrf.mxu0
      %3447 = vmatprep.mubr.bf16.mxu0 0
      %3448 = vmatmul.mubr.bf16.gmra.mxu0 %v3360
      %v3449 = vpop.f32.mrf.mxu0
      %v3450 = vadd.f32 0.0, %v3449
      %v3451 = vpop.f32.mrf.mxu0
      %v3452 = vpop.f32.mrf.mxu0
      %v3453 = vadd.f32 0.0, %v3452
      %v3454 = vpop.f32.mrf.mxu0
      %3455 = vmatprep.mubr.bf16.mxu0 0
      %3456 = vmatmul.mubr.bf16.gmra.mxu0 %v3363
      %v3457 = vpop.f32.mrf.mxu0
      %v3458 = vadd.f32 0.0, %v3457
      %v3459 = vpop.f32.mrf.mxu0
      %v3460 = vpop.f32.mrf.mxu0
      %v3461 = vadd.f32 0.0, %v3460
      %v3462 = vpop.f32.mrf.mxu0
      %3463 = vmatprep.mubr.bf16.mxu0 0
      %3464 = vmatmul.mubr.bf16.gmra.mxu0 %v3366
      %v3465 = vpop.f32.mrf.mxu0
      %v3466 = vadd.f32 0.0, %v3465
      %v3467 = vpop.f32.mrf.mxu0
      %v3468 = vpop.f32.mrf.mxu0
      %v3469 = vadd.f32 0.0, %v3468
      %v3470 = vpop.f32.mrf.mxu0
      %3471 = vmatprep.mubr.bf16.mxu0 0
      %3472 = vmatmul.mubr.bf16.gmra.mxu0 %v3369
      %v3473 = vpop.f32.mrf.mxu0
      %v3474 = vadd.f32 0.0, %v3473
      %v3475 = vpop.f32.mrf.mxu0
      %v3476 = vpop.f32.mrf.mxu0
      %v3477 = vadd.f32 0.0, %v3476
      %v3478 = vpop.f32.mrf.mxu0
      %3479 = vmatprep.mubr.bf16.mxu0 0
      %3480 = vmatmul.mubr.bf16.gmra.mxu0 %v3372
      %v3481 = vpop.f32.mrf.mxu0
      %v3482 = vadd.f32 0.0, %v3481
      %v3483 = vpop.f32.mrf.mxu0
      %v3484 = vpop.f32.mrf.mxu0
      %v3485 = vadd.f32 0.0, %v3484
      %v3486 = vpop.f32.mrf.mxu0
      %3487 = vmatprep.mubr.bf16.mxu0 0
      %3488 = vmatmul.mubr.bf16.gmra.mxu0 %v3375
      %v3489 = vpop.f32.mrf.mxu0
      %v3490 = vadd.f32 0.0, %v3489
      %v3491 = vpop.f32.mrf.mxu0
      %v3492 = vpop.f32.mrf.mxu0
      %v3493 = vadd.f32 0.0, %v3492
      %v3494 = vpop.f32.mrf.mxu0
      %3495 = vmatprep.mubr.bf16.mxu0 0
      %3496 = vmatmul.mubr.bf16.gmra.mxu0 %v3378
      %v3497 = vpop.f32.mrf.mxu0
      %v3498 = vadd.f32 0.0, %v3497
      %v3499 = vpop.f32.mrf.mxu0
      %v3500 = vpop.f32.mrf.mxu0
      %v3501 = vadd.f32 0.0, %v3500
      %v3502 = vpop.f32.mrf.mxu0
      %3503 = vmatprep.mubr.bf16.mxu0 0
      %3504 = vmatmul.mubr.bf16.gmra.mxu0 %v3381
      %v3505 = vpop.f32.mrf.mxu0
      %v3506 = vadd.f32 0.0, %v3505
      %v3507 = vpop.f32.mrf.mxu0
      %v3508 = vpop.f32.mrf.mxu0
      %v3509 = vadd.f32 0.0, %v3508
      %v3510 = vpop.f32.mrf.mxu0
      %3511 = vmatprep.mubr.bf16.mxu0 0
      %3512 = vmatmul.mubr.bf16.gmra.mxu0 %v3384
      %v3513 = vpop.f32.mrf.mxu0
      %v3514 = vadd.f32 0.0, %v3513
      %v3515 = vpop.f32.mrf.mxu0
      %v3516 = vpop.f32.mrf.mxu0
      %v3517 = vadd.f32 0.0, %v3516
      %v3518 = vpop.f32.mrf.mxu0
      %3519 = vmatprep.mubr.bf16.mxu0 0
      %3520 = vmatmul.mubr.bf16.gmra.mxu0 %v3387
      %v3521 = vpop.f32.mrf.mxu0
      %v3522 = vadd.f32 0.0, %v3521
      %v3523 = vpop.f32.mrf.mxu0
      %v3524 = vpop.f32.mrf.mxu0
      %v3525 = vadd.f32 0.0, %v3524
      %v3526 = vpop.f32.mrf.mxu0
      %3527 = vmatprep.mubr.bf16.mxu0 0
      %3528 = vmatmul.mubr.bf16.gmra.mxu0 %v3390
      %v3529 = vpop.f32.mrf.mxu0
      %v3530 = vadd.f32 0.0, %v3529
      %v3531 = vpop.f32.mrf.mxu0
      %v3532 = vpop.f32.mrf.mxu0
      %v3533 = vadd.f32 0.0, %v3532
      %v3534 = vpop.f32.mrf.mxu0
      %3535 = vmatprep.mubr.bf16.mxu0 0
      %3536 = vmatmul.mubr.bf16.gmra.mxu0 %v3393
      %v3537 = vpop.f32.mrf.mxu0
      %v3538 = vadd.f32 0.0, %v3537
      %v3539 = vpop.f32.mrf.mxu0
      %v3540 = vpop.f32.mrf.mxu0
      %v3541 = vadd.f32 0.0, %v3540
      %v3542 = vpop.f32.mrf.mxu0
      %3543 = vmatprep.mubr.bf16.mxu0 0
      %3544 = vmatmul.mubr.bf16.gmra.mxu0 %v3396
      %v3545 = vpop.f32.mrf.mxu0
      %v3546 = vadd.f32 0.0, %v3545
      %v3547 = vpop.f32.mrf.mxu0
      %v3548 = vpop.f32.mrf.mxu0
      %v3549 = vadd.f32 0.0, %v3548
      %v3550 = vpop.f32.mrf.mxu0
      %3551 = vmatprep.mubr.bf16.mxu0 0
      %3552 = vmatmul.mubr.bf16.gmra.mxu0 %v3399
      %v3553 = vpop.f32.mrf.mxu0
      %v3554 = vadd.f32 0.0, %v3553
      %v3555 = vpop.f32.mrf.mxu0
      %v3556 = vpop.f32.mrf.mxu0
      %v3557 = vadd.f32 0.0, %v3556
      %v3558 = vpop.f32.mrf.mxu0
      %3559 = vmatprep.mubr.bf16.mxu0 0
      %3560 = vmatmul.mubr.bf16.gmra.mxu0 %v3402
      %v3561 = vpop.f32.mrf.mxu0
      %v3562 = vadd.f32 0.0, %v3561
      %v3563 = vpop.f32.mrf.mxu0
      %v3564 = vpop.f32.mrf.mxu0
      %v3565 = vadd.f32 0.0, %v3564
      %v3566 = vpop.f32.mrf.mxu0
      %3567 = vdwg.mxu0
      %v3568 = vadd.f32 %v2843, %v3442
      %v3569 = vadd.f32 %v2844, %v3445
      %v3570 = vadd.f32 %v2845, %v3450
      %v3571 = vadd.f32 %v2846, %v3453
      %v3572 = vadd.f32 %v2847, %v3458
      %v3573 = vadd.f32 %v2848, %v3461
      %v3574 = vadd.f32 %v2849, %v3466
      %v3575 = vadd.f32 %v2850, %v3469
      %v3576 = vadd.f32 %v2851, %v3474
      %v3577 = vadd.f32 %v2852, %v3477
      %v3578 = vadd.f32 %v2853, %v3482
      %v3579 = vadd.f32 %v2854, %v3485
      %v3580 = vadd.f32 %v2855, %v3490
      %v3581 = vadd.f32 %v2856, %v3493
      %v3582 = vadd.f32 %v2857, %v3498
      %v3583 = vadd.f32 %v2858, %v3501
      %v3584 = vadd.f32 %v2859, %v3506
      %v3585 = vadd.f32 %v2860, %v3509
      %v3586 = vadd.f32 %v2861, %v3514
      %v3587 = vadd.f32 %v2862, %v3517
      %v3588 = vadd.f32 %v2863, %v3522
      %v3589 = vadd.f32 %v2864, %v3525
      %v3590 = vadd.f32 %v2865, %v3530
      %v3591 = vadd.f32 %v2866, %v3533
      %v3592 = vadd.f32 %v2867, %v3538
      %v3593 = vadd.f32 %v2868, %v3541
      %v3594 = vadd.f32 %v2869, %v3546
      %v3595 = vadd.f32 %v2870, %v3549
      %v3596 = vadd.f32 %v2871, %v3554
      %v3597 = vadd.f32 %v2872, %v3557
      %v3598 = vadd.f32 %v2873, %v3562
      %v3599 = vadd.f32 %v2874, %v3565
      %v3600 = vld [vmem:[%s890] sm:$0xe]
      %v3601 = vld [vmem:[%s890 + $0xc] sm:$0xe]
      %v3602 = vld [vmem:[%s890 + $0x18] sm:$0xe]
      %v3603 = vld [vmem:[%s890 + $0x24] sm:$0xe]
      %v3604 = vld [vmem:[%s890 + $0x30] sm:$0xe]
      %v3605 = vld [vmem:[%s890 + $0x3c] sm:$0xe]
      %v3606 = vld [vmem:[%s890 + $0x48] sm:$0xe]
      %v3607 = vld [vmem:[%s890 + $0x54] sm:$0xe]
      %v3608 = vld [vmem:[%s890 + $0x60] sm:$0xe]
      %v3609 = vld [vmem:[%s890 + $0x6c] sm:$0xe]
      %v3610 = vld [vmem:[%s890 + $0x78] sm:$0xe]
      %v3611 = vld [vmem:[%s890 + $0x84] sm:$0xe]
      %v3612 = vld [vmem:[%s890 + $0x90] sm:$0xe]
      %v3613 = vld [vmem:[%s890 + $0x9c] sm:$0xe]
      %v3614 = vld [vmem:[%s890 + $0xa8] sm:$0xe]
      %v3615 = vld [vmem:[%s890 + $0xb4] sm:$0xe]
      %v3664 = vrot.slane %v3600, 5
      %v3665 = vrot.slane %v3664, 4
      %v3666 = vrot.slane %v2876, 5
      %v3667 = vsel %vm2108, %v3665, %v3666
      %v3668 = vrot.slane %v3666, 4
      %v3669 = vrot.slane %v2877, 5
      %v3670 = vsel %vm2108, %v3668, %v3669
      %v3671 = vrot.slane %v3601, 5
      %v3672 = vrot.slane %v3671, 4
      %v3673 = vrot.slane %v2879, 5
      %v3674 = vsel %vm2108, %v3672, %v3673
      %v3675 = vrot.slane %v3673, 4
      %v3676 = vrot.slane %v2880, 5
      %v3677 = vsel %vm2108, %v3675, %v3676
      %v3678 = vrot.slane %v3602, 5
      %v3679 = vrot.slane %v3678, 4
      %v3680 = vrot.slane %v2882, 5
      %v3681 = vsel %vm2108, %v3679, %v3680
      %v3682 = vrot.slane %v3680, 4
      %v3683 = vrot.slane %v2883, 5
      %v3684 = vsel %vm2108, %v3682, %v3683
      %v3685 = vrot.slane %v3603, 5
      %v3686 = vrot.slane %v3685, 4
      %v3687 = vrot.slane %v2885, 5
      %v3688 = vsel %vm2108, %v3686, %v3687
      %v3689 = vrot.slane %v3687, 4
      %v3690 = vrot.slane %v2886, 5
      %v3691 = vsel %vm2108, %v3689, %v3690
      %v3692 = vrot.slane %v3604, 5
      %v3693 = vrot.slane %v3692, 4
      %v3694 = vrot.slane %v2888, 5
      %v3695 = vsel %vm2108, %v3693, %v3694
      %v3696 = vrot.slane %v3694, 4
      %v3697 = vrot.slane %v2889, 5
      %v3698 = vsel %vm2108, %v3696, %v3697
      %v3699 = vrot.slane %v3605, 5
      %v3700 = vrot.slane %v3699, 4
      %v3701 = vrot.slane %v2891, 5
      %v3702 = vsel %vm2108, %v3700, %v3701
      %v3703 = vrot.slane %v3701, 4
      %v3704 = vrot.slane %v2892, 5
      %v3705 = vsel %vm2108, %v3703, %v3704
      %v3706 = vrot.slane %v3606, 5
      %v3707 = vrot.slane %v3706, 4
      %v3708 = vrot.slane %v2894, 5
      %v3709 = vsel %vm2108, %v3707, %v3708
      %v3710 = vrot.slane %v3708, 4
      %v3711 = vrot.slane %v2895, 5
      %v3712 = vsel %vm2108, %v3710, %v3711
      %v3713 = vrot.slane %v3607, 5
      %v3714 = vrot.slane %v3713, 4
      %v3715 = vrot.slane %v2897, 5
      %v3716 = vsel %vm2108, %v3714, %v3715
      %v3717 = vrot.slane %v3715, 4
      %v3718 = vrot.slane %v2898, 5
      %v3719 = vsel %vm2108, %v3717, %v3718
      %v3720 = vrot.slane %v3608, 5
      %v3721 = vrot.slane %v3720, 4
      %v3722 = vrot.slane %v2900, 5
      %v3723 = vsel %vm2108, %v3721, %v3722
      %v3724 = vrot.slane %v3722, 4
      %v3725 = vrot.slane %v2901, 5
      %v3726 = vsel %vm2108, %v3724, %v3725
      %v3727 = vrot.slane %v3609, 5
      %v3728 = vrot.slane %v3727, 4
      %v3729 = vrot.slane %v2903, 5
      %v3730 = vsel %vm2108, %v3728, %v3729
      %v3731 = vrot.slane %v3729, 4
      %v3732 = vrot.slane %v2904, 5
      %v3733 = vsel %vm2108, %v3731, %v3732
      %v3734 = vrot.slane %v3610, 5
      %v3735 = vrot.slane %v3734, 4
      %v3736 = vrot.slane %v2906, 5
      %v3737 = vsel %vm2108, %v3735, %v3736
      %v3738 = vrot.slane %v3736, 4
      %v3739 = vrot.slane %v2907, 5
      %v3740 = vsel %vm2108, %v3738, %v3739
      %v3741 = vrot.slane %v3611, 5
      %v3742 = vrot.slane %v3741, 4
      %v3743 = vrot.slane %v2909, 5
      %v3744 = vsel %vm2108, %v3742, %v3743
      %v3745 = vrot.slane %v3743, 4
      %v3746 = vrot.slane %v2910, 5
      %v3747 = vsel %vm2108, %v3745, %v3746
      %v3748 = vrot.slane %v3612, 5
      %v3749 = vrot.slane %v3748, 4
      %v3750 = vrot.slane %v2912, 5
      %v3751 = vsel %vm2108, %v3749, %v3750
      %v3752 = vrot.slane %v3750, 4
      %v3753 = vrot.slane %v2913, 5
      %v3754 = vsel %vm2108, %v3752, %v3753
      %v3755 = vrot.slane %v3613, 5
      %v3756 = vrot.slane %v3755, 4
      %v3757 = vrot.slane %v2915, 5
      %v3758 = vsel %vm2108, %v3756, %v3757
      %v3759 = vrot.slane %v3757, 4
      %v3760 = vrot.slane %v2916, 5
      %v3761 = vsel %vm2108, %v3759, %v3760
      %v3762 = vrot.slane %v3614, 5
      %v3763 = vrot.slane %v3762, 4
      %v3764 = vrot.slane %v2918, 5
      %v3765 = vsel %vm2108, %v3763, %v3764
      %v3766 = vrot.slane %v3764, 4
      %v3767 = vrot.slane %v2919, 5
      %v3768 = vsel %vm2108, %v3766, %v3767
      %v3769 = vrot.slane %v3615, 5
      %v3770 = vrot.slane %v3769, 4
      %v3771 = vrot.slane %v2921, 5
      %v3772 = vsel %vm2108, %v3770, %v3771
      %v3773 = vrot.slane %v3771, 4
      %v3774 = vrot.slane %v2922, 5
      %v3775 = vsel %vm2108, %v3773, %v3774
      %v3776 = vld [vmem:[%s3 + $0x8] sm:$0xc]
      %v3777 = vunpack.c.l.b16 %v3667
      %v3778 = vunpack.c.l.b16 %v3670
      %v3779 = vunpack.c.l.b16 %v3674
      %v3780 = vunpack.c.l.b16 %v3677
      %v3781 = vunpack.c.l.b16 %v3681
      %v3782 = vunpack.c.l.b16 %v3684
      %v3783 = vunpack.c.l.b16 %v3688
      %v3784 = vunpack.c.l.b16 %v3691
      %v3785 = vunpack.c.l.b16 %v3695
      %v3786 = vunpack.c.l.b16 %v3698
      %v3787 = vunpack.c.l.b16 %v3702
      %v3788 = vunpack.c.l.b16 %v3705
      %v3789 = vunpack.c.l.b16 %v3709
      %v3790 = vunpack.c.l.b16 %v3712
      %v3791 = vunpack.c.l.b16 %v3716
      %v3792 = vunpack.c.l.b16 %v3719
      %v3793 = vunpack.c.l.b16 %v3723
      %v3794 = vunpack.c.l.b16 %v3726
      %v3795 = vunpack.c.l.b16 %v3730
      %v3796 = vunpack.c.l.b16 %v3733
      %v3797 = vunpack.c.l.b16 %v3737
      %v3798 = vunpack.c.l.b16 %v3740
      %v3799 = vunpack.c.l.b16 %v3744
      %v3800 = vunpack.c.l.b16 %v3747
      %v3801 = vunpack.c.l.b16 %v3751
      %v3802 = vunpack.c.l.b16 %v3754
      %v3803 = vunpack.c.l.b16 %v3758
      %v3804 = vunpack.c.l.b16 %v3761
      %v3805 = vunpack.c.l.b16 %v3765
      %v3806 = vunpack.c.l.b16 %v3768
      %v3807 = vunpack.c.l.b16 %v3772
      %v3808 = vunpack.c.l.b16 %v3775
      %v3809 = vpack.c.b16 %v3778, %v3777
      %v3810 = vpack.c.b16 %v3780, %v3779
      %v3811 = vpack.c.b16 %v3782, %v3781
      %v3812 = vpack.c.b16 %v3784, %v3783
      %v3813 = vpack.c.b16 %v3786, %v3785
      %v3814 = vpack.c.b16 %v3788, %v3787
      %v3815 = vpack.c.b16 %v3790, %v3789
      %v3816 = vpack.c.b16 %v3792, %v3791
      %v3817 = vpack.c.b16 %v3794, %v3793
      %v3818 = vpack.c.b16 %v3796, %v3795
      %v3819 = vpack.c.b16 %v3798, %v3797
      %v3820 = vpack.c.b16 %v3800, %v3799
      %v3821 = vpack.c.b16 %v3802, %v3801
      %v3822 = vpack.c.b16 %v3804, %v3803
      %v3823 = vpack.c.b16 %v3806, %v3805
      %v3824 = vpack.c.b16 %v3808, %v3807
      %v3826 = vunpack.c.l.b16 %v3776
      %v3827 = vpack.c.b16 %v3826, %v3826
      %v3828 = vrot.slane %v3827, 2
      %v3830 = vsel %vm1552, %v3809, 0
      %v3833 = vsel %vm1552, %v3810, 0
      %v3836 = vsel %vm1552, %v3811, 0
      %v3839 = vsel %vm1552, %v3812, 0
      %v3842 = vsel %vm1552, %v3813, 0
      %v3845 = vsel %vm1552, %v3814, 0
      %v3848 = vsel %vm1552, %v3815, 0
      %v3851 = vsel %vm1552, %v3816, 0
      %v3854 = vsel %vm1552, %v3817, 0
      %v3857 = vsel %vm1552, %v3818, 0
      %v3860 = vsel %vm1552, %v3819, 0
      %v3863 = vsel %vm1552, %v3820, 0
      %v3866 = vsel %vm1552, %v3821, 0
      %v3869 = vsel %vm1552, %v3822, 0
      %v3872 = vsel %vm1552, %v3823, 0
      %v3875 = vsel %vm1552, %v3824, 0
      %v3878 = vsel %vm1601, %v3828, 0
      %3880 = vmatprep.subr.bf16.mxu0 0
      %3881 = vmatpush1.bf16.msra.mxu0 0
      %3882 = vmatprep.subr.bf16.mxu0 0
      %3883 = vmatpush1.bf16.msra.mxu0 0
      %3884 = vmatprep.subr.bf16.mxu0 0
      %3885 = vmatpush1.bf16.msra.mxu0 0
      %3886 = vmatprep.subr.bf16.mxu0 0
      %3887 = vmatpush1.bf16.msra.mxu0 0
      %3888 = vmatprep.subr.bf16.mxu0 0
      %3889 = vmatpush1.bf16.msra.mxu0 0
      %3890 = vmatprep.subr.bf16.mxu0 0
      %3891 = vmatpush1.bf16.msra.mxu0 0
      %3892 = vmatprep.subr.bf16.mxu0 0
      %3893 = vmatpush1.bf16.msra.mxu0 0
      %3894 = vmatprep.subr.bf16.mxu0 0
      %3895 = vmatpush1.bf16.msra.mxu0 %v3878
      %3896 = vmatprep.subr.bf16.mxu0 0
      %3897 = vmatpush2.bf16.msra.mxu0 0
      %3898 = vmatprep.subr.bf16.mxu0 0
      %3899 = vmatpush2.bf16.msra.mxu0 0
      %3900 = vmatprep.subr.bf16.mxu0 0
      %3901 = vmatpush2.bf16.msra.mxu0 0
      %3902 = vmatprep.subr.bf16.mxu0 0
      %3903 = vmatpush2.bf16.msra.mxu0 0
      %3904 = vmatprep.subr.bf16.mxu0 0
      %3905 = vmatpush2.bf16.msra.mxu0 0
      %3906 = vmatprep.subr.bf16.mxu0 0
      %3907 = vmatpush2.bf16.msra.mxu0 0
      %3908 = vmatprep.subr.bf16.mxu0 0
      %3909 = vmatpush2.bf16.msra.mxu0 0
      %3910 = vmatprep.subr.bf16.mxu0 0
      %3911 = vmatpush2.bf16.msra.mxu0 0
      %3912 = vmatprep.mubr.bf16.mxu0 0
      %3913 = vmatmul.mubr.bf16.gmra.mxu0 %v3830
      %v3914 = vpop.f32.mrf.mxu0
      %v3915 = vadd.f32 0.0, %v3914
      %v3916 = vpop.f32.mrf.mxu0
      %v3917 = vpop.f32.mrf.mxu0
      %v3918 = vadd.f32 0.0, %v3917
      %v3919 = vpop.f32.mrf.mxu0
      %3920 = vmatprep.mubr.bf16.mxu0 0
      %3921 = vmatmul.mubr.bf16.gmra.mxu0 %v3833
      %v3922 = vpop.f32.mrf.mxu0
      %v3923 = vadd.f32 0.0, %v3922
      %v3924 = vpop.f32.mrf.mxu0
      %v3925 = vpop.f32.mrf.mxu0
      %v3926 = vadd.f32 0.0, %v3925
      %v3927 = vpop.f32.mrf.mxu0
      %3928 = vmatprep.mubr.bf16.mxu0 0
      %3929 = vmatmul.mubr.bf16.gmra.mxu0 %v3836
      %v3930 = vpop.f32.mrf.mxu0
      %v3931 = vadd.f32 0.0, %v3930
      %v3932 = vpop.f32.mrf.mxu0
      %v3933 = vpop.f32.mrf.mxu0
      %v3934 = vadd.f32 0.0, %v3933
      %v3935 = vpop.f32.mrf.mxu0
      %3936 = vmatprep.mubr.bf16.mxu0 0
      %3937 = vmatmul.mubr.bf16.gmra.mxu0 %v3839
      %v3938 = vpop.f32.mrf.mxu0
      %v3939 = vadd.f32 0.0, %v3938
      %v3940 = vpop.f32.mrf.mxu0
      %v3941 = vpop.f32.mrf.mxu0
      %v3942 = vadd.f32 0.0, %v3941
      %v3943 = vpop.f32.mrf.mxu0
      %3944 = vmatprep.mubr.bf16.mxu0 0
      %3945 = vmatmul.mubr.bf16.gmra.mxu0 %v3842
      %v3946 = vpop.f32.mrf.mxu0
      %v3947 = vadd.f32 0.0, %v3946
      %v3948 = vpop.f32.mrf.mxu0
      %v3949 = vpop.f32.mrf.mxu0
      %v3950 = vadd.f32 0.0, %v3949
      %v3951 = vpop.f32.mrf.mxu0
      %3952 = vmatprep.mubr.bf16.mxu0 0
      %3953 = vmatmul.mubr.bf16.gmra.mxu0 %v3845
      %v3954 = vpop.f32.mrf.mxu0
      %v3955 = vadd.f32 0.0, %v3954
      %v3956 = vpop.f32.mrf.mxu0
      %v3957 = vpop.f32.mrf.mxu0
      %v3958 = vadd.f32 0.0, %v3957
      %v3959 = vpop.f32.mrf.mxu0
      %3960 = vmatprep.mubr.bf16.mxu0 0
      %3961 = vmatmul.mubr.bf16.gmra.mxu0 %v3848
      %v3962 = vpop.f32.mrf.mxu0
      %v3963 = vadd.f32 0.0, %v3962
      %v3964 = vpop.f32.mrf.mxu0
      %v3965 = vpop.f32.mrf.mxu0
      %v3966 = vadd.f32 0.0, %v3965
      %v3967 = vpop.f32.mrf.mxu0
      %3968 = vmatprep.mubr.bf16.mxu0 0
      %3969 = vmatmul.mubr.bf16.gmra.mxu0 %v3851
      %v3970 = vpop.f32.mrf.mxu0
      %v3971 = vadd.f32 0.0, %v3970
      %v3972 = vpop.f32.mrf.mxu0
      %v3973 = vpop.f32.mrf.mxu0
      %v3974 = vadd.f32 0.0, %v3973
      %v3975 = vpop.f32.mrf.mxu0
      %3976 = vmatprep.mubr.bf16.mxu0 0
      %3977 = vmatmul.mubr.bf16.gmra.mxu0 %v3854
      %v3978 = vpop.f32.mrf.mxu0
      %v3979 = vadd.f32 0.0, %v3978
      %v3980 = vpop.f32.mrf.mxu0
      %v3981 = vpop.f32.mrf.mxu0
      %v3982 = vadd.f32 0.0, %v3981
      %v3983 = vpop.f32.mrf.mxu0
      %3984 = vmatprep.mubr.bf16.mxu0 0
      %3985 = vmatmul.mubr.bf16.gmra.mxu0 %v3857
      %v3986 = vpop.f32.mrf.mxu0
      %v3987 = vadd.f32 0.0, %v3986
      %v3988 = vpop.f32.mrf.mxu0
      %v3989 = vpop.f32.mrf.mxu0
      %v3990 = vadd.f32 0.0, %v3989
      %v3991 = vpop.f32.mrf.mxu0
      %3992 = vmatprep.mubr.bf16.mxu0 0
      %3993 = vmatmul.mubr.bf16.gmra.mxu0 %v3860
      %v3994 = vpop.f32.mrf.mxu0
      %v3995 = vadd.f32 0.0, %v3994
      %v3996 = vpop.f32.mrf.mxu0
      %v3997 = vpop.f32.mrf.mxu0
      %v3998 = vadd.f32 0.0, %v3997
      %v3999 = vpop.f32.mrf.mxu0
      %4000 = vmatprep.mubr.bf16.mxu0 0
      %4001 = vmatmul.mubr.bf16.gmra.mxu0 %v3863
      %v4002 = vpop.f32.mrf.mxu0
      %v4003 = vadd.f32 0.0, %v4002
      %v4004 = vpop.f32.mrf.mxu0
      %v4005 = vpop.f32.mrf.mxu0
      %v4006 = vadd.f32 0.0, %v4005
      %v4007 = vpop.f32.mrf.mxu0
      %4008 = vmatprep.mubr.bf16.mxu0 0
      %4009 = vmatmul.mubr.bf16.gmra.mxu0 %v3866
      %v4010 = vpop.f32.mrf.mxu0
      %v4011 = vadd.f32 0.0, %v4010
      %v4012 = vpop.f32.mrf.mxu0
      %v4013 = vpop.f32.mrf.mxu0
      %v4014 = vadd.f32 0.0, %v4013
      %v4015 = vpop.f32.mrf.mxu0
      %4016 = vmatprep.mubr.bf16.mxu0 0
      %4017 = vmatmul.mubr.bf16.gmra.mxu0 %v3869
      %v4018 = vpop.f32.mrf.mxu0
      %v4019 = vadd.f32 0.0, %v4018
      %v4020 = vpop.f32.mrf.mxu0
      %v4021 = vpop.f32.mrf.mxu0
      %v4022 = vadd.f32 0.0, %v4021
      %v4023 = vpop.f32.mrf.mxu0
      %4024 = vmatprep.mubr.bf16.mxu0 0
      %4025 = vmatmul.mubr.bf16.gmra.mxu0 %v3872
      %v4026 = vpop.f32.mrf.mxu0
      %v4027 = vadd.f32 0.0, %v4026
      %v4028 = vpop.f32.mrf.mxu0
      %v4029 = vpop.f32.mrf.mxu0
      %v4030 = vadd.f32 0.0, %v4029
      %v4031 = vpop.f32.mrf.mxu0
      %4032 = vmatprep.mubr.bf16.mxu0 0
      %4033 = vmatmul.mubr.bf16.gmra.mxu0 %v3875
      %v4034 = vpop.f32.mrf.mxu0
      %v4035 = vadd.f32 0.0, %v4034
      %v4036 = vpop.f32.mrf.mxu0
      %v4037 = vpop.f32.mrf.mxu0
      %v4038 = vadd.f32 0.0, %v4037
      %v4039 = vpop.f32.mrf.mxu0
      %4040 = vdwg.mxu0
      %v4041 = vadd.f32 %v3568, %v3915
      %v4042 = vadd.f32 %v3569, %v3918
      %v4043 = vadd.f32 %v3570, %v3923
      %v4044 = vadd.f32 %v3571, %v3926
      %v4045 = vadd.f32 %v3572, %v3931
      %v4046 = vadd.f32 %v3573, %v3934
      %v4047 = vadd.f32 %v3574, %v3939
      %v4048 = vadd.f32 %v3575, %v3942
      %v4049 = vadd.f32 %v3576, %v3947
      %v4050 = vadd.f32 %v3577, %v3950
      %v4051 = vadd.f32 %v3578, %v3955
      %v4052 = vadd.f32 %v3579, %v3958
      %v4053 = vadd.f32 %v3580, %v3963
      %v4054 = vadd.f32 %v3581, %v3966
      %v4055 = vadd.f32 %v3582, %v3971
      %v4056 = vadd.f32 %v3583, %v3974
      %v4057 = vadd.f32 %v3584, %v3979
      %v4058 = vadd.f32 %v3585, %v3982
      %v4059 = vadd.f32 %v3586, %v3987
      %v4060 = vadd.f32 %v3587, %v3990
      %v4061 = vadd.f32 %v3588, %v3995
      %v4062 = vadd.f32 %v3589, %v3998
      %v4063 = vadd.f32 %v3590, %v4003
      %v4064 = vadd.f32 %v3591, %v4006
      %v4065 = vadd.f32 %v3592, %v4011
      %v4066 = vadd.f32 %v3593, %v4014
      %v4067 = vadd.f32 %v3594, %v4019
      %v4068 = vadd.f32 %v3595, %v4022
      %v4069 = vadd.f32 %v3596, %v4027
      %v4070 = vadd.f32 %v3597, %v4030
      %v4071 = vadd.f32 %v3598, %v4035
      %v4072 = vadd.f32 %v3599, %v4038
      %s4073 = scalar_lea.vmem [#allocation2], 24
      %v4074 = vld [vmem:[%s4073] sm:$0xf]
      %v4075 = vld [vmem:[%s4073 + $0x4] sm:$0xf]
      %v4076 = vld [vmem:[%s4073 + $0xc] sm:$0xf]
      %v4077 = vld [vmem:[%s4073 + $0x10] sm:$0xf]
      %v4078 = vld [vmem:[%s4073 + $0x18] sm:$0xf]
      %v4079 = vld [vmem:[%s4073 + $0x1c] sm:$0xf]
      %v4080 = vld [vmem:[%s4073 + $0x24] sm:$0xf]
      %v4081 = vld [vmem:[%s4073 + $0x28] sm:$0xf]
      %v4082 = vld [vmem:[%s4073 + $0x30] sm:$0xf]
      %v4083 = vld [vmem:[%s4073 + $0x34] sm:$0xf]
      %v4084 = vld [vmem:[%s4073 + $0x3c] sm:$0xf]
      %v4085 = vld [vmem:[%s4073 + $0x40] sm:$0xf]
      %v4086 = vld [vmem:[%s4073 + $0x48] sm:$0xf]
      %v4087 = vld [vmem:[%s4073 + $0x4c] sm:$0xf]
      %v4088 = vld [vmem:[%s4073 + $0x54] sm:$0xf]
      %v4089 = vld [vmem:[%s4073 + $0x58] sm:$0xf]
      %v4090 = vld [vmem:[%s4073 + $0x60] sm:$0xf]
      %v4091 = vld [vmem:[%s4073 + $0x64] sm:$0xf]
      %v4092 = vld [vmem:[%s4073 + $0x6c] sm:$0xf]
      %v4093 = vld [vmem:[%s4073 + $0x70] sm:$0xf]
      %v4094 = vld [vmem:[%s4073 + $0x78] sm:$0xf]
      %v4095 = vld [vmem:[%s4073 + $0x7c] sm:$0xf]
      %v4096 = vld [vmem:[%s4073 + $0x84] sm:$0xf]
      %v4097 = vld [vmem:[%s4073 + $0x88] sm:$0xf]
      %v4098 = vld [vmem:[%s4073 + $0x90] sm:$0xf]
      %v4099 = vld [vmem:[%s4073 + $0x94] sm:$0xf]
      %v4100 = vld [vmem:[%s4073 + $0x9c] sm:$0xf]
      %v4101 = vld [vmem:[%s4073 + $0xa0] sm:$0xf]
      %v4102 = vld [vmem:[%s4073 + $0xa8] sm:$0xf]
      %v4103 = vld [vmem:[%s4073 + $0xac] sm:$0xf]
      %v4104 = vld [vmem:[%s4073 + $0xb4] sm:$0xf]
      %v4105 = vld [vmem:[%s4073 + $0xb8] sm:$0xf]
      %v4106 = vld [vmem:[%s3 + $0xc] sm:$0x3]
      %v4139 = vunpack.c.l.b16 %v4074
      %v4140 = vunpack.c.l.b16 %v4075
      %v4141 = vunpack.c.l.b16 %v4076
      %v4142 = vunpack.c.l.b16 %v4077
      %v4143 = vunpack.c.l.b16 %v4078
      %v4144 = vunpack.c.l.b16 %v4079
      %v4145 = vunpack.c.l.b16 %v4080
      %v4146 = vunpack.c.l.b16 %v4081
      %v4147 = vunpack.c.l.b16 %v4082
      %v4148 = vunpack.c.l.b16 %v4083
      %v4149 = vunpack.c.l.b16 %v4084
      %v4150 = vunpack.c.l.b16 %v4085
      %v4151 = vunpack.c.l.b16 %v4086
      %v4152 = vunpack.c.l.b16 %v4087
      %v4153 = vunpack.c.l.b16 %v4088
      %v4154 = vunpack.c.l.b16 %v4089
      %v4155 = vunpack.c.l.b16 %v4090
      %v4156 = vunpack.c.l.b16 %v4091
      %v4157 = vunpack.c.l.b16 %v4092
      %v4158 = vunpack.c.l.b16 %v4093
      %v4159 = vunpack.c.l.b16 %v4094
      %v4160 = vunpack.c.l.b16 %v4095
      %v4161 = vunpack.c.l.b16 %v4096
      %v4162 = vunpack.c.l.b16 %v4097
      %v4163 = vunpack.c.l.b16 %v4098
      %v4164 = vunpack.c.l.b16 %v4099
      %v4165 = vunpack.c.l.b16 %v4100
      %v4166 = vunpack.c.l.b16 %v4101
      %v4167 = vunpack.c.l.b16 %v4102
      %v4168 = vunpack.c.l.b16 %v4103
      %v4169 = vunpack.c.l.b16 %v4104
      %v4170 = vunpack.c.l.b16 %v4105
      %v4171 = vpack.c.b16 %v4140, %v4139
      %v4172 = vpack.c.b16 %v4142, %v4141
      %v4173 = vpack.c.b16 %v4144, %v4143
      %v4174 = vpack.c.b16 %v4146, %v4145
      %v4175 = vpack.c.b16 %v4148, %v4147
      %v4176 = vpack.c.b16 %v4150, %v4149
      %v4177 = vpack.c.b16 %v4152, %v4151
      %v4178 = vpack.c.b16 %v4154, %v4153
      %v4179 = vpack.c.b16 %v4156, %v4155
      %v4180 = vpack.c.b16 %v4158, %v4157
      %v4181 = vpack.c.b16 %v4160, %v4159
      %v4182 = vpack.c.b16 %v4162, %v4161
      %v4183 = vpack.c.b16 %v4164, %v4163
      %v4184 = vpack.c.b16 %v4166, %v4165
      %v4185 = vpack.c.b16 %v4168, %v4167
      %v4186 = vpack.c.b16 %v4170, %v4169
      %v4188 = vsel %vm1552, %v4171, 0
      %v4191 = vsel %vm1552, %v4172, 0
      %v4194 = vsel %vm1552, %v4173, 0
      %v4197 = vsel %vm1552, %v4174, 0
      %v4200 = vsel %vm1552, %v4175, 0
      %v4203 = vsel %vm1552, %v4176, 0
      %v4206 = vsel %vm1552, %v4177, 0
      %v4209 = vsel %vm1552, %v4178, 0
      %v4212 = vsel %vm1552, %v4179, 0
      %v4215 = vsel %vm1552, %v4180, 0
      %v4218 = vsel %vm1552, %v4181, 0
      %v4221 = vsel %vm1552, %v4182, 0
      %v4224 = vsel %vm1552, %v4183, 0
      %v4227 = vsel %vm1552, %v4184, 0
      %v4230 = vsel %vm1552, %v4185, 0
      %v4233 = vsel %vm1552, %v4186, 0
      %v4236 = vsel %vm1601, %v4106, 0
      %4238 = vmatprep.subr.bf16.mxu0 0
      %4239 = vmatpush1.bf16.msra.mxu0 0
      %4240 = vmatprep.subr.bf16.mxu0 0
      %4241 = vmatpush1.bf16.msra.mxu0 0
      %4242 = vmatprep.subr.bf16.mxu0 0
      %4243 = vmatpush1.bf16.msra.mxu0 0
      %4244 = vmatprep.subr.bf16.mxu0 0
      %4245 = vmatpush1.bf16.msra.mxu0 0
      %4246 = vmatprep.subr.bf16.mxu0 0
      %4247 = vmatpush1.bf16.msra.mxu0 0
      %4248 = vmatprep.subr.bf16.mxu0 0
      %4249 = vmatpush1.bf16.msra.mxu0 0
      %4250 = vmatprep.subr.bf16.mxu0 0
      %4251 = vmatpush1.bf16.msra.mxu0 0
      %4252 = vmatprep.subr.bf16.mxu0 0
      %4253 = vmatpush1.bf16.msra.mxu0 %v4236
      %4254 = vmatprep.subr.bf16.mxu0 0
      %4255 = vmatpush2.bf16.msra.mxu0 0
      %4256 = vmatprep.subr.bf16.mxu0 0
      %4257 = vmatpush2.bf16.msra.mxu0 0
      %4258 = vmatprep.subr.bf16.mxu0 0
      %4259 = vmatpush2.bf16.msra.mxu0 0
      %4260 = vmatprep.subr.bf16.mxu0 0
      %4261 = vmatpush2.bf16.msra.mxu0 0
      %4262 = vmatprep.subr.bf16.mxu0 0
      %4263 = vmatpush2.bf16.msra.mxu0 0
      %4264 = vmatprep.subr.bf16.mxu0 0
      %4265 = vmatpush2.bf16.msra.mxu0 0
      %4266 = vmatprep.subr.bf16.mxu0 0
      %4267 = vmatpush2.bf16.msra.mxu0 0
      %4268 = vmatprep.subr.bf16.mxu0 0
      %4269 = vmatpush2.bf16.msra.mxu0 0
      %4270 = vmatprep.mubr.bf16.mxu0 0
      %4271 = vmatmul.mubr.bf16.gmra.mxu0 %v4188
      %v4272 = vpop.f32.mrf.mxu0
      %v4273 = vadd.f32 0.0, %v4272
      %v4274 = vpop.f32.mrf.mxu0
      %v4275 = vpop.f32.mrf.mxu0
      %v4276 = vadd.f32 0.0, %v4275
      %v4277 = vpop.f32.mrf.mxu0
      %4278 = vmatprep.mubr.bf16.mxu0 0
      %4279 = vmatmul.mubr.bf16.gmra.mxu0 %v4191
      %v4280 = vpop.f32.mrf.mxu0
      %v4281 = vadd.f32 0.0, %v4280
      %v4282 = vpop.f32.mrf.mxu0
      %v4283 = vpop.f32.mrf.mxu0
      %v4284 = vadd.f32 0.0, %v4283
      %v4285 = vpop.f32.mrf.mxu0
      %4286 = vmatprep.mubr.bf16.mxu0 0
      %4287 = vmatmul.mubr.bf16.gmra.mxu0 %v4194
      %v4288 = vpop.f32.mrf.mxu0
      %v4289 = vadd.f32 0.0, %v4288
      %v4290 = vpop.f32.mrf.mxu0
      %v4291 = vpop.f32.mrf.mxu0
      %v4292 = vadd.f32 0.0, %v4291
      %v4293 = vpop.f32.mrf.mxu0
      %4294 = vmatprep.mubr.bf16.mxu0 0
      %4295 = vmatmul.mubr.bf16.gmra.mxu0 %v4197
      %v4296 = vpop.f32.mrf.mxu0
      %v4297 = vadd.f32 0.0, %v4296
      %v4298 = vpop.f32.mrf.mxu0
      %v4299 = vpop.f32.mrf.mxu0
      %v4300 = vadd.f32 0.0, %v4299
      %v4301 = vpop.f32.mrf.mxu0
      %4302 = vmatprep.mubr.bf16.mxu0 0
      %4303 = vmatmul.mubr.bf16.gmra.mxu0 %v4200
      %v4304 = vpop.f32.mrf.mxu0
      %v4305 = vadd.f32 0.0, %v4304
      %v4306 = vpop.f32.mrf.mxu0
      %v4307 = vpop.f32.mrf.mxu0
      %v4308 = vadd.f32 0.0, %v4307
      %v4309 = vpop.f32.mrf.mxu0
      %4310 = vmatprep.mubr.bf16.mxu0 0
      %4311 = vmatmul.mubr.bf16.gmra.mxu0 %v4203
      %v4312 = vpop.f32.mrf.mxu0
      %v4313 = vadd.f32 0.0, %v4312
      %v4314 = vpop.f32.mrf.mxu0
      %v4315 = vpop.f32.mrf.mxu0
      %v4316 = vadd.f32 0.0, %v4315
      %v4317 = vpop.f32.mrf.mxu0
      %4318 = vmatprep.mubr.bf16.mxu0 0
      %4319 = vmatmul.mubr.bf16.gmra.mxu0 %v4206
      %v4320 = vpop.f32.mrf.mxu0
      %v4321 = vadd.f32 0.0, %v4320
      %v4322 = vpop.f32.mrf.mxu0
      %v4323 = vpop.f32.mrf.mxu0
      %v4324 = vadd.f32 0.0, %v4323
      %v4325 = vpop.f32.mrf.mxu0
      %4326 = vmatprep.mubr.bf16.mxu0 0
      %4327 = vmatmul.mubr.bf16.gmra.mxu0 %v4209
      %v4328 = vpop.f32.mrf.mxu0
      %v4329 = vadd.f32 0.0, %v4328
      %v4330 = vpop.f32.mrf.mxu0
      %v4331 = vpop.f32.mrf.mxu0
      %v4332 = vadd.f32 0.0, %v4331
      %v4333 = vpop.f32.mrf.mxu0
      %4334 = vmatprep.mubr.bf16.mxu0 0
      %4335 = vmatmul.mubr.bf16.gmra.mxu0 %v4212
      %v4336 = vpop.f32.mrf.mxu0
      %v4337 = vadd.f32 0.0, %v4336
      %v4338 = vpop.f32.mrf.mxu0
      %v4339 = vpop.f32.mrf.mxu0
      %v4340 = vadd.f32 0.0, %v4339
      %v4341 = vpop.f32.mrf.mxu0
      %4342 = vmatprep.mubr.bf16.mxu0 0
      %4343 = vmatmul.mubr.bf16.gmra.mxu0 %v4215
      %v4344 = vpop.f32.mrf.mxu0
      %v4345 = vadd.f32 0.0, %v4344
      %v4346 = vpop.f32.mrf.mxu0
      %v4347 = vpop.f32.mrf.mxu0
      %v4348 = vadd.f32 0.0, %v4347
      %v4349 = vpop.f32.mrf.mxu0
      %4350 = vmatprep.mubr.bf16.mxu0 0
      %4351 = vmatmul.mubr.bf16.gmra.mxu0 %v4218
      %v4352 = vpop.f32.mrf.mxu0
      %v4353 = vadd.f32 0.0, %v4352
      %v4354 = vpop.f32.mrf.mxu0
      %v4355 = vpop.f32.mrf.mxu0
      %v4356 = vadd.f32 0.0, %v4355
      %v4357 = vpop.f32.mrf.mxu0
      %4358 = vmatprep.mubr.bf16.mxu0 0
      %4359 = vmatmul.mubr.bf16.gmra.mxu0 %v4221
      %v4360 = vpop.f32.mrf.mxu0
      %v4361 = vadd.f32 0.0, %v4360
      %v4362 = vpop.f32.mrf.mxu0
      %v4363 = vpop.f32.mrf.mxu0
      %v4364 = vadd.f32 0.0, %v4363
      %v4365 = vpop.f32.mrf.mxu0
      %4366 = vmatprep.mubr.bf16.mxu0 0
      %4367 = vmatmul.mubr.bf16.gmra.mxu0 %v4224
      %v4368 = vpop.f32.mrf.mxu0
      %v4369 = vadd.f32 0.0, %v4368
      %v4370 = vpop.f32.mrf.mxu0
      %v4371 = vpop.f32.mrf.mxu0
      %v4372 = vadd.f32 0.0, %v4371
      %v4373 = vpop.f32.mrf.mxu0
      %4374 = vmatprep.mubr.bf16.mxu0 0
      %4375 = vmatmul.mubr.bf16.gmra.mxu0 %v4227
      %v4376 = vpop.f32.mrf.mxu0
      %v4377 = vadd.f32 0.0, %v4376
      %v4378 = vpop.f32.mrf.mxu0
      %v4379 = vpop.f32.mrf.mxu0
      %v4380 = vadd.f32 0.0, %v4379
      %v4381 = vpop.f32.mrf.mxu0
      %4382 = vmatprep.mubr.bf16.mxu0 0
      %4383 = vmatmul.mubr.bf16.gmra.mxu0 %v4230
      %v4384 = vpop.f32.mrf.mxu0
      %v4385 = vadd.f32 0.0, %v4384
      %v4386 = vpop.f32.mrf.mxu0
      %v4387 = vpop.f32.mrf.mxu0
      %v4388 = vadd.f32 0.0, %v4387
      %v4389 = vpop.f32.mrf.mxu0
      %4390 = vmatprep.mubr.bf16.mxu0 0
      %4391 = vmatmul.mubr.bf16.gmra.mxu0 %v4233
      %v4392 = vpop.f32.mrf.mxu0
      %v4393 = vadd.f32 0.0, %v4392
      %v4394 = vpop.f32.mrf.mxu0
      %v4395 = vpop.f32.mrf.mxu0
      %v4396 = vadd.f32 0.0, %v4395
      %v4397 = vpop.f32.mrf.mxu0
      %4398 = vdwg.mxu0
      %v4399 = vadd.f32 %v4041, %v4273
      %v4400 = vadd.f32 %v4042, %v4276
      %v4401 = vadd.f32 %v4043, %v4281
      %v4402 = vadd.f32 %v4044, %v4284
      %v4403 = vadd.f32 %v4045, %v4289
      %v4404 = vadd.f32 %v4046, %v4292
      %v4405 = vadd.f32 %v4047, %v4297
      %v4406 = vadd.f32 %v4048, %v4300
      %v4407 = vadd.f32 %v4049, %v4305
      %v4408 = vadd.f32 %v4050, %v4308
      %v4409 = vadd.f32 %v4051, %v4313
      %v4410 = vadd.f32 %v4052, %v4316
      %v4411 = vadd.f32 %v4053, %v4321
      %v4412 = vadd.f32 %v4054, %v4324
      %v4413 = vadd.f32 %v4055, %v4329
      %v4414 = vadd.f32 %v4056, %v4332
      %v4415 = vadd.f32 %v4057, %v4337
      %v4416 = vadd.f32 %v4058, %v4340
      %v4417 = vadd.f32 %v4059, %v4345
      %v4418 = vadd.f32 %v4060, %v4348
      %v4419 = vadd.f32 %v4061, %v4353
      %v4420 = vadd.f32 %v4062, %v4356
      %v4421 = vadd.f32 %v4063, %v4361
      %v4422 = vadd.f32 %v4064, %v4364
      %v4423 = vadd.f32 %v4065, %v4369
      %v4424 = vadd.f32 %v4066, %v4372
      %v4425 = vadd.f32 %v4067, %v4377
      %v4426 = vadd.f32 %v4068, %v4380
      %v4427 = vadd.f32 %v4069, %v4385
      %v4428 = vadd.f32 %v4070, %v4388
      %v4429 = vadd.f32 %v4071, %v4393
      %v4430 = vadd.f32 %v4072, %v4396
      %v4431 = vld [vmem:[%s4073] sm:$0xf]
      %v4432 = vld [vmem:[%s4073 + $0x4] sm:$0xf]
      %v4433 = vld [vmem:[%s4073 + $0x8] sm:$0x1]
      %v4434 = vld [vmem:[%s4073 + $0xc] sm:$0xf]
      %v4435 = vld [vmem:[%s4073 + $0x10] sm:$0xf]
      %v4436 = vld [vmem:[%s4073 + $0x14] sm:$0x1]
      %v4437 = vld [vmem:[%s4073 + $0x18] sm:$0xf]
      %v4438 = vld [vmem:[%s4073 + $0x1c] sm:$0xf]
      %v4439 = vld [vmem:[%s4073 + $0x20] sm:$0x1]
      %v4440 = vld [vmem:[%s4073 + $0x24] sm:$0xf]
      %v4441 = vld [vmem:[%s4073 + $0x28] sm:$0xf]
      %v4442 = vld [vmem:[%s4073 + $0x2c] sm:$0x1]
      %v4443 = vld [vmem:[%s4073 + $0x30] sm:$0xf]
      %v4444 = vld [vmem:[%s4073 + $0x34] sm:$0xf]
      %v4445 = vld [vmem:[%s4073 + $0x38] sm:$0x1]
      %v4446 = vld [vmem:[%s4073 + $0x3c] sm:$0xf]
      %v4447 = vld [vmem:[%s4073 + $0x40] sm:$0xf]
      %v4448 = vld [vmem:[%s4073 + $0x44] sm:$0x1]
      %v4449 = vld [vmem:[%s4073 + $0x48] sm:$0xf]
      %v4450 = vld [vmem:[%s4073 + $0x4c] sm:$0xf]
      %v4451 = vld [vmem:[%s4073 + $0x50] sm:$0x1]
      %v4452 = vld [vmem:[%s4073 + $0x54] sm:$0xf]
      %v4453 = vld [vmem:[%s4073 + $0x58] sm:$0xf]
      %v4454 = vld [vmem:[%s4073 + $0x5c] sm:$0x1]
      %v4455 = vld [vmem:[%s4073 + $0x60] sm:$0xf]
      %v4456 = vld [vmem:[%s4073 + $0x64] sm:$0xf]
      %v4457 = vld [vmem:[%s4073 + $0x68] sm:$0x1]
      %v4458 = vld [vmem:[%s4073 + $0x6c] sm:$0xf]
      %v4459 = vld [vmem:[%s4073 + $0x70] sm:$0xf]
      %v4460 = vld [vmem:[%s4073 + $0x74] sm:$0x1]
      %v4461 = vld [vmem:[%s4073 + $0x78] sm:$0xf]
      %v4462 = vld [vmem:[%s4073 + $0x7c] sm:$0xf]
      %v4463 = vld [vmem:[%s4073 + $0x80] sm:$0x1]
      %v4464 = vld [vmem:[%s4073 + $0x84] sm:$0xf]
      %v4465 = vld [vmem:[%s4073 + $0x88] sm:$0xf]
      %v4466 = vld [vmem:[%s4073 + $0x8c] sm:$0x1]
      %v4467 = vld [vmem:[%s4073 + $0x90] sm:$0xf]
      %v4468 = vld [vmem:[%s4073 + $0x94] sm:$0xf]
      %v4469 = vld [vmem:[%s4073 + $0x98] sm:$0x1]
      %v4470 = vld [vmem:[%s4073 + $0x9c] sm:$0xf]
      %v4471 = vld [vmem:[%s4073 + $0xa0] sm:$0xf]
      %v4472 = vld [vmem:[%s4073 + $0xa4] sm:$0x1]
      %v4473 = vld [vmem:[%s4073 + $0xa8] sm:$0xf]
      %v4474 = vld [vmem:[%s4073 + $0xac] sm:$0xf]
      %v4475 = vld [vmem:[%s4073 + $0xb0] sm:$0x1]
      %v4476 = vld [vmem:[%s4073 + $0xb4] sm:$0xf]
      %v4477 = vld [vmem:[%s4073 + $0xb8] sm:$0xf]
      %v4478 = vld [vmem:[%s4073 + $0xbc] sm:$0x1]
      %v4480 = vshrl.u32 %v4431, 16
      %v4482 = vrot.slane %v4480, 4
      %v4483 = vshll.u32 %v4431, 16
      %v4485 = vrot.slane %v4483, 5
      %v4486 = vor.u32 %v4482, %v4485
      %v4487 = vrot.slane %v4486, 4
      %v4489 = vshll.u32 %v4432, 16
      %v4491 = vrot.slane %v4489, 5
      %v4492 = vsel %vm1114, %v4487, %v4491
      %v4493 = vshrl.u32 %v4432, 16
      %v4495 = vrot.slane %v4493, 4
      %v4496 = vor.u32 %v4495, %v4491
      %v4497 = vrot.slane %v4496, 4
      %v4499 = vshll.u32 %v4433, 16
      %v4501 = vrot.slane %v4499, 5
      %v4502 = vsel %vm1114, %v4497, %v4501
      %v4504 = vshrl.u32 %v4434, 16
      %v4506 = vrot.slane %v4504, 4
      %v4507 = vshll.u32 %v4434, 16
      %v4509 = vrot.slane %v4507, 5
      %v4510 = vor.u32 %v4506, %v4509
      %v4511 = vrot.slane %v4510, 4
      %v4513 = vshll.u32 %v4435, 16
      %v4515 = vrot.slane %v4513, 5
      %v4516 = vsel %vm1114, %v4511, %v4515
      %v4517 = vshrl.u32 %v4435, 16
      %v4519 = vrot.slane %v4517, 4
      %v4520 = vor.u32 %v4519, %v4515
      %v4521 = vrot.slane %v4520, 4
      %v4523 = vshll.u32 %v4436, 16
      %v4525 = vrot.slane %v4523, 5
      %v4526 = vsel %vm1114, %v4521, %v4525
      %v4528 = vshrl.u32 %v4437, 16
      %v4530 = vrot.slane %v4528, 4
      %v4531 = vshll.u32 %v4437, 16
      %v4533 = vrot.slane %v4531, 5
      %v4534 = vor.u32 %v4530, %v4533
      %v4535 = vrot.slane %v4534, 4
      %v4537 = vshll.u32 %v4438, 16
      %v4539 = vrot.slane %v4537, 5
      %v4540 = vsel %vm1114, %v4535, %v4539
      %v4541 = vshrl.u32 %v4438, 16
      %v4543 = vrot.slane %v4541, 4
      %v4544 = vor.u32 %v4543, %v4539
      %v4545 = vrot.slane %v4544, 4
      %v4547 = vshll.u32 %v4439, 16
      %v4549 = vrot.slane %v4547, 5
      %v4550 = vsel %vm1114, %v4545, %v4549
      %v4552 = vshrl.u32 %v4440, 16
      %v4554 = vrot.slane %v4552, 4
      %v4555 = vshll.u32 %v4440, 16
      %v4557 = vrot.slane %v4555, 5
      %v4558 = vor.u32 %v4554, %v4557
      %v4559 = vrot.slane %v4558, 4
      %v4561 = vshll.u32 %v4441, 16
      %v4563 = vrot.slane %v4561, 5
      %v4564 = vsel %vm1114, %v4559, %v4563
      %v4565 = vshrl.u32 %v4441, 16
      %v4567 = vrot.slane %v4565, 4
      %v4568 = vor.u32 %v4567, %v4563
      %v4569 = vrot.slane %v4568, 4
      %v4571 = vshll.u32 %v4442, 16
      %v4573 = vrot.slane %v4571, 5
      %v4574 = vsel %vm1114, %v4569, %v4573
      %v4576 = vshrl.u32 %v4443, 16
      %v4578 = vrot.slane %v4576, 4
      %v4579 = vshll.u32 %v4443, 16
      %v4581 = vrot.slane %v4579, 5
      %v4582 = vor.u32 %v4578, %v4581
      %v4583 = vrot.slane %v4582, 4
      %v4585 = vshll.u32 %v4444, 16
      %v4587 = vrot.slane %v4585, 5
      %v4588 = vsel %vm1114, %v4583, %v4587
      %v4589 = vshrl.u32 %v4444, 16
      %v4591 = vrot.slane %v4589, 4
      %v4592 = vor.u32 %v4591, %v4587
      %v4593 = vrot.slane %v4592, 4
      %v4595 = vshll.u32 %v4445, 16
      %v4597 = vrot.slane %v4595, 5
      %v4598 = vsel %vm1114, %v4593, %v4597
      %v4600 = vshrl.u32 %v4446, 16
      %v4602 = vrot.slane %v4600, 4
      %v4603 = vshll.u32 %v4446, 16
      %v4605 = vrot.slane %v4603, 5
      %v4606 = vor.u32 %v4602, %v4605
      %v4607 = vrot.slane %v4606, 4
      %v4609 = vshll.u32 %v4447, 16
      %v4611 = vrot.slane %v4609, 5
      %v4612 = vsel %vm1114, %v4607, %v4611
      %v4613 = vshrl.u32 %v4447, 16
      %v4615 = vrot.slane %v4613, 4
      %v4616 = vor.u32 %v4615, %v4611
      %v4617 = vrot.slane %v4616, 4
      %v4619 = vshll.u32 %v4448, 16
      %v4621 = vrot.slane %v4619, 5
      %v4622 = vsel %vm1114, %v4617, %v4621
      %v4624 = vshrl.u32 %v4449, 16
      %v4626 = vrot.slane %v4624, 4
      %v4627 = vshll.u32 %v4449, 16
      %v4629 = vrot.slane %v4627, 5
      %v4630 = vor.u32 %v4626, %v4629
      %v4631 = vrot.slane %v4630, 4
      %v4633 = vshll.u32 %v4450, 16
      %v4635 = vrot.slane %v4633, 5
      %v4636 = vsel %vm1114, %v4631, %v4635
      %v4637 = vshrl.u32 %v4450, 16
      %v4639 = vrot.slane %v4637, 4
      %v4640 = vor.u32 %v4639, %v4635
      %v4641 = vrot.slane %v4640, 4
      %v4643 = vshll.u32 %v4451, 16
      %v4645 = vrot.slane %v4643, 5
      %v4646 = vsel %vm1114, %v4641, %v4645
      %v4648 = vshrl.u32 %v4452, 16
      %v4650 = vrot.slane %v4648, 4
      %v4651 = vshll.u32 %v4452, 16
      %v4653 = vrot.slane %v4651, 5
      %v4654 = vor.u32 %v4650, %v4653
      %v4655 = vrot.slane %v4654, 4
      %v4657 = vshll.u32 %v4453, 16
      %v4659 = vrot.slane %v4657, 5
      %v4660 = vsel %vm1114, %v4655, %v4659
      %v4661 = vshrl.u32 %v4453, 16
      %v4663 = vrot.slane %v4661, 4
      %v4664 = vor.u32 %v4663, %v4659
      %v4665 = vrot.slane %v4664, 4
      %v4667 = vshll.u32 %v4454, 16
      %v4669 = vrot.slane %v4667, 5
      %v4670 = vsel %vm1114, %v4665, %v4669
      %v4672 = vshrl.u32 %v4455, 16
      %v4674 = vrot.slane %v4672, 4
      %v4675 = vshll.u32 %v4455, 16
      %v4677 = vrot.slane %v4675, 5
      %v4678 = vor.u32 %v4674, %v4677
      %v4679 = vrot.slane %v4678, 4
      %v4681 = vshll.u32 %v4456, 16
      %v4683 = vrot.slane %v4681, 5
      %v4684 = vsel %vm1114, %v4679, %v4683
      %v4685 = vshrl.u32 %v4456, 16
      %v4687 = vrot.slane %v4685, 4
      %v4688 = vor.u32 %v4687, %v4683
      %v4689 = vrot.slane %v4688, 4
      %v4691 = vshll.u32 %v4457, 16
      %v4693 = vrot.slane %v4691, 5
      %v4694 = vsel %vm1114, %v4689, %v4693
      %v4696 = vshrl.u32 %v4458, 16
      %v4698 = vrot.slane %v4696, 4
      %v4699 = vshll.u32 %v4458, 16
      %v4701 = vrot.slane %v4699, 5
      %v4702 = vor.u32 %v4698, %v4701
      %v4703 = vrot.slane %v4702, 4
      %v4705 = vshll.u32 %v4459, 16
      %v4707 = vrot.slane %v4705, 5
      %v4708 = vsel %vm1114, %v4703, %v4707
      %v4709 = vshrl.u32 %v4459, 16
      %v4711 = vrot.slane %v4709, 4
      %v4712 = vor.u32 %v4711, %v4707
      %v4713 = vrot.slane %v4712, 4
      %v4715 = vshll.u32 %v4460, 16
      %v4717 = vrot.slane %v4715, 5
      %v4718 = vsel %vm1114, %v4713, %v4717
      %v4720 = vshrl.u32 %v4461, 16
      %v4722 = vrot.slane %v4720, 4
      %v4723 = vshll.u32 %v4461, 16
      %v4725 = vrot.slane %v4723, 5
      %v4726 = vor.u32 %v4722, %v4725
      %v4727 = vrot.slane %v4726, 4
      %v4729 = vshll.u32 %v4462, 16
      %v4731 = vrot.slane %v4729, 5
      %v4732 = vsel %vm1114, %v4727, %v4731
      %v4733 = vshrl.u32 %v4462, 16
      %v4735 = vrot.slane %v4733, 4
      %v4736 = vor.u32 %v4735, %v4731
      %v4737 = vrot.slane %v4736, 4
      %v4739 = vshll.u32 %v4463, 16
      %v4741 = vrot.slane %v4739, 5
      %v4742 = vsel %vm1114, %v4737, %v4741
      %v4744 = vshrl.u32 %v4464, 16
      %v4746 = vrot.slane %v4744, 4
      %v4747 = vshll.u32 %v4464, 16
      %v4749 = vrot.slane %v4747, 5
      %v4750 = vor.u32 %v4746, %v4749
      %v4751 = vrot.slane %v4750, 4
      %v4753 = vshll.u32 %v4465, 16
      %v4755 = vrot.slane %v4753, 5
      %v4756 = vsel %vm1114, %v4751, %v4755
      %v4757 = vshrl.u32 %v4465, 16
      %v4759 = vrot.slane %v4757, 4
      %v4760 = vor.u32 %v4759, %v4755
      %v4761 = vrot.slane %v4760, 4
      %v4763 = vshll.u32 %v4466, 16
      %v4765 = vrot.slane %v4763, 5
      %v4766 = vsel %vm1114, %v4761, %v4765
      %v4768 = vshrl.u32 %v4467, 16
      %v4770 = vrot.slane %v4768, 4
      %v4771 = vshll.u32 %v4467, 16
      %v4773 = vrot.slane %v4771, 5
      %v4774 = vor.u32 %v4770, %v4773
      %v4775 = vrot.slane %v4774, 4
      %v4777 = vshll.u32 %v4468, 16
      %v4779 = vrot.slane %v4777, 5
      %v4780 = vsel %vm1114, %v4775, %v4779
      %v4781 = vshrl.u32 %v4468, 16
      %v4783 = vrot.slane %v4781, 4
      %v4784 = vor.u32 %v4783, %v4779
      %v4785 = vrot.slane %v4784, 4
      %v4787 = vshll.u32 %v4469, 16
      %v4789 = vrot.slane %v4787, 5
      %v4790 = vsel %vm1114, %v4785, %v4789
      %v4792 = vshrl.u32 %v4470, 16
      %v4794 = vrot.slane %v4792, 4
      %v4795 = vshll.u32 %v4470, 16
      %v4797 = vrot.slane %v4795, 5
      %v4798 = vor.u32 %v4794, %v4797
      %v4799 = vrot.slane %v4798, 4
      %v4801 = vshll.u32 %v4471, 16
      %v4803 = vrot.slane %v4801, 5
      %v4804 = vsel %vm1114, %v4799, %v4803
      %v4805 = vshrl.u32 %v4471, 16
      %v4807 = vrot.slane %v4805, 4
      %v4808 = vor.u32 %v4807, %v4803
      %v4809 = vrot.slane %v4808, 4
      %v4811 = vshll.u32 %v4472, 16
      %v4813 = vrot.slane %v4811, 5
      %v4814 = vsel %vm1114, %v4809, %v4813
      %v4816 = vshrl.u32 %v4473, 16
      %v4818 = vrot.slane %v4816, 4
      %v4819 = vshll.u32 %v4473, 16
      %v4821 = vrot.slane %v4819, 5
      %v4822 = vor.u32 %v4818, %v4821
      %v4823 = vrot.slane %v4822, 4
      %v4825 = vshll.u32 %v4474, 16
      %v4827 = vrot.slane %v4825, 5
      %v4828 = vsel %vm1114, %v4823, %v4827
      %v4829 = vshrl.u32 %v4474, 16
      %v4831 = vrot.slane %v4829, 4
      %v4832 = vor.u32 %v4831, %v4827
      %v4833 = vrot.slane %v4832, 4
      %v4835 = vshll.u32 %v4475, 16
      %v4837 = vrot.slane %v4835, 5
      %v4838 = vsel %vm1114, %v4833, %v4837
      %v4840 = vshrl.u32 %v4476, 16
      %v4842 = vrot.slane %v4840, 4
      %v4843 = vshll.u32 %v4476, 16
      %v4845 = vrot.slane %v4843, 5
      %v4846 = vor.u32 %v4842, %v4845
      %v4847 = vrot.slane %v4846, 4
      %v4849 = vshll.u32 %v4477, 16
      %v4851 = vrot.slane %v4849, 5
      %v4852 = vsel %vm1114, %v4847, %v4851
      %v4853 = vshrl.u32 %v4477, 16
      %v4855 = vrot.slane %v4853, 4
      %v4856 = vor.u32 %v4855, %v4851
      %v4857 = vrot.slane %v4856, 4
      %v4859 = vshll.u32 %v4478, 16
      %v4861 = vrot.slane %v4859, 5
      %v4862 = vsel %vm1114, %v4857, %v4861
      %v4863 = vld [vmem:[%s3 + $0xc] sm:$0xc]
      %v4864 = vunpack.c.l.b16 %v4492
      %v4865 = vunpack.c.l.b16 %v4502
      %v4866 = vunpack.c.l.b16 %v4516
      %v4867 = vunpack.c.l.b16 %v4526
      %v4868 = vunpack.c.l.b16 %v4540
      %v4869 = vunpack.c.l.b16 %v4550
      %v4870 = vunpack.c.l.b16 %v4564
      %v4871 = vunpack.c.l.b16 %v4574
      %v4872 = vunpack.c.l.b16 %v4588
      %v4873 = vunpack.c.l.b16 %v4598
      %v4874 = vunpack.c.l.b16 %v4612
      %v4875 = vunpack.c.l.b16 %v4622
      %v4876 = vunpack.c.l.b16 %v4636
      %v4877 = vunpack.c.l.b16 %v4646
      %v4878 = vunpack.c.l.b16 %v4660
      %v4879 = vunpack.c.l.b16 %v4670
      %v4880 = vunpack.c.l.b16 %v4684
      %v4881 = vunpack.c.l.b16 %v4694
      %v4882 = vunpack.c.l.b16 %v4708
      %v4883 = vunpack.c.l.b16 %v4718
      %v4884 = vunpack.c.l.b16 %v4732
      %v4885 = vunpack.c.l.b16 %v4742
      %v4886 = vunpack.c.l.b16 %v4756
      %v4887 = vunpack.c.l.b16 %v4766
      %v4888 = vunpack.c.l.b16 %v4780
      %v4889 = vunpack.c.l.b16 %v4790
      %v4890 = vunpack.c.l.b16 %v4804
      %v4891 = vunpack.c.l.b16 %v4814
      %v4892 = vunpack.c.l.b16 %v4828
      %v4893 = vunpack.c.l.b16 %v4838
      %v4894 = vunpack.c.l.b16 %v4852
      %v4895 = vunpack.c.l.b16 %v4862
      %v4896 = vpack.c.b16 %v4865, %v4864
      %v4897 = vpack.c.b16 %v4867, %v4866
      %v4898 = vpack.c.b16 %v4869, %v4868
      %v4899 = vpack.c.b16 %v4871, %v4870
      %v4900 = vpack.c.b16 %v4873, %v4872
      %v4901 = vpack.c.b16 %v4875, %v4874
      %v4902 = vpack.c.b16 %v4877, %v4876
      %v4903 = vpack.c.b16 %v4879, %v4878
      %v4904 = vpack.c.b16 %v4881, %v4880
      %v4905 = vpack.c.b16 %v4883, %v4882
      %v4906 = vpack.c.b16 %v4885, %v4884
      %v4907 = vpack.c.b16 %v4887, %v4886
      %v4908 = vpack.c.b16 %v4889, %v4888
      %v4909 = vpack.c.b16 %v4891, %v4890
      %v4910 = vpack.c.b16 %v4893, %v4892
      %v4911 = vpack.c.b16 %v4895, %v4894
      %v4913 = vunpack.c.l.b16 %v4863
      %v4914 = vpack.c.b16 %v4913, %v4913
      %v4915 = vrot.slane %v4914, 2
      %v4917 = vsel %vm1552, %v4896, 0
      %v4920 = vsel %vm1552, %v4897, 0
      %v4923 = vsel %vm1552, %v4898, 0
      %v4926 = vsel %vm1552, %v4899, 0
      %v4929 = vsel %vm1552, %v4900, 0
      %v4932 = vsel %vm1552, %v4901, 0
      %v4935 = vsel %vm1552, %v4902, 0
      %v4938 = vsel %vm1552, %v4903, 0
      %v4941 = vsel %vm1552, %v4904, 0
      %v4944 = vsel %vm1552, %v4905, 0
      %v4947 = vsel %vm1552, %v4906, 0
      %v4950 = vsel %vm1552, %v4907, 0
      %v4953 = vsel %vm1552, %v4908, 0
      %v4956 = vsel %vm1552, %v4909, 0
      %v4959 = vsel %vm1552, %v4910, 0
      %v4962 = vsel %vm1552, %v4911, 0
      %v4965 = vsel %vm1601, %v4915, 0
      %4967 = vmatprep.subr.bf16.mxu0 0
      %4968 = vmatpush1.bf16.msra.mxu0 0
      %4969 = vmatprep.subr.bf16.mxu0 0
      %4970 = vmatpush1.bf16.msra.mxu0 0
      %4971 = vmatprep.subr.bf16.mxu0 0
      %4972 = vmatpush1.bf16.msra.mxu0 0
      %4973 = vmatprep.subr.bf16.mxu0 0
      %4974 = vmatpush1.bf16.msra.mxu0 0
      %4975 = vmatprep.subr.bf16.mxu0 0
      %4976 = vmatpush1.bf16.msra.mxu0 0
      %4977 = vmatprep.subr.bf16.mxu0 0
      %4978 = vmatpush1.bf16.msra.mxu0 0
      %4979 = vmatprep.subr.bf16.mxu0 0
      %4980 = vmatpush1.bf16.msra.mxu0 0
      %4981 = vmatprep.subr.bf16.mxu0 0
      %4982 = vmatpush1.bf16.msra.mxu0 %v4965
      %4983 = vmatprep.subr.bf16.mxu0 0
      %4984 = vmatpush2.bf16.msra.mxu0 0
      %4985 = vmatprep.subr.bf16.mxu0 0
      %4986 = vmatpush2.bf16.msra.mxu0 0
      %4987 = vmatprep.subr.bf16.mxu0 0
      %4988 = vmatpush2.bf16.msra.mxu0 0
      %4989 = vmatprep.subr.bf16.mxu0 0
      %4990 = vmatpush2.bf16.msra.mxu0 0
      %4991 = vmatprep.subr.bf16.mxu0 0
      %4992 = vmatpush2.bf16.msra.mxu0 0
      %4993 = vmatprep.subr.bf16.mxu0 0
      %4994 = vmatpush2.bf16.msra.mxu0 0
      %4995 = vmatprep.subr.bf16.mxu0 0
      %4996 = vmatpush2.bf16.msra.mxu0 0
      %4997 = vmatprep.subr.bf16.mxu0 0
      %4998 = vmatpush2.bf16.msra.mxu0 0
      %4999 = vmatprep.mubr.bf16.mxu0 0
      %5000 = vmatmul.mubr.bf16.gmra.mxu0 %v4917
      %v5001 = vpop.f32.mrf.mxu0
      %v5002 = vadd.f32 0.0, %v5001
      %v5003 = vpop.f32.mrf.mxu0
      %v5004 = vpop.f32.mrf.mxu0
      %v5005 = vadd.f32 0.0, %v5004
      %v5006 = vpop.f32.mrf.mxu0
      %5007 = vmatprep.mubr.bf16.mxu0 0
      %5008 = vmatmul.mubr.bf16.gmra.mxu0 %v4920
      %v5009 = vpop.f32.mrf.mxu0
      %v5010 = vadd.f32 0.0, %v5009
      %v5011 = vpop.f32.mrf.mxu0
      %v5012 = vpop.f32.mrf.mxu0
      %v5013 = vadd.f32 0.0, %v5012
      %v5014 = vpop.f32.mrf.mxu0
      %5015 = vmatprep.mubr.bf16.mxu0 0
      %5016 = vmatmul.mubr.bf16.gmra.mxu0 %v4923
      %v5017 = vpop.f32.mrf.mxu0
      %v5018 = vadd.f32 0.0, %v5017
      %v5019 = vpop.f32.mrf.mxu0
      %v5020 = vpop.f32.mrf.mxu0
      %v5021 = vadd.f32 0.0, %v5020
      %v5022 = vpop.f32.mrf.mxu0
      %5023 = vmatprep.mubr.bf16.mxu0 0
      %5024 = vmatmul.mubr.bf16.gmra.mxu0 %v4926
      %v5025 = vpop.f32.mrf.mxu0
      %v5026 = vadd.f32 0.0, %v5025
      %v5027 = vpop.f32.mrf.mxu0
      %v5028 = vpop.f32.mrf.mxu0
      %v5029 = vadd.f32 0.0, %v5028
      %v5030 = vpop.f32.mrf.mxu0
      %5031 = vmatprep.mubr.bf16.mxu0 0
      %5032 = vmatmul.mubr.bf16.gmra.mxu0 %v4929
      %v5033 = vpop.f32.mrf.mxu0
      %v5034 = vadd.f32 0.0, %v5033
      %v5035 = vpop.f32.mrf.mxu0
      %v5036 = vpop.f32.mrf.mxu0
      %v5037 = vadd.f32 0.0, %v5036
      %v5038 = vpop.f32.mrf.mxu0
      %5039 = vmatprep.mubr.bf16.mxu0 0
      %5040 = vmatmul.mubr.bf16.gmra.mxu0 %v4932
      %v5041 = vpop.f32.mrf.mxu0
      %v5042 = vadd.f32 0.0, %v5041
      %v5043 = vpop.f32.mrf.mxu0
      %v5044 = vpop.f32.mrf.mxu0
      %v5045 = vadd.f32 0.0, %v5044
      %v5046 = vpop.f32.mrf.mxu0
      %5047 = vmatprep.mubr.bf16.mxu0 0
      %5048 = vmatmul.mubr.bf16.gmra.mxu0 %v4935
      %v5049 = vpop.f32.mrf.mxu0
      %v5050 = vadd.f32 0.0, %v5049
      %v5051 = vpop.f32.mrf.mxu0
      %v5052 = vpop.f32.mrf.mxu0
      %v5053 = vadd.f32 0.0, %v5052
      %v5054 = vpop.f32.mrf.mxu0
      %5055 = vmatprep.mubr.bf16.mxu0 0
      %5056 = vmatmul.mubr.bf16.gmra.mxu0 %v4938
      %v5057 = vpop.f32.mrf.mxu0
      %v5058 = vadd.f32 0.0, %v5057
      %v5059 = vpop.f32.mrf.mxu0
      %v5060 = vpop.f32.mrf.mxu0
      %v5061 = vadd.f32 0.0, %v5060
      %v5062 = vpop.f32.mrf.mxu0
      %5063 = vmatprep.mubr.bf16.mxu0 0
      %5064 = vmatmul.mubr.bf16.gmra.mxu0 %v4941
      %v5065 = vpop.f32.mrf.mxu0
      %v5066 = vadd.f32 0.0, %v5065
      %v5067 = vpop.f32.mrf.mxu0
      %v5068 = vpop.f32.mrf.mxu0
      %v5069 = vadd.f32 0.0, %v5068
      %v5070 = vpop.f32.mrf.mxu0
      %5071 = vmatprep.mubr.bf16.mxu0 0
      %5072 = vmatmul.mubr.bf16.gmra.mxu0 %v4944
      %v5073 = vpop.f32.mrf.mxu0
      %v5074 = vadd.f32 0.0, %v5073
      %v5075 = vpop.f32.mrf.mxu0
      %v5076 = vpop.f32.mrf.mxu0
      %v5077 = vadd.f32 0.0, %v5076
      %v5078 = vpop.f32.mrf.mxu0
      %5079 = vmatprep.mubr.bf16.mxu0 0
      %5080 = vmatmul.mubr.bf16.gmra.mxu0 %v4947
      %v5081 = vpop.f32.mrf.mxu0
      %v5082 = vadd.f32 0.0, %v5081
      %v5083 = vpop.f32.mrf.mxu0
      %v5084 = vpop.f32.mrf.mxu0
      %v5085 = vadd.f32 0.0, %v5084
      %v5086 = vpop.f32.mrf.mxu0
      %5087 = vmatprep.mubr.bf16.mxu0 0
      %5088 = vmatmul.mubr.bf16.gmra.mxu0 %v4950
      %v5089 = vpop.f32.mrf.mxu0
      %v5090 = vadd.f32 0.0, %v5089
      %v5091 = vpop.f32.mrf.mxu0
      %v5092 = vpop.f32.mrf.mxu0
      %v5093 = vadd.f32 0.0, %v5092
      %v5094 = vpop.f32.mrf.mxu0
      %5095 = vmatprep.mubr.bf16.mxu0 0
      %5096 = vmatmul.mubr.bf16.gmra.mxu0 %v4953
      %v5097 = vpop.f32.mrf.mxu0
      %v5098 = vadd.f32 0.0, %v5097
      %v5099 = vpop.f32.mrf.mxu0
      %v5100 = vpop.f32.mrf.mxu0
      %v5101 = vadd.f32 0.0, %v5100
      %v5102 = vpop.f32.mrf.mxu0
      %5103 = vmatprep.mubr.bf16.mxu0 0
      %5104 = vmatmul.mubr.bf16.gmra.mxu0 %v4956
      %v5105 = vpop.f32.mrf.mxu0
      %v5106 = vadd.f32 0.0, %v5105
      %v5107 = vpop.f32.mrf.mxu0
      %v5108 = vpop.f32.mrf.mxu0
      %v5109 = vadd.f32 0.0, %v5108
      %v5110 = vpop.f32.mrf.mxu0
      %5111 = vmatprep.mubr.bf16.mxu0 0
      %5112 = vmatmul.mubr.bf16.gmra.mxu0 %v4959
      %v5113 = vpop.f32.mrf.mxu0
      %v5114 = vadd.f32 0.0, %v5113
      %v5115 = vpop.f32.mrf.mxu0
      %v5116 = vpop.f32.mrf.mxu0
      %v5117 = vadd.f32 0.0, %v5116
      %v5118 = vpop.f32.mrf.mxu0
      %5119 = vmatprep.mubr.bf16.mxu0 0
      %5120 = vmatmul.mubr.bf16.gmra.mxu0 %v4962
      %v5121 = vpop.f32.mrf.mxu0
      %v5122 = vadd.f32 0.0, %v5121
      %v5123 = vpop.f32.mrf.mxu0
      %v5124 = vpop.f32.mrf.mxu0
      %v5125 = vadd.f32 0.0, %v5124
      %v5126 = vpop.f32.mrf.mxu0
      %5127 = vdwg.mxu0
      %v5128 = vadd.f32 %v4399, %v5002
      %v5129 = vadd.f32 %v4400, %v5005
      %v5130 = vadd.f32 %v4401, %v5010
      %v5131 = vadd.f32 %v4402, %v5013
      %v5132 = vadd.f32 %v4403, %v5018
      %v5133 = vadd.f32 %v4404, %v5021
      %v5134 = vadd.f32 %v4405, %v5026
      %v5135 = vadd.f32 %v4406, %v5029
      %v5136 = vadd.f32 %v4407, %v5034
      %v5137 = vadd.f32 %v4408, %v5037
      %v5138 = vadd.f32 %v4409, %v5042
      %v5139 = vadd.f32 %v4410, %v5045
      %v5140 = vadd.f32 %v4411, %v5050
      %v5141 = vadd.f32 %v4412, %v5053
      %v5142 = vadd.f32 %v4413, %v5058
      %v5143 = vadd.f32 %v4414, %v5061
      %v5144 = vadd.f32 %v4415, %v5066
      %v5145 = vadd.f32 %v4416, %v5069
      %v5146 = vadd.f32 %v4417, %v5074
      %v5147 = vadd.f32 %v4418, %v5077
      %v5148 = vadd.f32 %v4419, %v5082
      %v5149 = vadd.f32 %v4420, %v5085
      %v5150 = vadd.f32 %v4421, %v5090
      %v5151 = vadd.f32 %v4422, %v5093
      %v5152 = vadd.f32 %v4423, %v5098
      %v5153 = vadd.f32 %v4424, %v5101
      %v5154 = vadd.f32 %v4425, %v5106
      %v5155 = vadd.f32 %v4426, %v5109
      %v5156 = vadd.f32 %v4427, %v5114
      %v5157 = vadd.f32 %v4428, %v5117
      %v5158 = vadd.f32 %v4429, %v5122
      %v5159 = vadd.f32 %v4430, %v5125
      %v5160 = vld [vmem:[%s4073] sm:$0xe]
      %v5161 = vld [vmem:[%s4073 + $0xc] sm:$0xe]
      %v5162 = vld [vmem:[%s4073 + $0x18] sm:$0xe]
      %v5163 = vld [vmem:[%s4073 + $0x24] sm:$0xe]
      %v5164 = vld [vmem:[%s4073 + $0x30] sm:$0xe]
      %v5165 = vld [vmem:[%s4073 + $0x3c] sm:$0xe]
      %v5166 = vld [vmem:[%s4073 + $0x48] sm:$0xe]
      %v5167 = vld [vmem:[%s4073 + $0x54] sm:$0xe]
      %v5168 = vld [vmem:[%s4073 + $0x60] sm:$0xe]
      %v5169 = vld [vmem:[%s4073 + $0x6c] sm:$0xe]
      %v5170 = vld [vmem:[%s4073 + $0x78] sm:$0xe]
      %v5171 = vld [vmem:[%s4073 + $0x84] sm:$0xe]
      %v5172 = vld [vmem:[%s4073 + $0x90] sm:$0xe]
      %v5173 = vld [vmem:[%s4073 + $0x9c] sm:$0xe]
      %v5174 = vld [vmem:[%s4073 + $0xa8] sm:$0xe]
      %v5175 = vld [vmem:[%s4073 + $0xb4] sm:$0xe]
      %v5224 = vrot.slane %v5160, 5
      %v5225 = vrot.slane %v5224, 4
      %v5226 = vrot.slane %v4432, 5
      %v5227 = vsel %vm2108, %v5225, %v5226
      %v5228 = vrot.slane %v5226, 4
      %v5229 = vrot.slane %v4433, 5
      %v5230 = vsel %vm2108, %v5228, %v5229
      %v5231 = vrot.slane %v5161, 5
      %v5232 = vrot.slane %v5231, 4
      %v5233 = vrot.slane %v4435, 5
      %v5234 = vsel %vm2108, %v5232, %v5233
      %v5235 = vrot.slane %v5233, 4
      %v5236 = vrot.slane %v4436, 5
      %v5237 = vsel %vm2108, %v5235, %v5236
      %v5238 = vrot.slane %v5162, 5
      %v5239 = vrot.slane %v5238, 4
      %v5240 = vrot.slane %v4438, 5
      %v5241 = vsel %vm2108, %v5239, %v5240
      %v5242 = vrot.slane %v5240, 4
      %v5243 = vrot.slane %v4439, 5
      %v5244 = vsel %vm2108, %v5242, %v5243
      %v5245 = vrot.slane %v5163, 5
      %v5246 = vrot.slane %v5245, 4
      %v5247 = vrot.slane %v4441, 5
      %v5248 = vsel %vm2108, %v5246, %v5247
      %v5249 = vrot.slane %v5247, 4
      %v5250 = vrot.slane %v4442, 5
      %v5251 = vsel %vm2108, %v5249, %v5250
      %v5252 = vrot.slane %v5164, 5
      %v5253 = vrot.slane %v5252, 4
      %v5254 = vrot.slane %v4444, 5
      %v5255 = vsel %vm2108, %v5253, %v5254
      %v5256 = vrot.slane %v5254, 4
      %v5257 = vrot.slane %v4445, 5
      %v5258 = vsel %vm2108, %v5256, %v5257
      %v5259 = vrot.slane %v5165, 5
      %v5260 = vrot.slane %v5259, 4
      %v5261 = vrot.slane %v4447, 5
      %v5262 = vsel %vm2108, %v5260, %v5261
      %v5263 = vrot.slane %v5261, 4
      %v5264 = vrot.slane %v4448, 5
      %v5265 = vsel %vm2108, %v5263, %v5264
      %v5266 = vrot.slane %v5166, 5
      %v5267 = vrot.slane %v5266, 4
      %v5268 = vrot.slane %v4450, 5
      %v5269 = vsel %vm2108, %v5267, %v5268
      %v5270 = vrot.slane %v5268, 4
      %v5271 = vrot.slane %v4451, 5
      %v5272 = vsel %vm2108, %v5270, %v5271
      %v5273 = vrot.slane %v5167, 5
      %v5274 = vrot.slane %v5273, 4
      %v5275 = vrot.slane %v4453, 5
      %v5276 = vsel %vm2108, %v5274, %v5275
      %v5277 = vrot.slane %v5275, 4
      %v5278 = vrot.slane %v4454, 5
      %v5279 = vsel %vm2108, %v5277, %v5278
      %v5280 = vrot.slane %v5168, 5
      %v5281 = vrot.slane %v5280, 4
      %v5282 = vrot.slane %v4456, 5
      %v5283 = vsel %vm2108, %v5281, %v5282
      %v5284 = vrot.slane %v5282, 4
      %v5285 = vrot.slane %v4457, 5
      %v5286 = vsel %vm2108, %v5284, %v5285
      %v5287 = vrot.slane %v5169, 5
      %v5288 = vrot.slane %v5287, 4
      %v5289 = vrot.slane %v4459, 5
      %v5290 = vsel %vm2108, %v5288, %v5289
      %v5291 = vrot.slane %v5289, 4
      %v5292 = vrot.slane %v4460, 5
      %v5293 = vsel %vm2108, %v5291, %v5292
      %v5294 = vrot.slane %v5170, 5
      %v5295 = vrot.slane %v5294, 4
      %v5296 = vrot.slane %v4462, 5
      %v5297 = vsel %vm2108, %v5295, %v5296
      %v5298 = vrot.slane %v5296, 4
      %v5299 = vrot.slane %v4463, 5
      %v5300 = vsel %vm2108, %v5298, %v5299
      %v5301 = vrot.slane %v5171, 5
      %v5302 = vrot.slane %v5301, 4
      %v5303 = vrot.slane %v4465, 5
      %v5304 = vsel %vm2108, %v5302, %v5303
      %v5305 = vrot.slane %v5303, 4
      %v5306 = vrot.slane %v4466, 5
      %v5307 = vsel %vm2108, %v5305, %v5306
      %v5308 = vrot.slane %v5172, 5
      %v5309 = vrot.slane %v5308, 4
      %v5310 = vrot.slane %v4468, 5
      %v5311 = vsel %vm2108, %v5309, %v5310
      %v5312 = vrot.slane %v5310, 4
      %v5313 = vrot.slane %v4469, 5
      %v5314 = vsel %vm2108, %v5312, %v5313
      %v5315 = vrot.slane %v5173, 5
      %v5316 = vrot.slane %v5315, 4
      %v5317 = vrot.slane %v4471, 5
      %v5318 = vsel %vm2108, %v5316, %v5317
      %v5319 = vrot.slane %v5317, 4
      %v5320 = vrot.slane %v4472, 5
      %v5321 = vsel %vm2108, %v5319, %v5320
      %v5322 = vrot.slane %v5174, 5
      %v5323 = vrot.slane %v5322, 4
      %v5324 = vrot.slane %v4474, 5
      %v5325 = vsel %vm2108, %v5323, %v5324
      %v5326 = vrot.slane %v5324, 4
      %v5327 = vrot.slane %v4475, 5
      %v5328 = vsel %vm2108, %v5326, %v5327
      %v5329 = vrot.slane %v5175, 5
      %v5330 = vrot.slane %v5329, 4
      %v5331 = vrot.slane %v4477, 5
      %v5332 = vsel %vm2108, %v5330, %v5331
      %v5333 = vrot.slane %v5331, 4
      %v5334 = vrot.slane %v4478, 5
      %v5335 = vsel %vm2108, %v5333, %v5334
      %v5336 = vld [vmem:[%s3 + $0x10] sm:$0x3]
      %v5337 = vunpack.c.l.b16 %v5227
      %v5338 = vunpack.c.l.b16 %v5230
      %v5339 = vunpack.c.l.b16 %v5234
      %v5340 = vunpack.c.l.b16 %v5237
      %v5341 = vunpack.c.l.b16 %v5241
      %v5342 = vunpack.c.l.b16 %v5244
      %v5343 = vunpack.c.l.b16 %v5248
      %v5344 = vunpack.c.l.b16 %v5251
      %v5345 = vunpack.c.l.b16 %v5255
      %v5346 = vunpack.c.l.b16 %v5258
      %v5347 = vunpack.c.l.b16 %v5262
      %v5348 = vunpack.c.l.b16 %v5265
      %v5349 = vunpack.c.l.b16 %v5269
      %v5350 = vunpack.c.l.b16 %v5272
      %v5351 = vunpack.c.l.b16 %v5276
      %v5352 = vunpack.c.l.b16 %v5279
      %v5353 = vunpack.c.l.b16 %v5283
      %v5354 = vunpack.c.l.b16 %v5286
      %v5355 = vunpack.c.l.b16 %v5290
      %v5356 = vunpack.c.l.b16 %v5293
      %v5357 = vunpack.c.l.b16 %v5297
      %v5358 = vunpack.c.l.b16 %v5300
      %v5359 = vunpack.c.l.b16 %v5304
      %v5360 = vunpack.c.l.b16 %v5307
      %v5361 = vunpack.c.l.b16 %v5311
      %v5362 = vunpack.c.l.b16 %v5314
      %v5363 = vunpack.c.l.b16 %v5318
      %v5364 = vunpack.c.l.b16 %v5321
      %v5365 = vunpack.c.l.b16 %v5325
      %v5366 = vunpack.c.l.b16 %v5328
      %v5367 = vunpack.c.l.b16 %v5332
      %v5368 = vunpack.c.l.b16 %v5335
      %v5369 = vpack.c.b16 %v5338, %v5337
      %v5370 = vpack.c.b16 %v5340, %v5339
      %v5371 = vpack.c.b16 %v5342, %v5341
      %v5372 = vpack.c.b16 %v5344, %v5343
      %v5373 = vpack.c.b16 %v5346, %v5345
      %v5374 = vpack.c.b16 %v5348, %v5347
      %v5375 = vpack.c.b16 %v5350, %v5349
      %v5376 = vpack.c.b16 %v5352, %v5351
      %v5377 = vpack.c.b16 %v5354, %v5353
      %v5378 = vpack.c.b16 %v5356, %v5355
      %v5379 = vpack.c.b16 %v5358, %v5357
      %v5380 = vpack.c.b16 %v5360, %v5359
      %v5381 = vpack.c.b16 %v5362, %v5361
      %v5382 = vpack.c.b16 %v5364, %v5363
      %v5383 = vpack.c.b16 %v5366, %v5365
      %v5384 = vpack.c.b16 %v5368, %v5367
      %v5386 = vsel %vm1552, %v5369, 0
      %v5389 = vsel %vm1552, %v5370, 0
      %v5392 = vsel %vm1552, %v5371, 0
      %v5395 = vsel %vm1552, %v5372, 0
      %v5398 = vsel %vm1552, %v5373, 0
      %v5401 = vsel %vm1552, %v5374, 0
      %v5404 = vsel %vm1552, %v5375, 0
      %v5407 = vsel %vm1552, %v5376, 0
      %v5410 = vsel %vm1552, %v5377, 0
      %v5413 = vsel %vm1552, %v5378, 0
      %v5416 = vsel %vm1552, %v5379, 0
      %v5419 = vsel %vm1552, %v5380, 0
      %v5422 = vsel %vm1552, %v5381, 0
      %v5425 = vsel %vm1552, %v5382, 0
      %v5428 = vsel %vm1552, %v5383, 0
      %v5431 = vsel %vm1552, %v5384, 0
      %v5434 = vsel %vm1601, %v5336, 0
      %5436 = vmatprep.subr.bf16.mxu0 0
      %5437 = vmatpush1.bf16.msra.mxu0 0
      %5438 = vmatprep.subr.bf16.mxu0 0
      %5439 = vmatpush1.bf16.msra.mxu0 0
      %5440 = vmatprep.subr.bf16.mxu0 0
      %5441 = vmatpush1.bf16.msra.mxu0 0
      %5442 = vmatprep.subr.bf16.mxu0 0
      %5443 = vmatpush1.bf16.msra.mxu0 0
      %5444 = vmatprep.subr.bf16.mxu0 0
      %5445 = vmatpush1.bf16.msra.mxu0 0
      %5446 = vmatprep.subr.bf16.mxu0 0
      %5447 = vmatpush1.bf16.msra.mxu0 0
      %5448 = vmatprep.subr.bf16.mxu0 0
      %5449 = vmatpush1.bf16.msra.mxu0 0
      %5450 = vmatprep.subr.bf16.mxu0 0
      %5451 = vmatpush1.bf16.msra.mxu0 %v5434
      %5452 = vmatprep.subr.bf16.mxu0 0
      %5453 = vmatpush2.bf16.msra.mxu0 0
      %5454 = vmatprep.subr.bf16.mxu0 0
      %5455 = vmatpush2.bf16.msra.mxu0 0
      %5456 = vmatprep.subr.bf16.mxu0 0
      %5457 = vmatpush2.bf16.msra.mxu0 0
      %5458 = vmatprep.subr.bf16.mxu0 0
      %5459 = vmatpush2.bf16.msra.mxu0 0
      %5460 = vmatprep.subr.bf16.mxu0 0
      %5461 = vmatpush2.bf16.msra.mxu0 0
      %5462 = vmatprep.subr.bf16.mxu0 0
      %5463 = vmatpush2.bf16.msra.mxu0 0
      %5464 = vmatprep.subr.bf16.mxu0 0
      %5465 = vmatpush2.bf16.msra.mxu0 0
      %5466 = vmatprep.subr.bf16.mxu0 0
      %5467 = vmatpush2.bf16.msra.mxu0 0
      %5468 = vmatprep.mubr.bf16.mxu0 0
      %5469 = vmatmul.mubr.bf16.gmra.mxu0 %v5386
      %v5470 = vpop.f32.mrf.mxu0
      %v5471 = vadd.f32 0.0, %v5470
      %v5472 = vpop.f32.mrf.mxu0
      %v5473 = vpop.f32.mrf.mxu0
      %v5474 = vadd.f32 0.0, %v5473
      %v5475 = vpop.f32.mrf.mxu0
      %5476 = vmatprep.mubr.bf16.mxu0 0
      %5477 = vmatmul.mubr.bf16.gmra.mxu0 %v5389
      %v5478 = vpop.f32.mrf.mxu0
      %v5479 = vadd.f32 0.0, %v5478
      %v5480 = vpop.f32.mrf.mxu0
      %v5481 = vpop.f32.mrf.mxu0
      %v5482 = vadd.f32 0.0, %v5481
      %v5483 = vpop.f32.mrf.mxu0
      %5484 = vmatprep.mubr.bf16.mxu0 0
      %5485 = vmatmul.mubr.bf16.gmra.mxu0 %v5392
      %v5486 = vpop.f32.mrf.mxu0
      %v5487 = vadd.f32 0.0, %v5486
      %v5488 = vpop.f32.mrf.mxu0
      %v5489 = vpop.f32.mrf.mxu0
      %v5490 = vadd.f32 0.0, %v5489
      %v5491 = vpop.f32.mrf.mxu0
      %5492 = vmatprep.mubr.bf16.mxu0 0
      %5493 = vmatmul.mubr.bf16.gmra.mxu0 %v5395
      %v5494 = vpop.f32.mrf.mxu0
      %v5495 = vadd.f32 0.0, %v5494
      %v5496 = vpop.f32.mrf.mxu0
      %v5497 = vpop.f32.mrf.mxu0
      %v5498 = vadd.f32 0.0, %v5497
      %v5499 = vpop.f32.mrf.mxu0
      %5500 = vmatprep.mubr.bf16.mxu0 0
      %5501 = vmatmul.mubr.bf16.gmra.mxu0 %v5398
      %v5502 = vpop.f32.mrf.mxu0
      %v5503 = vadd.f32 0.0, %v5502
      %v5504 = vpop.f32.mrf.mxu0
      %v5505 = vpop.f32.mrf.mxu0
      %v5506 = vadd.f32 0.0, %v5505
      %v5507 = vpop.f32.mrf.mxu0
      %5508 = vmatprep.mubr.bf16.mxu0 0
      %5509 = vmatmul.mubr.bf16.gmra.mxu0 %v5401
      %v5510 = vpop.f32.mrf.mxu0
      %v5511 = vadd.f32 0.0, %v5510
      %v5512 = vpop.f32.mrf.mxu0
      %v5513 = vpop.f32.mrf.mxu0
      %v5514 = vadd.f32 0.0, %v5513
      %v5515 = vpop.f32.mrf.mxu0
      %5516 = vmatprep.mubr.bf16.mxu0 0
      %5517 = vmatmul.mubr.bf16.gmra.mxu0 %v5404
      %v5518 = vpop.f32.mrf.mxu0
      %v5519 = vadd.f32 0.0, %v5518
      %v5520 = vpop.f32.mrf.mxu0
      %v5521 = vpop.f32.mrf.mxu0
      %v5522 = vadd.f32 0.0, %v5521
      %v5523 = vpop.f32.mrf.mxu0
      %5524 = vmatprep.mubr.bf16.mxu0 0
      %5525 = vmatmul.mubr.bf16.gmra.mxu0 %v5407
      %v5526 = vpop.f32.mrf.mxu0
      %v5527 = vadd.f32 0.0, %v5526
      %v5528 = vpop.f32.mrf.mxu0
      %v5529 = vpop.f32.mrf.mxu0
      %v5530 = vadd.f32 0.0, %v5529
      %v5531 = vpop.f32.mrf.mxu0
      %5532 = vmatprep.mubr.bf16.mxu0 0
      %5533 = vmatmul.mubr.bf16.gmra.mxu0 %v5410
      %v5534 = vpop.f32.mrf.mxu0
      %v5535 = vadd.f32 0.0, %v5534
      %v5536 = vpop.f32.mrf.mxu0
      %v5537 = vpop.f32.mrf.mxu0
      %v5538 = vadd.f32 0.0, %v5537
      %v5539 = vpop.f32.mrf.mxu0
      %5540 = vmatprep.mubr.bf16.mxu0 0
      %5541 = vmatmul.mubr.bf16.gmra.mxu0 %v5413
      %v5542 = vpop.f32.mrf.mxu0
      %v5543 = vadd.f32 0.0, %v5542
      %v5544 = vpop.f32.mrf.mxu0
      %v5545 = vpop.f32.mrf.mxu0
      %v5546 = vadd.f32 0.0, %v5545
      %v5547 = vpop.f32.mrf.mxu0
      %5548 = vmatprep.mubr.bf16.mxu0 0
      %5549 = vmatmul.mubr.bf16.gmra.mxu0 %v5416
      %v5550 = vpop.f32.mrf.mxu0
      %v5551 = vadd.f32 0.0, %v5550
      %v5552 = vpop.f32.mrf.mxu0
      %v5553 = vpop.f32.mrf.mxu0
      %v5554 = vadd.f32 0.0, %v5553
      %v5555 = vpop.f32.mrf.mxu0
      %5556 = vmatprep.mubr.bf16.mxu0 0
      %5557 = vmatmul.mubr.bf16.gmra.mxu0 %v5419
      %v5558 = vpop.f32.mrf.mxu0
      %v5559 = vadd.f32 0.0, %v5558
      %v5560 = vpop.f32.mrf.mxu0
      %v5561 = vpop.f32.mrf.mxu0
      %v5562 = vadd.f32 0.0, %v5561
      %v5563 = vpop.f32.mrf.mxu0
      %5564 = vmatprep.mubr.bf16.mxu0 0
      %5565 = vmatmul.mubr.bf16.gmra.mxu0 %v5422
      %v5566 = vpop.f32.mrf.mxu0
      %v5567 = vadd.f32 0.0, %v5566
      %v5568 = vpop.f32.mrf.mxu0
      %v5569 = vpop.f32.mrf.mxu0
      %v5570 = vadd.f32 0.0, %v5569
      %v5571 = vpop.f32.mrf.mxu0
      %5572 = vmatprep.mubr.bf16.mxu0 0
      %5573 = vmatmul.mubr.bf16.gmra.mxu0 %v5425
      %v5574 = vpop.f32.mrf.mxu0
      %v5575 = vadd.f32 0.0, %v5574
      %v5576 = vpop.f32.mrf.mxu0
      %v5577 = vpop.f32.mrf.mxu0
      %v5578 = vadd.f32 0.0, %v5577
      %v5579 = vpop.f32.mrf.mxu0
      %5580 = vmatprep.mubr.bf16.mxu0 0
      %5581 = vmatmul.mubr.bf16.gmra.mxu0 %v5428
      %v5582 = vpop.f32.mrf.mxu0
      %v5583 = vadd.f32 0.0, %v5582
      %v5584 = vpop.f32.mrf.mxu0
      %v5585 = vpop.f32.mrf.mxu0
      %v5586 = vadd.f32 0.0, %v5585
      %v5587 = vpop.f32.mrf.mxu0
      %5588 = vmatprep.mubr.bf16.mxu0 0
      %5589 = vmatmul.mubr.bf16.gmra.mxu0 %v5431
      %v5590 = vpop.f32.mrf.mxu0
      %v5591 = vadd.f32 0.0, %v5590
      %v5592 = vpop.f32.mrf.mxu0
      %v5593 = vpop.f32.mrf.mxu0
      %v5594 = vadd.f32 0.0, %v5593
      %v5595 = vpop.f32.mrf.mxu0
      %5596 = vdwg.mxu0
      %v5597 = vadd.f32 %v5128, %v5471
      %v5598 = vadd.f32 %v5129, %v5474
      %v5599 = vadd.f32 %v5130, %v5479
      %v5600 = vadd.f32 %v5131, %v5482
      %v5601 = vadd.f32 %v5132, %v5487
      %v5602 = vadd.f32 %v5133, %v5490
      %v5603 = vadd.f32 %v5134, %v5495
      %v5604 = vadd.f32 %v5135, %v5498
      %v5605 = vadd.f32 %v5136, %v5503
      %v5606 = vadd.f32 %v5137, %v5506
      %v5607 = vadd.f32 %v5138, %v5511
      %v5608 = vadd.f32 %v5139, %v5514
      %v5609 = vadd.f32 %v5140, %v5519
      %v5610 = vadd.f32 %v5141, %v5522
      %v5611 = vadd.f32 %v5142, %v5527
      %v5612 = vadd.f32 %v5143, %v5530
      %v5613 = vadd.f32 %v5144, %v5535
      %v5614 = vadd.f32 %v5145, %v5538
      %v5615 = vadd.f32 %v5146, %v5543
      %v5616 = vadd.f32 %v5147, %v5546
      %v5617 = vadd.f32 %v5148, %v5551
      %v5618 = vadd.f32 %v5149, %v5554
      %v5619 = vadd.f32 %v5150, %v5559
      %v5620 = vadd.f32 %v5151, %v5562
      %v5621 = vadd.f32 %v5152, %v5567
      %v5622 = vadd.f32 %v5153, %v5570
      %v5623 = vadd.f32 %v5154, %v5575
      %v5624 = vadd.f32 %v5155, %v5578
      %v5625 = vadd.f32 %v5156, %v5583
      %v5626 = vadd.f32 %v5157, %v5586
      %v5627 = vadd.f32 %v5158, %v5591
      %v5628 = vadd.f32 %v5159, %v5594
      %v5629 = vpack.c.bf16 %v5598, %v5597
      %v5630 = vpack.c.bf16 %v5600, %v5599
      %v5631 = vpack.c.bf16 %v5602, %v5601
      %v5632 = vpack.c.bf16 %v5604, %v5603
      %v5633 = vpack.c.bf16 %v5606, %v5605
      %v5634 = vpack.c.bf16 %v5608, %v5607
      %v5635 = vpack.c.bf16 %v5610, %v5609
      %v5636 = vpack.c.bf16 %v5612, %v5611
      %v5637 = vpack.c.bf16 %v5614, %v5613
      %v5638 = vpack.c.bf16 %v5616, %v5615
      %v5639 = vpack.c.bf16 %v5618, %v5617
      %v5640 = vpack.c.bf16 %v5620, %v5619
      %v5641 = vpack.c.bf16 %v5622, %v5621
      %v5642 = vpack.c.bf16 %v5624, %v5623
      %v5643 = vpack.c.bf16 %v5626, %v5625
      %v5644 = vpack.c.bf16 %v5628, %v5627
      %v5661 = vunpack.c.l.b16 %v5629
      %v5662 = vunpack.c.h.b16 %v5629
      %v5663 = vunpack.c.l.b16 %v5630
      %v5664 = vunpack.c.h.b16 %v5630
      %v5665 = vunpack.c.l.b16 %v5631
      %v5666 = vunpack.c.h.b16 %v5631
      %v5667 = vunpack.c.l.b16 %v5632
      %v5668 = vunpack.c.h.b16 %v5632
      %v5669 = vunpack.c.l.b16 %v5633
      %v5670 = vunpack.c.h.b16 %v5633
      %v5671 = vunpack.c.l.b16 %v5634
      %v5672 = vunpack.c.h.b16 %v5634
      %v5673 = vunpack.c.l.b16 %v5635
      %v5674 = vunpack.c.h.b16 %v5635
      %v5675 = vunpack.c.l.b16 %v5636
      %v5676 = vunpack.c.h.b16 %v5636
      %v5677 = vunpack.c.l.b16 %v5637
      %v5678 = vunpack.c.h.b16 %v5637
      %v5679 = vunpack.c.l.b16 %v5638
      %v5680 = vunpack.c.h.b16 %v5638
      %v5681 = vunpack.c.l.b16 %v5639
      %v5682 = vunpack.c.h.b16 %v5639
      %v5683 = vunpack.c.l.b16 %v5640
      %v5684 = vunpack.c.h.b16 %v5640
      %v5685 = vunpack.c.l.b16 %v5641
      %v5686 = vunpack.c.h.b16 %v5641
      %v5687 = vunpack.c.l.b16 %v5642
      %v5688 = vunpack.c.h.b16 %v5642
      %v5689 = vunpack.c.l.b16 %v5643
      %v5690 = vunpack.c.h.b16 %v5643
      %v5691 = vunpack.c.l.b16 %v5644
      %v5692 = vunpack.c.h.b16 %v5644
      %v5693 = vpack.c.b16 %v5661, %v5661
      %v5694 = vpack.c.b16 %v5662, %v5662
      %v5695 = vpack.c.b16 %v5663, %v5663
      %v5696 = vpack.c.b16 %v5664, %v5664
      %v5697 = vpack.c.b16 %v5665, %v5665
      %v5698 = vpack.c.b16 %v5666, %v5666
      %v5699 = vpack.c.b16 %v5667, %v5667
      %v5700 = vpack.c.b16 %v5668, %v5668
      %v5701 = vpack.c.b16 %v5669, %v5669
      %v5702 = vpack.c.b16 %v5670, %v5670
      %v5703 = vpack.c.b16 %v5671, %v5671
      %v5704 = vpack.c.b16 %v5672, %v5672
      %v5705 = vpack.c.b16 %v5673, %v5673
      %v5706 = vpack.c.b16 %v5674, %v5674
      %v5707 = vpack.c.b16 %v5675, %v5675
      %v5708 = vpack.c.b16 %v5676, %v5676
      %v5709 = vpack.c.b16 %v5677, %v5677
      %v5710 = vpack.c.b16 %v5678, %v5678
      %v5711 = vpack.c.b16 %v5679, %v5679
      %v5712 = vpack.c.b16 %v5680, %v5680
      %v5713 = vpack.c.b16 %v5681, %v5681
      %v5714 = vpack.c.b16 %v5682, %v5682
      %v5715 = vpack.c.b16 %v5683, %v5683
      %v5716 = vpack.c.b16 %v5684, %v5684
      %v5717 = vpack.c.b16 %v5685, %v5685
      %v5718 = vpack.c.b16 %v5686, %v5686
      %v5719 = vpack.c.b16 %v5687, %v5687
      %v5720 = vpack.c.b16 %v5688, %v5688
      %v5721 = vpack.c.b16 %v5689, %v5689
      %v5722 = vpack.c.b16 %v5690, %v5690
      %v5723 = vpack.c.b16 %v5691, %v5691
      %v5724 = vpack.c.b16 %v5692, %v5692
      %5757 = vst [vmem:[%s457] sm:$0xf] %v5693
      %5758 = vst [vmem:[%s457 + $0x4] sm:$0xf] %v5694
      %5759 = vst [vmem:[%s457 + $0x8] sm:$0xf] %v5695
      %5760 = vst [vmem:[%s457 + $0xc] sm:$0xf] %v5696
      %5761 = vst [vmem:[%s457 + $0x10] sm:$0xf] %v5697
      %5762 = vst [vmem:[%s457 + $0x14] sm:$0xf] %v5698
      %5763 = vst [vmem:[%s457 + $0x18] sm:$0xf] %v5699
      %5764 = vst [vmem:[%s457 + $0x1c] sm:$0xf] %v5700
      %5765 = vst [vmem:[%s457 + $0x20] sm:$0xf] %v5701
      %5766 = vst [vmem:[%s457 + $0x24] sm:$0xf] %v5702
      %5767 = vst [vmem:[%s457 + $0x28] sm:$0xf] %v5703
      %5768 = vst [vmem:[%s457 + $0x2c] sm:$0xf] %v5704
      %5769 = vst [vmem:[%s457 + $0x30] sm:$0xf] %v5705
      %5770 = vst [vmem:[%s457 + $0x34] sm:$0xf] %v5706
      %5771 = vst [vmem:[%s457 + $0x38] sm:$0xf] %v5707
      %5772 = vst [vmem:[%s457 + $0x3c] sm:$0xf] %v5708
      %5773 = vst [vmem:[%s457 + $0x40] sm:$0xf] %v5709
      %5774 = vst [vmem:[%s457 + $0x44] sm:$0xf] %v5710
      %5775 = vst [vmem:[%s457 + $0x48] sm:$0xf] %v5711
      %5776 = vst [vmem:[%s457 + $0x4c] sm:$0xf] %v5712
      %5777 = vst [vmem:[%s457 + $0x50] sm:$0xf] %v5713
      %5778 = vst [vmem:[%s457 + $0x54] sm:$0xf] %v5714
      %5779 = vst [vmem:[%s457 + $0x58] sm:$0xf] %v5715
      %5780 = vst [vmem:[%s457 + $0x5c] sm:$0xf] %v5716
      %5781 = vst [vmem:[%s457 + $0x60] sm:$0xf] %v5717
      %5782 = vst [vmem:[%s457 + $0x64] sm:$0xf] %v5718
      %5783 = vst [vmem:[%s457 + $0x68] sm:$0xf] %v5719
      %5784 = vst [vmem:[%s457 + $0x6c] sm:$0xf] %v5720
      %5785 = vst [vmem:[%s457 + $0x70] sm:$0xf] %v5721
      %5786 = vst [vmem:[%s457 + $0x74] sm:$0xf] %v5722
      %5787 = vst [vmem:[%s457 + $0x78] sm:$0xf] %v5723
      %5788 = vst [vmem:[%s457 + $0x7c] sm:$0xf] %v5724
      %v5789 = vadd.f32 %v5597, %v5598
      %v5790 = vadd.f32 %v5789, %v5599
      %v5791 = vadd.f32 %v5790, %v5600
      %v5792 = vadd.f32 %v5791, %v5601
      %v5793 = vadd.f32 %v5792, %v5602
      %v5794 = vadd.f32 %v5793, %v5603
      %v5795 = vadd.f32 %v5794, %v5604
      %v5796 = vadd.f32 %v5795, %v5605
      %v5797 = vadd.f32 %v5796, %v5606
      %v5798 = vadd.f32 %v5797, %v5607
      %v5799 = vadd.f32 %v5798, %v5608
      %v5800 = vadd.f32 %v5799, %v5609
      %v5801 = vadd.f32 %v5800, %v5610
      %v5802 = vadd.f32 %v5801, %v5611
      %v5803 = vadd.f32 %v5802, %v5612
      %v5804 = vadd.f32 %v5803, %v5613
      %v5805 = vadd.f32 %v5804, %v5614
      %v5806 = vadd.f32 %v5805, %v5615
      %v5807 = vadd.f32 %v5806, %v5616
      %v5808 = vadd.f32 %v5807, %v5617
      %v5809 = vadd.f32 %v5808, %v5618
      %v5810 = vadd.f32 %v5809, %v5619
      %v5811 = vadd.f32 %v5810, %v5620
      %v5812 = vadd.f32 %v5811, %v5621
      %v5813 = vadd.f32 %v5812, %v5622
      %v5814 = vadd.f32 %v5813, %v5623
      %v5815 = vadd.f32 %v5814, %v5624
      %v5816 = vadd.f32 %v5815, %v5625
      %v5817 = vadd.f32 %v5816, %v5626
      %v5818 = vadd.f32 %v5817, %v5627
      %v5819 = vadd.f32 %v5818, %v5628
      %v5820 = vrot.slane %v5819, 4
      %v5821 = vadd.f32 %v5819, %v5820
      %v5822 = vrot.slane %v5821, 2
      %v5823 = vadd.f32 %v5821, %v5822
      %v5824 = vrot.slane %v5823, 1
      %v5825 = vadd.f32 %v5823, %v5824
      %v5826 = vmul.f32 %v5597, %v5597
      %v5827 = vmul.f32 %v5598, %v5598
      %v5828 = vmul.f32 %v5599, %v5599
      %v5829 = vmul.f32 %v5600, %v5600
      %v5830 = vmul.f32 %v5601, %v5601
      %v5831 = vmul.f32 %v5602, %v5602
      %v5832 = vmul.f32 %v5603, %v5603
      %v5833 = vmul.f32 %v5604, %v5604
      %v5834 = vmul.f32 %v5605, %v5605
      %v5835 = vmul.f32 %v5606, %v5606
      %v5836 = vmul.f32 %v5607, %v5607
      %v5837 = vmul.f32 %v5608, %v5608
      %v5838 = vmul.f32 %v5609, %v5609
      %v5839 = vmul.f32 %v5610, %v5610
      %v5840 = vmul.f32 %v5611, %v5611
      %v5841 = vmul.f32 %v5612, %v5612
      %v5842 = vmul.f32 %v5613, %v5613
      %v5843 = vmul.f32 %v5614, %v5614
      %v5844 = vmul.f32 %v5615, %v5615
      %v5845 = vmul.f32 %v5616, %v5616
      %v5846 = vmul.f32 %v5617, %v5617
      %v5847 = vmul.f32 %v5618, %v5618
      %v5848 = vmul.f32 %v5619, %v5619
      %v5849 = vmul.f32 %v5620, %v5620
      %v5850 = vmul.f32 %v5621, %v5621
      %v5851 = vmul.f32 %v5622, %v5622
      %v5852 = vmul.f32 %v5623, %v5623
      %v5853 = vmul.f32 %v5624, %v5624
      %v5854 = vmul.f32 %v5625, %v5625
      %v5855 = vmul.f32 %v5626, %v5626
      %v5856 = vmul.f32 %v5627, %v5627
      %v5857 = vmul.f32 %v5628, %v5628
      %v5858 = vadd.f32 %v5826, %v5827
      %v5859 = vadd.f32 %v5858, %v5828
      %v5860 = vadd.f32 %v5859, %v5829
      %v5861 = vadd.f32 %v5860, %v5830
      %v5862 = vadd.f32 %v5861, %v5831
      %v5863 = vadd.f32 %v5862, %v5832
      %v5864 = vadd.f32 %v5863, %v5833
      %v5865 = vadd.f32 %v5864, %v5834
      %v5866 = vadd.f32 %v5865, %v5835
      %v5867 = vadd.f32 %v5866, %v5836
      %v5868 = vadd.f32 %v5867, %v5837
      %v5869 = vadd.f32 %v5868, %v5838
      %v5870 = vadd.f32 %v5869, %v5839
      %v5871 = vadd.f32 %v5870, %v5840
      %v5872 = vadd.f32 %v5871, %v5841
      %v5873 = vadd.f32 %v5872, %v5842
      %v5874 = vadd.f32 %v5873, %v5843
      %v5875 = vadd.f32 %v5874, %v5844
      %v5876 = vadd.f32 %v5875, %v5845
      %v5877 = vadd.f32 %v5876, %v5846
      %v5878 = vadd.f32 %v5877, %v5847
      %v5879 = vadd.f32 %v5878, %v5848
      %v5880 = vadd.f32 %v5879, %v5849
      %v5881 = vadd.f32 %v5880, %v5850
      %v5882 = vadd.f32 %v5881, %v5851
      %v5883 = vadd.f32 %v5882, %v5852
      %v5884 = vadd.f32 %v5883, %v5853
      %v5885 = vadd.f32 %v5884, %v5854
      %v5886 = vadd.f32 %v5885, %v5855
      %v5887 = vadd.f32 %v5886, %v5856
      %v5888 = vadd.f32 %v5887, %v5857
      %v5889 = vrot.slane %v5888, 4
      %v5890 = vadd.f32 %v5888, %v5889
      %v5891 = vrot.slane %v5890, 2
      %v5892 = vadd.f32 %v5890, %v5891
      %v5893 = vrot.slane %v5892, 1
      %v5894 = vadd.f32 %v5892, %v5893
      %vm5895 = vcmask 1040384
      %v5896 = vsel %vm5895, %v5825, %v5894
      %5897 = vst [vmem:[%s465] sm:$0x3] %v5896
      %s5898 = smul.u32 16, %s24
      %p5899 = scmp.lt.s32.totalorder %s23, 1
      %s5900 = scalar_select %p5899, %s23, 1
      %p5901 = scmp.lt.s32.totalorder %s5898, 15
      %s5902 = scalar_select %p5901, %s5898, 15
      %s5903 = smul.addr %s5902, 2
      %s5904 = smul.addr %s5900, 32
      %s5905 = sadd.s32 %s5903, %s5904
      %s5906 = smul.addr %s5905, 4
      %s5907 = scalar_lea.vmem %s6, %s5906
      %p5908 = scmp.lt.s32.totalorder %s23, 1
      %s5909 = scalar_select %p5908, %s23, 1
      %p5910 = scmp.lt.s32.totalorder %s24, 0
      %s5911 = scalar_select %p5910, %s24, 0
      %s5912 = sadd.s32 %s5911, %s5909
      %s5913 = smul.addr %s5912, 2
      %s5914 = scalar_lea.vmem %s7, %s5913
      // Predicated region
      $region45: #{double_conv_forward.3} parent=43 // pred_check
        %p5915 = pneg %p214
      $region46: #{double_conv_forward.3} parent=43 // pred_check_branch
        %5917 = sbr.rel (%p5915) target = $region48
      $region47: #{double_conv_forward.3} parent=43 // pred_region
        %s5918 = smul.u32 16, %s24
      $region48: #{double_conv_forward.3} parent=43 // pred_fallthru
        _
      // Predicated region
      $region49: #{double_conv_forward.3} parent=43 // pred_check
        %p5919 = pneg %p242
      $region50: #{double_conv_forward.3} parent=43 // pred_check_branch
        %5921 = sbr.rel (%p5919) target = $region52
      $region51: #{double_conv_forward.3} parent=43 // pred_region
        _
      $region52: #{double_conv_forward.3} parent=43 // pred_fallthru
        _
    $region44: #{double_conv_forward.3} parent=5 // pred_fallthru
      _
    %p5922 = scmp.le.s32.totalorder 2, %s14
    // Predicated region
    $region53: #{double_conv_forward.3} parent=5 // pred_check
      %p5923 = pneg %p5922
    $region54: #{double_conv_forward.3} parent=5 // pred_check_branch
      %5925 = sbr.rel (%p5923) target = $region56
    $region55: #{double_conv_forward.3} parent=5 // pred_region
      %s5926 = ssub.s32 %s14, 2
      // Predicated region
      $region57: #{double_conv_forward.3} parent=55 // pred_check
        %p5927 = pneg %p220
      $region58: #{double_conv_forward.3} parent=55 // pred_check_branch
        %5929 = sbr.rel (%p5927) target = $region60
      $region59: #{double_conv_forward.3} parent=55 // pred_region
        %s5930 = smul.u32 16, %s26
        %p5931 = scmp.lt.s32.totalorder %s25, 1
        %s5932 = scalar_select %p5931, %s25, 1
        %p5933 = scmp.lt.s32.totalorder %s5930, 15
        %s5934 = scalar_select %p5933, %s5930, 15
        %s5935 = smul.addr %s5934, 2
        %s5936 = smul.addr %s5932, 32
        %s5937 = sadd.s32 %s5935, %s5936
        %s5938 = smul.addr %s5937, 4
        %s5939 = scalar_lea.vmem %s6, %s5938
      $region60: #{double_conv_forward.3} parent=55 // pred_fallthru
        _
      // Predicated region
      $region61: #{double_conv_forward.3} parent=55 // pred_check
        %p5940 = pneg %p248
      $region62: #{double_conv_forward.3} parent=55 // pred_check_branch
        %5942 = sbr.rel (%p5940) target = $region64
      $region63: #{double_conv_forward.3} parent=55 // pred_region
        %p5943 = scmp.lt.s32.totalorder %s25, 1
        %s5944 = scalar_select %p5943, %s25, 1
        %p5945 = scmp.lt.s32.totalorder %s26, 0
        %s5946 = scalar_select %p5945, %s26, 0
        %s5947 = sadd.s32 %s5946, %s5944
        %s5948 = smul.addr %s5947, 2
        %s5949 = scalar_lea.vmem %s7, %s5948
      $region64: #{double_conv_forward.3} parent=55 // pred_fallthru
        _
    $region56: #{double_conv_forward.3} parent=5 // pred_fallthru
      _
  $region6: #{double_conv_forward.3} parent=0 // loop_footer
    %s18 = sadd.s32 1, %s14
  $region7: #{double_conv_forward.3} parent=0 // loop_footer_branch
    %13 = sbr.rel target = $region3
  $region8: #{double_conv_forward.3} parent=0 // loop_exit
    _

// kernel: double_conv_forward.4
$region0: #{double_conv_forward.4}
  #allocation0 [shape = 'u32[]', space=smem, size = 0x4, offset = 0x4, fixed_abs, tag = 'smem constant byte address 0x4 - core index']
  #allocation1 [shape = 'u32[144,128]{1,0:T(1,128)}', space=vmem, size = 0x12000, scoped, tag = 'internal scratch']
  #allocation2 [shape = 'bf16[18,18,128]{2,1,0:T(8,128)(2,1)}', space=vmem, size = 0x1b000, scoped, tag = 'scratch operand']
  %s0 = inlined_call_operand.vmem [shape: bf16[2,16,16,128], index: 0, kind: input, shape index: {}, may-alias: {0,1,2}]
  %s1 = inlined_call_operand.vmem [shape: bf16[2,16,16,128], index: 1, kind: input, shape index: {}, may-alias: {0,1,2}]
  %s2 = inlined_call_operand.vmem [shape: bf16[2,16,16,128], index: 2, kind: input, shape index: {}, may-alias: {0,1,2}]
  %s3 = inlined_call_operand.vmem [shape: bf16[1152,128], index: 3, kind: input, shape index: {}]
  %s4 = inlined_call_operand.vmem [shape: f32[1,128], index: 4, kind: input, shape index: {}]
  %s5 = inlined_call_operand.vmem [shape: f32[1,128], index: 5, kind: input, shape index: {}]
  %s6 = inlined_call_operand.vmem [shape: bf16[2,16,16,128], index: 6, kind: output, shape index: {0}]
  %s7 = inlined_call_operand.vmem [shape: f32[2,1,2,128], index: 7, kind: output, shape index: {1}]
  %8 = xla_tuple %s6, %s7
  %s9 = sld [smem:[#allocation0]]
  $region65: #{double_conv_forward.4} parent=0
    _
  %s11 = ssub.s32 1, %s9
  %s12 = scalar_select 0, %s11, %s9
  loop: start=0, step=1, limit=4
  $region2: #{double_conv_forward.4} parent=0 // loop_pre_header
    _
  $region3: #{double_conv_forward.4} parent=0 // loop_header
    %s14 = sphi 0, %s18
    %p15 = scmp.ge.s32.totalorder %s14, 4
    %s21 = sphi 0, %s33
    %s22 = sphi 0, %s29
    %s23 = sphi 0, %s21
    %s24 = sphi 0, %s22
    %s25 = sphi 0, %s23
    %s26 = sphi 0, %s24
    %s38 = sphi 0, %s40
    %s41 = sphi 0, %s38
    %s42 = sphi 0, %s41
    %s58 = sphi 0, %s42
    %s74 = sphi 0, %s76
    %s77 = sphi 0, %s74
    %s78 = sphi 0, %s77
    %s94 = sphi 0, %s78
    %s110 = sphi 0, %s112
    %s113 = sphi 0, %s110
    %s114 = sphi 0, %s113
    %s130 = sphi 0, %s114
    %s134 = sphi 0, %s134
    %s136 = sphi 0, %s134
    %s137 = sphi 0, %s136
    %s151 = sphi 0, %s137
    %s155 = sphi 0, %s155
    %s157 = sphi 0, %s155
    %s158 = sphi 0, %s157
    %s172 = sphi 0, %s158
    %s176 = sphi 0, %s176
    %s178 = sphi 0, %s176
    %s179 = sphi 0, %s178
    %s193 = sphi 0, %s179
    %s201 = sphi 0, %s203
    %s204 = sphi 0, %s201
    %s205 = sphi 0, %s204
    %s221 = sphi 0, %s205
    %s229 = sphi 0, %s231
    %s232 = sphi 0, %s229
    %s233 = sphi 0, %s232
    %s249 = sphi 0, %s233
  $region4: #{double_conv_forward.4} parent=0 // loop_header_branch
    %17 = sbr.rel (%p15) target = $region8
  $region5: #{double_conv_forward.4} parent=0 // loop_body
    %s19 = ssub.s32 %s14, 1
    %s20 = ssub.s32 %s14, 2
    %s27 = sadd.s32 1, %s22
    %p28 = scmp.ge.s32.totalorder %s27, 1
    %s29 = scalar_select %p28, 0, %s27
    %s30 = sadd.s32 1, %s21
    %s31 = scalar_select %p28, %s30, %s21
    %p32 = scmp.ge.s32.totalorder %s31, 2
    %s33 = scalar_select %p32, 0, %s31
    %s34 = ssub.s32 %s21, %s33
    %s35 = ssub.s32 %s22, %s29
    %s36 = sor.u32 %s34, %s35
    %p37 = scmp.eq.s32.totalorder %s36, 0
    %s39 = sadd.s32 %s38, 1
    %s40 = scalar_select %p37, %s38, %s39
    %p43 = pneg %p37
    %p44 = scmp.eq.s32.totalorder %s14, 1
    %p45 = por %p43, %p44
    %p46 = scmp.ne.s32.totalorder %s38, %s41
    %p47 = scmp.eq.s32.totalorder %s14, 0
    %p48 = por %p46, %p47
    %p49 = scmp.ne.s32.totalorder %s38, %s41
    %p50 = scmp.eq.s32.totalorder %s19, 1
    %p51 = por %p49, %p50
    %p52 = scmp.ne.s32.totalorder %s41, %s42
    %p53 = scmp.eq.s32.totalorder %s19, 0
    %p54 = por %p52, %p53
    %p55 = scmp.ne.s32.totalorder %s41, %s42
    %p56 = scmp.eq.s32.totalorder %s20, 1
    %p57 = por %p55, %p56
    %p59 = scmp.ne.s32.totalorder %s42, %s58
    %p60 = scmp.eq.s32.totalorder %s20, 0
    %p61 = por %p59, %p60
    %s62 = smul.u32 %s22, 16
    %s63 = ssub.s32 %s62, 1
    %p64 = scmp.gt.s32.totalorder %s63, 0
    %s65 = scalar_select %p64, %s63, 0
    %s66 = smul.u32 %s29, 16
    %s67 = ssub.s32 %s66, 1
    %p68 = scmp.gt.s32.totalorder %s67, 0
    %s69 = scalar_select %p68, %s67, 0
    %s70 = ssub.s32 %s21, %s33
    %s71 = ssub.s32 %s65, %s69
    %s72 = sor.u32 %s70, %s71
    %p73 = scmp.eq.s32.totalorder %s72, 0
    %s75 = sadd.s32 %s74, 1
    %s76 = scalar_select %p73, %s74, %s75
    %p79 = pneg %p73
    %p80 = scmp.eq.s32.totalorder %s14, 1
    %p81 = por %p79, %p80
    %p82 = scmp.ne.s32.totalorder %s74, %s77
    %p83 = scmp.eq.s32.totalorder %s14, 0
    %p84 = por %p82, %p83
    %p85 = scmp.ne.s32.totalorder %s74, %s77
    %p86 = scmp.eq.s32.totalorder %s19, 1
    %p87 = por %p85, %p86
    %p88 = scmp.ne.s32.totalorder %s77, %s78
    %p89 = scmp.eq.s32.totalorder %s19, 0
    %p90 = por %p88, %p89
    %p91 = scmp.ne.s32.totalorder %s77, %s78
    %p92 = scmp.eq.s32.totalorder %s20, 1
    %p93 = por %p91, %p92
    %p95 = scmp.ne.s32.totalorder %s78, %s94
    %p96 = scmp.eq.s32.totalorder %s20, 0
    %p97 = por %p95, %p96
    %s98 = sadd.s32 %s22, 1
    %s99 = smul.u32 %s98, 16
    %p100 = scmp.lt.s32.totalorder %s99, 15
    %s101 = scalar_select %p100, %s99, 15
    %s102 = sadd.s32 %s29, 1
    %s103 = smul.u32 %s102, 16
    %p104 = scmp.lt.s32.totalorder %s103, 15
    %s105 = scalar_select %p104, %s103, 15
    %s106 = ssub.s32 %s21, %s33
    %s107 = ssub.s32 %s101, %s105
    %s108 = sor.u32 %s106, %s107
    %p109 = scmp.eq.s32.totalorder %s108, 0
    %s111 = sadd.s32 %s110, 1
    %s112 = scalar_select %p109, %s110, %s111
    %p115 = pneg %p109
    %p116 = scmp.eq.s32.totalorder %s14, 1
    %p117 = por %p115, %p116
    %p118 = scmp.ne.s32.totalorder %s110, %s113
    %p119 = scmp.eq.s32.totalorder %s14, 0
    %p120 = por %p118, %p119
    %p121 = scmp.ne.s32.totalorder %s110, %s113
    %p122 = scmp.eq.s32.totalorder %s19, 1
    %p123 = por %p121, %p122
    %p124 = scmp.ne.s32.totalorder %s113, %s114
    %p125 = scmp.eq.s32.totalorder %s19, 0
    %p126 = por %p124, %p125
    %p127 = scmp.ne.s32.totalorder %s113, %s114
    %p128 = scmp.eq.s32.totalorder %s20, 1
    %p129 = por %p127, %p128
    %p131 = scmp.ne.s32.totalorder %s114, %s130
    %p132 = scmp.eq.s32.totalorder %s20, 0
    %p133 = por %p131, %p132
    %s135 = sadd.s32 %s134, 1
    %p138 = scmp.eq.s32.totalorder %s14, 1
    %p139 = scmp.ne.s32.totalorder %s134, %s136
    %p140 = scmp.eq.s32.totalorder %s14, 0
    %p141 = por %p139, %p140
    %p142 = scmp.ne.s32.totalorder %s134, %s136
    %p143 = scmp.eq.s32.totalorder %s19, 1
    %p144 = por %p142, %p143
    %p145 = scmp.ne.s32.totalorder %s136, %s137
    %p146 = scmp.eq.s32.totalorder %s19, 0
    %p147 = por %p145, %p146
    %p148 = scmp.ne.s32.totalorder %s136, %s137
    %p149 = scmp.eq.s32.totalorder %s20, 1
    %p150 = por %p148, %p149
    %p152 = scmp.ne.s32.totalorder %s137, %s151
    %p153 = scmp.eq.s32.totalorder %s20, 0
    %p154 = por %p152, %p153
    %s156 = sadd.s32 %s155, 1
    %p159 = scmp.eq.s32.totalorder %s14, 1
    %p160 = scmp.ne.s32.totalorder %s155, %s157
    %p161 = scmp.eq.s32.totalorder %s14, 0
    %p162 = por %p160, %p161
    %p163 = scmp.ne.s32.totalorder %s155, %s157
    %p164 = scmp.eq.s32.totalorder %s19, 1
    %p165 = por %p163, %p164
    %p166 = scmp.ne.s32.totalorder %s157, %s158
    %p167 = scmp.eq.s32.totalorder %s19, 0
    %p168 = por %p166, %p167
    %p169 = scmp.ne.s32.totalorder %s157, %s158
    %p170 = scmp.eq.s32.totalorder %s20, 1
    %p171 = por %p169, %p170
    %p173 = scmp.ne.s32.totalorder %s158, %s172
    %p174 = scmp.eq.s32.totalorder %s20, 0
    %p175 = por %p173, %p174
    %s177 = sadd.s32 %s176, 1
    %p180 = scmp.eq.s32.totalorder %s14, 1
    %p181 = scmp.ne.s32.totalorder %s176, %s178
    %p182 = scmp.eq.s32.totalorder %s14, 0
    %p183 = por %p181, %p182
    %p184 = scmp.ne.s32.totalorder %s176, %s178
    %p185 = scmp.eq.s32.totalorder %s19, 1
    %p186 = por %p184, %p185
    %p187 = scmp.ne.s32.totalorder %s178, %s179
    %p188 = scmp.eq.s32.totalorder %s19, 0
    %p189 = por %p187, %p188
    %p190 = scmp.ne.s32.totalorder %s178, %s179
    %p191 = scmp.eq.s32.totalorder %s20, 1
    %p192 = por %p190, %p191
    %p194 = scmp.ne.s32.totalorder %s179, %s193
    %p195 = scmp.eq.s32.totalorder %s20, 0
    %p196 = por %p194, %p195
    %s197 = ssub.s32 %s21, %s33
    %s198 = ssub.s32 %s22, %s29
    %s199 = sor.u32 %s197, %s198
    %p200 = scmp.eq.s32.totalorder %s199, 0
    %s202 = sadd.s32 %s201, 1
    %s203 = scalar_select %p200, %s201, %s202
    %p206 = pneg %p200
    %p207 = scmp.eq.s32.totalorder %s14, 1
    %p208 = por %p206, %p207
    %p209 = scmp.ne.s32.totalorder %s201, %s204
    %p210 = scmp.eq.s32.totalorder %s14, 0
    %p211 = por %p209, %p210
    %p212 = scmp.ne.s32.totalorder %s201, %s204
    %p213 = scmp.eq.s32.totalorder %s19, 1
    %p214 = por %p212, %p213
    %p215 = scmp.ne.s32.totalorder %s204, %s205
    %p216 = scmp.eq.s32.totalorder %s19, 0
    %p217 = por %p215, %p216
    %p218 = scmp.ne.s32.totalorder %s204, %s205
    %p219 = scmp.eq.s32.totalorder %s20, 1
    %p220 = por %p218, %p219
    %p222 = scmp.ne.s32.totalorder %s205, %s221
    %p223 = scmp.eq.s32.totalorder %s20, 0
    %p224 = por %p222, %p223
    %s225 = ssub.s32 %s21, %s33
    %s226 = ssub.s32 %s22, %s29
    %s227 = sor.u32 %s225, %s226
    %p228 = scmp.eq.s32.totalorder %s227, 0
    %s230 = sadd.s32 %s229, 1
    %s231 = scalar_select %p228, %s229, %s230
    %p234 = pneg %p228
    %p235 = scmp.eq.s32.totalorder %s14, 1
    %p236 = por %p234, %p235
    %p237 = scmp.ne.s32.totalorder %s229, %s232
    %p238 = scmp.eq.s32.totalorder %s14, 0
    %p239 = por %p237, %p238
    %p240 = scmp.ne.s32.totalorder %s229, %s232
    %p241 = scmp.eq.s32.totalorder %s19, 1
    %p242 = por %p240, %p241
    %p243 = scmp.ne.s32.totalorder %s232, %s233
    %p244 = scmp.eq.s32.totalorder %s19, 0
    %p245 = por %p243, %p244
    %p246 = scmp.ne.s32.totalorder %s232, %s233
    %p247 = scmp.eq.s32.totalorder %s20, 1
    %p248 = por %p246, %p247
    %p250 = scmp.ne.s32.totalorder %s233, %s249
    %p251 = scmp.eq.s32.totalorder %s20, 0
    %p252 = por %p250, %p251
    %p253 = scmp.le.s32.totalorder 1, %s14
    %p254 = scmp.lt.s32.totalorder %s14, 3
    %p255 = pnand %p253, %p254
    %p256 = pneg %p255
    // Predicated region
    $region9: #{double_conv_forward.4} parent=5 // pred_check
      _
    $region10: #{double_conv_forward.4} parent=5 // pred_check_branch
      %258 = sbr.rel (%p255) target = $region12
    $region11: #{double_conv_forward.4} parent=5 // pred_region
      %s259 = ssub.s32 %s14, 1
      // Predicated region
      $region13: #{double_conv_forward.4} parent=11 // pred_check
        %p260 = pneg %p147
      $region14: #{double_conv_forward.4} parent=11 // pred_check_branch
        %262 = sbr.rel (%p260) target = $region16
      $region15: #{double_conv_forward.4} parent=11 // pred_region
        _
      $region16: #{double_conv_forward.4} parent=11 // pred_fallthru
        _
      // Predicated region
      $region17: #{double_conv_forward.4} parent=11 // pred_check
        %p263 = pneg %p168
      $region18: #{double_conv_forward.4} parent=11 // pred_check_branch
        %265 = sbr.rel (%p263) target = $region20
      $region19: #{double_conv_forward.4} parent=11 // pred_region
        _
      $region20: #{double_conv_forward.4} parent=11 // pred_fallthru
        _
      // Predicated region
      $region21: #{double_conv_forward.4} parent=11 // pred_check
        %p266 = pneg %p189
      $region22: #{double_conv_forward.4} parent=11 // pred_check_branch
        %268 = sbr.rel (%p266) target = $region24
      $region23: #{double_conv_forward.4} parent=11 // pred_region
        _
      $region24: #{double_conv_forward.4} parent=11 // pred_fallthru
        _
    $region12: #{double_conv_forward.4} parent=5 // pred_fallthru
      _
    %p269 = scmp.lt.s32.totalorder %s14, 2
    // Predicated region
    $region25: #{double_conv_forward.4} parent=5 // pred_check
      %p270 = pneg %p269
    $region26: #{double_conv_forward.4} parent=5 // pred_check_branch
      %272 = sbr.rel (%p270) target = $region28
    $region27: #{double_conv_forward.4} parent=5 // pred_region
      // Predicated region
      $region29: #{double_conv_forward.4} parent=27 // pred_check
        %p273 = pneg %p48
      $region30: #{double_conv_forward.4} parent=27 // pred_check_branch
        %275 = sbr.rel (%p273) target = $region32
      $region31: #{double_conv_forward.4} parent=27 // pred_region
        %s276 = smul.u32 16, %s22
        %p277 = scmp.lt.s32.totalorder %s21, 1
        %s278 = scalar_select %p277, %s21, 1
        %p279 = scmp.lt.s32.totalorder %s276, 15
        %s280 = scalar_select %p279, %s276, 15
        %s281 = smul.addr %s280, 2
        %s282 = smul.addr %s278, 32
        %s283 = sadd.s32 %s281, %s282
        %s284 = smul.addr %s283, 4
        %s285 = scalar_lea.vmem %s0, %s284
        %s286 = smul.u32 16, %s22
      $region32: #{double_conv_forward.4} parent=27 // pred_fallthru
        _
      // Predicated region
      $region33: #{double_conv_forward.4} parent=27 // pred_check
        %p287 = pneg %p84
      $region34: #{double_conv_forward.4} parent=27 // pred_check_branch
        %289 = sbr.rel (%p287) target = $region36
      $region35: #{double_conv_forward.4} parent=27 // pred_region
        %s290 = smul.u32 %s22, 16
        %s291 = ssub.s32 %s290, 1
        %p292 = scmp.gt.s32.totalorder %s291, 0
        %s293 = scalar_select %p292, %s291, 0
        %p294 = scmp.lt.s32.totalorder %s21, 1
        %s295 = scalar_select %p294, %s21, 1
        %p296 = scmp.lt.s32.totalorder %s293, 15
        %s297 = scalar_select %p296, %s293, 15
        %s298 = smul.addr %s297, 2
        %s299 = smul.addr %s295, 32
        %s300 = sadd.s32 %s298, %s299
        %s301 = smul.addr %s300, 4
        %s302 = scalar_lea.vmem %s1, %s301
        %s303 = smul.u32 %s22, 16
        %s304 = ssub.s32 %s303, 1
        %p305 = scmp.gt.s32.totalorder %s304, 0
        %s306 = scalar_select %p305, %s304, 0
      $region36: #{double_conv_forward.4} parent=27 // pred_fallthru
        _
      // Predicated region
      $region37: #{double_conv_forward.4} parent=27 // pred_check
        %p307 = pneg %p120
      $region38: #{double_conv_forward.4} parent=27 // pred_check_branch
        %309 = sbr.rel (%p307) target = $region40
      $region39: #{double_conv_forward.4} parent=27 // pred_region
        %s310 = sadd.s32 %s22, 1
        %s311 = smul.u32 %s310, 16
        %p312 = scmp.lt.s32.totalorder %s311, 15
        %s313 = scalar_select %p312, %s311, 15
        %p314 = scmp.lt.s32.totalorder %s21, 1
        %s315 = scalar_select %p314, %s21, 1
        %p316 = scmp.lt.s32.totalorder %s313, 15
        %s317 = scalar_select %p316, %s313, 15
        %s318 = smul.addr %s317, 2
        %s319 = smul.addr %s315, 32
        %s320 = sadd.s32 %s318, %s319
        %s321 = smul.addr %s320, 4
        %s322 = scalar_lea.vmem %s2, %s321
        %s323 = sadd.s32 %s22, 1
        %s324 = smul.u32 %s323, 16
        %p325 = scmp.lt.s32.totalorder %s324, 15
        %s326 = scalar_select %p325, %s324, 15
      $region40: #{double_conv_forward.4} parent=27 // pred_fallthru
        _
    $region28: #{double_conv_forward.4} parent=5 // pred_fallthru
      _
    %p327 = scmp.le.s32.totalorder 1, %s14
    %p328 = scmp.lt.s32.totalorder %s14, 3
    %p329 = pnand %p327, %p328
    %p330 = pneg %p329
    // Predicated region
    $region41: #{double_conv_forward.4} parent=5 // pred_check
      _
    $region42: #{double_conv_forward.4} parent=5 // pred_check_branch
      %332 = sbr.rel (%p329) target = $region44
    $region43: #{double_conv_forward.4} parent=5 // pred_region
      %s333 = ssub.s32 %s14, 1
      %s334 = smul.u32 16, %s24
      %p335 = scmp.lt.s32.totalorder %s23, 1
      %s336 = scalar_select %p335, %s23, 1
      %p337 = scmp.lt.s32.totalorder %s334, 15
      %s338 = scalar_select %p337, %s334, 15
      %s339 = smul.addr %s338, 2
      %s340 = smul.addr %s336, 32
      %s341 = sadd.s32 %s339, %s340
      %s342 = smul.addr %s341, 4
      %s343 = scalar_lea.vmem %s0, %s342
      %p344 = pneg %p54
      %p345 = pneg %p51
      %s346 = smul.u32 %s24, 16
      %s347 = ssub.s32 %s346, 1
      %p348 = scmp.gt.s32.totalorder %s347, 0
      %s349 = scalar_select %p348, %s347, 0
      %p350 = scmp.lt.s32.totalorder %s23, 1
      %s351 = scalar_select %p350, %s23, 1
      %p352 = scmp.lt.s32.totalorder %s349, 15
      %s353 = scalar_select %p352, %s349, 15
      %s354 = smul.addr %s353, 2
      %s355 = smul.addr %s351, 32
      %s356 = sadd.s32 %s354, %s355
      %s357 = smul.addr %s356, 4
      %s358 = scalar_lea.vmem %s1, %s357
      %p359 = pneg %p90
      %p360 = pneg %p87
      %s361 = sadd.s32 %s24, 1
      %s362 = smul.u32 %s361, 16
      %p363 = scmp.lt.s32.totalorder %s362, 15
      %s364 = scalar_select %p363, %s362, 15
      %p365 = scmp.lt.s32.totalorder %s23, 1
      %s366 = scalar_select %p365, %s23, 1
      %p367 = scmp.lt.s32.totalorder %s364, 15
      %s368 = scalar_select %p367, %s364, 15
      %s369 = smul.addr %s368, 2
      %s370 = smul.addr %s366, 32
      %s371 = sadd.s32 %s369, %s370
      %s372 = smul.addr %s371, 4
      %s373 = scalar_lea.vmem %s2, %s372
      %p374 = pneg %p126
      %p375 = pneg %p123
      %p376 = pneg %p147
      %p377 = pneg %p144
      %p378 = pneg %p168
      %p379 = pneg %p165
      %p380 = pneg %p189
      %p381 = pneg %p186
      %p382 = pneg %p217
      %p383 = pneg %p214
      %s384 = smul.u32 16, %s24
      %p385 = scmp.lt.s32.totalorder %s23, 1
      %s386 = scalar_select %p385, %s23, 1
      %p387 = scmp.lt.s32.totalorder %s384, 15
      %s388 = scalar_select %p387, %s384, 15
      %s389 = smul.addr %s388, 2
      %s390 = smul.addr %s386, 32
      %s391 = sadd.s32 %s389, %s390
      %s392 = smul.addr %s391, 4
      %s393 = scalar_lea.vmem %s6, %s392
      %p394 = pneg %p245
      %p395 = pneg %p242
      %p396 = scmp.lt.s32.totalorder %s23, 1
      %s397 = scalar_select %p396, %s23, 1
      %p398 = scmp.lt.s32.totalorder %s24, 0
      %s399 = scalar_select %p398, %s24, 0
      %s400 = sadd.s32 %s399, %s397
      %s401 = smul.addr %s400, 2
      %s402 = scalar_lea.vmem %s7, %s401
      %s403 = smul.u32 16, %s24
      %p404 = scmp.lt.s32.totalorder %s23, 1
      %s405 = scalar_select %p404, %s23, 1
      %p406 = scmp.lt.s32.totalorder %s403, 15
      %s407 = scalar_select %p406, %s403, 15
      %s408 = smul.addr %s407, 2
      %s409 = smul.addr %s405, 32
      %s410 = sadd.s32 %s408, %s409
      %s411 = smul.addr %s410, 4
      %s412 = scalar_lea.vmem %s0, %s411
      %s413 = smul.u32 16, %s24
      %s414 = smul.u32 %s24, 16
      %s415 = ssub.s32 %s414, 1
      %p416 = scmp.gt.s32.totalorder %s415, 0
      %s417 = scalar_select %p416, %s415, 0
      %p418 = scmp.lt.s32.totalorder %s23, 1
      %s419 = scalar_select %p418, %s23, 1
      %p420 = scmp.lt.s32.totalorder %s417, 15
      %s421 = scalar_select %p420, %s417, 15
      %s422 = smul.addr %s421, 2
      %s423 = smul.addr %s419, 32
      %s424 = sadd.s32 %s422, %s423
      %s425 = smul.addr %s424, 4
      %s426 = scalar_lea.vmem %s1, %s425
      %s427 = smul.u32 %s24, 16
      %s428 = ssub.s32 %s427, 1
      %p429 = scmp.gt.s32.totalorder %s428, 0
      %s430 = scalar_select %p429, %s428, 0
      %s431 = sadd.s32 %s24, 1
      %s432 = smul.u32 %s431, 16
      %p433 = scmp.lt.s32.totalorder %s432, 15
      %s434 = scalar_select %p433, %s432, 15
      %p435 = scmp.lt.s32.totalorder %s23, 1
      %s436 = scalar_select %p435, %s23, 1
      %p437 = scmp.lt.s32.totalorder %s434, 15
      %s438 = scalar_select %p437, %s434, 15
      %s439 = smul.addr %s438, 2
      %s440 = smul.addr %s436, 32
      %s441 = sadd.s32 %s439, %s440
      %s442 = smul.addr %s441, 4
      %s443 = scalar_lea.vmem %s2, %s442
      %s444 = sadd.s32 %s24, 1
      %s445 = smul.u32 %s444, 16
      %p446 = scmp.lt.s32.totalorder %s445, 15
      %s447 = scalar_select %p446, %s445, 15
      %s448 = smul.u32 16, %s24
      %p449 = scmp.lt.s32.totalorder %s23, 1
      %s450 = scalar_select %p449, %s23, 1
      %p451 = scmp.lt.s32.totalorder %s448, 15
      %s452 = scalar_select %p451, %s448, 15
      %s453 = smul.addr %s452, 2
      %s454 = smul.addr %s450, 32
      %s455 = sadd.s32 %s453, %s454
      %s456 = smul.addr %s455, 4
      %s457 = scalar_lea.vmem %s6, %s456
      %s458 = smul.u32 16, %s24
      %p459 = scmp.lt.s32.totalorder %s23, 1
      %s460 = scalar_select %p459, %s23, 1
      %p461 = scmp.lt.s32.totalorder %s24, 0
      %s462 = scalar_select %p461, %s24, 0
      %s463 = sadd.s32 %s462, %s460
      %s464 = smul.addr %s463, 2
      %s465 = scalar_lea.vmem %s7, %s464
      %v467 = vld [vmem:[%s412] sm:$0xf]
      %v468 = vld [vmem:[%s412 + $0x4] sm:$0xf]
      %v469 = vld [vmem:[%s412 + $0x8] sm:$0xf]
      %v470 = vld [vmem:[%s412 + $0xc] sm:$0xf]
      %v471 = vld [vmem:[%s412 + $0x10] sm:$0xf]
      %v472 = vld [vmem:[%s412 + $0x14] sm:$0xf]
      %v473 = vld [vmem:[%s412 + $0x18] sm:$0xf]
      %v474 = vld [vmem:[%s412 + $0x1c] sm:$0xf]
      %v475 = vld [vmem:[%s412 + $0x20] sm:$0xf]
      %v476 = vld [vmem:[%s412 + $0x24] sm:$0xf]
      %v477 = vld [vmem:[%s412 + $0x28] sm:$0xf]
      %v478 = vld [vmem:[%s412 + $0x2c] sm:$0xf]
      %v479 = vld [vmem:[%s412 + $0x30] sm:$0xf]
      %v480 = vld [vmem:[%s412 + $0x34] sm:$0xf]
      %v481 = vld [vmem:[%s412 + $0x38] sm:$0xf]
      %v482 = vld [vmem:[%s412 + $0x3c] sm:$0xf]
      %v483 = vld [vmem:[%s412 + $0x40] sm:$0xf]
      %v484 = vld [vmem:[%s412 + $0x44] sm:$0xf]
      %v485 = vld [vmem:[%s412 + $0x48] sm:$0xf]
      %v486 = vld [vmem:[%s412 + $0x4c] sm:$0xf]
      %v487 = vld [vmem:[%s412 + $0x50] sm:$0xf]
      %v488 = vld [vmem:[%s412 + $0x54] sm:$0xf]
      %v489 = vld [vmem:[%s412 + $0x58] sm:$0xf]
      %v490 = vld [vmem:[%s412 + $0x5c] sm:$0xf]
      %v491 = vld [vmem:[%s412 + $0x60] sm:$0xf]
      %v492 = vld [vmem:[%s412 + $0x64] sm:$0xf]
      %v493 = vld [vmem:[%s412 + $0x68] sm:$0xf]
      %v494 = vld [vmem:[%s412 + $0x6c] sm:$0xf]
      %v495 = vld [vmem:[%s412 + $0x70] sm:$0xf]
      %v496 = vld [vmem:[%s412 + $0x74] sm:$0xf]
      %v497 = vld [vmem:[%s412 + $0x78] sm:$0xf]
      %v498 = vld [vmem:[%s412 + $0x7c] sm:$0xf]
      %v499 = vld [vmem:[%s4] sm:$0x1]
      %v500 = vld [vmem:[%s5] sm:$0x1]
      %v501 = vunpack.c.l.bf16 %v467
      %v502 = vunpack.c.l.bf16 %v468
      %v503 = vunpack.c.l.bf16 %v469
      %v504 = vunpack.c.l.bf16 %v470
      %v505 = vunpack.c.l.bf16 %v471
      %v506 = vunpack.c.l.bf16 %v472
      %v507 = vunpack.c.l.bf16 %v473
      %v508 = vunpack.c.l.bf16 %v474
      %v509 = vunpack.c.l.bf16 %v475
      %v510 = vunpack.c.l.bf16 %v476
      %v511 = vunpack.c.l.bf16 %v477
      %v512 = vunpack.c.l.bf16 %v478
      %v513 = vunpack.c.l.bf16 %v479
      %v514 = vunpack.c.l.bf16 %v480
      %v515 = vunpack.c.l.bf16 %v481
      %v516 = vunpack.c.l.bf16 %v482
      %v517 = vunpack.c.l.bf16 %v483
      %v518 = vunpack.c.l.bf16 %v484
      %v519 = vunpack.c.l.bf16 %v485
      %v520 = vunpack.c.l.bf16 %v486
      %v521 = vunpack.c.l.bf16 %v487
      %v522 = vunpack.c.l.bf16 %v488
      %v523 = vunpack.c.l.bf16 %v489
      %v524 = vunpack.c.l.bf16 %v490
      %v525 = vunpack.c.l.bf16 %v491
      %v526 = vunpack.c.l.bf16 %v492
      %v527 = vunpack.c.l.bf16 %v493
      %v528 = vunpack.c.l.bf16 %v494
      %v529 = vunpack.c.l.bf16 %v495
      %v530 = vunpack.c.l.bf16 %v496
      %v531 = vunpack.c.l.bf16 %v497
      %v532 = vunpack.c.l.bf16 %v498
      %v534 = vlaneseq
      %v535 = vshrl.u32 %v534, 7
      %v536 = vsub.s32 0, %v535
      %v537 = vrot.slane %v499, %v536
      %v539 = vmul.f32 %v501, %v537
      %v540 = vmul.f32 %v502, %v537
      %v541 = vmul.f32 %v503, %v537
      %v542 = vmul.f32 %v504, %v537
      %v543 = vmul.f32 %v505, %v537
      %v544 = vmul.f32 %v506, %v537
      %v545 = vmul.f32 %v507, %v537
      %v546 = vmul.f32 %v508, %v537
      %v547 = vmul.f32 %v509, %v537
      %v548 = vmul.f32 %v510, %v537
      %v549 = vmul.f32 %v511, %v537
      %v550 = vmul.f32 %v512, %v537
      %v551 = vmul.f32 %v513, %v537
      %v552 = vmul.f32 %v514, %v537
      %v553 = vmul.f32 %v515, %v537
      %v554 = vmul.f32 %v516, %v537
      %v555 = vmul.f32 %v517, %v537
      %v556 = vmul.f32 %v518, %v537
      %v557 = vmul.f32 %v519, %v537
      %v558 = vmul.f32 %v520, %v537
      %v559 = vmul.f32 %v521, %v537
      %v560 = vmul.f32 %v522, %v537
      %v561 = vmul.f32 %v523, %v537
      %v562 = vmul.f32 %v524, %v537
      %v563 = vmul.f32 %v525, %v537
      %v564 = vmul.f32 %v526, %v537
      %v565 = vmul.f32 %v527, %v537
      %v566 = vmul.f32 %v528, %v537
      %v567 = vmul.f32 %v529, %v537
      %v568 = vmul.f32 %v530, %v537
      %v569 = vmul.f32 %v531, %v537
      %v570 = vmul.f32 %v532, %v537
      %v572 = vlaneseq
      %v573 = vshrl.u32 %v572, 7
      %v574 = vsub.s32 0, %v573
      %v575 = vrot.slane %v500, %v574
      %v577 = vadd.f32 %v539, %v575
      %v578 = vadd.f32 %v540, %v575
      %v579 = vadd.f32 %v541, %v575
      %v580 = vadd.f32 %v542, %v575
      %v581 = vadd.f32 %v543, %v575
      %v582 = vadd.f32 %v544, %v575
      %v583 = vadd.f32 %v545, %v575
      %v584 = vadd.f32 %v546, %v575
      %v585 = vadd.f32 %v547, %v575
      %v586 = vadd.f32 %v548, %v575
      %v587 = vadd.f32 %v549, %v575
      %v588 = vadd.f32 %v550, %v575
      %v589 = vadd.f32 %v551, %v575
      %v590 = vadd.f32 %v552, %v575
      %v591 = vadd.f32 %v553, %v575
      %v592 = vadd.f32 %v554, %v575
      %v593 = vadd.f32 %v555, %v575
      %v594 = vadd.f32 %v556, %v575
      %v595 = vadd.f32 %v557, %v575
      %v596 = vadd.f32 %v558, %v575
      %v597 = vadd.f32 %v559, %v575
      %v598 = vadd.f32 %v560, %v575
      %v599 = vadd.f32 %v561, %v575
      %v600 = vadd.f32 %v562, %v575
      %v601 = vadd.f32 %v563, %v575
      %v602 = vadd.f32 %v564, %v575
      %v603 = vadd.f32 %v565, %v575
      %v604 = vadd.f32 %v566, %v575
      %v605 = vadd.f32 %v567, %v575
      %v606 = vadd.f32 %v568, %v575
      %v607 = vadd.f32 %v569, %v575
      %v608 = vadd.f32 %v570, %v575
      %v609 = vmax.f32 %v577, 0.0
      %v610 = vmax.f32 %v578, 0.0
      %v611 = vmax.f32 %v579, 0.0
      %v612 = vmax.f32 %v580, 0.0
      %v613 = vmax.f32 %v581, 0.0
      %v614 = vmax.f32 %v582, 0.0
      %v615 = vmax.f32 %v583, 0.0
      %v616 = vmax.f32 %v584, 0.0
      %v617 = vmax.f32 %v585, 0.0
      %v618 = vmax.f32 %v586, 0.0
      %v619 = vmax.f32 %v587, 0.0
      %v620 = vmax.f32 %v588, 0.0
      %v621 = vmax.f32 %v589, 0.0
      %v622 = vmax.f32 %v590, 0.0
      %v623 = vmax.f32 %v591, 0.0
      %v624 = vmax.f32 %v592, 0.0
      %v625 = vmax.f32 %v593, 0.0
      %v626 = vmax.f32 %v594, 0.0
      %v627 = vmax.f32 %v595, 0.0
      %v628 = vmax.f32 %v596, 0.0
      %v629 = vmax.f32 %v597, 0.0
      %v630 = vmax.f32 %v598, 0.0
      %v631 = vmax.f32 %v599, 0.0
      %v632 = vmax.f32 %v600, 0.0
      %v633 = vmax.f32 %v601, 0.0
      %v634 = vmax.f32 %v602, 0.0
      %v635 = vmax.f32 %v603, 0.0
      %v636 = vmax.f32 %v604, 0.0
      %v637 = vmax.f32 %v605, 0.0
      %v638 = vmax.f32 %v606, 0.0
      %v639 = vmax.f32 %v607, 0.0
      %v640 = vmax.f32 %v608, 0.0
      %v641 = vpack.c.bf16 %v610, %v609
      %v642 = vpack.c.bf16 %v612, %v611
      %v643 = vpack.c.bf16 %v614, %v613
      %v644 = vpack.c.bf16 %v616, %v615
      %v645 = vpack.c.bf16 %v618, %v617
      %v646 = vpack.c.bf16 %v620, %v619
      %v647 = vpack.c.bf16 %v622, %v621
      %v648 = vpack.c.bf16 %v624, %v623
      %v649 = vpack.c.bf16 %v626, %v625
      %v650 = vpack.c.bf16 %v628, %v627
      %v651 = vpack.c.bf16 %v630, %v629
      %v652 = vpack.c.bf16 %v632, %v631
      %v653 = vpack.c.bf16 %v634, %v633
      %v654 = vpack.c.bf16 %v636, %v635
      %v655 = vpack.c.bf16 %v638, %v637
      %v656 = vpack.c.bf16 %v640, %v639
      %v657 = vld [vmem:[%s426] sm:$0xf]
      %v658 = vld [vmem:[%s426 + $0x4] sm:$0xf]
      %v659 = vunpack.c.l.bf16 %v657
      %v660 = vunpack.c.l.bf16 %v658
      %v661 = vmul.f32 %v659, %v537
      %v662 = vmul.f32 %v660, %v537
      %v663 = vadd.f32 %v661, %v575
      %v664 = vadd.f32 %v662, %v575
      %v665 = vmax.f32 %v663, 0.0
      %v666 = vmax.f32 %v664, 0.0
      %v667 = vpack.c.bf16 %v666, %v665
      %v668 = vld [vmem:[%s443] sm:$0xf]
      %v669 = vld [vmem:[%s443 + $0x4] sm:$0xf]
      %v670 = vunpack.c.l.bf16 %v668
      %v671 = vunpack.c.l.bf16 %v669
      %v672 = vmul.f32 %v670, %v537
      %v673 = vmul.f32 %v671, %v537
      %v674 = vadd.f32 %v672, %v575
      %v675 = vadd.f32 %v673, %v575
      %v676 = vmax.f32 %v674, 0.0
      %v677 = vmax.f32 %v675, 0.0
      %v678 = vpack.c.bf16 %v677, %v676
      %p679 = scmp.eq.s32.totalorder %s24, 0
      %s680 = scalar_select %p679, 1, 0
      %v681 = vstv %s680
      %vm682 = vcmp.eq.s32.totalorder %v681, 1
      %v683 = vsel %vm682, 0, %v667
      %v684 = vsel %vm682, 0, %v678
      %685 = vst [vmem:[#allocation2] sm:$0xf] 0
      %686 = vst [vmem:[#allocation2 + $0x4] sm:$0xf] 0
      %687 = vst [vmem:[#allocation2 + $0x8] sm:$0x1] 0
      %688 = vst [vmem:[#allocation2 + $0xc] sm:$0xf] 0
      %689 = vst [vmem:[#allocation2 + $0x10] sm:$0xf] 0
      %690 = vst [vmem:[#allocation2 + $0x14] sm:$0x1] 0
      %691 = vst [vmem:[#allocation2 + $0x18] sm:$0xf] 0
      %692 = vst [vmem:[#allocation2 + $0x1c] sm:$0xf] 0
      %693 = vst [vmem:[#allocation2 + $0x20] sm:$0x1] 0
      %694 = vst [vmem:[#allocation2 + $0x24] sm:$0xf] 0
      %695 = vst [vmem:[#allocation2 + $0x28] sm:$0xf] 0
      %696 = vst [vmem:[#allocation2 + $0x2c] sm:$0x1] 0
      %697 = vst [vmem:[#allocation2 + $0x30] sm:$0xf] 0
      %698 = vst [vmem:[#allocation2 + $0x34] sm:$0xf] 0
      %699 = vst [vmem:[#allocation2 + $0x38] sm:$0x1] 0
      %700 = vst [vmem:[#allocation2 + $0x3c] sm:$0xf] 0
      %701 = vst [vmem:[#allocation2 + $0x40] sm:$0xf] 0
      %702 = vst [vmem:[#allocation2 + $0x44] sm:$0x1] 0
      %703 = vst [vmem:[#allocation2 + $0x48] sm:$0xf] 0
      %704 = vst [vmem:[#allocation2 + $0x4c] sm:$0xf] 0
      %705 = vst [vmem:[#allocation2 + $0x50] sm:$0x1] 0
      %706 = vst [vmem:[#allocation2 + $0x54] sm:$0xf] 0
      %707 = vst [vmem:[#allocation2 + $0x58] sm:$0xf] 0
      %708 = vst [vmem:[#allocation2 + $0x5c] sm:$0x1] 0
      %709 = vst [vmem:[#allocation2 + $0x60] sm:$0xf] 0
      %710 = vst [vmem:[#allocation2 + $0x64] sm:$0xf] 0
      %711 = vst [vmem:[#allocation2 + $0x68] sm:$0x1] 0
      %712 = vst [vmem:[#allocation2 + $0x6c] sm:$0xf] 0
      %713 = vst [vmem:[#allocation2 + $0x70] sm:$0xf] 0
      %714 = vst [vmem:[#allocation2 + $0x74] sm:$0x1] 0
      %715 = vst [vmem:[#allocation2 + $0x78] sm:$0xf] 0
      %716 = vst [vmem:[#allocation2 + $0x7c] sm:$0xf] 0
      %717 = vst [vmem:[#allocation2 + $0x80] sm:$0x1] 0
      %718 = vst [vmem:[#allocation2 + $0x84] sm:$0xf] 0
      %719 = vst [vmem:[#allocation2 + $0x88] sm:$0xf] 0
      %720 = vst [vmem:[#allocation2 + $0x8c] sm:$0x1] 0
      %721 = vst [vmem:[#allocation2 + $0x90] sm:$0xf] 0
      %722 = vst [vmem:[#allocation2 + $0x94] sm:$0xf] 0
      %723 = vst [vmem:[#allocation2 + $0x98] sm:$0x1] 0
      %724 = vst [vmem:[#allocation2 + $0x9c] sm:$0xf] 0
      %725 = vst [vmem:[#allocation2 + $0xa0] sm:$0xf] 0
      %726 = vst [vmem:[#allocation2 + $0xa4] sm:$0x1] 0
      %727 = vst [vmem:[#allocation2 + $0xa8] sm:$0xf] 0
      %728 = vst [vmem:[#allocation2 + $0xac] sm:$0xf] 0
      %729 = vst [vmem:[#allocation2 + $0xb0] sm:$0x1] 0
      %730 = vst [vmem:[#allocation2 + $0xb4] sm:$0xf] 0
      %731 = vst [vmem:[#allocation2 + $0xb8] sm:$0xf] 0
      %732 = vst [vmem:[#allocation2 + $0xbc] sm:$0x1] 0
      %733 = vst [vmem:[#allocation2 + $0xc0] sm:$0xf] 0
      %734 = vst [vmem:[#allocation2 + $0xc4] sm:$0xf] 0
      %735 = vst [vmem:[#allocation2 + $0xc8] sm:$0x1] 0
      %736 = vst [vmem:[#allocation2 + $0xcc] sm:$0xf] 0
      %737 = vst [vmem:[#allocation2 + $0xd0] sm:$0xf] 0
      %738 = vst [vmem:[#allocation2 + $0xd4] sm:$0x1] 0
      %v755 = vunpack.c.l.b16 %v641
      %v756 = vunpack.c.h.b16 %v641
      %v757 = vunpack.c.l.b16 %v642
      %v758 = vunpack.c.h.b16 %v642
      %v759 = vunpack.c.l.b16 %v643
      %v760 = vunpack.c.h.b16 %v643
      %v761 = vunpack.c.l.b16 %v644
      %v762 = vunpack.c.h.b16 %v644
      %v763 = vunpack.c.l.b16 %v645
      %v764 = vunpack.c.h.b16 %v645
      %v765 = vunpack.c.l.b16 %v646
      %v766 = vunpack.c.h.b16 %v646
      %v767 = vunpack.c.l.b16 %v647
      %v768 = vunpack.c.h.b16 %v647
      %v769 = vunpack.c.l.b16 %v648
      %v770 = vunpack.c.h.b16 %v648
      %v771 = vunpack.c.l.b16 %v649
      %v772 = vunpack.c.h.b16 %v649
      %v773 = vunpack.c.l.b16 %v650
      %v774 = vunpack.c.h.b16 %v650
      %v775 = vunpack.c.l.b16 %v651
      %v776 = vunpack.c.h.b16 %v651
      %v777 = vunpack.c.l.b16 %v652
      %v778 = vunpack.c.h.b16 %v652
      %v779 = vunpack.c.l.b16 %v653
      %v780 = vunpack.c.h.b16 %v653
      %v781 = vunpack.c.l.b16 %v654
      %v782 = vunpack.c.h.b16 %v654
      %v783 = vunpack.c.l.b16 %v655
      %v784 = vunpack.c.h.b16 %v655
      %v785 = vunpack.c.l.b16 %v656
      %v786 = vunpack.c.h.b16 %v656
      %v787 = vpack.c.b16 %v755, %v755
      %v788 = vpack.c.b16 %v756, %v756
      %v789 = vpack.c.b16 %v757, %v757
      %v790 = vpack.c.b16 %v758, %v758
      %v791 = vpack.c.b16 %v759, %v759
      %v792 = vpack.c.b16 %v760, %v760
      %v793 = vpack.c.b16 %v761, %v761
      %v794 = vpack.c.b16 %v762, %v762
      %v795 = vpack.c.b16 %v763, %v763
      %v796 = vpack.c.b16 %v764, %v764
      %v797 = vpack.c.b16 %v765, %v765
      %v798 = vpack.c.b16 %v766, %v766
      %v799 = vpack.c.b16 %v767, %v767
      %v800 = vpack.c.b16 %v768, %v768
      %v801 = vpack.c.b16 %v769, %v769
      %v802 = vpack.c.b16 %v770, %v770
      %v803 = vpack.c.b16 %v771, %v771
      %v804 = vpack.c.b16 %v772, %v772
      %v805 = vpack.c.b16 %v773, %v773
      %v806 = vpack.c.b16 %v774, %v774
      %v807 = vpack.c.b16 %v775, %v775
      %v808 = vpack.c.b16 %v776, %v776
      %v809 = vpack.c.b16 %v777, %v777
      %v810 = vpack.c.b16 %v778, %v778
      %v811 = vpack.c.b16 %v779, %v779
      %v812 = vpack.c.b16 %v780, %v780
      %v813 = vpack.c.b16 %v781, %v781
      %v814 = vpack.c.b16 %v782, %v782
      %v815 = vpack.c.b16 %v783, %v783
      %v816 = vpack.c.b16 %v784, %v784
      %v817 = vpack.c.b16 %v785, %v785
      %v818 = vpack.c.b16 %v786, %v786
      %vm819 = vsmask.f32 256
      %vm820 = vsmask.f32 4368
      %vm821 = vmor %vm819, %vm820
      %v823 = vshrl.u32 %v787, 16
      %v825 = vrot.slane %v823, 7
      %v826 = vshll.u32 %v787, 16
      %v828 = vor.u32 %v825, %v826
      %v829 = vrot.slane %v825, 4
      %v831 = vshrl.u32 %v788, 16
      %v833 = vrot.slane %v831, 7
      %v834 = vshll.u32 %v788, 16
      %v836 = vor.u32 %v833, %v834
      %v837 = vsel %vm821, %v829, %v836
      %v838 = vrot.slane %v833, 4
      %v840 = vshrl.u32 %v789, 16
      %v842 = vrot.slane %v840, 7
      %v843 = vshll.u32 %v789, 16
      %v845 = vor.u32 %v842, %v843
      %v846 = vrot.slane %v842, 4
      %v848 = vshrl.u32 %v790, 16
      %v850 = vrot.slane %v848, 7
      %v851 = vshll.u32 %v790, 16
      %v853 = vor.u32 %v850, %v851
      %v854 = vsel %vm821, %v846, %v853
      %v855 = vrot.slane %v850, 4
      %v857 = vshrl.u32 %v791, 16
      %v859 = vrot.slane %v857, 7
      %v860 = vshll.u32 %v791, 16
      %v862 = vor.u32 %v859, %v860
      %v863 = vrot.slane %v859, 4
      %v865 = vshrl.u32 %v792, 16
      %v867 = vrot.slane %v865, 7
      %v868 = vshll.u32 %v792, 16
      %v870 = vor.u32 %v867, %v868
      %v871 = vsel %vm821, %v863, %v870
      %v872 = vrot.slane %v867, 4
      %v874 = vshrl.u32 %v793, 16
      %v876 = vrot.slane %v874, 7
      %v877 = vshll.u32 %v793, 16
      %v879 = vor.u32 %v876, %v877
      %v880 = vrot.slane %v876, 4
      %v882 = vshrl.u32 %v794, 16
      %v884 = vrot.slane %v882, 7
      %v885 = vshll.u32 %v794, 16
      %v887 = vor.u32 %v884, %v885
      %v888 = vsel %vm821, %v880, %v887
      %v889 = vrot.slane %v884, 4
      %v891 = vshrl.u32 %v795, 16
      %v893 = vrot.slane %v891, 7
      %v894 = vshll.u32 %v795, 16
      %v896 = vor.u32 %v893, %v894
      %v897 = vrot.slane %v893, 4
      %v899 = vshrl.u32 %v796, 16
      %v901 = vrot.slane %v899, 7
      %v902 = vshll.u32 %v796, 16
      %v904 = vor.u32 %v901, %v902
      %v905 = vsel %vm821, %v897, %v904
      %v906 = vrot.slane %v901, 4
      %v908 = vshrl.u32 %v797, 16
      %v910 = vrot.slane %v908, 7
      %v911 = vshll.u32 %v797, 16
      %v913 = vor.u32 %v910, %v911
      %v914 = vrot.slane %v910, 4
      %v916 = vshrl.u32 %v798, 16
      %v918 = vrot.slane %v916, 7
      %v919 = vshll.u32 %v798, 16
      %v921 = vor.u32 %v918, %v919
      %v922 = vsel %vm821, %v914, %v921
      %v923 = vrot.slane %v918, 4
      %v925 = vshrl.u32 %v799, 16
      %v927 = vrot.slane %v925, 7
      %v928 = vshll.u32 %v799, 16
      %v930 = vor.u32 %v927, %v928
      %v931 = vrot.slane %v927, 4
      %v933 = vshrl.u32 %v800, 16
      %v935 = vrot.slane %v933, 7
      %v936 = vshll.u32 %v800, 16
      %v938 = vor.u32 %v935, %v936
      %v939 = vsel %vm821, %v931, %v938
      %v940 = vrot.slane %v935, 4
      %v942 = vshrl.u32 %v801, 16
      %v944 = vrot.slane %v942, 7
      %v945 = vshll.u32 %v801, 16
      %v947 = vor.u32 %v944, %v945
      %v948 = vrot.slane %v944, 4
      %v950 = vshrl.u32 %v802, 16
      %v952 = vrot.slane %v950, 7
      %v953 = vshll.u32 %v802, 16
      %v955 = vor.u32 %v952, %v953
      %v956 = vsel %vm821, %v948, %v955
      %v957 = vrot.slane %v952, 4
      %v959 = vshrl.u32 %v803, 16
      %v961 = vrot.slane %v959, 7
      %v962 = vshll.u32 %v803, 16
      %v964 = vor.u32 %v961, %v962
      %v965 = vrot.slane %v961, 4
      %v967 = vshrl.u32 %v804, 16
      %v969 = vrot.slane %v967, 7
      %v970 = vshll.u32 %v804, 16
      %v972 = vor.u32 %v969, %v970
      %v973 = vsel %vm821, %v965, %v972
      %v974 = vrot.slane %v969, 4
      %v976 = vshrl.u32 %v805, 16
      %v978 = vrot.slane %v976, 7
      %v979 = vshll.u32 %v805, 16
      %v981 = vor.u32 %v978, %v979
      %v982 = vrot.slane %v978, 4
      %v984 = vshrl.u32 %v806, 16
      %v986 = vrot.slane %v984, 7
      %v987 = vshll.u32 %v806, 16
      %v989 = vor.u32 %v986, %v987
      %v990 = vsel %vm821, %v982, %v989
      %v991 = vrot.slane %v986, 4
      %v993 = vshrl.u32 %v807, 16
      %v995 = vrot.slane %v993, 7
      %v996 = vshll.u32 %v807, 16
      %v998 = vor.u32 %v995, %v996
      %v999 = vrot.slane %v995, 4
      %v1001 = vshrl.u32 %v808, 16
      %v1003 = vrot.slane %v1001, 7
      %v1004 = vshll.u32 %v808, 16
      %v1006 = vor.u32 %v1003, %v1004
      %v1007 = vsel %vm821, %v999, %v1006
      %v1008 = vrot.slane %v1003, 4
      %v1010 = vshrl.u32 %v809, 16
      %v1012 = vrot.slane %v1010, 7
      %v1013 = vshll.u32 %v809, 16
      %v1015 = vor.u32 %v1012, %v1013
      %v1016 = vrot.slane %v1012, 4
      %v1018 = vshrl.u32 %v810, 16
      %v1020 = vrot.slane %v1018, 7
      %v1021 = vshll.u32 %v810, 16
      %v1023 = vor.u32 %v1020, %v1021
      %v1024 = vsel %vm821, %v1016, %v1023
      %v1025 = vrot.slane %v1020, 4
      %v1027 = vshrl.u32 %v811, 16
      %v1029 = vrot.slane %v1027, 7
      %v1030 = vshll.u32 %v811, 16
      %v1032 = vor.u32 %v1029, %v1030
      %v1033 = vrot.slane %v1029, 4
      %v1035 = vshrl.u32 %v812, 16
      %v1037 = vrot.slane %v1035, 7
      %v1038 = vshll.u32 %v812, 16
      %v1040 = vor.u32 %v1037, %v1038
      %v1041 = vsel %vm821, %v1033, %v1040
      %v1042 = vrot.slane %v1037, 4
      %v1044 = vshrl.u32 %v813, 16
      %v1046 = vrot.slane %v1044, 7
      %v1047 = vshll.u32 %v813, 16
      %v1049 = vor.u32 %v1046, %v1047
      %v1050 = vrot.slane %v1046, 4
      %v1052 = vshrl.u32 %v814, 16
      %v1054 = vrot.slane %v1052, 7
      %v1055 = vshll.u32 %v814, 16
      %v1057 = vor.u32 %v1054, %v1055
      %v1058 = vsel %vm821, %v1050, %v1057
      %v1059 = vrot.slane %v1054, 4
      %v1061 = vshrl.u32 %v815, 16
      %v1063 = vrot.slane %v1061, 7
      %v1064 = vshll.u32 %v815, 16
      %v1066 = vor.u32 %v1063, %v1064
      %v1067 = vrot.slane %v1063, 4
      %v1069 = vshrl.u32 %v816, 16
      %v1071 = vrot.slane %v1069, 7
      %v1072 = vshll.u32 %v816, 16
      %v1074 = vor.u32 %v1071, %v1072
      %v1075 = vsel %vm821, %v1067, %v1074
      %v1076 = vrot.slane %v1071, 4
      %v1078 = vshrl.u32 %v817, 16
      %v1080 = vrot.slane %v1078, 7
      %v1081 = vshll.u32 %v817, 16
      %v1083 = vor.u32 %v1080, %v1081
      %v1084 = vrot.slane %v1080, 4
      %v1086 = vshrl.u32 %v818, 16
      %v1088 = vrot.slane %v1086, 7
      %v1089 = vshll.u32 %v818, 16
      %v1091 = vor.u32 %v1088, %v1089
      %v1092 = vsel %vm821, %v1084, %v1091
      %v1093 = vrot.slane %v1088, 4
      %s1142 = scalar_lea.vmem [#allocation2], 12
      %vm1143 = vcmask 1043456
      %vm1144 = vsmask.f32 7938
      %vm1145 = vmand %vm1143, %vm1144
      %v1146 = vld [vmem:[%s1142] sm:$0xf]
      %v1147 = vsel %vm1145, %v828, %v1146
      %1148 = vst [vmem:[%s1142] sm:$0xf] %v1147
      %1149 = vst [vmem:[%s1142 + $0x4] sm:$0xf] %v837
      %vm1150 = vcmask 1040384
      %vm1151 = vmand %vm1150, %vm819
      %v1152 = vld [vmem:[%s1142 + $0x8] sm:$0x1]
      %v1153 = vsel %vm1151, %v838, %v1152
      %1154 = vst [vmem:[%s1142 + $0x8] sm:$0x1] %v1153
      %v1155 = vld [vmem:[%s1142 + $0xc] sm:$0xf]
      %v1156 = vsel %vm1145, %v845, %v1155
      %1157 = vst [vmem:[%s1142 + $0xc] sm:$0xf] %v1156
      %1158 = vst [vmem:[%s1142 + $0x10] sm:$0xf] %v854
      %v1159 = vld [vmem:[%s1142 + $0x14] sm:$0x1]
      %v1160 = vsel %vm1151, %v855, %v1159
      %1161 = vst [vmem:[%s1142 + $0x14] sm:$0x1] %v1160
      %v1162 = vld [vmem:[%s1142 + $0x18] sm:$0xf]
      %v1163 = vsel %vm1145, %v862, %v1162
      %1164 = vst [vmem:[%s1142 + $0x18] sm:$0xf] %v1163
      %1165 = vst [vmem:[%s1142 + $0x1c] sm:$0xf] %v871
      %v1166 = vld [vmem:[%s1142 + $0x20] sm:$0x1]
      %v1167 = vsel %vm1151, %v872, %v1166
      %1168 = vst [vmem:[%s1142 + $0x20] sm:$0x1] %v1167
      %v1169 = vld [vmem:[%s1142 + $0x24] sm:$0xf]
      %v1170 = vsel %vm1145, %v879, %v1169
      %1171 = vst [vmem:[%s1142 + $0x24] sm:$0xf] %v1170
      %1172 = vst [vmem:[%s1142 + $0x28] sm:$0xf] %v888
      %v1173 = vld [vmem:[%s1142 + $0x2c] sm:$0x1]
      %v1174 = vsel %vm1151, %v889, %v1173
      %1175 = vst [vmem:[%s1142 + $0x2c] sm:$0x1] %v1174
      %v1176 = vld [vmem:[%s1142 + $0x30] sm:$0xf]
      %v1177 = vsel %vm1145, %v896, %v1176
      %1178 = vst [vmem:[%s1142 + $0x30] sm:$0xf] %v1177
      %1179 = vst [vmem:[%s1142 + $0x34] sm:$0xf] %v905
      %v1180 = vld [vmem:[%s1142 + $0x38] sm:$0x1]
      %v1181 = vsel %vm1151, %v906, %v1180
      %1182 = vst [vmem:[%s1142 + $0x38] sm:$0x1] %v1181
      %v1183 = vld [vmem:[%s1142 + $0x3c] sm:$0xf]
      %v1184 = vsel %vm1145, %v913, %v1183
      %1185 = vst [vmem:[%s1142 + $0x3c] sm:$0xf] %v1184
      %1186 = vst [vmem:[%s1142 + $0x40] sm:$0xf] %v922
      %v1187 = vld [vmem:[%s1142 + $0x44] sm:$0x1]
      %v1188 = vsel %vm1151, %v923, %v1187
      %1189 = vst [vmem:[%s1142 + $0x44] sm:$0x1] %v1188
      %v1190 = vld [vmem:[%s1142 + $0x48] sm:$0xf]
      %v1191 = vsel %vm1145, %v930, %v1190
      %1192 = vst [vmem:[%s1142 + $0x48] sm:$0xf] %v1191
      %1193 = vst [vmem:[%s1142 + $0x4c] sm:$0xf] %v939
      %v1194 = vld [vmem:[%s1142 + $0x50] sm:$0x1]
      %v1195 = vsel %vm1151, %v940, %v1194
      %1196 = vst [vmem:[%s1142 + $0x50] sm:$0x1] %v1195
      %v1197 = vld [vmem:[%s1142 + $0x54] sm:$0xf]
      %v1198 = vsel %vm1145, %v947, %v1197
      %1199 = vst [vmem:[%s1142 + $0x54] sm:$0xf] %v1198
      %1200 = vst [vmem:[%s1142 + $0x58] sm:$0xf] %v956
      %v1201 = vld [vmem:[%s1142 + $0x5c] sm:$0x1]
      %v1202 = vsel %vm1151, %v957, %v1201
      %1203 = vst [vmem:[%s1142 + $0x5c] sm:$0x1] %v1202
      %v1204 = vld [vmem:[%s1142 + $0x60] sm:$0xf]
      %v1205 = vsel %vm1145, %v964, %v1204
      %1206 = vst [vmem:[%s1142 + $0x60] sm:$0xf] %v1205
      %1207 = vst [vmem:[%s1142 + $0x64] sm:$0xf] %v973
      %v1208 = vld [vmem:[%s1142 + $0x68] sm:$0x1]
      %v1209 = vsel %vm1151, %v974, %v1208
      %1210 = vst [vmem:[%s1142 + $0x68] sm:$0x1] %v1209
      %v1211 = vld [vmem:[%s1142 + $0x6c] sm:$0xf]
      %v1212 = vsel %vm1145, %v981, %v1211
      %1213 = vst [vmem:[%s1142 + $0x6c] sm:$0xf] %v1212
      %1214 = vst [vmem:[%s1142 + $0x70] sm:$0xf] %v990
      %v1215 = vld [vmem:[%s1142 + $0x74] sm:$0x1]
      %v1216 = vsel %vm1151, %v991, %v1215
      %1217 = vst [vmem:[%s1142 + $0x74] sm:$0x1] %v1216
      %v1218 = vld [vmem:[%s1142 + $0x78] sm:$0xf]
      %v1219 = vsel %vm1145, %v998, %v1218
      %1220 = vst [vmem:[%s1142 + $0x78] sm:$0xf] %v1219
      %1221 = vst [vmem:[%s1142 + $0x7c] sm:$0xf] %v1007
      %v1222 = vld [vmem:[%s1142 + $0x80] sm:$0x1]
      %v1223 = vsel %vm1151, %v1008, %v1222
      %1224 = vst [vmem:[%s1142 + $0x80] sm:$0x1] %v1223
      %v1225 = vld [vmem:[%s1142 + $0x84] sm:$0xf]
      %v1226 = vsel %vm1145, %v1015, %v1225
      %1227 = vst [vmem:[%s1142 + $0x84] sm:$0xf] %v1226
      %1228 = vst [vmem:[%s1142 + $0x88] sm:$0xf] %v1024
      %v1229 = vld [vmem:[%s1142 + $0x8c] sm:$0x1]
      %v1230 = vsel %vm1151, %v1025, %v1229
      %1231 = vst [vmem:[%s1142 + $0x8c] sm:$0x1] %v1230
      %v1232 = vld [vmem:[%s1142 + $0x90] sm:$0xf]
      %v1233 = vsel %vm1145, %v1032, %v1232
      %1234 = vst [vmem:[%s1142 + $0x90] sm:$0xf] %v1233
      %1235 = vst [vmem:[%s1142 + $0x94] sm:$0xf] %v1041
      %v1236 = vld [vmem:[%s1142 + $0x98] sm:$0x1]
      %v1237 = vsel %vm1151, %v1042, %v1236
      %1238 = vst [vmem:[%s1142 + $0x98] sm:$0x1] %v1237
      %v1239 = vld [vmem:[%s1142 + $0x9c] sm:$0xf]
      %v1240 = vsel %vm1145, %v1049, %v1239
      %1241 = vst [vmem:[%s1142 + $0x9c] sm:$0xf] %v1240
      %1242 = vst [vmem:[%s1142 + $0xa0] sm:$0xf] %v1058
      %v1243 = vld [vmem:[%s1142 + $0xa4] sm:$0x1]
      %v1244 = vsel %vm1151, %v1059, %v1243
      %1245 = vst [vmem:[%s1142 + $0xa4] sm:$0x1] %v1244
      %v1246 = vld [vmem:[%s1142 + $0xa8] sm:$0xf]
      %v1247 = vsel %vm1145, %v1066, %v1246
      %1248 = vst [vmem:[%s1142 + $0xa8] sm:$0xf] %v1247
      %1249 = vst [vmem:[%s1142 + $0xac] sm:$0xf] %v1075
      %v1250 = vld [vmem:[%s1142 + $0xb0] sm:$0x1]
      %v1251 = vsel %vm1151, %v1076, %v1250
      %1252 = vst [vmem:[%s1142 + $0xb0] sm:$0x1] %v1251
      %v1253 = vld [vmem:[%s1142 + $0xb4] sm:$0xf]
      %v1254 = vsel %vm1145, %v1083, %v1253
      %1255 = vst [vmem:[%s1142 + $0xb4] sm:$0xf] %v1254
      %1256 = vst [vmem:[%s1142 + $0xb8] sm:$0xf] %v1092
      %v1257 = vld [vmem:[%s1142 + $0xbc] sm:$0x1]
      %v1258 = vsel %vm1151, %v1093, %v1257
      %1259 = vst [vmem:[%s1142 + $0xbc] sm:$0x1] %v1258
      %v1261 = vunpack.c.l.b16 %v683
      %v1262 = vunpack.c.h.b16 %v683
      %v1263 = vpack.c.b16 %v1261, %v1261
      %v1264 = vpack.c.b16 %v1262, %v1262
      %v1266 = vshrl.u32 %v1263, 16
      %v1268 = vrot.slane %v1266, 7
      %v1269 = vshll.u32 %v1263, 16
      %v1271 = vor.u32 %v1268, %v1269
      %v1272 = vrot.slane %v1268, 4
      %v1274 = vshrl.u32 %v1264, 16
      %v1276 = vrot.slane %v1274, 7
      %v1277 = vshll.u32 %v1264, 16
      %v1279 = vor.u32 %v1276, %v1277
      %v1280 = vsel %vm821, %v1272, %v1279
      %v1281 = vrot.slane %v1276, 4
      %v1285 = vld [vmem:[#allocation2] sm:$0xf]
      %v1286 = vsel %vm1145, %v1271, %v1285
      %1287 = vst [vmem:[#allocation2] sm:$0xf] %v1286
      %1288 = vst [vmem:[#allocation2 + $0x4] sm:$0xf] %v1280
      %v1289 = vld [vmem:[#allocation2 + $0x8] sm:$0x1]
      %v1290 = vsel %vm1151, %v1281, %v1289
      %1291 = vst [vmem:[#allocation2 + $0x8] sm:$0x1] %v1290
      %v1293 = vunpack.c.l.b16 %v684
      %v1294 = vunpack.c.h.b16 %v684
      %v1295 = vpack.c.b16 %v1293, %v1293
      %v1296 = vpack.c.b16 %v1294, %v1294
      %v1298 = vshrl.u32 %v1295, 16
      %v1300 = vrot.slane %v1298, 7
      %v1301 = vshll.u32 %v1295, 16
      %v1303 = vor.u32 %v1300, %v1301
      %v1304 = vrot.slane %v1300, 4
      %v1306 = vshrl.u32 %v1296, 16
      %v1308 = vrot.slane %v1306, 7
      %v1309 = vshll.u32 %v1296, 16
      %v1311 = vor.u32 %v1308, %v1309
      %v1312 = vsel %vm821, %v1304, %v1311
      %v1313 = vrot.slane %v1308, 4
      %s1317 = scalar_lea.vmem [#allocation2], 204
      %v1318 = vld [vmem:[%s1317] sm:$0xf]
      %v1319 = vsel %vm1145, %v1303, %v1318
      %1320 = vst [vmem:[%s1317] sm:$0xf] %v1319
      %1321 = vst [vmem:[%s1317 + $0x4] sm:$0xf] %v1312
      %v1322 = vld [vmem:[%s1317 + $0x8] sm:$0x1]
      %v1323 = vsel %vm1151, %v1313, %v1322
      %1324 = vst [vmem:[%s1317 + $0x8] sm:$0x1] %v1323
      %v1325 = vld [vmem:[#allocation2] sm:$0xf]
      %v1326 = vld [vmem:[#allocation2 + $0x4] sm:$0xf]
      %v1327 = vld [vmem:[#allocation2 + $0xc] sm:$0xf]
      %v1328 = vld [vmem:[#allocation2 + $0x10] sm:$0xf]
      %v1329 = vld [vmem:[#allocation2 + $0x18] sm:$0xf]
      %v1330 = vld [vmem:[#allocation2 + $0x1c] sm:$0xf]
      %v1331 = vld [vmem:[#allocation2 + $0x24] sm:$0xf]
      %v1332 = vld [vmem:[#allocation2 + $0x28] sm:$0xf]
      %v1333 = vld [vmem:[#allocation2 + $0x30] sm:$0xf]
      %v1334 = vld [vmem:[#allocation2 + $0x34] sm:$0xf]
      %v1335 = vld [vmem:[#allocation2 + $0x3c] sm:$0xf]
      %v1336 = vld [vmem:[#allocation2 + $0x40] sm:$0xf]
      %v1337 = vld [vmem:[#allocation2 + $0x48] sm:$0xf]
      %v1338 = vld [vmem:[#allocation2 + $0x4c] sm:$0xf]
      %v1339 = vld [vmem:[#allocation2 + $0x54] sm:$0xf]
      %v1340 = vld [vmem:[#allocation2 + $0x58] sm:$0xf]
      %v1341 = vld [vmem:[#allocation2 + $0x60] sm:$0xf]
      %v1342 = vld [vmem:[#allocation2 + $0x64] sm:$0xf]
      %v1343 = vld [vmem:[#allocation2 + $0x6c] sm:$0xf]
      %v1344 = vld [vmem:[#allocation2 + $0x70] sm:$0xf]
      %v1345 = vld [vmem:[#allocation2 + $0x78] sm:$0xf]
      %v1346 = vld [vmem:[#allocation2 + $0x7c] sm:$0xf]
      %v1347 = vld [vmem:[#allocation2 + $0x84] sm:$0xf]
      %v1348 = vld [vmem:[#allocation2 + $0x88] sm:$0xf]
      %v1349 = vld [vmem:[#allocation2 + $0x90] sm:$0xf]
      %v1350 = vld [vmem:[#allocation2 + $0x94] sm:$0xf]
      %v1351 = vld [vmem:[#allocation2 + $0x9c] sm:$0xf]
      %v1352 = vld [vmem:[#allocation2 + $0xa0] sm:$0xf]
      %v1353 = vld [vmem:[#allocation2 + $0xa8] sm:$0xf]
      %v1354 = vld [vmem:[#allocation2 + $0xac] sm:$0xf]
      %v1355 = vld [vmem:[#allocation2 + $0xb4] sm:$0xf]
      %v1356 = vld [vmem:[#allocation2 + $0xb8] sm:$0xf]
      %v1357 = vld [vmem:[#allocation2 + $0x8] sm:$0x1]
      %v1358 = vld [vmem:[#allocation2 + $0x14] sm:$0x1]
      %v1359 = vld [vmem:[#allocation2 + $0x20] sm:$0x1]
      %v1360 = vld [vmem:[#allocation2 + $0x2c] sm:$0x1]
      %v1361 = vld [vmem:[#allocation2 + $0x38] sm:$0x1]
      %v1362 = vld [vmem:[#allocation2 + $0x44] sm:$0x1]
      %v1363 = vld [vmem:[#allocation2 + $0x50] sm:$0x1]
      %v1364 = vld [vmem:[#allocation2 + $0x5c] sm:$0x1]
      %v1365 = vld [vmem:[#allocation2 + $0x68] sm:$0x1]
      %v1366 = vld [vmem:[#allocation2 + $0x74] sm:$0x1]
      %v1367 = vld [vmem:[#allocation2 + $0x80] sm:$0x1]
      %v1368 = vld [vmem:[#allocation2 + $0x8c] sm:$0x1]
      %v1369 = vld [vmem:[#allocation2 + $0x98] sm:$0x1]
      %v1370 = vld [vmem:[#allocation2 + $0xa4] sm:$0x1]
      %v1371 = vld [vmem:[#allocation2 + $0xb0] sm:$0x1]
      %v1372 = vld [vmem:[#allocation2 + $0xbc] sm:$0x1]
      %vm1373 = vsmask.f32 3328
      %vm1374 = vsmask.f32 7440
      %vm1375 = vmor %vm1373, %vm1374
      %v1377 = vshrl.u32 %v1325, 16
      %v1379 = vrot.slane %v1377, 4
      %v1380 = vshll.u32 %v1325, 16
      %v1382 = vrot.slane %v1380, 5
      %v1383 = vor.u32 %v1379, %v1382
      %v1384 = vrot.slane %v1383, 4
      %v1386 = vshll.u32 %v1326, 16
      %v1388 = vrot.slane %v1386, 5
      %v1389 = vsel %vm1375, %v1384, %v1388
      %v1390 = vshrl.u32 %v1326, 16
      %v1392 = vrot.slane %v1390, 4
      %v1393 = vor.u32 %v1392, %v1388
      %v1394 = vrot.slane %v1393, 4
      %v1396 = vshll.u32 %v1357, 16
      %v1398 = vrot.slane %v1396, 5
      %v1399 = vsel %vm1375, %v1394, %v1398
      %v1401 = vshrl.u32 %v1327, 16
      %v1403 = vrot.slane %v1401, 4
      %v1404 = vshll.u32 %v1327, 16
      %v1406 = vrot.slane %v1404, 5
      %v1407 = vor.u32 %v1403, %v1406
      %v1408 = vrot.slane %v1407, 4
      %v1410 = vshll.u32 %v1328, 16
      %v1412 = vrot.slane %v1410, 5
      %v1413 = vsel %vm1375, %v1408, %v1412
      %v1414 = vshrl.u32 %v1328, 16
      %v1416 = vrot.slane %v1414, 4
      %v1417 = vor.u32 %v1416, %v1412
      %v1418 = vrot.slane %v1417, 4
      %v1420 = vshll.u32 %v1358, 16
      %v1422 = vrot.slane %v1420, 5
      %v1423 = vsel %vm1375, %v1418, %v1422
      %v1425 = vshrl.u32 %v1329, 16
      %v1427 = vrot.slane %v1425, 4
      %v1428 = vshll.u32 %v1329, 16
      %v1430 = vrot.slane %v1428, 5
      %v1431 = vor.u32 %v1427, %v1430
      %v1432 = vrot.slane %v1431, 4
      %v1434 = vshll.u32 %v1330, 16
      %v1436 = vrot.slane %v1434, 5
      %v1437 = vsel %vm1375, %v1432, %v1436
      %v1438 = vshrl.u32 %v1330, 16
      %v1440 = vrot.slane %v1438, 4
      %v1441 = vor.u32 %v1440, %v1436
      %v1442 = vrot.slane %v1441, 4
      %v1444 = vshll.u32 %v1359, 16
      %v1446 = vrot.slane %v1444, 5
      %v1447 = vsel %vm1375, %v1442, %v1446
      %v1449 = vshrl.u32 %v1331, 16
      %v1451 = vrot.slane %v1449, 4
      %v1452 = vshll.u32 %v1331, 16
      %v1454 = vrot.slane %v1452, 5
      %v1455 = vor.u32 %v1451, %v1454
      %v1456 = vrot.slane %v1455, 4
      %v1458 = vshll.u32 %v1332, 16
      %v1460 = vrot.slane %v1458, 5
      %v1461 = vsel %vm1375, %v1456, %v1460
      %v1462 = vshrl.u32 %v1332, 16
      %v1464 = vrot.slane %v1462, 4
      %v1465 = vor.u32 %v1464, %v1460
      %v1466 = vrot.slane %v1465, 4
      %v1468 = vshll.u32 %v1360, 16
      %v1470 = vrot.slane %v1468, 5
      %v1471 = vsel %vm1375, %v1466, %v1470
      %v1473 = vshrl.u32 %v1333, 16
      %v1475 = vrot.slane %v1473, 4
      %v1476 = vshll.u32 %v1333, 16
      %v1478 = vrot.slane %v1476, 5
      %v1479 = vor.u32 %v1475, %v1478
      %v1480 = vrot.slane %v1479, 4
      %v1482 = vshll.u32 %v1334, 16
      %v1484 = vrot.slane %v1482, 5
      %v1485 = vsel %vm1375, %v1480, %v1484
      %v1486 = vshrl.u32 %v1334, 16
      %v1488 = vrot.slane %v1486, 4
      %v1489 = vor.u32 %v1488, %v1484
      %v1490 = vrot.slane %v1489, 4
      %v1492 = vshll.u32 %v1361, 16
      %v1494 = vrot.slane %v1492, 5
      %v1495 = vsel %vm1375, %v1490, %v1494
      %v1497 = vshrl.u32 %v1335, 16
      %v1499 = vrot.slane %v1497, 4
      %v1500 = vshll.u32 %v1335, 16
      %v1502 = vrot.slane %v1500, 5
      %v1503 = vor.u32 %v1499, %v1502
      %v1504 = vrot.slane %v1503, 4
      %v1506 = vshll.u32 %v1336, 16
      %v1508 = vrot.slane %v1506, 5
      %v1509 = vsel %vm1375, %v1504, %v1508
      %v1510 = vshrl.u32 %v1336, 16
      %v1512 = vrot.slane %v1510, 4
      %v1513 = vor.u32 %v1512, %v1508
      %v1514 = vrot.slane %v1513, 4
      %v1516 = vshll.u32 %v1362, 16
      %v1518 = vrot.slane %v1516, 5
      %v1519 = vsel %vm1375, %v1514, %v1518
      %v1521 = vshrl.u32 %v1337, 16
      %v1523 = vrot.slane %v1521, 4
      %v1524 = vshll.u32 %v1337, 16
      %v1526 = vrot.slane %v1524, 5
      %v1527 = vor.u32 %v1523, %v1526
      %v1528 = vrot.slane %v1527, 4
      %v1530 = vshll.u32 %v1338, 16
      %v1532 = vrot.slane %v1530, 5
      %v1533 = vsel %vm1375, %v1528, %v1532
      %v1534 = vshrl.u32 %v1338, 16
      %v1536 = vrot.slane %v1534, 4
      %v1537 = vor.u32 %v1536, %v1532
      %v1538 = vrot.slane %v1537, 4
      %v1540 = vshll.u32 %v1363, 16
      %v1542 = vrot.slane %v1540, 5
      %v1543 = vsel %vm1375, %v1538, %v1542
      %v1545 = vshrl.u32 %v1339, 16
      %v1547 = vrot.slane %v1545, 4
      %v1548 = vshll.u32 %v1339, 16
      %v1550 = vrot.slane %v1548, 5
      %v1551 = vor.u32 %v1547, %v1550
      %v1552 = vrot.slane %v1551, 4
      %v1554 = vshll.u32 %v1340, 16
      %v1556 = vrot.slane %v1554, 5
      %v1557 = vsel %vm1375, %v1552, %v1556
      %v1558 = vshrl.u32 %v1340, 16
      %v1560 = vrot.slane %v1558, 4
      %v1561 = vor.u32 %v1560, %v1556
      %v1562 = vrot.slane %v1561, 4
      %v1564 = vshll.u32 %v1364, 16
      %v1566 = vrot.slane %v1564, 5
      %v1567 = vsel %vm1375, %v1562, %v1566
      %v1569 = vshrl.u32 %v1341, 16
      %v1571 = vrot.slane %v1569, 4
      %v1572 = vshll.u32 %v1341, 16
      %v1574 = vrot.slane %v1572, 5
      %v1575 = vor.u32 %v1571, %v1574
      %v1576 = vrot.slane %v1575, 4
      %v1578 = vshll.u32 %v1342, 16
      %v1580 = vrot.slane %v1578, 5
      %v1581 = vsel %vm1375, %v1576, %v1580
      %v1582 = vshrl.u32 %v1342, 16
      %v1584 = vrot.slane %v1582, 4
      %v1585 = vor.u32 %v1584, %v1580
      %v1586 = vrot.slane %v1585, 4
      %v1588 = vshll.u32 %v1365, 16
      %v1590 = vrot.slane %v1588, 5
      %v1591 = vsel %vm1375, %v1586, %v1590
      %v1593 = vshrl.u32 %v1343, 16
      %v1595 = vrot.slane %v1593, 4
      %v1596 = vshll.u32 %v1343, 16
      %v1598 = vrot.slane %v1596, 5
      %v1599 = vor.u32 %v1595, %v1598
      %v1600 = vrot.slane %v1599, 4
      %v1602 = vshll.u32 %v1344, 16
      %v1604 = vrot.slane %v1602, 5
      %v1605 = vsel %vm1375, %v1600, %v1604
      %v1606 = vshrl.u32 %v1344, 16
      %v1608 = vrot.slane %v1606, 4
      %v1609 = vor.u32 %v1608, %v1604
      %v1610 = vrot.slane %v1609, 4
      %v1612 = vshll.u32 %v1366, 16
      %v1614 = vrot.slane %v1612, 5
      %v1615 = vsel %vm1375, %v1610, %v1614
      %v1617 = vshrl.u32 %v1345, 16
      %v1619 = vrot.slane %v1617, 4
      %v1620 = vshll.u32 %v1345, 16
      %v1622 = vrot.slane %v1620, 5
      %v1623 = vor.u32 %v1619, %v1622
      %v1624 = vrot.slane %v1623, 4
      %v1626 = vshll.u32 %v1346, 16
      %v1628 = vrot.slane %v1626, 5
      %v1629 = vsel %vm1375, %v1624, %v1628
      %v1630 = vshrl.u32 %v1346, 16
      %v1632 = vrot.slane %v1630, 4
      %v1633 = vor.u32 %v1632, %v1628
      %v1634 = vrot.slane %v1633, 4
      %v1636 = vshll.u32 %v1367, 16
      %v1638 = vrot.slane %v1636, 5
      %v1639 = vsel %vm1375, %v1634, %v1638
      %v1641 = vshrl.u32 %v1347, 16
      %v1643 = vrot.slane %v1641, 4
      %v1644 = vshll.u32 %v1347, 16
      %v1646 = vrot.slane %v1644, 5
      %v1647 = vor.u32 %v1643, %v1646
      %v1648 = vrot.slane %v1647, 4
      %v1650 = vshll.u32 %v1348, 16
      %v1652 = vrot.slane %v1650, 5
      %v1653 = vsel %vm1375, %v1648, %v1652
      %v1654 = vshrl.u32 %v1348, 16
      %v1656 = vrot.slane %v1654, 4
      %v1657 = vor.u32 %v1656, %v1652
      %v1658 = vrot.slane %v1657, 4
      %v1660 = vshll.u32 %v1368, 16
      %v1662 = vrot.slane %v1660, 5
      %v1663 = vsel %vm1375, %v1658, %v1662
      %v1665 = vshrl.u32 %v1349, 16
      %v1667 = vrot.slane %v1665, 4
      %v1668 = vshll.u32 %v1349, 16
      %v1670 = vrot.slane %v1668, 5
      %v1671 = vor.u32 %v1667, %v1670
      %v1672 = vrot.slane %v1671, 4
      %v1674 = vshll.u32 %v1350, 16
      %v1676 = vrot.slane %v1674, 5
      %v1677 = vsel %vm1375, %v1672, %v1676
      %v1678 = vshrl.u32 %v1350, 16
      %v1680 = vrot.slane %v1678, 4
      %v1681 = vor.u32 %v1680, %v1676
      %v1682 = vrot.slane %v1681, 4
      %v1684 = vshll.u32 %v1369, 16
      %v1686 = vrot.slane %v1684, 5
      %v1687 = vsel %vm1375, %v1682, %v1686
      %v1689 = vshrl.u32 %v1351, 16
      %v1691 = vrot.slane %v1689, 4
      %v1692 = vshll.u32 %v1351, 16
      %v1694 = vrot.slane %v1692, 5
      %v1695 = vor.u32 %v1691, %v1694
      %v1696 = vrot.slane %v1695, 4
      %v1698 = vshll.u32 %v1352, 16
      %v1700 = vrot.slane %v1698, 5
      %v1701 = vsel %vm1375, %v1696, %v1700
      %v1702 = vshrl.u32 %v1352, 16
      %v1704 = vrot.slane %v1702, 4
      %v1705 = vor.u32 %v1704, %v1700
      %v1706 = vrot.slane %v1705, 4
      %v1708 = vshll.u32 %v1370, 16
      %v1710 = vrot.slane %v1708, 5
      %v1711 = vsel %vm1375, %v1706, %v1710
      %v1713 = vshrl.u32 %v1353, 16
      %v1715 = vrot.slane %v1713, 4
      %v1716 = vshll.u32 %v1353, 16
      %v1718 = vrot.slane %v1716, 5
      %v1719 = vor.u32 %v1715, %v1718
      %v1720 = vrot.slane %v1719, 4
      %v1722 = vshll.u32 %v1354, 16
      %v1724 = vrot.slane %v1722, 5
      %v1725 = vsel %vm1375, %v1720, %v1724
      %v1726 = vshrl.u32 %v1354, 16
      %v1728 = vrot.slane %v1726, 4
      %v1729 = vor.u32 %v1728, %v1724
      %v1730 = vrot.slane %v1729, 4
      %v1732 = vshll.u32 %v1371, 16
      %v1734 = vrot.slane %v1732, 5
      %v1735 = vsel %vm1375, %v1730, %v1734
      %v1737 = vshrl.u32 %v1355, 16
      %v1739 = vrot.slane %v1737, 4
      %v1740 = vshll.u32 %v1355, 16
      %v1742 = vrot.slane %v1740, 5
      %v1743 = vor.u32 %v1739, %v1742
      %v1744 = vrot.slane %v1743, 4
      %v1746 = vshll.u32 %v1356, 16
      %v1748 = vrot.slane %v1746, 5
      %v1749 = vsel %vm1375, %v1744, %v1748
      %v1750 = vshrl.u32 %v1356, 16
      %v1752 = vrot.slane %v1750, 4
      %v1753 = vor.u32 %v1752, %v1748
      %v1754 = vrot.slane %v1753, 4
      %v1756 = vshll.u32 %v1372, 16
      %v1758 = vrot.slane %v1756, 5
      %v1759 = vsel %vm1375, %v1754, %v1758
      %v1760 = vld [vmem:[#allocation2] sm:$0xe]
      %v1761 = vld [vmem:[#allocation2 + $0xc] sm:$0xe]
      %v1762 = vld [vmem:[#allocation2 + $0x18] sm:$0xe]
      %v1763 = vld [vmem:[#allocation2 + $0x24] sm:$0xe]
      %v1764 = vld [vmem:[#allocation2 + $0x30] sm:$0xe]
      %v1765 = vld [vmem:[#allocation2 + $0x3c] sm:$0xe]
      %v1766 = vld [vmem:[#allocation2 + $0x48] sm:$0xe]
      %v1767 = vld [vmem:[#allocation2 + $0x54] sm:$0xe]
      %v1768 = vld [vmem:[#allocation2 + $0x60] sm:$0xe]
      %v1769 = vld [vmem:[#allocation2 + $0x6c] sm:$0xe]
      %v1770 = vld [vmem:[#allocation2 + $0x78] sm:$0xe]
      %v1771 = vld [vmem:[#allocation2 + $0x84] sm:$0xe]
      %v1772 = vld [vmem:[#allocation2 + $0x90] sm:$0xe]
      %v1773 = vld [vmem:[#allocation2 + $0x9c] sm:$0xe]
      %v1774 = vld [vmem:[#allocation2 + $0xa8] sm:$0xe]
      %v1775 = vld [vmem:[#allocation2 + $0xb4] sm:$0xe]
      %vm1824 = vcmask 1042432
      %vm1825 = vcmask 1046532
      %vm1826 = vmor %vm1824, %vm1825
      %v1827 = vrot.slane %v1760, 5
      %v1828 = vrot.slane %v1827, 4
      %v1829 = vrot.slane %v1326, 5
      %v1830 = vsel %vm1826, %v1828, %v1829
      %v1831 = vrot.slane %v1829, 4
      %v1832 = vrot.slane %v1357, 5
      %v1833 = vsel %vm1826, %v1831, %v1832
      %v1834 = vrot.slane %v1761, 5
      %v1835 = vrot.slane %v1834, 4
      %v1836 = vrot.slane %v1328, 5
      %v1837 = vsel %vm1826, %v1835, %v1836
      %v1838 = vrot.slane %v1836, 4
      %v1839 = vrot.slane %v1358, 5
      %v1840 = vsel %vm1826, %v1838, %v1839
      %v1841 = vrot.slane %v1762, 5
      %v1842 = vrot.slane %v1841, 4
      %v1843 = vrot.slane %v1330, 5
      %v1844 = vsel %vm1826, %v1842, %v1843
      %v1845 = vrot.slane %v1843, 4
      %v1846 = vrot.slane %v1359, 5
      %v1847 = vsel %vm1826, %v1845, %v1846
      %v1848 = vrot.slane %v1763, 5
      %v1849 = vrot.slane %v1848, 4
      %v1850 = vrot.slane %v1332, 5
      %v1851 = vsel %vm1826, %v1849, %v1850
      %v1852 = vrot.slane %v1850, 4
      %v1853 = vrot.slane %v1360, 5
      %v1854 = vsel %vm1826, %v1852, %v1853
      %v1855 = vrot.slane %v1764, 5
      %v1856 = vrot.slane %v1855, 4
      %v1857 = vrot.slane %v1334, 5
      %v1858 = vsel %vm1826, %v1856, %v1857
      %v1859 = vrot.slane %v1857, 4
      %v1860 = vrot.slane %v1361, 5
      %v1861 = vsel %vm1826, %v1859, %v1860
      %v1862 = vrot.slane %v1765, 5
      %v1863 = vrot.slane %v1862, 4
      %v1864 = vrot.slane %v1336, 5
      %v1865 = vsel %vm1826, %v1863, %v1864
      %v1866 = vrot.slane %v1864, 4
      %v1867 = vrot.slane %v1362, 5
      %v1868 = vsel %vm1826, %v1866, %v1867
      %v1869 = vrot.slane %v1766, 5
      %v1870 = vrot.slane %v1869, 4
      %v1871 = vrot.slane %v1338, 5
      %v1872 = vsel %vm1826, %v1870, %v1871
      %v1873 = vrot.slane %v1871, 4
      %v1874 = vrot.slane %v1363, 5
      %v1875 = vsel %vm1826, %v1873, %v1874
      %v1876 = vrot.slane %v1767, 5
      %v1877 = vrot.slane %v1876, 4
      %v1878 = vrot.slane %v1340, 5
      %v1879 = vsel %vm1826, %v1877, %v1878
      %v1880 = vrot.slane %v1878, 4
      %v1881 = vrot.slane %v1364, 5
      %v1882 = vsel %vm1826, %v1880, %v1881
      %v1883 = vrot.slane %v1768, 5
      %v1884 = vrot.slane %v1883, 4
      %v1885 = vrot.slane %v1342, 5
      %v1886 = vsel %vm1826, %v1884, %v1885
      %v1887 = vrot.slane %v1885, 4
      %v1888 = vrot.slane %v1365, 5
      %v1889 = vsel %vm1826, %v1887, %v1888
      %v1890 = vrot.slane %v1769, 5
      %v1891 = vrot.slane %v1890, 4
      %v1892 = vrot.slane %v1344, 5
      %v1893 = vsel %vm1826, %v1891, %v1892
      %v1894 = vrot.slane %v1892, 4
      %v1895 = vrot.slane %v1366, 5
      %v1896 = vsel %vm1826, %v1894, %v1895
      %v1897 = vrot.slane %v1770, 5
      %v1898 = vrot.slane %v1897, 4
      %v1899 = vrot.slane %v1346, 5
      %v1900 = vsel %vm1826, %v1898, %v1899
      %v1901 = vrot.slane %v1899, 4
      %v1902 = vrot.slane %v1367, 5
      %v1903 = vsel %vm1826, %v1901, %v1902
      %v1904 = vrot.slane %v1771, 5
      %v1905 = vrot.slane %v1904, 4
      %v1906 = vrot.slane %v1348, 5
      %v1907 = vsel %vm1826, %v1905, %v1906
      %v1908 = vrot.slane %v1906, 4
      %v1909 = vrot.slane %v1368, 5
      %v1910 = vsel %vm1826, %v1908, %v1909
      %v1911 = vrot.slane %v1772, 5
      %v1912 = vrot.slane %v1911, 4
      %v1913 = vrot.slane %v1350, 5
      %v1914 = vsel %vm1826, %v1912, %v1913
      %v1915 = vrot.slane %v1913, 4
      %v1916 = vrot.slane %v1369, 5
      %v1917 = vsel %vm1826, %v1915, %v1916
      %v1918 = vrot.slane %v1773, 5
      %v1919 = vrot.slane %v1918, 4
      %v1920 = vrot.slane %v1352, 5
      %v1921 = vsel %vm1826, %v1919, %v1920
      %v1922 = vrot.slane %v1920, 4
      %v1923 = vrot.slane %v1370, 5
      %v1924 = vsel %vm1826, %v1922, %v1923
      %v1925 = vrot.slane %v1774, 5
      %v1926 = vrot.slane %v1925, 4
      %v1927 = vrot.slane %v1354, 5
      %v1928 = vsel %vm1826, %v1926, %v1927
      %v1929 = vrot.slane %v1927, 4
      %v1930 = vrot.slane %v1371, 5
      %v1931 = vsel %vm1826, %v1929, %v1930
      %v1932 = vrot.slane %v1775, 5
      %v1933 = vrot.slane %v1932, 4
      %v1934 = vrot.slane %v1356, 5
      %v1935 = vsel %vm1826, %v1933, %v1934
      %v1936 = vrot.slane %v1934, 4
      %v1937 = vrot.slane %v1372, 5
      %v1938 = vsel %vm1826, %v1936, %v1937
      %v1939 = vld [vmem:[%s1142] sm:$0xf]
      %v1940 = vld [vmem:[%s1142 + $0x4] sm:$0xf]
      %v1941 = vld [vmem:[%s1142 + $0xc] sm:$0xf]
      %v1942 = vld [vmem:[%s1142 + $0x10] sm:$0xf]
      %v1943 = vld [vmem:[%s1142 + $0x18] sm:$0xf]
      %v1944 = vld [vmem:[%s1142 + $0x1c] sm:$0xf]
      %v1945 = vld [vmem:[%s1142 + $0x24] sm:$0xf]
      %v1946 = vld [vmem:[%s1142 + $0x28] sm:$0xf]
      %v1947 = vld [vmem:[%s1142 + $0x30] sm:$0xf]
      %v1948 = vld [vmem:[%s1142 + $0x34] sm:$0xf]
      %v1949 = vld [vmem:[%s1142 + $0x3c] sm:$0xf]
      %v1950 = vld [vmem:[%s1142 + $0x40] sm:$0xf]
      %v1951 = vld [vmem:[%s1142 + $0x48] sm:$0xf]
      %v1952 = vld [vmem:[%s1142 + $0x4c] sm:$0xf]
      %v1953 = vld [vmem:[%s1142 + $0x54] sm:$0xf]
      %v1954 = vld [vmem:[%s1142 + $0x58] sm:$0xf]
      %v1955 = vld [vmem:[%s1142 + $0x60] sm:$0xf]
      %v1956 = vld [vmem:[%s1142 + $0x64] sm:$0xf]
      %v1957 = vld [vmem:[%s1142 + $0x6c] sm:$0xf]
      %v1958 = vld [vmem:[%s1142 + $0x70] sm:$0xf]
      %v1959 = vld [vmem:[%s1142 + $0x78] sm:$0xf]
      %v1960 = vld [vmem:[%s1142 + $0x7c] sm:$0xf]
      %v1961 = vld [vmem:[%s1142 + $0x84] sm:$0xf]
      %v1962 = vld [vmem:[%s1142 + $0x88] sm:$0xf]
      %v1963 = vld [vmem:[%s1142 + $0x90] sm:$0xf]
      %v1964 = vld [vmem:[%s1142 + $0x94] sm:$0xf]
      %v1965 = vld [vmem:[%s1142 + $0x9c] sm:$0xf]
      %v1966 = vld [vmem:[%s1142 + $0xa0] sm:$0xf]
      %v1967 = vld [vmem:[%s1142 + $0xa8] sm:$0xf]
      %v1968 = vld [vmem:[%s1142 + $0xac] sm:$0xf]
      %v1969 = vld [vmem:[%s1142 + $0xb4] sm:$0xf]
      %v1970 = vld [vmem:[%s1142 + $0xb8] sm:$0xf]
      %v1971 = vld [vmem:[%s1142 + $0x8] sm:$0x1]
      %v1972 = vld [vmem:[%s1142 + $0x14] sm:$0x1]
      %v1973 = vld [vmem:[%s1142 + $0x20] sm:$0x1]
      %v1974 = vld [vmem:[%s1142 + $0x2c] sm:$0x1]
      %v1975 = vld [vmem:[%s1142 + $0x38] sm:$0x1]
      %v1976 = vld [vmem:[%s1142 + $0x44] sm:$0x1]
      %v1977 = vld [vmem:[%s1142 + $0x50] sm:$0x1]
      %v1978 = vld [vmem:[%s1142 + $0x5c] sm:$0x1]
      %v1979 = vld [vmem:[%s1142 + $0x68] sm:$0x1]
      %v1980 = vld [vmem:[%s1142 + $0x74] sm:$0x1]
      %v1981 = vld [vmem:[%s1142 + $0x80] sm:$0x1]
      %v1982 = vld [vmem:[%s1142 + $0x8c] sm:$0x1]
      %v1983 = vld [vmem:[%s1142 + $0x98] sm:$0x1]
      %v1984 = vld [vmem:[%s1142 + $0xa4] sm:$0x1]
      %v1985 = vld [vmem:[%s1142 + $0xb0] sm:$0x1]
      %v1986 = vld [vmem:[%s1142 + $0xbc] sm:$0x1]
      %v1988 = vshrl.u32 %v1939, 16
      %v1990 = vrot.slane %v1988, 4
      %v1991 = vshll.u32 %v1939, 16
      %v1993 = vrot.slane %v1991, 5
      %v1994 = vor.u32 %v1990, %v1993
      %v1995 = vrot.slane %v1994, 4
      %v1997 = vshll.u32 %v1940, 16
      %v1999 = vrot.slane %v1997, 5
      %v2000 = vsel %vm1375, %v1995, %v1999
      %v2001 = vshrl.u32 %v1940, 16
      %v2003 = vrot.slane %v2001, 4
      %v2004 = vor.u32 %v2003, %v1999
      %v2005 = vrot.slane %v2004, 4
      %v2007 = vshll.u32 %v1971, 16
      %v2009 = vrot.slane %v2007, 5
      %v2010 = vsel %vm1375, %v2005, %v2009
      %v2012 = vshrl.u32 %v1941, 16
      %v2014 = vrot.slane %v2012, 4
      %v2015 = vshll.u32 %v1941, 16
      %v2017 = vrot.slane %v2015, 5
      %v2018 = vor.u32 %v2014, %v2017
      %v2019 = vrot.slane %v2018, 4
      %v2021 = vshll.u32 %v1942, 16
      %v2023 = vrot.slane %v2021, 5
      %v2024 = vsel %vm1375, %v2019, %v2023
      %v2025 = vshrl.u32 %v1942, 16
      %v2027 = vrot.slane %v2025, 4
      %v2028 = vor.u32 %v2027, %v2023
      %v2029 = vrot.slane %v2028, 4
      %v2031 = vshll.u32 %v1972, 16
      %v2033 = vrot.slane %v2031, 5
      %v2034 = vsel %vm1375, %v2029, %v2033
      %v2036 = vshrl.u32 %v1943, 16
      %v2038 = vrot.slane %v2036, 4
      %v2039 = vshll.u32 %v1943, 16
      %v2041 = vrot.slane %v2039, 5
      %v2042 = vor.u32 %v2038, %v2041
      %v2043 = vrot.slane %v2042, 4
      %v2045 = vshll.u32 %v1944, 16
      %v2047 = vrot.slane %v2045, 5
      %v2048 = vsel %vm1375, %v2043, %v2047
      %v2049 = vshrl.u32 %v1944, 16
      %v2051 = vrot.slane %v2049, 4
      %v2052 = vor.u32 %v2051, %v2047
      %v2053 = vrot.slane %v2052, 4
      %v2055 = vshll.u32 %v1973, 16
      %v2057 = vrot.slane %v2055, 5
      %v2058 = vsel %vm1375, %v2053, %v2057
      %v2060 = vshrl.u32 %v1945, 16
      %v2062 = vrot.slane %v2060, 4
      %v2063 = vshll.u32 %v1945, 16
      %v2065 = vrot.slane %v2063, 5
      %v2066 = vor.u32 %v2062, %v2065
      %v2067 = vrot.slane %v2066, 4
      %v2069 = vshll.u32 %v1946, 16
      %v2071 = vrot.slane %v2069, 5
      %v2072 = vsel %vm1375, %v2067, %v2071
      %v2073 = vshrl.u32 %v1946, 16
      %v2075 = vrot.slane %v2073, 4
      %v2076 = vor.u32 %v2075, %v2071
      %v2077 = vrot.slane %v2076, 4
      %v2079 = vshll.u32 %v1974, 16
      %v2081 = vrot.slane %v2079, 5
      %v2082 = vsel %vm1375, %v2077, %v2081
      %v2084 = vshrl.u32 %v1947, 16
      %v2086 = vrot.slane %v2084, 4
      %v2087 = vshll.u32 %v1947, 16
      %v2089 = vrot.slane %v2087, 5
      %v2090 = vor.u32 %v2086, %v2089
      %v2091 = vrot.slane %v2090, 4
      %v2093 = vshll.u32 %v1948, 16
      %v2095 = vrot.slane %v2093, 5
      %v2096 = vsel %vm1375, %v2091, %v2095
      %v2097 = vshrl.u32 %v1948, 16
      %v2099 = vrot.slane %v2097, 4
      %v2100 = vor.u32 %v2099, %v2095
      %v2101 = vrot.slane %v2100, 4
      %v2103 = vshll.u32 %v1975, 16
      %v2105 = vrot.slane %v2103, 5
      %v2106 = vsel %vm1375, %v2101, %v2105
      %v2108 = vshrl.u32 %v1949, 16
      %v2110 = vrot.slane %v2108, 4
      %v2111 = vshll.u32 %v1949, 16
      %v2113 = vrot.slane %v2111, 5
      %v2114 = vor.u32 %v2110, %v2113
      %v2115 = vrot.slane %v2114, 4
      %v2117 = vshll.u32 %v1950, 16
      %v2119 = vrot.slane %v2117, 5
      %v2120 = vsel %vm1375, %v2115, %v2119
      %v2121 = vshrl.u32 %v1950, 16
      %v2123 = vrot.slane %v2121, 4
      %v2124 = vor.u32 %v2123, %v2119
      %v2125 = vrot.slane %v2124, 4
      %v2127 = vshll.u32 %v1976, 16
      %v2129 = vrot.slane %v2127, 5
      %v2130 = vsel %vm1375, %v2125, %v2129
      %v2132 = vshrl.u32 %v1951, 16
      %v2134 = vrot.slane %v2132, 4
      %v2135 = vshll.u32 %v1951, 16
      %v2137 = vrot.slane %v2135, 5
      %v2138 = vor.u32 %v2134, %v2137
      %v2139 = vrot.slane %v2138, 4
      %v2141 = vshll.u32 %v1952, 16
      %v2143 = vrot.slane %v2141, 5
      %v2144 = vsel %vm1375, %v2139, %v2143
      %v2145 = vshrl.u32 %v1952, 16
      %v2147 = vrot.slane %v2145, 4
      %v2148 = vor.u32 %v2147, %v2143
      %v2149 = vrot.slane %v2148, 4
      %v2151 = vshll.u32 %v1977, 16
      %v2153 = vrot.slane %v2151, 5
      %v2154 = vsel %vm1375, %v2149, %v2153
      %v2156 = vshrl.u32 %v1953, 16
      %v2158 = vrot.slane %v2156, 4
      %v2159 = vshll.u32 %v1953, 16
      %v2161 = vrot.slane %v2159, 5
      %v2162 = vor.u32 %v2158, %v2161
      %v2163 = vrot.slane %v2162, 4
      %v2165 = vshll.u32 %v1954, 16
      %v2167 = vrot.slane %v2165, 5
      %v2168 = vsel %vm1375, %v2163, %v2167
      %v2169 = vshrl.u32 %v1954, 16
      %v2171 = vrot.slane %v2169, 4
      %v2172 = vor.u32 %v2171, %v2167
      %v2173 = vrot.slane %v2172, 4
      %v2175 = vshll.u32 %v1978, 16
      %v2177 = vrot.slane %v2175, 5
      %v2178 = vsel %vm1375, %v2173, %v2177
      %v2180 = vshrl.u32 %v1955, 16
      %v2182 = vrot.slane %v2180, 4
      %v2183 = vshll.u32 %v1955, 16
      %v2185 = vrot.slane %v2183, 5
      %v2186 = vor.u32 %v2182, %v2185
      %v2187 = vrot.slane %v2186, 4
      %v2189 = vshll.u32 %v1956, 16
      %v2191 = vrot.slane %v2189, 5
      %v2192 = vsel %vm1375, %v2187, %v2191
      %v2193 = vshrl.u32 %v1956, 16
      %v2195 = vrot.slane %v2193, 4
      %v2196 = vor.u32 %v2195, %v2191
      %v2197 = vrot.slane %v2196, 4
      %v2199 = vshll.u32 %v1979, 16
      %v2201 = vrot.slane %v2199, 5
      %v2202 = vsel %vm1375, %v2197, %v2201
      %v2204 = vshrl.u32 %v1957, 16
      %v2206 = vrot.slane %v2204, 4
      %v2207 = vshll.u32 %v1957, 16
      %v2209 = vrot.slane %v2207, 5
      %v2210 = vor.u32 %v2206, %v2209
      %v2211 = vrot.slane %v2210, 4
      %v2213 = vshll.u32 %v1958, 16
      %v2215 = vrot.slane %v2213, 5
      %v2216 = vsel %vm1375, %v2211, %v2215
      %v2217 = vshrl.u32 %v1958, 16
      %v2219 = vrot.slane %v2217, 4
      %v2220 = vor.u32 %v2219, %v2215
      %v2221 = vrot.slane %v2220, 4
      %v2223 = vshll.u32 %v1980, 16
      %v2225 = vrot.slane %v2223, 5
      %v2226 = vsel %vm1375, %v2221, %v2225
      %v2228 = vshrl.u32 %v1959, 16
      %v2230 = vrot.slane %v2228, 4
      %v2231 = vshll.u32 %v1959, 16
      %v2233 = vrot.slane %v2231, 5
      %v2234 = vor.u32 %v2230, %v2233
      %v2235 = vrot.slane %v2234, 4
      %v2237 = vshll.u32 %v1960, 16
      %v2239 = vrot.slane %v2237, 5
      %v2240 = vsel %vm1375, %v2235, %v2239
      %v2241 = vshrl.u32 %v1960, 16
      %v2243 = vrot.slane %v2241, 4
      %v2244 = vor.u32 %v2243, %v2239
      %v2245 = vrot.slane %v2244, 4
      %v2247 = vshll.u32 %v1981, 16
      %v2249 = vrot.slane %v2247, 5
      %v2250 = vsel %vm1375, %v2245, %v2249
      %v2252 = vshrl.u32 %v1961, 16
      %v2254 = vrot.slane %v2252, 4
      %v2255 = vshll.u32 %v1961, 16
      %v2257 = vrot.slane %v2255, 5
      %v2258 = vor.u32 %v2254, %v2257
      %v2259 = vrot.slane %v2258, 4
      %v2261 = vshll.u32 %v1962, 16
      %v2263 = vrot.slane %v2261, 5
      %v2264 = vsel %vm1375, %v2259, %v2263
      %v2265 = vshrl.u32 %v1962, 16
      %v2267 = vrot.slane %v2265, 4
      %v2268 = vor.u32 %v2267, %v2263
      %v2269 = vrot.slane %v2268, 4
      %v2271 = vshll.u32 %v1982, 16
      %v2273 = vrot.slane %v2271, 5
      %v2274 = vsel %vm1375, %v2269, %v2273
      %v2276 = vshrl.u32 %v1963, 16
      %v2278 = vrot.slane %v2276, 4
      %v2279 = vshll.u32 %v1963, 16
      %v2281 = vrot.slane %v2279, 5
      %v2282 = vor.u32 %v2278, %v2281
      %v2283 = vrot.slane %v2282, 4
      %v2285 = vshll.u32 %v1964, 16
      %v2287 = vrot.slane %v2285, 5
      %v2288 = vsel %vm1375, %v2283, %v2287
      %v2289 = vshrl.u32 %v1964, 16
      %v2291 = vrot.slane %v2289, 4
      %v2292 = vor.u32 %v2291, %v2287
      %v2293 = vrot.slane %v2292, 4
      %v2295 = vshll.u32 %v1983, 16
      %v2297 = vrot.slane %v2295, 5
      %v2298 = vsel %vm1375, %v2293, %v2297
      %v2300 = vshrl.u32 %v1965, 16
      %v2302 = vrot.slane %v2300, 4
      %v2303 = vshll.u32 %v1965, 16
      %v2305 = vrot.slane %v2303, 5
      %v2306 = vor.u32 %v2302, %v2305
      %v2307 = vrot.slane %v2306, 4
      %v2309 = vshll.u32 %v1966, 16
      %v2311 = vrot.slane %v2309, 5
      %v2312 = vsel %vm1375, %v2307, %v2311
      %v2313 = vshrl.u32 %v1966, 16
      %v2315 = vrot.slane %v2313, 4
      %v2316 = vor.u32 %v2315, %v2311
      %v2317 = vrot.slane %v2316, 4
      %v2319 = vshll.u32 %v1984, 16
      %v2321 = vrot.slane %v2319, 5
      %v2322 = vsel %vm1375, %v2317, %v2321
      %v2324 = vshrl.u32 %v1967, 16
      %v2326 = vrot.slane %v2324, 4
      %v2327 = vshll.u32 %v1967, 16
      %v2329 = vrot.slane %v2327, 5
      %v2330 = vor.u32 %v2326, %v2329
      %v2331 = vrot.slane %v2330, 4
      %v2333 = vshll.u32 %v1968, 16
      %v2335 = vrot.slane %v2333, 5
      %v2336 = vsel %vm1375, %v2331, %v2335
      %v2337 = vshrl.u32 %v1968, 16
      %v2339 = vrot.slane %v2337, 4
      %v2340 = vor.u32 %v2339, %v2335
      %v2341 = vrot.slane %v2340, 4
      %v2343 = vshll.u32 %v1985, 16
      %v2345 = vrot.slane %v2343, 5
      %v2346 = vsel %vm1375, %v2341, %v2345
      %v2348 = vshrl.u32 %v1969, 16
      %v2350 = vrot.slane %v2348, 4
      %v2351 = vshll.u32 %v1969, 16
      %v2353 = vrot.slane %v2351, 5
      %v2354 = vor.u32 %v2350, %v2353
      %v2355 = vrot.slane %v2354, 4
      %v2357 = vshll.u32 %v1970, 16
      %v2359 = vrot.slane %v2357, 5
      %v2360 = vsel %vm1375, %v2355, %v2359
      %v2361 = vshrl.u32 %v1970, 16
      %v2363 = vrot.slane %v2361, 4
      %v2364 = vor.u32 %v2363, %v2359
      %v2365 = vrot.slane %v2364, 4
      %v2367 = vshll.u32 %v1986, 16
      %v2369 = vrot.slane %v2367, 5
      %v2370 = vsel %vm1375, %v2365, %v2369
      %v2371 = vld [vmem:[%s1142] sm:$0xe]
      %v2372 = vld [vmem:[%s1142 + $0xc] sm:$0xe]
      %v2373 = vld [vmem:[%s1142 + $0x18] sm:$0xe]
      %v2374 = vld [vmem:[%s1142 + $0x24] sm:$0xe]
      %v2375 = vld [vmem:[%s1142 + $0x30] sm:$0xe]
      %v2376 = vld [vmem:[%s1142 + $0x3c] sm:$0xe]
      %v2377 = vld [vmem:[%s1142 + $0x48] sm:$0xe]
      %v2378 = vld [vmem:[%s1142 + $0x54] sm:$0xe]
      %v2379 = vld [vmem:[%s1142 + $0x60] sm:$0xe]
      %v2380 = vld [vmem:[%s1142 + $0x6c] sm:$0xe]
      %v2381 = vld [vmem:[%s1142 + $0x78] sm:$0xe]
      %v2382 = vld [vmem:[%s1142 + $0x84] sm:$0xe]
      %v2383 = vld [vmem:[%s1142 + $0x90] sm:$0xe]
      %v2384 = vld [vmem:[%s1142 + $0x9c] sm:$0xe]
      %v2385 = vld [vmem:[%s1142 + $0xa8] sm:$0xe]
      %v2386 = vld [vmem:[%s1142 + $0xb4] sm:$0xe]
      %v2435 = vrot.slane %v2371, 5
      %v2436 = vrot.slane %v2435, 4
      %v2437 = vrot.slane %v1940, 5
      %v2438 = vsel %vm1826, %v2436, %v2437
      %v2439 = vrot.slane %v2437, 4
      %v2440 = vrot.slane %v1971, 5
      %v2441 = vsel %vm1826, %v2439, %v2440
      %v2442 = vrot.slane %v2372, 5
      %v2443 = vrot.slane %v2442, 4
      %v2444 = vrot.slane %v1942, 5
      %v2445 = vsel %vm1826, %v2443, %v2444
      %v2446 = vrot.slane %v2444, 4
      %v2447 = vrot.slane %v1972, 5
      %v2448 = vsel %vm1826, %v2446, %v2447
      %v2449 = vrot.slane %v2373, 5
      %v2450 = vrot.slane %v2449, 4
      %v2451 = vrot.slane %v1944, 5
      %v2452 = vsel %vm1826, %v2450, %v2451
      %v2453 = vrot.slane %v2451, 4
      %v2454 = vrot.slane %v1973, 5
      %v2455 = vsel %vm1826, %v2453, %v2454
      %v2456 = vrot.slane %v2374, 5
      %v2457 = vrot.slane %v2456, 4
      %v2458 = vrot.slane %v1946, 5
      %v2459 = vsel %vm1826, %v2457, %v2458
      %v2460 = vrot.slane %v2458, 4
      %v2461 = vrot.slane %v1974, 5
      %v2462 = vsel %vm1826, %v2460, %v2461
      %v2463 = vrot.slane %v2375, 5
      %v2464 = vrot.slane %v2463, 4
      %v2465 = vrot.slane %v1948, 5
      %v2466 = vsel %vm1826, %v2464, %v2465
      %v2467 = vrot.slane %v2465, 4
      %v2468 = vrot.slane %v1975, 5
      %v2469 = vsel %vm1826, %v2467, %v2468
      %v2470 = vrot.slane %v2376, 5
      %v2471 = vrot.slane %v2470, 4
      %v2472 = vrot.slane %v1950, 5
      %v2473 = vsel %vm1826, %v2471, %v2472
      %v2474 = vrot.slane %v2472, 4
      %v2475 = vrot.slane %v1976, 5
      %v2476 = vsel %vm1826, %v2474, %v2475
      %v2477 = vrot.slane %v2377, 5
      %v2478 = vrot.slane %v2477, 4
      %v2479 = vrot.slane %v1952, 5
      %v2480 = vsel %vm1826, %v2478, %v2479
      %v2481 = vrot.slane %v2479, 4
      %v2482 = vrot.slane %v1977, 5
      %v2483 = vsel %vm1826, %v2481, %v2482
      %v2484 = vrot.slane %v2378, 5
      %v2485 = vrot.slane %v2484, 4
      %v2486 = vrot.slane %v1954, 5
      %v2487 = vsel %vm1826, %v2485, %v2486
      %v2488 = vrot.slane %v2486, 4
      %v2489 = vrot.slane %v1978, 5
      %v2490 = vsel %vm1826, %v2488, %v2489
      %v2491 = vrot.slane %v2379, 5
      %v2492 = vrot.slane %v2491, 4
      %v2493 = vrot.slane %v1956, 5
      %v2494 = vsel %vm1826, %v2492, %v2493
      %v2495 = vrot.slane %v2493, 4
      %v2496 = vrot.slane %v1979, 5
      %v2497 = vsel %vm1826, %v2495, %v2496
      %v2498 = vrot.slane %v2380, 5
      %v2499 = vrot.slane %v2498, 4
      %v2500 = vrot.slane %v1958, 5
      %v2501 = vsel %vm1826, %v2499, %v2500
      %v2502 = vrot.slane %v2500, 4
      %v2503 = vrot.slane %v1980, 5
      %v2504 = vsel %vm1826, %v2502, %v2503
      %v2505 = vrot.slane %v2381, 5
      %v2506 = vrot.slane %v2505, 4
      %v2507 = vrot.slane %v1960, 5
      %v2508 = vsel %vm1826, %v2506, %v2507
      %v2509 = vrot.slane %v2507, 4
      %v2510 = vrot.slane %v1981, 5
      %v2511 = vsel %vm1826, %v2509, %v2510
      %v2512 = vrot.slane %v2382, 5
      %v2513 = vrot.slane %v2512, 4
      %v2514 = vrot.slane %v1962, 5
      %v2515 = vsel %vm1826, %v2513, %v2514
      %v2516 = vrot.slane %v2514, 4
      %v2517 = vrot.slane %v1982, 5
      %v2518 = vsel %vm1826, %v2516, %v2517
      %v2519 = vrot.slane %v2383, 5
      %v2520 = vrot.slane %v2519, 4
      %v2521 = vrot.slane %v1964, 5
      %v2522 = vsel %vm1826, %v2520, %v2521
      %v2523 = vrot.slane %v2521, 4
      %v2524 = vrot.slane %v1983, 5
      %v2525 = vsel %vm1826, %v2523, %v2524
      %v2526 = vrot.slane %v2384, 5
      %v2527 = vrot.slane %v2526, 4
      %v2528 = vrot.slane %v1966, 5
      %v2529 = vsel %vm1826, %v2527, %v2528
      %v2530 = vrot.slane %v2528, 4
      %v2531 = vrot.slane %v1984, 5
      %v2532 = vsel %vm1826, %v2530, %v2531
      %v2533 = vrot.slane %v2385, 5
      %v2534 = vrot.slane %v2533, 4
      %v2535 = vrot.slane %v1968, 5
      %v2536 = vsel %vm1826, %v2534, %v2535
      %v2537 = vrot.slane %v2535, 4
      %v2538 = vrot.slane %v1985, 5
      %v2539 = vsel %vm1826, %v2537, %v2538
      %v2540 = vrot.slane %v2386, 5
      %v2541 = vrot.slane %v2540, 4
      %v2542 = vrot.slane %v1970, 5
      %v2543 = vsel %vm1826, %v2541, %v2542
      %v2544 = vrot.slane %v2542, 4
      %v2545 = vrot.slane %v1986, 5
      %v2546 = vsel %vm1826, %v2544, %v2545
      %s2547 = scalar_lea.vmem [#allocation2], 24
      %v2548 = vld [vmem:[%s2547] sm:$0xf]
      %v2549 = vld [vmem:[%s2547 + $0x4] sm:$0xf]
      %v2550 = vld [vmem:[%s2547 + $0xc] sm:$0xf]
      %v2551 = vld [vmem:[%s2547 + $0x10] sm:$0xf]
      %v2552 = vld [vmem:[%s2547 + $0x18] sm:$0xf]
      %v2553 = vld [vmem:[%s2547 + $0x1c] sm:$0xf]
      %v2554 = vld [vmem:[%s2547 + $0x24] sm:$0xf]
      %v2555 = vld [vmem:[%s2547 + $0x28] sm:$0xf]
      %v2556 = vld [vmem:[%s2547 + $0x30] sm:$0xf]
      %v2557 = vld [vmem:[%s2547 + $0x34] sm:$0xf]
      %v2558 = vld [vmem:[%s2547 + $0x3c] sm:$0xf]
      %v2559 = vld [vmem:[%s2547 + $0x40] sm:$0xf]
      %v2560 = vld [vmem:[%s2547 + $0x48] sm:$0xf]
      %v2561 = vld [vmem:[%s2547 + $0x4c] sm:$0xf]
      %v2562 = vld [vmem:[%s2547 + $0x54] sm:$0xf]
      %v2563 = vld [vmem:[%s2547 + $0x58] sm:$0xf]
      %v2564 = vld [vmem:[%s2547 + $0x60] sm:$0xf]
      %v2565 = vld [vmem:[%s2547 + $0x64] sm:$0xf]
      %v2566 = vld [vmem:[%s2547 + $0x6c] sm:$0xf]
      %v2567 = vld [vmem:[%s2547 + $0x70] sm:$0xf]
      %v2568 = vld [vmem:[%s2547 + $0x78] sm:$0xf]
      %v2569 = vld [vmem:[%s2547 + $0x7c] sm:$0xf]
      %v2570 = vld [vmem:[%s2547 + $0x84] sm:$0xf]
      %v2571 = vld [vmem:[%s2547 + $0x88] sm:$0xf]
      %v2572 = vld [vmem:[%s2547 + $0x90] sm:$0xf]
      %v2573 = vld [vmem:[%s2547 + $0x94] sm:$0xf]
      %v2574 = vld [vmem:[%s2547 + $0x9c] sm:$0xf]
      %v2575 = vld [vmem:[%s2547 + $0xa0] sm:$0xf]
      %v2576 = vld [vmem:[%s2547 + $0xa8] sm:$0xf]
      %v2577 = vld [vmem:[%s2547 + $0xac] sm:$0xf]
      %v2578 = vld [vmem:[%s2547 + $0xb4] sm:$0xf]
      %v2579 = vld [vmem:[%s2547 + $0xb8] sm:$0xf]
      %v2580 = vld [vmem:[%s2547 + $0x8] sm:$0x1]
      %v2581 = vld [vmem:[%s2547 + $0x14] sm:$0x1]
      %v2582 = vld [vmem:[%s2547 + $0x20] sm:$0x1]
      %v2583 = vld [vmem:[%s2547 + $0x2c] sm:$0x1]
      %v2584 = vld [vmem:[%s2547 + $0x38] sm:$0x1]
      %v2585 = vld [vmem:[%s2547 + $0x44] sm:$0x1]
      %v2586 = vld [vmem:[%s2547 + $0x50] sm:$0x1]
      %v2587 = vld [vmem:[%s2547 + $0x5c] sm:$0x1]
      %v2588 = vld [vmem:[%s2547 + $0x68] sm:$0x1]
      %v2589 = vld [vmem:[%s2547 + $0x74] sm:$0x1]
      %v2590 = vld [vmem:[%s2547 + $0x80] sm:$0x1]
      %v2591 = vld [vmem:[%s2547 + $0x8c] sm:$0x1]
      %v2592 = vld [vmem:[%s2547 + $0x98] sm:$0x1]
      %v2593 = vld [vmem:[%s2547 + $0xa4] sm:$0x1]
      %v2594 = vld [vmem:[%s2547 + $0xb0] sm:$0x1]
      %v2595 = vld [vmem:[%s2547 + $0xbc] sm:$0x1]
      %v2597 = vshrl.u32 %v2548, 16
      %v2599 = vrot.slane %v2597, 4
      %v2600 = vshll.u32 %v2548, 16
      %v2602 = vrot.slane %v2600, 5
      %v2603 = vor.u32 %v2599, %v2602
      %v2604 = vrot.slane %v2603, 4
      %v2606 = vshll.u32 %v2549, 16
      %v2608 = vrot.slane %v2606, 5
      %v2609 = vsel %vm1375, %v2604, %v2608
      %v2610 = vshrl.u32 %v2549, 16
      %v2612 = vrot.slane %v2610, 4
      %v2613 = vor.u32 %v2612, %v2608
      %v2614 = vrot.slane %v2613, 4
      %v2616 = vshll.u32 %v2580, 16
      %v2618 = vrot.slane %v2616, 5
      %v2619 = vsel %vm1375, %v2614, %v2618
      %v2621 = vshrl.u32 %v2550, 16
      %v2623 = vrot.slane %v2621, 4
      %v2624 = vshll.u32 %v2550, 16
      %v2626 = vrot.slane %v2624, 5
      %v2627 = vor.u32 %v2623, %v2626
      %v2628 = vrot.slane %v2627, 4
      %v2630 = vshll.u32 %v2551, 16
      %v2632 = vrot.slane %v2630, 5
      %v2633 = vsel %vm1375, %v2628, %v2632
      %v2634 = vshrl.u32 %v2551, 16
      %v2636 = vrot.slane %v2634, 4
      %v2637 = vor.u32 %v2636, %v2632
      %v2638 = vrot.slane %v2637, 4
      %v2640 = vshll.u32 %v2581, 16
      %v2642 = vrot.slane %v2640, 5
      %v2643 = vsel %vm1375, %v2638, %v2642
      %v2645 = vshrl.u32 %v2552, 16
      %v2647 = vrot.slane %v2645, 4
      %v2648 = vshll.u32 %v2552, 16
      %v2650 = vrot.slane %v2648, 5
      %v2651 = vor.u32 %v2647, %v2650
      %v2652 = vrot.slane %v2651, 4
      %v2654 = vshll.u32 %v2553, 16
      %v2656 = vrot.slane %v2654, 5
      %v2657 = vsel %vm1375, %v2652, %v2656
      %v2658 = vshrl.u32 %v2553, 16
      %v2660 = vrot.slane %v2658, 4
      %v2661 = vor.u32 %v2660, %v2656
      %v2662 = vrot.slane %v2661, 4
      %v2664 = vshll.u32 %v2582, 16
      %v2666 = vrot.slane %v2664, 5
      %v2667 = vsel %vm1375, %v2662, %v2666
      %v2669 = vshrl.u32 %v2554, 16
      %v2671 = vrot.slane %v2669, 4
      %v2672 = vshll.u32 %v2554, 16
      %v2674 = vrot.slane %v2672, 5
      %v2675 = vor.u32 %v2671, %v2674
      %v2676 = vrot.slane %v2675, 4
      %v2678 = vshll.u32 %v2555, 16
      %v2680 = vrot.slane %v2678, 5
      %v2681 = vsel %vm1375, %v2676, %v2680
      %v2682 = vshrl.u32 %v2555, 16
      %v2684 = vrot.slane %v2682, 4
      %v2685 = vor.u32 %v2684, %v2680
      %v2686 = vrot.slane %v2685, 4
      %v2688 = vshll.u32 %v2583, 16
      %v2690 = vrot.slane %v2688, 5
      %v2691 = vsel %vm1375, %v2686, %v2690
      %v2693 = vshrl.u32 %v2556, 16
      %v2695 = vrot.slane %v2693, 4
      %v2696 = vshll.u32 %v2556, 16
      %v2698 = vrot.slane %v2696, 5
      %v2699 = vor.u32 %v2695, %v2698
      %v2700 = vrot.slane %v2699, 4
      %v2702 = vshll.u32 %v2557, 16
      %v2704 = vrot.slane %v2702, 5
      %v2705 = vsel %vm1375, %v2700, %v2704
      %v2706 = vshrl.u32 %v2557, 16
      %v2708 = vrot.slane %v2706, 4
      %v2709 = vor.u32 %v2708, %v2704
      %v2710 = vrot.slane %v2709, 4
      %v2712 = vshll.u32 %v2584, 16
      %v2714 = vrot.slane %v2712, 5
      %v2715 = vsel %vm1375, %v2710, %v2714
      %v2717 = vshrl.u32 %v2558, 16
      %v2719 = vrot.slane %v2717, 4
      %v2720 = vshll.u32 %v2558, 16
      %v2722 = vrot.slane %v2720, 5
      %v2723 = vor.u32 %v2719, %v2722
      %v2724 = vrot.slane %v2723, 4
      %v2726 = vshll.u32 %v2559, 16
      %v2728 = vrot.slane %v2726, 5
      %v2729 = vsel %vm1375, %v2724, %v2728
      %v2730 = vshrl.u32 %v2559, 16
      %v2732 = vrot.slane %v2730, 4
      %v2733 = vor.u32 %v2732, %v2728
      %v2734 = vrot.slane %v2733, 4
      %v2736 = vshll.u32 %v2585, 16
      %v2738 = vrot.slane %v2736, 5
      %v2739 = vsel %vm1375, %v2734, %v2738
      %v2741 = vshrl.u32 %v2560, 16
      %v2743 = vrot.slane %v2741, 4
      %v2744 = vshll.u32 %v2560, 16
      %v2746 = vrot.slane %v2744, 5
      %v2747 = vor.u32 %v2743, %v2746
      %v2748 = vrot.slane %v2747, 4
      %v2750 = vshll.u32 %v2561, 16
      %v2752 = vrot.slane %v2750, 5
      %v2753 = vsel %vm1375, %v2748, %v2752
      %v2754 = vshrl.u32 %v2561, 16
      %v2756 = vrot.slane %v2754, 4
      %v2757 = vor.u32 %v2756, %v2752
      %v2758 = vrot.slane %v2757, 4
      %v2760 = vshll.u32 %v2586, 16
      %v2762 = vrot.slane %v2760, 5
      %v2763 = vsel %vm1375, %v2758, %v2762
      %v2765 = vshrl.u32 %v2562, 16
      %v2767 = vrot.slane %v2765, 4
      %v2768 = vshll.u32 %v2562, 16
      %v2770 = vrot.slane %v2768, 5
      %v2771 = vor.u32 %v2767, %v2770
      %v2772 = vrot.slane %v2771, 4
      %v2774 = vshll.u32 %v2563, 16
      %v2776 = vrot.slane %v2774, 5
      %v2777 = vsel %vm1375, %v2772, %v2776
      %v2778 = vshrl.u32 %v2563, 16
      %v2780 = vrot.slane %v2778, 4
      %v2781 = vor.u32 %v2780, %v2776
      %v2782 = vrot.slane %v2781, 4
      %v2784 = vshll.u32 %v2587, 16
      %v2786 = vrot.slane %v2784, 5
      %v2787 = vsel %vm1375, %v2782, %v2786
      %v2789 = vshrl.u32 %v2564, 16
      %v2791 = vrot.slane %v2789, 4
      %v2792 = vshll.u32 %v2564, 16
      %v2794 = vrot.slane %v2792, 5
      %v2795 = vor.u32 %v2791, %v2794
      %v2796 = vrot.slane %v2795, 4
      %v2798 = vshll.u32 %v2565, 16
      %v2800 = vrot.slane %v2798, 5
      %v2801 = vsel %vm1375, %v2796, %v2800
      %v2802 = vshrl.u32 %v2565, 16
      %v2804 = vrot.slane %v2802, 4
      %v2805 = vor.u32 %v2804, %v2800
      %v2806 = vrot.slane %v2805, 4
      %v2808 = vshll.u32 %v2588, 16
      %v2810 = vrot.slane %v2808, 5
      %v2811 = vsel %vm1375, %v2806, %v2810
      %v2813 = vshrl.u32 %v2566, 16
      %v2815 = vrot.slane %v2813, 4
      %v2816 = vshll.u32 %v2566, 16
      %v2818 = vrot.slane %v2816, 5
      %v2819 = vor.u32 %v2815, %v2818
      %v2820 = vrot.slane %v2819, 4
      %v2822 = vshll.u32 %v2567, 16
      %v2824 = vrot.slane %v2822, 5
      %v2825 = vsel %vm1375, %v2820, %v2824
      %v2826 = vshrl.u32 %v2567, 16
      %v2828 = vrot.slane %v2826, 4
      %v2829 = vor.u32 %v2828, %v2824
      %v2830 = vrot.slane %v2829, 4
      %v2832 = vshll.u32 %v2589, 16
      %v2834 = vrot.slane %v2832, 5
      %v2835 = vsel %vm1375, %v2830, %v2834
      %v2837 = vshrl.u32 %v2568, 16
      %v2839 = vrot.slane %v2837, 4
      %v2840 = vshll.u32 %v2568, 16
      %v2842 = vrot.slane %v2840, 5
      %v2843 = vor.u32 %v2839, %v2842
      %v2844 = vrot.slane %v2843, 4
      %v2846 = vshll.u32 %v2569, 16
      %v2848 = vrot.slane %v2846, 5
      %v2849 = vsel %vm1375, %v2844, %v2848
      %v2850 = vshrl.u32 %v2569, 16
      %v2852 = vrot.slane %v2850, 4
      %v2853 = vor.u32 %v2852, %v2848
      %v2854 = vrot.slane %v2853, 4
      %v2856 = vshll.u32 %v2590, 16
      %v2858 = vrot.slane %v2856, 5
      %v2859 = vsel %vm1375, %v2854, %v2858
      %v2861 = vshrl.u32 %v2570, 16
      %v2863 = vrot.slane %v2861, 4
      %v2864 = vshll.u32 %v2570, 16
      %v2866 = vrot.slane %v2864, 5
      %v2867 = vor.u32 %v2863, %v2866
      %v2868 = vrot.slane %v2867, 4
      %v2870 = vshll.u32 %v2571, 16
      %v2872 = vrot.slane %v2870, 5
      %v2873 = vsel %vm1375, %v2868, %v2872
      %v2874 = vshrl.u32 %v2571, 16
      %v2876 = vrot.slane %v2874, 4
      %v2877 = vor.u32 %v2876, %v2872
      %v2878 = vrot.slane %v2877, 4
      %v2880 = vshll.u32 %v2591, 16
      %v2882 = vrot.slane %v2880, 5
      %v2883 = vsel %vm1375, %v2878, %v2882
      %v2885 = vshrl.u32 %v2572, 16
      %v2887 = vrot.slane %v2885, 4
      %v2888 = vshll.u32 %v2572, 16
      %v2890 = vrot.slane %v2888, 5
      %v2891 = vor.u32 %v2887, %v2890
      %v2892 = vrot.slane %v2891, 4
      %v2894 = vshll.u32 %v2573, 16
      %v2896 = vrot.slane %v2894, 5
      %v2897 = vsel %vm1375, %v2892, %v2896
      %v2898 = vshrl.u32 %v2573, 16
      %v2900 = vrot.slane %v2898, 4
      %v2901 = vor.u32 %v2900, %v2896
      %v2902 = vrot.slane %v2901, 4
      %v2904 = vshll.u32 %v2592, 16
      %v2906 = vrot.slane %v2904, 5
      %v2907 = vsel %vm1375, %v2902, %v2906
      %v2909 = vshrl.u32 %v2574, 16
      %v2911 = vrot.slane %v2909, 4
      %v2912 = vshll.u32 %v2574, 16
      %v2914 = vrot.slane %v2912, 5
      %v2915 = vor.u32 %v2911, %v2914
      %v2916 = vrot.slane %v2915, 4
      %v2918 = vshll.u32 %v2575, 16
      %v2920 = vrot.slane %v2918, 5
      %v2921 = vsel %vm1375, %v2916, %v2920
      %v2922 = vshrl.u32 %v2575, 16
      %v2924 = vrot.slane %v2922, 4
      %v2925 = vor.u32 %v2924, %v2920
      %v2926 = vrot.slane %v2925, 4
      %v2928 = vshll.u32 %v2593, 16
      %v2930 = vrot.slane %v2928, 5
      %v2931 = vsel %vm1375, %v2926, %v2930
      %v2933 = vshrl.u32 %v2576, 16
      %v2935 = vrot.slane %v2933, 4
      %v2936 = vshll.u32 %v2576, 16
      %v2938 = vrot.slane %v2936, 5
      %v2939 = vor.u32 %v2935, %v2938
      %v2940 = vrot.slane %v2939, 4
      %v2942 = vshll.u32 %v2577, 16
      %v2944 = vrot.slane %v2942, 5
      %v2945 = vsel %vm1375, %v2940, %v2944
      %v2946 = vshrl.u32 %v2577, 16
      %v2948 = vrot.slane %v2946, 4
      %v2949 = vor.u32 %v2948, %v2944
      %v2950 = vrot.slane %v2949, 4
      %v2952 = vshll.u32 %v2594, 16
      %v2954 = vrot.slane %v2952, 5
      %v2955 = vsel %vm1375, %v2950, %v2954
      %v2957 = vshrl.u32 %v2578, 16
      %v2959 = vrot.slane %v2957, 4
      %v2960 = vshll.u32 %v2578, 16
      %v2962 = vrot.slane %v2960, 5
      %v2963 = vor.u32 %v2959, %v2962
      %v2964 = vrot.slane %v2963, 4
      %v2966 = vshll.u32 %v2579, 16
      %v2968 = vrot.slane %v2966, 5
      %v2969 = vsel %vm1375, %v2964, %v2968
      %v2970 = vshrl.u32 %v2579, 16
      %v2972 = vrot.slane %v2970, 4
      %v2973 = vor.u32 %v2972, %v2968
      %v2974 = vrot.slane %v2973, 4
      %v2976 = vshll.u32 %v2595, 16
      %v2978 = vrot.slane %v2976, 5
      %v2979 = vsel %vm1375, %v2974, %v2978
      %v2980 = vld [vmem:[%s2547] sm:$0xe]
      %v2981 = vld [vmem:[%s2547 + $0xc] sm:$0xe]
      %v2982 = vld [vmem:[%s2547 + $0x18] sm:$0xe]
      %v2983 = vld [vmem:[%s2547 + $0x24] sm:$0xe]
      %v2984 = vld [vmem:[%s2547 + $0x30] sm:$0xe]
      %v2985 = vld [vmem:[%s2547 + $0x3c] sm:$0xe]
      %v2986 = vld [vmem:[%s2547 + $0x48] sm:$0xe]
      %v2987 = vld [vmem:[%s2547 + $0x54] sm:$0xe]
      %v2988 = vld [vmem:[%s2547 + $0x60] sm:$0xe]
      %v2989 = vld [vmem:[%s2547 + $0x6c] sm:$0xe]
      %v2990 = vld [vmem:[%s2547 + $0x78] sm:$0xe]
      %v2991 = vld [vmem:[%s2547 + $0x84] sm:$0xe]
      %v2992 = vld [vmem:[%s2547 + $0x90] sm:$0xe]
      %v2993 = vld [vmem:[%s2547 + $0x9c] sm:$0xe]
      %v2994 = vld [vmem:[%s2547 + $0xa8] sm:$0xe]
      %v2995 = vld [vmem:[%s2547 + $0xb4] sm:$0xe]
      %v3044 = vrot.slane %v2980, 5
      %v3045 = vrot.slane %v3044, 4
      %v3046 = vrot.slane %v2549, 5
      %v3047 = vsel %vm1826, %v3045, %v3046
      %v3048 = vrot.slane %v3046, 4
      %v3049 = vrot.slane %v2580, 5
      %v3050 = vsel %vm1826, %v3048, %v3049
      %v3051 = vrot.slane %v2981, 5
      %v3052 = vrot.slane %v3051, 4
      %v3053 = vrot.slane %v2551, 5
      %v3054 = vsel %vm1826, %v3052, %v3053
      %v3055 = vrot.slane %v3053, 4
      %v3056 = vrot.slane %v2581, 5
      %v3057 = vsel %vm1826, %v3055, %v3056
      %v3058 = vrot.slane %v2982, 5
      %v3059 = vrot.slane %v3058, 4
      %v3060 = vrot.slane %v2553, 5
      %v3061 = vsel %vm1826, %v3059, %v3060
      %v3062 = vrot.slane %v3060, 4
      %v3063 = vrot.slane %v2582, 5
      %v3064 = vsel %vm1826, %v3062, %v3063
      %v3065 = vrot.slane %v2983, 5
      %v3066 = vrot.slane %v3065, 4
      %v3067 = vrot.slane %v2555, 5
      %v3068 = vsel %vm1826, %v3066, %v3067
      %v3069 = vrot.slane %v3067, 4
      %v3070 = vrot.slane %v2583, 5
      %v3071 = vsel %vm1826, %v3069, %v3070
      %v3072 = vrot.slane %v2984, 5
      %v3073 = vrot.slane %v3072, 4
      %v3074 = vrot.slane %v2557, 5
      %v3075 = vsel %vm1826, %v3073, %v3074
      %v3076 = vrot.slane %v3074, 4
      %v3077 = vrot.slane %v2584, 5
      %v3078 = vsel %vm1826, %v3076, %v3077
      %v3079 = vrot.slane %v2985, 5
      %v3080 = vrot.slane %v3079, 4
      %v3081 = vrot.slane %v2559, 5
      %v3082 = vsel %vm1826, %v3080, %v3081
      %v3083 = vrot.slane %v3081, 4
      %v3084 = vrot.slane %v2585, 5
      %v3085 = vsel %vm1826, %v3083, %v3084
      %v3086 = vrot.slane %v2986, 5
      %v3087 = vrot.slane %v3086, 4
      %v3088 = vrot.slane %v2561, 5
      %v3089 = vsel %vm1826, %v3087, %v3088
      %v3090 = vrot.slane %v3088, 4
      %v3091 = vrot.slane %v2586, 5
      %v3092 = vsel %vm1826, %v3090, %v3091
      %v3093 = vrot.slane %v2987, 5
      %v3094 = vrot.slane %v3093, 4
      %v3095 = vrot.slane %v2563, 5
      %v3096 = vsel %vm1826, %v3094, %v3095
      %v3097 = vrot.slane %v3095, 4
      %v3098 = vrot.slane %v2587, 5
      %v3099 = vsel %vm1826, %v3097, %v3098
      %v3100 = vrot.slane %v2988, 5
      %v3101 = vrot.slane %v3100, 4
      %v3102 = vrot.slane %v2565, 5
      %v3103 = vsel %vm1826, %v3101, %v3102
      %v3104 = vrot.slane %v3102, 4
      %v3105 = vrot.slane %v2588, 5
      %v3106 = vsel %vm1826, %v3104, %v3105
      %v3107 = vrot.slane %v2989, 5
      %v3108 = vrot.slane %v3107, 4
      %v3109 = vrot.slane %v2567, 5
      %v3110 = vsel %vm1826, %v3108, %v3109
      %v3111 = vrot.slane %v3109, 4
      %v3112 = vrot.slane %v2589, 5
      %v3113 = vsel %vm1826, %v3111, %v3112
      %v3114 = vrot.slane %v2990, 5
      %v3115 = vrot.slane %v3114, 4
      %v3116 = vrot.slane %v2569, 5
      %v3117 = vsel %vm1826, %v3115, %v3116
      %v3118 = vrot.slane %v3116, 4
      %v3119 = vrot.slane %v2590, 5
      %v3120 = vsel %vm1826, %v3118, %v3119
      %v3121 = vrot.slane %v2991, 5
      %v3122 = vrot.slane %v3121, 4
      %v3123 = vrot.slane %v2571, 5
      %v3124 = vsel %vm1826, %v3122, %v3123
      %v3125 = vrot.slane %v3123, 4
      %v3126 = vrot.slane %v2591, 5
      %v3127 = vsel %vm1826, %v3125, %v3126
      %v3128 = vrot.slane %v2992, 5
      %v3129 = vrot.slane %v3128, 4
      %v3130 = vrot.slane %v2573, 5
      %v3131 = vsel %vm1826, %v3129, %v3130
      %v3132 = vrot.slane %v3130, 4
      %v3133 = vrot.slane %v2592, 5
      %v3134 = vsel %vm1826, %v3132, %v3133
      %v3135 = vrot.slane %v2993, 5
      %v3136 = vrot.slane %v3135, 4
      %v3137 = vrot.slane %v2575, 5
      %v3138 = vsel %vm1826, %v3136, %v3137
      %v3139 = vrot.slane %v3137, 4
      %v3140 = vrot.slane %v2593, 5
      %v3141 = vsel %vm1826, %v3139, %v3140
      %v3142 = vrot.slane %v2994, 5
      %v3143 = vrot.slane %v3142, 4
      %v3144 = vrot.slane %v2577, 5
      %v3145 = vsel %vm1826, %v3143, %v3144
      %v3146 = vrot.slane %v3144, 4
      %v3147 = vrot.slane %v2594, 5
      %v3148 = vsel %vm1826, %v3146, %v3147
      %v3149 = vrot.slane %v2995, 5
      %v3150 = vrot.slane %v3149, 4
      %v3151 = vrot.slane %v2579, 5
      %v3152 = vsel %vm1826, %v3150, %v3151
      %v3153 = vrot.slane %v3151, 4
      %v3154 = vrot.slane %v2595, 5
      %v3155 = vsel %vm1826, %v3153, %v3154
      %v3172 = vunpack.c.l.b16 %v1325
      %v3173 = vunpack.c.l.b16 %v1326
      %v3174 = vunpack.c.l.b16 %v1327
      %v3175 = vunpack.c.l.b16 %v1328
      %v3176 = vunpack.c.l.b16 %v1329
      %v3177 = vunpack.c.l.b16 %v1330
      %v3178 = vunpack.c.l.b16 %v1331
      %v3179 = vunpack.c.l.b16 %v1332
      %v3180 = vunpack.c.l.b16 %v1333
      %v3181 = vunpack.c.l.b16 %v1334
      %v3182 = vunpack.c.l.b16 %v1335
      %v3183 = vunpack.c.l.b16 %v1336
      %v3184 = vunpack.c.l.b16 %v1337
      %v3185 = vunpack.c.l.b16 %v1338
      %v3186 = vunpack.c.l.b16 %v1339
      %v3187 = vunpack.c.l.b16 %v1340
      %v3188 = vunpack.c.l.b16 %v1341
      %v3189 = vunpack.c.l.b16 %v1342
      %v3190 = vunpack.c.l.b16 %v1343
      %v3191 = vunpack.c.l.b16 %v1344
      %v3192 = vunpack.c.l.b16 %v1345
      %v3193 = vunpack.c.l.b16 %v1346
      %v3194 = vunpack.c.l.b16 %v1347
      %v3195 = vunpack.c.l.b16 %v1348
      %v3196 = vunpack.c.l.b16 %v1349
      %v3197 = vunpack.c.l.b16 %v1350
      %v3198 = vunpack.c.l.b16 %v1351
      %v3199 = vunpack.c.l.b16 %v1352
      %v3200 = vunpack.c.l.b16 %v1353
      %v3201 = vunpack.c.l.b16 %v1354
      %v3202 = vunpack.c.l.b16 %v1355
      %v3203 = vunpack.c.l.b16 %v1356
      %v3204 = vpack.c.b16 %v3173, %v3172
      %v3205 = vpack.c.b16 %v3175, %v3174
      %v3206 = vpack.c.b16 %v3177, %v3176
      %v3207 = vpack.c.b16 %v3179, %v3178
      %v3208 = vpack.c.b16 %v3181, %v3180
      %v3209 = vpack.c.b16 %v3183, %v3182
      %v3210 = vpack.c.b16 %v3185, %v3184
      %v3211 = vpack.c.b16 %v3187, %v3186
      %v3212 = vpack.c.b16 %v3189, %v3188
      %v3213 = vpack.c.b16 %v3191, %v3190
      %v3214 = vpack.c.b16 %v3193, %v3192
      %v3215 = vpack.c.b16 %v3195, %v3194
      %v3216 = vpack.c.b16 %v3197, %v3196
      %v3217 = vpack.c.b16 %v3199, %v3198
      %v3218 = vpack.c.b16 %v3201, %v3200
      %v3219 = vpack.c.b16 %v3203, %v3202
      %v3236 = vunpack.c.l.b16 %v1389
      %v3237 = vunpack.c.l.b16 %v1399
      %v3238 = vunpack.c.l.b16 %v1413
      %v3239 = vunpack.c.l.b16 %v1423
      %v3240 = vunpack.c.l.b16 %v1437
      %v3241 = vunpack.c.l.b16 %v1447
      %v3242 = vunpack.c.l.b16 %v1461
      %v3243 = vunpack.c.l.b16 %v1471
      %v3244 = vunpack.c.l.b16 %v1485
      %v3245 = vunpack.c.l.b16 %v1495
      %v3246 = vunpack.c.l.b16 %v1509
      %v3247 = vunpack.c.l.b16 %v1519
      %v3248 = vunpack.c.l.b16 %v1533
      %v3249 = vunpack.c.l.b16 %v1543
      %v3250 = vunpack.c.l.b16 %v1557
      %v3251 = vunpack.c.l.b16 %v1567
      %v3252 = vunpack.c.l.b16 %v1581
      %v3253 = vunpack.c.l.b16 %v1591
      %v3254 = vunpack.c.l.b16 %v1605
      %v3255 = vunpack.c.l.b16 %v1615
      %v3256 = vunpack.c.l.b16 %v1629
      %v3257 = vunpack.c.l.b16 %v1639
      %v3258 = vunpack.c.l.b16 %v1653
      %v3259 = vunpack.c.l.b16 %v1663
      %v3260 = vunpack.c.l.b16 %v1677
      %v3261 = vunpack.c.l.b16 %v1687
      %v3262 = vunpack.c.l.b16 %v1701
      %v3263 = vunpack.c.l.b16 %v1711
      %v3264 = vunpack.c.l.b16 %v1725
      %v3265 = vunpack.c.l.b16 %v1735
      %v3266 = vunpack.c.l.b16 %v1749
      %v3267 = vunpack.c.l.b16 %v1759
      %v3268 = vpack.c.b16 %v3237, %v3236
      %v3269 = vpack.c.b16 %v3239, %v3238
      %v3270 = vpack.c.b16 %v3241, %v3240
      %v3271 = vpack.c.b16 %v3243, %v3242
      %v3272 = vpack.c.b16 %v3245, %v3244
      %v3273 = vpack.c.b16 %v3247, %v3246
      %v3274 = vpack.c.b16 %v3249, %v3248
      %v3275 = vpack.c.b16 %v3251, %v3250
      %v3276 = vpack.c.b16 %v3253, %v3252
      %v3277 = vpack.c.b16 %v3255, %v3254
      %v3278 = vpack.c.b16 %v3257, %v3256
      %v3279 = vpack.c.b16 %v3259, %v3258
      %v3280 = vpack.c.b16 %v3261, %v3260
      %v3281 = vpack.c.b16 %v3263, %v3262
      %v3282 = vpack.c.b16 %v3265, %v3264
      %v3283 = vpack.c.b16 %v3267, %v3266
      %v3300 = vunpack.c.l.b16 %v1830
      %v3301 = vunpack.c.l.b16 %v1833
      %v3302 = vunpack.c.l.b16 %v1837
      %v3303 = vunpack.c.l.b16 %v1840
      %v3304 = vunpack.c.l.b16 %v1844
      %v3305 = vunpack.c.l.b16 %v1847
      %v3306 = vunpack.c.l.b16 %v1851
      %v3307 = vunpack.c.l.b16 %v1854
      %v3308 = vunpack.c.l.b16 %v1858
      %v3309 = vunpack.c.l.b16 %v1861
      %v3310 = vunpack.c.l.b16 %v1865
      %v3311 = vunpack.c.l.b16 %v1868
      %v3312 = vunpack.c.l.b16 %v1872
      %v3313 = vunpack.c.l.b16 %v1875
      %v3314 = vunpack.c.l.b16 %v1879
      %v3315 = vunpack.c.l.b16 %v1882
      %v3316 = vunpack.c.l.b16 %v1886
      %v3317 = vunpack.c.l.b16 %v1889
      %v3318 = vunpack.c.l.b16 %v1893
      %v3319 = vunpack.c.l.b16 %v1896
      %v3320 = vunpack.c.l.b16 %v1900
      %v3321 = vunpack.c.l.b16 %v1903
      %v3322 = vunpack.c.l.b16 %v1907
      %v3323 = vunpack.c.l.b16 %v1910
      %v3324 = vunpack.c.l.b16 %v1914
      %v3325 = vunpack.c.l.b16 %v1917
      %v3326 = vunpack.c.l.b16 %v1921
      %v3327 = vunpack.c.l.b16 %v1924
      %v3328 = vunpack.c.l.b16 %v1928
      %v3329 = vunpack.c.l.b16 %v1931
      %v3330 = vunpack.c.l.b16 %v1935
      %v3331 = vunpack.c.l.b16 %v1938
      %v3332 = vpack.c.b16 %v3301, %v3300
      %v3333 = vpack.c.b16 %v3303, %v3302
      %v3334 = vpack.c.b16 %v3305, %v3304
      %v3335 = vpack.c.b16 %v3307, %v3306
      %v3336 = vpack.c.b16 %v3309, %v3308
      %v3337 = vpack.c.b16 %v3311, %v3310
      %v3338 = vpack.c.b16 %v3313, %v3312
      %v3339 = vpack.c.b16 %v3315, %v3314
      %v3340 = vpack.c.b16 %v3317, %v3316
      %v3341 = vpack.c.b16 %v3319, %v3318
      %v3342 = vpack.c.b16 %v3321, %v3320
      %v3343 = vpack.c.b16 %v3323, %v3322
      %v3344 = vpack.c.b16 %v3325, %v3324
      %v3345 = vpack.c.b16 %v3327, %v3326
      %v3346 = vpack.c.b16 %v3329, %v3328
      %v3347 = vpack.c.b16 %v3331, %v3330
      %v3380 = vunpack.c.l.b16 %v1939
      %v3381 = vunpack.c.l.b16 %v1940
      %v3382 = vunpack.c.l.b16 %v1941
      %v3383 = vunpack.c.l.b16 %v1942
      %v3384 = vunpack.c.l.b16 %v1943
      %v3385 = vunpack.c.l.b16 %v1944
      %v3386 = vunpack.c.l.b16 %v1945
      %v3387 = vunpack.c.l.b16 %v1946
      %v3388 = vunpack.c.l.b16 %v1947
      %v3389 = vunpack.c.l.b16 %v1948
      %v3390 = vunpack.c.l.b16 %v1949
      %v3391 = vunpack.c.l.b16 %v1950
      %v3392 = vunpack.c.l.b16 %v1951
      %v3393 = vunpack.c.l.b16 %v1952
      %v3394 = vunpack.c.l.b16 %v1953
      %v3395 = vunpack.c.l.b16 %v1954
      %v3396 = vunpack.c.l.b16 %v1955
      %v3397 = vunpack.c.l.b16 %v1956
      %v3398 = vunpack.c.l.b16 %v1957
      %v3399 = vunpack.c.l.b16 %v1958
      %v3400 = vunpack.c.l.b16 %v1959
      %v3401 = vunpack.c.l.b16 %v1960
      %v3402 = vunpack.c.l.b16 %v1961
      %v3403 = vunpack.c.l.b16 %v1962
      %v3404 = vunpack.c.l.b16 %v1963
      %v3405 = vunpack.c.l.b16 %v1964
      %v3406 = vunpack.c.l.b16 %v1965
      %v3407 = vunpack.c.l.b16 %v1966
      %v3408 = vunpack.c.l.b16 %v1967
      %v3409 = vunpack.c.l.b16 %v1968
      %v3410 = vunpack.c.l.b16 %v1969
      %v3411 = vunpack.c.l.b16 %v1970
      %v3412 = vpack.c.b16 %v3381, %v3380
      %v3413 = vpack.c.b16 %v3383, %v3382
      %v3414 = vpack.c.b16 %v3385, %v3384
      %v3415 = vpack.c.b16 %v3387, %v3386
      %v3416 = vpack.c.b16 %v3389, %v3388
      %v3417 = vpack.c.b16 %v3391, %v3390
      %v3418 = vpack.c.b16 %v3393, %v3392
      %v3419 = vpack.c.b16 %v3395, %v3394
      %v3420 = vpack.c.b16 %v3397, %v3396
      %v3421 = vpack.c.b16 %v3399, %v3398
      %v3422 = vpack.c.b16 %v3401, %v3400
      %v3423 = vpack.c.b16 %v3403, %v3402
      %v3424 = vpack.c.b16 %v3405, %v3404
      %v3425 = vpack.c.b16 %v3407, %v3406
      %v3426 = vpack.c.b16 %v3409, %v3408
      %v3427 = vpack.c.b16 %v3411, %v3410
      %v3444 = vunpack.c.l.b16 %v2000
      %v3445 = vunpack.c.l.b16 %v2010
      %v3446 = vunpack.c.l.b16 %v2024
      %v3447 = vunpack.c.l.b16 %v2034
      %v3448 = vunpack.c.l.b16 %v2048
      %v3449 = vunpack.c.l.b16 %v2058
      %v3450 = vunpack.c.l.b16 %v2072
      %v3451 = vunpack.c.l.b16 %v2082
      %v3452 = vunpack.c.l.b16 %v2096
      %v3453 = vunpack.c.l.b16 %v2106
      %v3454 = vunpack.c.l.b16 %v2120
      %v3455 = vunpack.c.l.b16 %v2130
      %v3456 = vunpack.c.l.b16 %v2144
      %v3457 = vunpack.c.l.b16 %v2154
      %v3458 = vunpack.c.l.b16 %v2168
      %v3459 = vunpack.c.l.b16 %v2178
      %v3460 = vunpack.c.l.b16 %v2192
      %v3461 = vunpack.c.l.b16 %v2202
      %v3462 = vunpack.c.l.b16 %v2216
      %v3463 = vunpack.c.l.b16 %v2226
      %v3464 = vunpack.c.l.b16 %v2240
      %v3465 = vunpack.c.l.b16 %v2250
      %v3466 = vunpack.c.l.b16 %v2264
      %v3467 = vunpack.c.l.b16 %v2274
      %v3468 = vunpack.c.l.b16 %v2288
      %v3469 = vunpack.c.l.b16 %v2298
      %v3470 = vunpack.c.l.b16 %v2312
      %v3471 = vunpack.c.l.b16 %v2322
      %v3472 = vunpack.c.l.b16 %v2336
      %v3473 = vunpack.c.l.b16 %v2346
      %v3474 = vunpack.c.l.b16 %v2360
      %v3475 = vunpack.c.l.b16 %v2370
      %v3476 = vpack.c.b16 %v3445, %v3444
      %v3477 = vpack.c.b16 %v3447, %v3446
      %v3478 = vpack.c.b16 %v3449, %v3448
      %v3479 = vpack.c.b16 %v3451, %v3450
      %v3480 = vpack.c.b16 %v3453, %v3452
      %v3481 = vpack.c.b16 %v3455, %v3454
      %v3482 = vpack.c.b16 %v3457, %v3456
      %v3483 = vpack.c.b16 %v3459, %v3458
      %v3484 = vpack.c.b16 %v3461, %v3460
      %v3485 = vpack.c.b16 %v3463, %v3462
      %v3486 = vpack.c.b16 %v3465, %v3464
      %v3487 = vpack.c.b16 %v3467, %v3466
      %v3488 = vpack.c.b16 %v3469, %v3468
      %v3489 = vpack.c.b16 %v3471, %v3470
      %v3490 = vpack.c.b16 %v3473, %v3472
      %v3491 = vpack.c.b16 %v3475, %v3474
      %v3508 = vunpack.c.l.b16 %v2438
      %v3509 = vunpack.c.l.b16 %v2441
      %v3510 = vunpack.c.l.b16 %v2445
      %v3511 = vunpack.c.l.b16 %v2448
      %v3512 = vunpack.c.l.b16 %v2452
      %v3513 = vunpack.c.l.b16 %v2455
      %v3514 = vunpack.c.l.b16 %v2459
      %v3515 = vunpack.c.l.b16 %v2462
      %v3516 = vunpack.c.l.b16 %v2466
      %v3517 = vunpack.c.l.b16 %v2469
      %v3518 = vunpack.c.l.b16 %v2473
      %v3519 = vunpack.c.l.b16 %v2476
      %v3520 = vunpack.c.l.b16 %v2480
      %v3521 = vunpack.c.l.b16 %v2483
      %v3522 = vunpack.c.l.b16 %v2487
      %v3523 = vunpack.c.l.b16 %v2490
      %v3524 = vunpack.c.l.b16 %v2494
      %v3525 = vunpack.c.l.b16 %v2497
      %v3526 = vunpack.c.l.b16 %v2501
      %v3527 = vunpack.c.l.b16 %v2504
      %v3528 = vunpack.c.l.b16 %v2508
      %v3529 = vunpack.c.l.b16 %v2511
      %v3530 = vunpack.c.l.b16 %v2515
      %v3531 = vunpack.c.l.b16 %v2518
      %v3532 = vunpack.c.l.b16 %v2522
      %v3533 = vunpack.c.l.b16 %v2525
      %v3534 = vunpack.c.l.b16 %v2529
      %v3535 = vunpack.c.l.b16 %v2532
      %v3536 = vunpack.c.l.b16 %v2536
      %v3537 = vunpack.c.l.b16 %v2539
      %v3538 = vunpack.c.l.b16 %v2543
      %v3539 = vunpack.c.l.b16 %v2546
      %v3540 = vpack.c.b16 %v3509, %v3508
      %v3541 = vpack.c.b16 %v3511, %v3510
      %v3542 = vpack.c.b16 %v3513, %v3512
      %v3543 = vpack.c.b16 %v3515, %v3514
      %v3544 = vpack.c.b16 %v3517, %v3516
      %v3545 = vpack.c.b16 %v3519, %v3518
      %v3546 = vpack.c.b16 %v3521, %v3520
      %v3547 = vpack.c.b16 %v3523, %v3522
      %v3548 = vpack.c.b16 %v3525, %v3524
      %v3549 = vpack.c.b16 %v3527, %v3526
      %v3550 = vpack.c.b16 %v3529, %v3528
      %v3551 = vpack.c.b16 %v3531, %v3530
      %v3552 = vpack.c.b16 %v3533, %v3532
      %v3553 = vpack.c.b16 %v3535, %v3534
      %v3554 = vpack.c.b16 %v3537, %v3536
      %v3555 = vpack.c.b16 %v3539, %v3538
      %v3588 = vunpack.c.l.b16 %v2548
      %v3589 = vunpack.c.l.b16 %v2549
      %v3590 = vunpack.c.l.b16 %v2550
      %v3591 = vunpack.c.l.b16 %v2551
      %v3592 = vunpack.c.l.b16 %v2552
      %v3593 = vunpack.c.l.b16 %v2553
      %v3594 = vunpack.c.l.b16 %v2554
      %v3595 = vunpack.c.l.b16 %v2555
      %v3596 = vunpack.c.l.b16 %v2556
      %v3597 = vunpack.c.l.b16 %v2557
      %v3598 = vunpack.c.l.b16 %v2558
      %v3599 = vunpack.c.l.b16 %v2559
      %v3600 = vunpack.c.l.b16 %v2560
      %v3601 = vunpack.c.l.b16 %v2561
      %v3602 = vunpack.c.l.b16 %v2562
      %v3603 = vunpack.c.l.b16 %v2563
      %v3604 = vunpack.c.l.b16 %v2564
      %v3605 = vunpack.c.l.b16 %v2565
      %v3606 = vunpack.c.l.b16 %v2566
      %v3607 = vunpack.c.l.b16 %v2567
      %v3608 = vunpack.c.l.b16 %v2568
      %v3609 = vunpack.c.l.b16 %v2569
      %v3610 = vunpack.c.l.b16 %v2570
      %v3611 = vunpack.c.l.b16 %v2571
      %v3612 = vunpack.c.l.b16 %v2572
      %v3613 = vunpack.c.l.b16 %v2573
      %v3614 = vunpack.c.l.b16 %v2574
      %v3615 = vunpack.c.l.b16 %v2575
      %v3616 = vunpack.c.l.b16 %v2576
      %v3617 = vunpack.c.l.b16 %v2577
      %v3618 = vunpack.c.l.b16 %v2578
      %v3619 = vunpack.c.l.b16 %v2579
      %v3620 = vpack.c.b16 %v3589, %v3588
      %v3621 = vpack.c.b16 %v3591, %v3590
      %v3622 = vpack.c.b16 %v3593, %v3592
      %v3623 = vpack.c.b16 %v3595, %v3594
      %v3624 = vpack.c.b16 %v3597, %v3596
      %v3625 = vpack.c.b16 %v3599, %v3598
      %v3626 = vpack.c.b16 %v3601, %v3600
      %v3627 = vpack.c.b16 %v3603, %v3602
      %v3628 = vpack.c.b16 %v3605, %v3604
      %v3629 = vpack.c.b16 %v3607, %v3606
      %v3630 = vpack.c.b16 %v3609, %v3608
      %v3631 = vpack.c.b16 %v3611, %v3610
      %v3632 = vpack.c.b16 %v3613, %v3612
      %v3633 = vpack.c.b16 %v3615, %v3614
      %v3634 = vpack.c.b16 %v3617, %v3616
      %v3635 = vpack.c.b16 %v3619, %v3618
      %v3652 = vunpack.c.l.b16 %v2609
      %v3653 = vunpack.c.l.b16 %v2619
      %v3654 = vunpack.c.l.b16 %v2633
      %v3655 = vunpack.c.l.b16 %v2643
      %v3656 = vunpack.c.l.b16 %v2657
      %v3657 = vunpack.c.l.b16 %v2667
      %v3658 = vunpack.c.l.b16 %v2681
      %v3659 = vunpack.c.l.b16 %v2691
      %v3660 = vunpack.c.l.b16 %v2705
      %v3661 = vunpack.c.l.b16 %v2715
      %v3662 = vunpack.c.l.b16 %v2729
      %v3663 = vunpack.c.l.b16 %v2739
      %v3664 = vunpack.c.l.b16 %v2753
      %v3665 = vunpack.c.l.b16 %v2763
      %v3666 = vunpack.c.l.b16 %v2777
      %v3667 = vunpack.c.l.b16 %v2787
      %v3668 = vunpack.c.l.b16 %v2801
      %v3669 = vunpack.c.l.b16 %v2811
      %v3670 = vunpack.c.l.b16 %v2825
      %v3671 = vunpack.c.l.b16 %v2835
      %v3672 = vunpack.c.l.b16 %v2849
      %v3673 = vunpack.c.l.b16 %v2859
      %v3674 = vunpack.c.l.b16 %v2873
      %v3675 = vunpack.c.l.b16 %v2883
      %v3676 = vunpack.c.l.b16 %v2897
      %v3677 = vunpack.c.l.b16 %v2907
      %v3678 = vunpack.c.l.b16 %v2921
      %v3679 = vunpack.c.l.b16 %v2931
      %v3680 = vunpack.c.l.b16 %v2945
      %v3681 = vunpack.c.l.b16 %v2955
      %v3682 = vunpack.c.l.b16 %v2969
      %v3683 = vunpack.c.l.b16 %v2979
      %v3684 = vpack.c.b16 %v3653, %v3652
      %v3685 = vpack.c.b16 %v3655, %v3654
      %v3686 = vpack.c.b16 %v3657, %v3656
      %v3687 = vpack.c.b16 %v3659, %v3658
      %v3688 = vpack.c.b16 %v3661, %v3660
      %v3689 = vpack.c.b16 %v3663, %v3662
      %v3690 = vpack.c.b16 %v3665, %v3664
      %v3691 = vpack.c.b16 %v3667, %v3666
      %v3692 = vpack.c.b16 %v3669, %v3668
      %v3693 = vpack.c.b16 %v3671, %v3670
      %v3694 = vpack.c.b16 %v3673, %v3672
      %v3695 = vpack.c.b16 %v3675, %v3674
      %v3696 = vpack.c.b16 %v3677, %v3676
      %v3697 = vpack.c.b16 %v3679, %v3678
      %v3698 = vpack.c.b16 %v3681, %v3680
      %v3699 = vpack.c.b16 %v3683, %v3682
      %v3716 = vunpack.c.l.b16 %v3047
      %v3717 = vunpack.c.l.b16 %v3050
      %v3718 = vunpack.c.l.b16 %v3054
      %v3719 = vunpack.c.l.b16 %v3057
      %v3720 = vunpack.c.l.b16 %v3061
      %v3721 = vunpack.c.l.b16 %v3064
      %v3722 = vunpack.c.l.b16 %v3068
      %v3723 = vunpack.c.l.b16 %v3071
      %v3724 = vunpack.c.l.b16 %v3075
      %v3725 = vunpack.c.l.b16 %v3078
      %v3726 = vunpack.c.l.b16 %v3082
      %v3727 = vunpack.c.l.b16 %v3085
      %v3728 = vunpack.c.l.b16 %v3089
      %v3729 = vunpack.c.l.b16 %v3092
      %v3730 = vunpack.c.l.b16 %v3096
      %v3731 = vunpack.c.l.b16 %v3099
      %v3732 = vunpack.c.l.b16 %v3103
      %v3733 = vunpack.c.l.b16 %v3106
      %v3734 = vunpack.c.l.b16 %v3110
      %v3735 = vunpack.c.l.b16 %v3113
      %v3736 = vunpack.c.l.b16 %v3117
      %v3737 = vunpack.c.l.b16 %v3120
      %v3738 = vunpack.c.l.b16 %v3124
      %v3739 = vunpack.c.l.b16 %v3127
      %v3740 = vunpack.c.l.b16 %v3131
      %v3741 = vunpack.c.l.b16 %v3134
      %v3742 = vunpack.c.l.b16 %v3138
      %v3743 = vunpack.c.l.b16 %v3141
      %v3744 = vunpack.c.l.b16 %v3145
      %v3745 = vunpack.c.l.b16 %v3148
      %v3746 = vunpack.c.l.b16 %v3152
      %v3747 = vunpack.c.l.b16 %v3155
      %v3748 = vpack.c.b16 %v3717, %v3716
      %v3749 = vpack.c.b16 %v3719, %v3718
      %v3750 = vpack.c.b16 %v3721, %v3720
      %v3751 = vpack.c.b16 %v3723, %v3722
      %v3752 = vpack.c.b16 %v3725, %v3724
      %v3753 = vpack.c.b16 %v3727, %v3726
      %v3754 = vpack.c.b16 %v3729, %v3728
      %v3755 = vpack.c.b16 %v3731, %v3730
      %v3756 = vpack.c.b16 %v3733, %v3732
      %v3757 = vpack.c.b16 %v3735, %v3734
      %v3758 = vpack.c.b16 %v3737, %v3736
      %v3759 = vpack.c.b16 %v3739, %v3738
      %v3760 = vpack.c.b16 %v3741, %v3740
      %v3761 = vpack.c.b16 %v3743, %v3742
      %v3762 = vpack.c.b16 %v3745, %v3744
      %v3763 = vpack.c.b16 %v3747, %v3746
      %v3780 = vld [vmem:[%s3] sm:$0xf]
      %v3781 = vld [vmem:[%s3 + $0x4] sm:$0xf]
      %v3782 = vld [vmem:[%s3 + $0x8] sm:$0xf]
      %v3783 = vld [vmem:[%s3 + $0xc] sm:$0xf]
      %v3784 = vld [vmem:[%s3 + $0x10] sm:$0xf]
      %v3785 = vld [vmem:[%s3 + $0x14] sm:$0xf]
      %v3786 = vld [vmem:[%s3 + $0x18] sm:$0xf]
      %v3787 = vld [vmem:[%s3 + $0x1c] sm:$0xf]
      %v3788 = vld [vmem:[%s3 + $0x20] sm:$0xf]
      %v3789 = vld [vmem:[%s3 + $0x24] sm:$0xf]
      %v3790 = vld [vmem:[%s3 + $0x28] sm:$0xf]
      %v3791 = vld [vmem:[%s3 + $0x2c] sm:$0xf]
      %v3792 = vld [vmem:[%s3 + $0x30] sm:$0xf]
      %v3793 = vld [vmem:[%s3 + $0x34] sm:$0xf]
      %v3794 = vld [vmem:[%s3 + $0x38] sm:$0xf]
      %v3795 = vld [vmem:[%s3 + $0x3c] sm:$0xf]
      %v3796 = vld [vmem:[%s3 + $0x40] sm:$0xf]
      %v3797 = vld [vmem:[%s3 + $0x44] sm:$0xf]
      %v3798 = vld [vmem:[%s3 + $0x48] sm:$0xf]
      %v3799 = vld [vmem:[%s3 + $0x4c] sm:$0xf]
      %v3800 = vld [vmem:[%s3 + $0x50] sm:$0xf]
      %v3801 = vld [vmem:[%s3 + $0x54] sm:$0xf]
      %v3802 = vld [vmem:[%s3 + $0x58] sm:$0xf]
      %v3803 = vld [vmem:[%s3 + $0x5c] sm:$0xf]
      %v3804 = vld [vmem:[%s3 + $0x60] sm:$0xf]
      %v3805 = vld [vmem:[%s3 + $0x64] sm:$0xf]
      %v3806 = vld [vmem:[%s3 + $0x68] sm:$0xf]
      %v3807 = vld [vmem:[%s3 + $0x6c] sm:$0xf]
      %v3808 = vld [vmem:[%s3 + $0x70] sm:$0xf]
      %v3809 = vld [vmem:[%s3 + $0x74] sm:$0xf]
      %v3810 = vld [vmem:[%s3 + $0x78] sm:$0xf]
      %v3811 = vld [vmem:[%s3 + $0x7c] sm:$0xf]
      %v3812 = vld [vmem:[%s3 + $0x80] sm:$0xf]
      %v3813 = vld [vmem:[%s3 + $0x84] sm:$0xf]
      %v3814 = vld [vmem:[%s3 + $0x88] sm:$0xf]
      %v3815 = vld [vmem:[%s3 + $0x8c] sm:$0xf]
      %v3816 = vld [vmem:[%s3 + $0x90] sm:$0xf]
      %v3817 = vld [vmem:[%s3 + $0x94] sm:$0xf]
      %v3818 = vld [vmem:[%s3 + $0x98] sm:$0xf]
      %v3819 = vld [vmem:[%s3 + $0x9c] sm:$0xf]
      %v3820 = vld [vmem:[%s3 + $0xa0] sm:$0xf]
      %v3821 = vld [vmem:[%s3 + $0xa4] sm:$0xf]
      %v3822 = vld [vmem:[%s3 + $0xa8] sm:$0xf]
      %v3823 = vld [vmem:[%s3 + $0xac] sm:$0xf]
      %v3824 = vld [vmem:[%s3 + $0xb0] sm:$0xf]
      %v3825 = vld [vmem:[%s3 + $0xb4] sm:$0xf]
      %v3826 = vld [vmem:[%s3 + $0xb8] sm:$0xf]
      %v3827 = vld [vmem:[%s3 + $0xbc] sm:$0xf]
      %v3828 = vld [vmem:[%s3 + $0xc0] sm:$0xf]
      %v3829 = vld [vmem:[%s3 + $0xc4] sm:$0xf]
      %v3830 = vld [vmem:[%s3 + $0xc8] sm:$0xf]
      %v3831 = vld [vmem:[%s3 + $0xcc] sm:$0xf]
      %v3832 = vld [vmem:[%s3 + $0xd0] sm:$0xf]
      %v3833 = vld [vmem:[%s3 + $0xd4] sm:$0xf]
      %v3834 = vld [vmem:[%s3 + $0xd8] sm:$0xf]
      %v3835 = vld [vmem:[%s3 + $0xdc] sm:$0xf]
      %v3836 = vld [vmem:[%s3 + $0xe0] sm:$0xf]
      %v3837 = vld [vmem:[%s3 + $0xe4] sm:$0xf]
      %v3838 = vld [vmem:[%s3 + $0xe8] sm:$0xf]
      %v3839 = vld [vmem:[%s3 + $0xec] sm:$0xf]
      %v3840 = vld [vmem:[%s3 + $0xf0] sm:$0xf]
      %v3841 = vld [vmem:[%s3 + $0xf4] sm:$0xf]
      %v3842 = vld [vmem:[%s3 + $0xf8] sm:$0xf]
      %v3843 = vld [vmem:[%s3 + $0xfc] sm:$0xf]
      %v3844 = vld [vmem:[%s3 + $0x100] sm:$0xf]
      %v3845 = vld [vmem:[%s3 + $0x104] sm:$0xf]
      %v3846 = vld [vmem:[%s3 + $0x108] sm:$0xf]
      %v3847 = vld [vmem:[%s3 + $0x10c] sm:$0xf]
      %v3848 = vld [vmem:[%s3 + $0x110] sm:$0xf]
      %v3849 = vld [vmem:[%s3 + $0x114] sm:$0xf]
      %v3850 = vld [vmem:[%s3 + $0x118] sm:$0xf]
      %v3851 = vld [vmem:[%s3 + $0x11c] sm:$0xf]
      %v3852 = vld [vmem:[%s3 + $0x120] sm:$0xf]
      %v3853 = vld [vmem:[%s3 + $0x124] sm:$0xf]
      %v3854 = vld [vmem:[%s3 + $0x128] sm:$0xf]
      %v3855 = vld [vmem:[%s3 + $0x12c] sm:$0xf]
      %v3856 = vld [vmem:[%s3 + $0x130] sm:$0xf]
      %v3857 = vld [vmem:[%s3 + $0x134] sm:$0xf]
      %v3858 = vld [vmem:[%s3 + $0x138] sm:$0xf]
      %v3859 = vld [vmem:[%s3 + $0x13c] sm:$0xf]
      %v3860 = vld [vmem:[%s3 + $0x140] sm:$0xf]
      %v3861 = vld [vmem:[%s3 + $0x144] sm:$0xf]
      %v3862 = vld [vmem:[%s3 + $0x148] sm:$0xf]
      %v3863 = vld [vmem:[%s3 + $0x14c] sm:$0xf]
      %v3864 = vld [vmem:[%s3 + $0x150] sm:$0xf]
      %v3865 = vld [vmem:[%s3 + $0x154] sm:$0xf]
      %v3866 = vld [vmem:[%s3 + $0x158] sm:$0xf]
      %v3867 = vld [vmem:[%s3 + $0x15c] sm:$0xf]
      %v3868 = vld [vmem:[%s3 + $0x160] sm:$0xf]
      %v3869 = vld [vmem:[%s3 + $0x164] sm:$0xf]
      %v3870 = vld [vmem:[%s3 + $0x168] sm:$0xf]
      %v3871 = vld [vmem:[%s3 + $0x16c] sm:$0xf]
      %v3872 = vld [vmem:[%s3 + $0x170] sm:$0xf]
      %v3873 = vld [vmem:[%s3 + $0x174] sm:$0xf]
      %v3874 = vld [vmem:[%s3 + $0x178] sm:$0xf]
      %v3875 = vld [vmem:[%s3 + $0x17c] sm:$0xf]
      %v3876 = vld [vmem:[%s3 + $0x180] sm:$0xf]
      %v3877 = vld [vmem:[%s3 + $0x184] sm:$0xf]
      %v3878 = vld [vmem:[%s3 + $0x188] sm:$0xf]
      %v3879 = vld [vmem:[%s3 + $0x18c] sm:$0xf]
      %v3880 = vld [vmem:[%s3 + $0x190] sm:$0xf]
      %v3881 = vld [vmem:[%s3 + $0x194] sm:$0xf]
      %v3882 = vld [vmem:[%s3 + $0x198] sm:$0xf]
      %v3883 = vld [vmem:[%s3 + $0x19c] sm:$0xf]
      %v3884 = vld [vmem:[%s3 + $0x1a0] sm:$0xf]
      %v3885 = vld [vmem:[%s3 + $0x1a4] sm:$0xf]
      %v3886 = vld [vmem:[%s3 + $0x1a8] sm:$0xf]
      %v3887 = vld [vmem:[%s3 + $0x1ac] sm:$0xf]
      %v3888 = vld [vmem:[%s3 + $0x1b0] sm:$0xf]
      %v3889 = vld [vmem:[%s3 + $0x1b4] sm:$0xf]
      %v3890 = vld [vmem:[%s3 + $0x1b8] sm:$0xf]
      %v3891 = vld [vmem:[%s3 + $0x1bc] sm:$0xf]
      %v3892 = vld [vmem:[%s3 + $0x1c0] sm:$0xf]
      %v3893 = vld [vmem:[%s3 + $0x1c4] sm:$0xf]
      %v3894 = vld [vmem:[%s3 + $0x1c8] sm:$0xf]
      %v3895 = vld [vmem:[%s3 + $0x1cc] sm:$0xf]
      %v3896 = vld [vmem:[%s3 + $0x1d0] sm:$0xf]
      %v3897 = vld [vmem:[%s3 + $0x1d4] sm:$0xf]
      %v3898 = vld [vmem:[%s3 + $0x1d8] sm:$0xf]
      %v3899 = vld [vmem:[%s3 + $0x1dc] sm:$0xf]
      %v3900 = vld [vmem:[%s3 + $0x1e0] sm:$0xf]
      %v3901 = vld [vmem:[%s3 + $0x1e4] sm:$0xf]
      %v3902 = vld [vmem:[%s3 + $0x1e8] sm:$0xf]
      %v3903 = vld [vmem:[%s3 + $0x1ec] sm:$0xf]
      %v3904 = vld [vmem:[%s3 + $0x1f0] sm:$0xf]
      %v3905 = vld [vmem:[%s3 + $0x1f4] sm:$0xf]
      %v3906 = vld [vmem:[%s3 + $0x1f8] sm:$0xf]
      %v3907 = vld [vmem:[%s3 + $0x1fc] sm:$0xf]
      %v3908 = vld [vmem:[%s3 + $0x200] sm:$0xf]
      %v3909 = vld [vmem:[%s3 + $0x204] sm:$0xf]
      %v3910 = vld [vmem:[%s3 + $0x208] sm:$0xf]
      %v3911 = vld [vmem:[%s3 + $0x20c] sm:$0xf]
      %v3912 = vld [vmem:[%s3 + $0x210] sm:$0xf]
      %v3913 = vld [vmem:[%s3 + $0x214] sm:$0xf]
      %v3914 = vld [vmem:[%s3 + $0x218] sm:$0xf]
      %v3915 = vld [vmem:[%s3 + $0x21c] sm:$0xf]
      %v3916 = vld [vmem:[%s3 + $0x220] sm:$0xf]
      %v3917 = vld [vmem:[%s3 + $0x224] sm:$0xf]
      %v3918 = vld [vmem:[%s3 + $0x228] sm:$0xf]
      %v3919 = vld [vmem:[%s3 + $0x22c] sm:$0xf]
      %v3920 = vld [vmem:[%s3 + $0x230] sm:$0xf]
      %v3921 = vld [vmem:[%s3 + $0x234] sm:$0xf]
      %v3922 = vld [vmem:[%s3 + $0x238] sm:$0xf]
      %v3923 = vld [vmem:[%s3 + $0x23c] sm:$0xf]
      %v4068 = vunpack.c.l.b16 %v3780
      %v4069 = vunpack.c.l.b16 %v3781
      %v4070 = vunpack.c.l.b16 %v3782
      %v4071 = vunpack.c.l.b16 %v3783
      %v4072 = vunpack.c.l.b16 %v3784
      %v4073 = vunpack.c.l.b16 %v3785
      %v4074 = vunpack.c.l.b16 %v3786
      %v4075 = vunpack.c.l.b16 %v3787
      %v4076 = vunpack.c.l.b16 %v3788
      %v4077 = vunpack.c.l.b16 %v3789
      %v4078 = vunpack.c.l.b16 %v3790
      %v4079 = vunpack.c.l.b16 %v3791
      %v4080 = vunpack.c.l.b16 %v3792
      %v4081 = vunpack.c.l.b16 %v3793
      %v4082 = vunpack.c.l.b16 %v3794
      %v4083 = vunpack.c.l.b16 %v3795
      %v4084 = vunpack.c.l.b16 %v3796
      %v4085 = vunpack.c.l.b16 %v3797
      %v4086 = vunpack.c.l.b16 %v3798
      %v4087 = vunpack.c.l.b16 %v3799
      %v4088 = vunpack.c.l.b16 %v3800
      %v4089 = vunpack.c.l.b16 %v3801
      %v4090 = vunpack.c.l.b16 %v3802
      %v4091 = vunpack.c.l.b16 %v3803
      %v4092 = vunpack.c.l.b16 %v3804
      %v4093 = vunpack.c.l.b16 %v3805
      %v4094 = vunpack.c.l.b16 %v3806
      %v4095 = vunpack.c.l.b16 %v3807
      %v4096 = vunpack.c.l.b16 %v3808
      %v4097 = vunpack.c.l.b16 %v3809
      %v4098 = vunpack.c.l.b16 %v3810
      %v4099 = vunpack.c.l.b16 %v3811
      %v4100 = vunpack.c.l.b16 %v3812
      %v4101 = vunpack.c.l.b16 %v3813
      %v4102 = vunpack.c.l.b16 %v3814
      %v4103 = vunpack.c.l.b16 %v3815
      %v4104 = vunpack.c.l.b16 %v3816
      %v4105 = vunpack.c.l.b16 %v3817
      %v4106 = vunpack.c.l.b16 %v3818
      %v4107 = vunpack.c.l.b16 %v3819
      %v4108 = vunpack.c.l.b16 %v3820
      %v4109 = vunpack.c.l.b16 %v3821
      %v4110 = vunpack.c.l.b16 %v3822
      %v4111 = vunpack.c.l.b16 %v3823
      %v4112 = vunpack.c.l.b16 %v3824
      %v4113 = vunpack.c.l.b16 %v3825
      %v4114 = vunpack.c.l.b16 %v3826
      %v4115 = vunpack.c.l.b16 %v3827
      %v4116 = vunpack.c.l.b16 %v3828
      %v4117 = vunpack.c.l.b16 %v3829
      %v4118 = vunpack.c.l.b16 %v3830
      %v4119 = vunpack.c.l.b16 %v3831
      %v4120 = vunpack.c.l.b16 %v3832
      %v4121 = vunpack.c.l.b16 %v3833
      %v4122 = vunpack.c.l.b16 %v3834
      %v4123 = vunpack.c.l.b16 %v3835
      %v4124 = vunpack.c.l.b16 %v3836
      %v4125 = vunpack.c.l.b16 %v3837
      %v4126 = vunpack.c.l.b16 %v3838
      %v4127 = vunpack.c.l.b16 %v3839
      %v4128 = vunpack.c.l.b16 %v3840
      %v4129 = vunpack.c.l.b16 %v3841
      %v4130 = vunpack.c.l.b16 %v3842
      %v4131 = vunpack.c.l.b16 %v3843
      %v4132 = vunpack.c.l.b16 %v3844
      %v4133 = vunpack.c.l.b16 %v3845
      %v4134 = vunpack.c.l.b16 %v3846
      %v4135 = vunpack.c.l.b16 %v3847
      %v4136 = vunpack.c.l.b16 %v3848
      %v4137 = vunpack.c.l.b16 %v3849
      %v4138 = vunpack.c.l.b16 %v3850
      %v4139 = vunpack.c.l.b16 %v3851
      %v4140 = vunpack.c.l.b16 %v3852
      %v4141 = vunpack.c.l.b16 %v3853
      %v4142 = vunpack.c.l.b16 %v3854
      %v4143 = vunpack.c.l.b16 %v3855
      %v4144 = vunpack.c.l.b16 %v3856
      %v4145 = vunpack.c.l.b16 %v3857
      %v4146 = vunpack.c.l.b16 %v3858
      %v4147 = vunpack.c.l.b16 %v3859
      %v4148 = vunpack.c.l.b16 %v3860
      %v4149 = vunpack.c.l.b16 %v3861
      %v4150 = vunpack.c.l.b16 %v3862
      %v4151 = vunpack.c.l.b16 %v3863
      %v4152 = vunpack.c.l.b16 %v3864
      %v4153 = vunpack.c.l.b16 %v3865
      %v4154 = vunpack.c.l.b16 %v3866
      %v4155 = vunpack.c.l.b16 %v3867
      %v4156 = vunpack.c.l.b16 %v3868
      %v4157 = vunpack.c.l.b16 %v3869
      %v4158 = vunpack.c.l.b16 %v3870
      %v4159 = vunpack.c.l.b16 %v3871
      %v4160 = vunpack.c.l.b16 %v3872
      %v4161 = vunpack.c.l.b16 %v3873
      %v4162 = vunpack.c.l.b16 %v3874
      %v4163 = vunpack.c.l.b16 %v3875
      %v4164 = vunpack.c.l.b16 %v3876
      %v4165 = vunpack.c.l.b16 %v3877
      %v4166 = vunpack.c.l.b16 %v3878
      %v4167 = vunpack.c.l.b16 %v3879
      %v4168 = vunpack.c.l.b16 %v3880
      %v4169 = vunpack.c.l.b16 %v3881
      %v4170 = vunpack.c.l.b16 %v3882
      %v4171 = vunpack.c.l.b16 %v3883
      %v4172 = vunpack.c.l.b16 %v3884
      %v4173 = vunpack.c.l.b16 %v3885
      %v4174 = vunpack.c.l.b16 %v3886
      %v4175 = vunpack.c.l.b16 %v3887
      %v4176 = vunpack.c.l.b16 %v3888
      %v4177 = vunpack.c.l.b16 %v3889
      %v4178 = vunpack.c.l.b16 %v3890
      %v4179 = vunpack.c.l.b16 %v3891
      %v4180 = vunpack.c.l.b16 %v3892
      %v4181 = vunpack.c.l.b16 %v3893
      %v4182 = vunpack.c.l.b16 %v3894
      %v4183 = vunpack.c.l.b16 %v3895
      %v4184 = vunpack.c.l.b16 %v3896
      %v4185 = vunpack.c.l.b16 %v3897
      %v4186 = vunpack.c.l.b16 %v3898
      %v4187 = vunpack.c.l.b16 %v3899
      %v4188 = vunpack.c.l.b16 %v3900
      %v4189 = vunpack.c.l.b16 %v3901
      %v4190 = vunpack.c.l.b16 %v3902
      %v4191 = vunpack.c.l.b16 %v3903
      %v4192 = vunpack.c.l.b16 %v3904
      %v4193 = vunpack.c.l.b16 %v3905
      %v4194 = vunpack.c.l.b16 %v3906
      %v4195 = vunpack.c.l.b16 %v3907
      %v4196 = vunpack.c.l.b16 %v3908
      %v4197 = vunpack.c.l.b16 %v3909
      %v4198 = vunpack.c.l.b16 %v3910
      %v4199 = vunpack.c.l.b16 %v3911
      %v4200 = vunpack.c.l.b16 %v3912
      %v4201 = vunpack.c.l.b16 %v3913
      %v4202 = vunpack.c.l.b16 %v3914
      %v4203 = vunpack.c.l.b16 %v3915
      %v4204 = vunpack.c.l.b16 %v3916
      %v4205 = vunpack.c.l.b16 %v3917
      %v4206 = vunpack.c.l.b16 %v3918
      %v4207 = vunpack.c.l.b16 %v3919
      %v4208 = vunpack.c.l.b16 %v3920
      %v4209 = vunpack.c.l.b16 %v3921
      %v4210 = vunpack.c.l.b16 %v3922
      %v4211 = vunpack.c.l.b16 %v3923
      %v4212 = vpack.c.b16 %v4069, %v4068
      %v4213 = vpack.c.b16 %v4071, %v4070
      %v4214 = vpack.c.b16 %v4073, %v4072
      %v4215 = vpack.c.b16 %v4075, %v4074
      %v4216 = vpack.c.b16 %v4077, %v4076
      %v4217 = vpack.c.b16 %v4079, %v4078
      %v4218 = vpack.c.b16 %v4081, %v4080
      %v4219 = vpack.c.b16 %v4083, %v4082
      %v4220 = vpack.c.b16 %v4085, %v4084
      %v4221 = vpack.c.b16 %v4087, %v4086
      %v4222 = vpack.c.b16 %v4089, %v4088
      %v4223 = vpack.c.b16 %v4091, %v4090
      %v4224 = vpack.c.b16 %v4093, %v4092
      %v4225 = vpack.c.b16 %v4095, %v4094
      %v4226 = vpack.c.b16 %v4097, %v4096
      %v4227 = vpack.c.b16 %v4099, %v4098
      %v4228 = vpack.c.b16 %v4101, %v4100
      %v4229 = vpack.c.b16 %v4103, %v4102
      %v4230 = vpack.c.b16 %v4105, %v4104
      %v4231 = vpack.c.b16 %v4107, %v4106
      %v4232 = vpack.c.b16 %v4109, %v4108
      %v4233 = vpack.c.b16 %v4111, %v4110
      %v4234 = vpack.c.b16 %v4113, %v4112
      %v4235 = vpack.c.b16 %v4115, %v4114
      %v4236 = vpack.c.b16 %v4117, %v4116
      %v4237 = vpack.c.b16 %v4119, %v4118
      %v4238 = vpack.c.b16 %v4121, %v4120
      %v4239 = vpack.c.b16 %v4123, %v4122
      %v4240 = vpack.c.b16 %v4125, %v4124
      %v4241 = vpack.c.b16 %v4127, %v4126
      %v4242 = vpack.c.b16 %v4129, %v4128
      %v4243 = vpack.c.b16 %v4131, %v4130
      %v4244 = vpack.c.b16 %v4133, %v4132
      %v4245 = vpack.c.b16 %v4135, %v4134
      %v4246 = vpack.c.b16 %v4137, %v4136
      %v4247 = vpack.c.b16 %v4139, %v4138
      %v4248 = vpack.c.b16 %v4141, %v4140
      %v4249 = vpack.c.b16 %v4143, %v4142
      %v4250 = vpack.c.b16 %v4145, %v4144
      %v4251 = vpack.c.b16 %v4147, %v4146
      %v4252 = vpack.c.b16 %v4149, %v4148
      %v4253 = vpack.c.b16 %v4151, %v4150
      %v4254 = vpack.c.b16 %v4153, %v4152
      %v4255 = vpack.c.b16 %v4155, %v4154
      %v4256 = vpack.c.b16 %v4157, %v4156
      %v4257 = vpack.c.b16 %v4159, %v4158
      %v4258 = vpack.c.b16 %v4161, %v4160
      %v4259 = vpack.c.b16 %v4163, %v4162
      %v4260 = vpack.c.b16 %v4165, %v4164
      %v4261 = vpack.c.b16 %v4167, %v4166
      %v4262 = vpack.c.b16 %v4169, %v4168
      %v4263 = vpack.c.b16 %v4171, %v4170
      %v4264 = vpack.c.b16 %v4173, %v4172
      %v4265 = vpack.c.b16 %v4175, %v4174
      %v4266 = vpack.c.b16 %v4177, %v4176
      %v4267 = vpack.c.b16 %v4179, %v4178
      %v4268 = vpack.c.b16 %v4181, %v4180
      %v4269 = vpack.c.b16 %v4183, %v4182
      %v4270 = vpack.c.b16 %v4185, %v4184
      %v4271 = vpack.c.b16 %v4187, %v4186
      %v4272 = vpack.c.b16 %v4189, %v4188
      %v4273 = vpack.c.b16 %v4191, %v4190
      %v4274 = vpack.c.b16 %v4193, %v4192
      %v4275 = vpack.c.b16 %v4195, %v4194
      %v4276 = vpack.c.b16 %v4197, %v4196
      %v4277 = vpack.c.b16 %v4199, %v4198
      %v4278 = vpack.c.b16 %v4201, %v4200
      %v4279 = vpack.c.b16 %v4203, %v4202
      %v4280 = vpack.c.b16 %v4205, %v4204
      %v4281 = vpack.c.b16 %v4207, %v4206
      %v4282 = vpack.c.b16 %v4209, %v4208
      %v4283 = vpack.c.b16 %v4211, %v4210
      %4356 = vmatprep.subr.bf16.mxu0 0
      %4357 = vmatpush1.bf16.msra.mxu0 %v4219
      %4358 = vmatprep.subr.bf16.mxu0 0
      %4359 = vmatpush1.bf16.msra.mxu0 %v4218
      %4360 = vmatprep.subr.bf16.mxu0 0
      %4361 = vmatpush1.bf16.msra.mxu0 %v4217
      %4362 = vmatprep.subr.bf16.mxu0 0
      %4363 = vmatpush1.bf16.msra.mxu0 %v4216
      %4364 = vmatprep.subr.bf16.mxu0 0
      %4365 = vmatpush1.bf16.msra.mxu0 %v4215
      %4366 = vmatprep.subr.bf16.mxu0 0
      %4367 = vmatpush1.bf16.msra.mxu0 %v4214
      %4368 = vmatprep.subr.bf16.mxu0 0
      %4369 = vmatpush1.bf16.msra.mxu0 %v4213
      %4370 = vmatprep.subr.bf16.mxu0 0
      %4371 = vmatpush1.bf16.msra.mxu0 %v4212
      %4372 = vmatprep.subr.bf16.mxu0 0
      %4373 = vmatpush2.bf16.msra.mxu0 %v4227
      %4374 = vmatprep.subr.bf16.mxu0 0
      %4375 = vmatpush2.bf16.msra.mxu0 %v4226
      %4376 = vmatprep.subr.bf16.mxu0 0
      %4377 = vmatpush2.bf16.msra.mxu0 %v4225
      %4378 = vmatprep.subr.bf16.mxu0 0
      %4379 = vmatpush2.bf16.msra.mxu0 %v4224
      %4380 = vmatprep.subr.bf16.mxu0 0
      %4381 = vmatpush2.bf16.msra.mxu0 %v4223
      %4382 = vmatprep.subr.bf16.mxu0 0
      %4383 = vmatpush2.bf16.msra.mxu0 %v4222
      %4384 = vmatprep.subr.bf16.mxu0 0
      %4385 = vmatpush2.bf16.msra.mxu0 %v4221
      %4386 = vmatprep.subr.bf16.mxu0 0
      %4387 = vmatpush2.bf16.msra.mxu0 %v4220
      %4388 = vmatprep.mubr.bf16.mxu0 %v3268
      %4389 = vmatmul.mubr.bf16.gmra.mxu0 %v3204
      %v4390 = vpop.f32.mrf.mxu0
      %v4391 = vadd.f32 0.0, %v4390
      %v4392 = vpop.f32.mrf.mxu0
      %v4393 = vpop.f32.mrf.mxu0
      %v4394 = vadd.f32 0.0, %v4393
      %v4395 = vpop.f32.mrf.mxu0
      %4396 = vmatprep.mubr.bf16.mxu0 %v3269
      %4397 = vmatmul.mubr.bf16.gmra.mxu0 %v3205
      %v4398 = vpop.f32.mrf.mxu0
      %v4399 = vadd.f32 0.0, %v4398
      %v4400 = vpop.f32.mrf.mxu0
      %v4401 = vpop.f32.mrf.mxu0
      %v4402 = vadd.f32 0.0, %v4401
      %v4403 = vpop.f32.mrf.mxu0
      %4404 = vmatprep.mubr.bf16.mxu0 %v3270
      %4405 = vmatmul.mubr.bf16.gmra.mxu0 %v3206
      %v4406 = vpop.f32.mrf.mxu0
      %v4407 = vadd.f32 0.0, %v4406
      %v4408 = vpop.f32.mrf.mxu0
      %v4409 = vpop.f32.mrf.mxu0
      %v4410 = vadd.f32 0.0, %v4409
      %v4411 = vpop.f32.mrf.mxu0
      %4412 = vmatprep.mubr.bf16.mxu0 %v3271
      %4413 = vmatmul.mubr.bf16.gmra.mxu0 %v3207
      %v4414 = vpop.f32.mrf.mxu0
      %v4415 = vadd.f32 0.0, %v4414
      %v4416 = vpop.f32.mrf.mxu0
      %v4417 = vpop.f32.mrf.mxu0
      %v4418 = vadd.f32 0.0, %v4417
      %v4419 = vpop.f32.mrf.mxu0
      %4420 = vmatprep.mubr.bf16.mxu0 %v3272
      %4421 = vmatmul.mubr.bf16.gmra.mxu0 %v3208
      %v4422 = vpop.f32.mrf.mxu0
      %v4423 = vadd.f32 0.0, %v4422
      %v4424 = vpop.f32.mrf.mxu0
      %v4425 = vpop.f32.mrf.mxu0
      %v4426 = vadd.f32 0.0, %v4425
      %v4427 = vpop.f32.mrf.mxu0
      %4428 = vmatprep.mubr.bf16.mxu0 %v3273
      %4429 = vmatmul.mubr.bf16.gmra.mxu0 %v3209
      %v4430 = vpop.f32.mrf.mxu0
      %v4431 = vadd.f32 0.0, %v4430
      %v4432 = vpop.f32.mrf.mxu0
      %v4433 = vpop.f32.mrf.mxu0
      %v4434 = vadd.f32 0.0, %v4433
      %v4435 = vpop.f32.mrf.mxu0
      %4436 = vmatprep.mubr.bf16.mxu0 %v3274
      %4437 = vmatmul.mubr.bf16.gmra.mxu0 %v3210
      %v4438 = vpop.f32.mrf.mxu0
      %v4439 = vadd.f32 0.0, %v4438
      %v4440 = vpop.f32.mrf.mxu0
      %v4441 = vpop.f32.mrf.mxu0
      %v4442 = vadd.f32 0.0, %v4441
      %v4443 = vpop.f32.mrf.mxu0
      %4444 = vmatprep.mubr.bf16.mxu0 %v3275
      %4445 = vmatmul.mubr.bf16.gmra.mxu0 %v3211
      %v4446 = vpop.f32.mrf.mxu0
      %v4447 = vadd.f32 0.0, %v4446
      %v4448 = vpop.f32.mrf.mxu0
      %v4449 = vpop.f32.mrf.mxu0
      %v4450 = vadd.f32 0.0, %v4449
      %v4451 = vpop.f32.mrf.mxu0
      %4452 = vmatprep.mubr.bf16.mxu0 %v3276
      %4453 = vmatmul.mubr.bf16.gmra.mxu0 %v3212
      %v4454 = vpop.f32.mrf.mxu0
      %v4455 = vadd.f32 0.0, %v4454
      %v4456 = vpop.f32.mrf.mxu0
      %v4457 = vpop.f32.mrf.mxu0
      %v4458 = vadd.f32 0.0, %v4457
      %v4459 = vpop.f32.mrf.mxu0
      %4460 = vmatprep.mubr.bf16.mxu0 %v3277
      %4461 = vmatmul.mubr.bf16.gmra.mxu0 %v3213
      %v4462 = vpop.f32.mrf.mxu0
      %v4463 = vadd.f32 0.0, %v4462
      %v4464 = vpop.f32.mrf.mxu0
      %v4465 = vpop.f32.mrf.mxu0
      %v4466 = vadd.f32 0.0, %v4465
      %v4467 = vpop.f32.mrf.mxu0
      %4468 = vmatprep.mubr.bf16.mxu0 %v3278
      %4469 = vmatmul.mubr.bf16.gmra.mxu0 %v3214
      %v4470 = vpop.f32.mrf.mxu0
      %v4471 = vadd.f32 0.0, %v4470
      %v4472 = vpop.f32.mrf.mxu0
      %v4473 = vpop.f32.mrf.mxu0
      %v4474 = vadd.f32 0.0, %v4473
      %v4475 = vpop.f32.mrf.mxu0
      %4476 = vmatprep.mubr.bf16.mxu0 %v3279
      %4477 = vmatmul.mubr.bf16.gmra.mxu0 %v3215
      %v4478 = vpop.f32.mrf.mxu0
      %v4479 = vadd.f32 0.0, %v4478
      %v4480 = vpop.f32.mrf.mxu0
      %v4481 = vpop.f32.mrf.mxu0
      %v4482 = vadd.f32 0.0, %v4481
      %v4483 = vpop.f32.mrf.mxu0
      %4484 = vmatprep.mubr.bf16.mxu0 %v3280
      %4485 = vmatmul.mubr.bf16.gmra.mxu0 %v3216
      %v4486 = vpop.f32.mrf.mxu0
      %v4487 = vadd.f32 0.0, %v4486
      %v4488 = vpop.f32.mrf.mxu0
      %v4489 = vpop.f32.mrf.mxu0
      %v4490 = vadd.f32 0.0, %v4489
      %v4491 = vpop.f32.mrf.mxu0
      %4492 = vmatprep.mubr.bf16.mxu0 %v3281
      %4493 = vmatmul.mubr.bf16.gmra.mxu0 %v3217
      %v4494 = vpop.f32.mrf.mxu0
      %v4495 = vadd.f32 0.0, %v4494
      %v4496 = vpop.f32.mrf.mxu0
      %v4497 = vpop.f32.mrf.mxu0
      %v4498 = vadd.f32 0.0, %v4497
      %v4499 = vpop.f32.mrf.mxu0
      %4500 = vmatprep.mubr.bf16.mxu0 %v3282
      %4501 = vmatmul.mubr.bf16.gmra.mxu0 %v3218
      %v4502 = vpop.f32.mrf.mxu0
      %v4503 = vadd.f32 0.0, %v4502
      %v4504 = vpop.f32.mrf.mxu0
      %v4505 = vpop.f32.mrf.mxu0
      %v4506 = vadd.f32 0.0, %v4505
      %v4507 = vpop.f32.mrf.mxu0
      %4508 = vmatprep.mubr.bf16.mxu0 %v3283
      %4509 = vmatmul.mubr.bf16.gmra.mxu0 %v3219
      %v4510 = vpop.f32.mrf.mxu0
      %v4511 = vadd.f32 0.0, %v4510
      %v4512 = vpop.f32.mrf.mxu0
      %v4513 = vpop.f32.mrf.mxu0
      %v4514 = vadd.f32 0.0, %v4513
      %v4515 = vpop.f32.mrf.mxu0
      %4516 = vdwg.mxu0
      %4517 = vmatprep.subr.bf16.mxu0 0
      %4518 = vmatpush1.bf16.msra.mxu0 %v4235
      %4519 = vmatprep.subr.bf16.mxu0 0
      %4520 = vmatpush1.bf16.msra.mxu0 %v4234
      %4521 = vmatprep.subr.bf16.mxu0 0
      %4522 = vmatpush1.bf16.msra.mxu0 %v4233
      %4523 = vmatprep.subr.bf16.mxu0 0
      %4524 = vmatpush1.bf16.msra.mxu0 %v4232
      %4525 = vmatprep.subr.bf16.mxu0 0
      %4526 = vmatpush1.bf16.msra.mxu0 %v4231
      %4527 = vmatprep.subr.bf16.mxu0 0
      %4528 = vmatpush1.bf16.msra.mxu0 %v4230
      %4529 = vmatprep.subr.bf16.mxu0 0
      %4530 = vmatpush1.bf16.msra.mxu0 %v4229
      %4531 = vmatprep.subr.bf16.mxu0 0
      %4532 = vmatpush1.bf16.msra.mxu0 %v4228
      %4533 = vmatprep.subr.bf16.mxu0 0
      %4534 = vmatpush2.bf16.msra.mxu0 %v4243
      %4535 = vmatprep.subr.bf16.mxu0 0
      %4536 = vmatpush2.bf16.msra.mxu0 %v4242
      %4537 = vmatprep.subr.bf16.mxu0 0
      %4538 = vmatpush2.bf16.msra.mxu0 %v4241
      %4539 = vmatprep.subr.bf16.mxu0 0
      %4540 = vmatpush2.bf16.msra.mxu0 %v4240
      %4541 = vmatprep.subr.bf16.mxu0 0
      %4542 = vmatpush2.bf16.msra.mxu0 %v4239
      %4543 = vmatprep.subr.bf16.mxu0 0
      %4544 = vmatpush2.bf16.msra.mxu0 %v4238
      %4545 = vmatprep.subr.bf16.mxu0 0
      %4546 = vmatpush2.bf16.msra.mxu0 %v4237
      %4547 = vmatprep.subr.bf16.mxu0 0
      %4548 = vmatpush2.bf16.msra.mxu0 %v4236
      %4549 = vmatprep.mubr.bf16.mxu0 %v3412
      %4550 = vmatmul.mubr.bf16.gmra.mxu0 %v3332
      %v4551 = vpop.f32.mrf.mxu0
      %v4552 = vadd.f32 %v4391, %v4551
      %v4553 = vpop.f32.mrf.mxu0
      %v4554 = vpop.f32.mrf.mxu0
      %v4555 = vadd.f32 %v4394, %v4554
      %v4556 = vpop.f32.mrf.mxu0
      %4557 = vmatprep.mubr.bf16.mxu0 %v3413
      %4558 = vmatmul.mubr.bf16.gmra.mxu0 %v3333
      %v4559 = vpop.f32.mrf.mxu0
      %v4560 = vadd.f32 %v4399, %v4559
      %v4561 = vpop.f32.mrf.mxu0
      %v4562 = vpop.f32.mrf.mxu0
      %v4563 = vadd.f32 %v4402, %v4562
      %v4564 = vpop.f32.mrf.mxu0
      %4565 = vmatprep.mubr.bf16.mxu0 %v3414
      %4566 = vmatmul.mubr.bf16.gmra.mxu0 %v3334
      %v4567 = vpop.f32.mrf.mxu0
      %v4568 = vadd.f32 %v4407, %v4567
      %v4569 = vpop.f32.mrf.mxu0
      %v4570 = vpop.f32.mrf.mxu0
      %v4571 = vadd.f32 %v4410, %v4570
      %v4572 = vpop.f32.mrf.mxu0
      %4573 = vmatprep.mubr.bf16.mxu0 %v3415
      %4574 = vmatmul.mubr.bf16.gmra.mxu0 %v3335
      %v4575 = vpop.f32.mrf.mxu0
      %v4576 = vadd.f32 %v4415, %v4575
      %v4577 = vpop.f32.mrf.mxu0
      %v4578 = vpop.f32.mrf.mxu0
      %v4579 = vadd.f32 %v4418, %v4578
      %v4580 = vpop.f32.mrf.mxu0
      %4581 = vmatprep.mubr.bf16.mxu0 %v3416
      %4582 = vmatmul.mubr.bf16.gmra.mxu0 %v3336
      %v4583 = vpop.f32.mrf.mxu0
      %v4584 = vadd.f32 %v4423, %v4583
      %v4585 = vpop.f32.mrf.mxu0
      %v4586 = vpop.f32.mrf.mxu0
      %v4587 = vadd.f32 %v4426, %v4586
      %v4588 = vpop.f32.mrf.mxu0
      %4589 = vmatprep.mubr.bf16.mxu0 %v3417
      %4590 = vmatmul.mubr.bf16.gmra.mxu0 %v3337
      %v4591 = vpop.f32.mrf.mxu0
      %v4592 = vadd.f32 %v4431, %v4591
      %v4593 = vpop.f32.mrf.mxu0
      %v4594 = vpop.f32.mrf.mxu0
      %v4595 = vadd.f32 %v4434, %v4594
      %v4596 = vpop.f32.mrf.mxu0
      %4597 = vmatprep.mubr.bf16.mxu0 %v3418
      %4598 = vmatmul.mubr.bf16.gmra.mxu0 %v3338
      %v4599 = vpop.f32.mrf.mxu0
      %v4600 = vadd.f32 %v4439, %v4599
      %v4601 = vpop.f32.mrf.mxu0
      %v4602 = vpop.f32.mrf.mxu0
      %v4603 = vadd.f32 %v4442, %v4602
      %v4604 = vpop.f32.mrf.mxu0
      %4605 = vmatprep.mubr.bf16.mxu0 %v3419
      %4606 = vmatmul.mubr.bf16.gmra.mxu0 %v3339
      %v4607 = vpop.f32.mrf.mxu0
      %v4608 = vadd.f32 %v4447, %v4607
      %v4609 = vpop.f32.mrf.mxu0
      %v4610 = vpop.f32.mrf.mxu0
      %v4611 = vadd.f32 %v4450, %v4610
      %v4612 = vpop.f32.mrf.mxu0
      %4613 = vmatprep.mubr.bf16.mxu0 %v3420
      %4614 = vmatmul.mubr.bf16.gmra.mxu0 %v3340
      %v4615 = vpop.f32.mrf.mxu0
      %v4616 = vadd.f32 %v4455, %v4615
      %v4617 = vpop.f32.mrf.mxu0
      %v4618 = vpop.f32.mrf.mxu0
      %v4619 = vadd.f32 %v4458, %v4618
      %v4620 = vpop.f32.mrf.mxu0
      %4621 = vmatprep.mubr.bf16.mxu0 %v3421
      %4622 = vmatmul.mubr.bf16.gmra.mxu0 %v3341
      %v4623 = vpop.f32.mrf.mxu0
      %v4624 = vadd.f32 %v4463, %v4623
      %v4625 = vpop.f32.mrf.mxu0
      %v4626 = vpop.f32.mrf.mxu0
      %v4627 = vadd.f32 %v4466, %v4626
      %v4628 = vpop.f32.mrf.mxu0
      %4629 = vmatprep.mubr.bf16.mxu0 %v3422
      %4630 = vmatmul.mubr.bf16.gmra.mxu0 %v3342
      %v4631 = vpop.f32.mrf.mxu0
      %v4632 = vadd.f32 %v4471, %v4631
      %v4633 = vpop.f32.mrf.mxu0
      %v4634 = vpop.f32.mrf.mxu0
      %v4635 = vadd.f32 %v4474, %v4634
      %v4636 = vpop.f32.mrf.mxu0
      %4637 = vmatprep.mubr.bf16.mxu0 %v3423
      %4638 = vmatmul.mubr.bf16.gmra.mxu0 %v3343
      %v4639 = vpop.f32.mrf.mxu0
      %v4640 = vadd.f32 %v4479, %v4639
      %v4641 = vpop.f32.mrf.mxu0
      %v4642 = vpop.f32.mrf.mxu0
      %v4643 = vadd.f32 %v4482, %v4642
      %v4644 = vpop.f32.mrf.mxu0
      %4645 = vmatprep.mubr.bf16.mxu0 %v3424
      %4646 = vmatmul.mubr.bf16.gmra.mxu0 %v3344
      %v4647 = vpop.f32.mrf.mxu0
      %v4648 = vadd.f32 %v4487, %v4647
      %v4649 = vpop.f32.mrf.mxu0
      %v4650 = vpop.f32.mrf.mxu0
      %v4651 = vadd.f32 %v4490, %v4650
      %v4652 = vpop.f32.mrf.mxu0
      %4653 = vmatprep.mubr.bf16.mxu0 %v3425
      %4654 = vmatmul.mubr.bf16.gmra.mxu0 %v3345
      %v4655 = vpop.f32.mrf.mxu0
      %v4656 = vadd.f32 %v4495, %v4655
      %v4657 = vpop.f32.mrf.mxu0
      %v4658 = vpop.f32.mrf.mxu0
      %v4659 = vadd.f32 %v4498, %v4658
      %v4660 = vpop.f32.mrf.mxu0
      %4661 = vmatprep.mubr.bf16.mxu0 %v3426
      %4662 = vmatmul.mubr.bf16.gmra.mxu0 %v3346
      %v4663 = vpop.f32.mrf.mxu0
      %v4664 = vadd.f32 %v4503, %v4663
      %v4665 = vpop.f32.mrf.mxu0
      %v4666 = vpop.f32.mrf.mxu0
      %v4667 = vadd.f32 %v4506, %v4666
      %v4668 = vpop.f32.mrf.mxu0
      %4669 = vmatprep.mubr.bf16.mxu0 %v3427
      %4670 = vmatmul.mubr.bf16.gmra.mxu0 %v3347
      %v4671 = vpop.f32.mrf.mxu0
      %v4672 = vadd.f32 %v4511, %v4671
      %v4673 = vpop.f32.mrf.mxu0
      %v4674 = vpop.f32.mrf.mxu0
      %v4675 = vadd.f32 %v4514, %v4674
      %v4676 = vpop.f32.mrf.mxu0
      %4677 = vdwg.mxu0
      %4678 = vmatprep.subr.bf16.mxu0 0
      %4679 = vmatpush1.bf16.msra.mxu0 %v4251
      %4680 = vmatprep.subr.bf16.mxu0 0
      %4681 = vmatpush1.bf16.msra.mxu0 %v4250
      %4682 = vmatprep.subr.bf16.mxu0 0
      %4683 = vmatpush1.bf16.msra.mxu0 %v4249
      %4684 = vmatprep.subr.bf16.mxu0 0
      %4685 = vmatpush1.bf16.msra.mxu0 %v4248
      %4686 = vmatprep.subr.bf16.mxu0 0
      %4687 = vmatpush1.bf16.msra.mxu0 %v4247
      %4688 = vmatprep.subr.bf16.mxu0 0
      %4689 = vmatpush1.bf16.msra.mxu0 %v4246
      %4690 = vmatprep.subr.bf16.mxu0 0
      %4691 = vmatpush1.bf16.msra.mxu0 %v4245
      %4692 = vmatprep.subr.bf16.mxu0 0
      %4693 = vmatpush1.bf16.msra.mxu0 %v4244
      %4694 = vmatprep.subr.bf16.mxu0 0
      %4695 = vmatpush2.bf16.msra.mxu0 %v4259
      %4696 = vmatprep.subr.bf16.mxu0 0
      %4697 = vmatpush2.bf16.msra.mxu0 %v4258
      %4698 = vmatprep.subr.bf16.mxu0 0
      %4699 = vmatpush2.bf16.msra.mxu0 %v4257
      %4700 = vmatprep.subr.bf16.mxu0 0
      %4701 = vmatpush2.bf16.msra.mxu0 %v4256
      %4702 = vmatprep.subr.bf16.mxu0 0
      %4703 = vmatpush2.bf16.msra.mxu0 %v4255
      %4704 = vmatprep.subr.bf16.mxu0 0
      %4705 = vmatpush2.bf16.msra.mxu0 %v4254
      %4706 = vmatprep.subr.bf16.mxu0 0
      %4707 = vmatpush2.bf16.msra.mxu0 %v4253
      %4708 = vmatprep.subr.bf16.mxu0 0
      %4709 = vmatpush2.bf16.msra.mxu0 %v4252
      %4710 = vmatprep.mubr.bf16.mxu0 %v3540
      %4711 = vmatmul.mubr.bf16.gmra.mxu0 %v3476
      %v4712 = vpop.f32.mrf.mxu0
      %v4713 = vadd.f32 %v4552, %v4712
      %v4714 = vpop.f32.mrf.mxu0
      %v4715 = vpop.f32.mrf.mxu0
      %v4716 = vadd.f32 %v4555, %v4715
      %v4717 = vpop.f32.mrf.mxu0
      %4718 = vmatprep.mubr.bf16.mxu0 %v3541
      %4719 = vmatmul.mubr.bf16.gmra.mxu0 %v3477
      %v4720 = vpop.f32.mrf.mxu0
      %v4721 = vadd.f32 %v4560, %v4720
      %v4722 = vpop.f32.mrf.mxu0
      %v4723 = vpop.f32.mrf.mxu0
      %v4724 = vadd.f32 %v4563, %v4723
      %v4725 = vpop.f32.mrf.mxu0
      %4726 = vmatprep.mubr.bf16.mxu0 %v3542
      %4727 = vmatmul.mubr.bf16.gmra.mxu0 %v3478
      %v4728 = vpop.f32.mrf.mxu0
      %v4729 = vadd.f32 %v4568, %v4728
      %v4730 = vpop.f32.mrf.mxu0
      %v4731 = vpop.f32.mrf.mxu0
      %v4732 = vadd.f32 %v4571, %v4731
      %v4733 = vpop.f32.mrf.mxu0
      %4734 = vmatprep.mubr.bf16.mxu0 %v3543
      %4735 = vmatmul.mubr.bf16.gmra.mxu0 %v3479
      %v4736 = vpop.f32.mrf.mxu0
      %v4737 = vadd.f32 %v4576, %v4736
      %v4738 = vpop.f32.mrf.mxu0
      %v4739 = vpop.f32.mrf.mxu0
      %v4740 = vadd.f32 %v4579, %v4739
      %v4741 = vpop.f32.mrf.mxu0
      %4742 = vmatprep.mubr.bf16.mxu0 %v3544
      %4743 = vmatmul.mubr.bf16.gmra.mxu0 %v3480
      %v4744 = vpop.f32.mrf.mxu0
      %v4745 = vadd.f32 %v4584, %v4744
      %v4746 = vpop.f32.mrf.mxu0
      %v4747 = vpop.f32.mrf.mxu0
      %v4748 = vadd.f32 %v4587, %v4747
      %v4749 = vpop.f32.mrf.mxu0
      %4750 = vmatprep.mubr.bf16.mxu0 %v3545
      %4751 = vmatmul.mubr.bf16.gmra.mxu0 %v3481
      %v4752 = vpop.f32.mrf.mxu0
      %v4753 = vadd.f32 %v4592, %v4752
      %v4754 = vpop.f32.mrf.mxu0
      %v4755 = vpop.f32.mrf.mxu0
      %v4756 = vadd.f32 %v4595, %v4755
      %v4757 = vpop.f32.mrf.mxu0
      %4758 = vmatprep.mubr.bf16.mxu0 %v3546
      %4759 = vmatmul.mubr.bf16.gmra.mxu0 %v3482
      %v4760 = vpop.f32.mrf.mxu0
      %v4761 = vadd.f32 %v4600, %v4760
      %v4762 = vpop.f32.mrf.mxu0
      %v4763 = vpop.f32.mrf.mxu0
      %v4764 = vadd.f32 %v4603, %v4763
      %v4765 = vpop.f32.mrf.mxu0
      %4766 = vmatprep.mubr.bf16.mxu0 %v3547
      %4767 = vmatmul.mubr.bf16.gmra.mxu0 %v3483
      %v4768 = vpop.f32.mrf.mxu0
      %v4769 = vadd.f32 %v4608, %v4768
      %v4770 = vpop.f32.mrf.mxu0
      %v4771 = vpop.f32.mrf.mxu0
      %v4772 = vadd.f32 %v4611, %v4771
      %v4773 = vpop.f32.mrf.mxu0
      %4774 = vmatprep.mubr.bf16.mxu0 %v3548
      %4775 = vmatmul.mubr.bf16.gmra.mxu0 %v3484
      %v4776 = vpop.f32.mrf.mxu0
      %v4777 = vadd.f32 %v4616, %v4776
      %v4778 = vpop.f32.mrf.mxu0
      %v4779 = vpop.f32.mrf.mxu0
      %v4780 = vadd.f32 %v4619, %v4779
      %v4781 = vpop.f32.mrf.mxu0
      %4782 = vmatprep.mubr.bf16.mxu0 %v3549
      %4783 = vmatmul.mubr.bf16.gmra.mxu0 %v3485
      %v4784 = vpop.f32.mrf.mxu0
      %v4785 = vadd.f32 %v4624, %v4784
      %v4786 = vpop.f32.mrf.mxu0
      %v4787 = vpop.f32.mrf.mxu0
      %v4788 = vadd.f32 %v4627, %v4787
      %v4789 = vpop.f32.mrf.mxu0
      %4790 = vmatprep.mubr.bf16.mxu0 %v3550
      %4791 = vmatmul.mubr.bf16.gmra.mxu0 %v3486
      %v4792 = vpop.f32.mrf.mxu0
      %v4793 = vadd.f32 %v4632, %v4792
      %v4794 = vpop.f32.mrf.mxu0
      %v4795 = vpop.f32.mrf.mxu0
      %v4796 = vadd.f32 %v4635, %v4795
      %v4797 = vpop.f32.mrf.mxu0
      %4798 = vmatprep.mubr.bf16.mxu0 %v3551
      %4799 = vmatmul.mubr.bf16.gmra.mxu0 %v3487
      %v4800 = vpop.f32.mrf.mxu0
      %v4801 = vadd.f32 %v4640, %v4800
      %v4802 = vpop.f32.mrf.mxu0
      %v4803 = vpop.f32.mrf.mxu0
      %v4804 = vadd.f32 %v4643, %v4803
      %v4805 = vpop.f32.mrf.mxu0
      %4806 = vmatprep.mubr.bf16.mxu0 %v3552
      %4807 = vmatmul.mubr.bf16.gmra.mxu0 %v3488
      %v4808 = vpop.f32.mrf.mxu0
      %v4809 = vadd.f32 %v4648, %v4808
      %v4810 = vpop.f32.mrf.mxu0
      %v4811 = vpop.f32.mrf.mxu0
      %v4812 = vadd.f32 %v4651, %v4811
      %v4813 = vpop.f32.mrf.mxu0
      %4814 = vmatprep.mubr.bf16.mxu0 %v3553
      %4815 = vmatmul.mubr.bf16.gmra.mxu0 %v3489
      %v4816 = vpop.f32.mrf.mxu0
      %v4817 = vadd.f32 %v4656, %v4816
      %v4818 = vpop.f32.mrf.mxu0
      %v4819 = vpop.f32.mrf.mxu0
      %v4820 = vadd.f32 %v4659, %v4819
      %v4821 = vpop.f32.mrf.mxu0
      %4822 = vmatprep.mubr.bf16.mxu0 %v3554
      %4823 = vmatmul.mubr.bf16.gmra.mxu0 %v3490
      %v4824 = vpop.f32.mrf.mxu0
      %v4825 = vadd.f32 %v4664, %v4824
      %v4826 = vpop.f32.mrf.mxu0
      %v4827 = vpop.f32.mrf.mxu0
      %v4828 = vadd.f32 %v4667, %v4827
      %v4829 = vpop.f32.mrf.mxu0
      %4830 = vmatprep.mubr.bf16.mxu0 %v3555
      %4831 = vmatmul.mubr.bf16.gmra.mxu0 %v3491
      %v4832 = vpop.f32.mrf.mxu0
      %v4833 = vadd.f32 %v4672, %v4832
      %v4834 = vpop.f32.mrf.mxu0
      %v4835 = vpop.f32.mrf.mxu0
      %v4836 = vadd.f32 %v4675, %v4835
      %v4837 = vpop.f32.mrf.mxu0
      %4838 = vdwg.mxu0
      %4839 = vmatprep.subr.bf16.mxu0 0
      %4840 = vmatpush1.bf16.msra.mxu0 %v4267
      %4841 = vmatprep.subr.bf16.mxu0 0
      %4842 = vmatpush1.bf16.msra.mxu0 %v4266
      %4843 = vmatprep.subr.bf16.mxu0 0
      %4844 = vmatpush1.bf16.msra.mxu0 %v4265
      %4845 = vmatprep.subr.bf16.mxu0 0
      %4846 = vmatpush1.bf16.msra.mxu0 %v4264
      %4847 = vmatprep.subr.bf16.mxu0 0
      %4848 = vmatpush1.bf16.msra.mxu0 %v4263
      %4849 = vmatprep.subr.bf16.mxu0 0
      %4850 = vmatpush1.bf16.msra.mxu0 %v4262
      %4851 = vmatprep.subr.bf16.mxu0 0
      %4852 = vmatpush1.bf16.msra.mxu0 %v4261
      %4853 = vmatprep.subr.bf16.mxu0 0
      %4854 = vmatpush1.bf16.msra.mxu0 %v4260
      %4855 = vmatprep.subr.bf16.mxu0 0
      %4856 = vmatpush2.bf16.msra.mxu0 %v4275
      %4857 = vmatprep.subr.bf16.mxu0 0
      %4858 = vmatpush2.bf16.msra.mxu0 %v4274
      %4859 = vmatprep.subr.bf16.mxu0 0
      %4860 = vmatpush2.bf16.msra.mxu0 %v4273
      %4861 = vmatprep.subr.bf16.mxu0 0
      %4862 = vmatpush2.bf16.msra.mxu0 %v4272
      %4863 = vmatprep.subr.bf16.mxu0 0
      %4864 = vmatpush2.bf16.msra.mxu0 %v4271
      %4865 = vmatprep.subr.bf16.mxu0 0
      %4866 = vmatpush2.bf16.msra.mxu0 %v4270
      %4867 = vmatprep.subr.bf16.mxu0 0
      %4868 = vmatpush2.bf16.msra.mxu0 %v4269
      %4869 = vmatprep.subr.bf16.mxu0 0
      %4870 = vmatpush2.bf16.msra.mxu0 %v4268
      %4871 = vmatprep.mubr.bf16.mxu0 %v3684
      %4872 = vmatmul.mubr.bf16.gmra.mxu0 %v3620
      %v4873 = vpop.f32.mrf.mxu0
      %v4874 = vadd.f32 %v4713, %v4873
      %v4875 = vpop.f32.mrf.mxu0
      %v4876 = vpop.f32.mrf.mxu0
      %v4877 = vadd.f32 %v4716, %v4876
      %v4878 = vpop.f32.mrf.mxu0
      %4879 = vmatprep.mubr.bf16.mxu0 %v3685
      %4880 = vmatmul.mubr.bf16.gmra.mxu0 %v3621
      %v4881 = vpop.f32.mrf.mxu0
      %v4882 = vadd.f32 %v4721, %v4881
      %v4883 = vpop.f32.mrf.mxu0
      %v4884 = vpop.f32.mrf.mxu0
      %v4885 = vadd.f32 %v4724, %v4884
      %v4886 = vpop.f32.mrf.mxu0
      %4887 = vmatprep.mubr.bf16.mxu0 %v3686
      %4888 = vmatmul.mubr.bf16.gmra.mxu0 %v3622
      %v4889 = vpop.f32.mrf.mxu0
      %v4890 = vadd.f32 %v4729, %v4889
      %v4891 = vpop.f32.mrf.mxu0
      %v4892 = vpop.f32.mrf.mxu0
      %v4893 = vadd.f32 %v4732, %v4892
      %v4894 = vpop.f32.mrf.mxu0
      %4895 = vmatprep.mubr.bf16.mxu0 %v3687
      %4896 = vmatmul.mubr.bf16.gmra.mxu0 %v3623
      %v4897 = vpop.f32.mrf.mxu0
      %v4898 = vadd.f32 %v4737, %v4897
      %v4899 = vpop.f32.mrf.mxu0
      %v4900 = vpop.f32.mrf.mxu0
      %v4901 = vadd.f32 %v4740, %v4900
      %v4902 = vpop.f32.mrf.mxu0
      %4903 = vmatprep.mubr.bf16.mxu0 %v3688
      %4904 = vmatmul.mubr.bf16.gmra.mxu0 %v3624
      %v4905 = vpop.f32.mrf.mxu0
      %v4906 = vadd.f32 %v4745, %v4905
      %v4907 = vpop.f32.mrf.mxu0
      %v4908 = vpop.f32.mrf.mxu0
      %v4909 = vadd.f32 %v4748, %v4908
      %v4910 = vpop.f32.mrf.mxu0
      %4911 = vmatprep.mubr.bf16.mxu0 %v3689
      %4912 = vmatmul.mubr.bf16.gmra.mxu0 %v3625
      %v4913 = vpop.f32.mrf.mxu0
      %v4914 = vadd.f32 %v4753, %v4913
      %v4915 = vpop.f32.mrf.mxu0
      %v4916 = vpop.f32.mrf.mxu0
      %v4917 = vadd.f32 %v4756, %v4916
      %v4918 = vpop.f32.mrf.mxu0
      %4919 = vmatprep.mubr.bf16.mxu0 %v3690
      %4920 = vmatmul.mubr.bf16.gmra.mxu0 %v3626
      %v4921 = vpop.f32.mrf.mxu0
      %v4922 = vadd.f32 %v4761, %v4921
      %v4923 = vpop.f32.mrf.mxu0
      %v4924 = vpop.f32.mrf.mxu0
      %v4925 = vadd.f32 %v4764, %v4924
      %v4926 = vpop.f32.mrf.mxu0
      %4927 = vmatprep.mubr.bf16.mxu0 %v3691
      %4928 = vmatmul.mubr.bf16.gmra.mxu0 %v3627
      %v4929 = vpop.f32.mrf.mxu0
      %v4930 = vadd.f32 %v4769, %v4929
      %v4931 = vpop.f32.mrf.mxu0
      %v4932 = vpop.f32.mrf.mxu0
      %v4933 = vadd.f32 %v4772, %v4932
      %v4934 = vpop.f32.mrf.mxu0
      %4935 = vmatprep.mubr.bf16.mxu0 %v3692
      %4936 = vmatmul.mubr.bf16.gmra.mxu0 %v3628
      %v4937 = vpop.f32.mrf.mxu0
      %v4938 = vadd.f32 %v4777, %v4937
      %v4939 = vpop.f32.mrf.mxu0
      %v4940 = vpop.f32.mrf.mxu0
      %v4941 = vadd.f32 %v4780, %v4940
      %v4942 = vpop.f32.mrf.mxu0
      %4943 = vmatprep.mubr.bf16.mxu0 %v3693
      %4944 = vmatmul.mubr.bf16.gmra.mxu0 %v3629
      %v4945 = vpop.f32.mrf.mxu0
      %v4946 = vadd.f32 %v4785, %v4945
      %v4947 = vpop.f32.mrf.mxu0
      %v4948 = vpop.f32.mrf.mxu0
      %v4949 = vadd.f32 %v4788, %v4948
      %v4950 = vpop.f32.mrf.mxu0
      %4951 = vmatprep.mubr.bf16.mxu0 %v3694
      %4952 = vmatmul.mubr.bf16.gmra.mxu0 %v3630
      %v4953 = vpop.f32.mrf.mxu0
      %v4954 = vadd.f32 %v4793, %v4953
      %v4955 = vpop.f32.mrf.mxu0
      %v4956 = vpop.f32.mrf.mxu0
      %v4957 = vadd.f32 %v4796, %v4956
      %v4958 = vpop.f32.mrf.mxu0
      %4959 = vmatprep.mubr.bf16.mxu0 %v3695
      %4960 = vmatmul.mubr.bf16.gmra.mxu0 %v3631
      %v4961 = vpop.f32.mrf.mxu0
      %v4962 = vadd.f32 %v4801, %v4961
      %v4963 = vpop.f32.mrf.mxu0
      %v4964 = vpop.f32.mrf.mxu0
      %v4965 = vadd.f32 %v4804, %v4964
      %v4966 = vpop.f32.mrf.mxu0
      %4967 = vmatprep.mubr.bf16.mxu0 %v3696
      %4968 = vmatmul.mubr.bf16.gmra.mxu0 %v3632
      %v4969 = vpop.f32.mrf.mxu0
      %v4970 = vadd.f32 %v4809, %v4969
      %v4971 = vpop.f32.mrf.mxu0
      %v4972 = vpop.f32.mrf.mxu0
      %v4973 = vadd.f32 %v4812, %v4972
      %v4974 = vpop.f32.mrf.mxu0
      %4975 = vmatprep.mubr.bf16.mxu0 %v3697
      %4976 = vmatmul.mubr.bf16.gmra.mxu0 %v3633
      %v4977 = vpop.f32.mrf.mxu0
      %v4978 = vadd.f32 %v4817, %v4977
      %v4979 = vpop.f32.mrf.mxu0
      %v4980 = vpop.f32.mrf.mxu0
      %v4981 = vadd.f32 %v4820, %v4980
      %v4982 = vpop.f32.mrf.mxu0
      %4983 = vmatprep.mubr.bf16.mxu0 %v3698
      %4984 = vmatmul.mubr.bf16.gmra.mxu0 %v3634
      %v4985 = vpop.f32.mrf.mxu0
      %v4986 = vadd.f32 %v4825, %v4985
      %v4987 = vpop.f32.mrf.mxu0
      %v4988 = vpop.f32.mrf.mxu0
      %v4989 = vadd.f32 %v4828, %v4988
      %v4990 = vpop.f32.mrf.mxu0
      %4991 = vmatprep.mubr.bf16.mxu0 %v3699
      %4992 = vmatmul.mubr.bf16.gmra.mxu0 %v3635
      %v4993 = vpop.f32.mrf.mxu0
      %v4994 = vadd.f32 %v4833, %v4993
      %v4995 = vpop.f32.mrf.mxu0
      %v4996 = vpop.f32.mrf.mxu0
      %v4997 = vadd.f32 %v4836, %v4996
      %v4998 = vpop.f32.mrf.mxu0
      %4999 = vdwg.mxu0
      %5000 = vmatprep.subr.bf16.mxu0 0
      %5001 = vmatpush1.bf16.msra.mxu0 %v4283
      %5002 = vmatprep.subr.bf16.mxu0 0
      %5003 = vmatpush1.bf16.msra.mxu0 %v4282
      %5004 = vmatprep.subr.bf16.mxu0 0
      %5005 = vmatpush1.bf16.msra.mxu0 %v4281
      %5006 = vmatprep.subr.bf16.mxu0 0
      %5007 = vmatpush1.bf16.msra.mxu0 %v4280
      %5008 = vmatprep.subr.bf16.mxu0 0
      %5009 = vmatpush1.bf16.msra.mxu0 %v4279
      %5010 = vmatprep.subr.bf16.mxu0 0
      %5011 = vmatpush1.bf16.msra.mxu0 %v4278
      %5012 = vmatprep.subr.bf16.mxu0 0
      %5013 = vmatpush1.bf16.msra.mxu0 %v4277
      %5014 = vmatprep.subr.bf16.mxu0 0
      %5015 = vmatpush1.bf16.msra.mxu0 %v4276
      %5016 = vmatprep.subr.bf16.mxu0 0
      %5017 = vmatpush2.bf16.msra.mxu0 0
      %5018 = vmatprep.subr.bf16.mxu0 0
      %5019 = vmatpush2.bf16.msra.mxu0 0
      %5020 = vmatprep.subr.bf16.mxu0 0
      %5021 = vmatpush2.bf16.msra.mxu0 0
      %5022 = vmatprep.subr.bf16.mxu0 0
      %5023 = vmatpush2.bf16.msra.mxu0 0
      %5024 = vmatprep.subr.bf16.mxu0 0
      %5025 = vmatpush2.bf16.msra.mxu0 0
      %5026 = vmatprep.subr.bf16.mxu0 0
      %5027 = vmatpush2.bf16.msra.mxu0 0
      %5028 = vmatprep.subr.bf16.mxu0 0
      %5029 = vmatpush2.bf16.msra.mxu0 0
      %5030 = vmatprep.subr.bf16.mxu0 0
      %5031 = vmatpush2.bf16.msra.mxu0 0
      %5032 = vmatprep.mubr.bf16.mxu0 0
      %5033 = vmatmul.mubr.bf16.gmra.mxu0 %v3748
      %v5034 = vpop.f32.mrf.mxu0
      %v5035 = vadd.f32 %v4874, %v5034
      %v5036 = vpop.f32.mrf.mxu0
      %v5037 = vpop.f32.mrf.mxu0
      %v5038 = vadd.f32 %v4877, %v5037
      %v5039 = vpop.f32.mrf.mxu0
      %5040 = vmatprep.mubr.bf16.mxu0 0
      %5041 = vmatmul.mubr.bf16.gmra.mxu0 %v3749
      %v5042 = vpop.f32.mrf.mxu0
      %v5043 = vadd.f32 %v4882, %v5042
      %v5044 = vpop.f32.mrf.mxu0
      %v5045 = vpop.f32.mrf.mxu0
      %v5046 = vadd.f32 %v4885, %v5045
      %v5047 = vpop.f32.mrf.mxu0
      %5048 = vmatprep.mubr.bf16.mxu0 0
      %5049 = vmatmul.mubr.bf16.gmra.mxu0 %v3750
      %v5050 = vpop.f32.mrf.mxu0
      %v5051 = vadd.f32 %v4890, %v5050
      %v5052 = vpop.f32.mrf.mxu0
      %v5053 = vpop.f32.mrf.mxu0
      %v5054 = vadd.f32 %v4893, %v5053
      %v5055 = vpop.f32.mrf.mxu0
      %5056 = vmatprep.mubr.bf16.mxu0 0
      %5057 = vmatmul.mubr.bf16.gmra.mxu0 %v3751
      %v5058 = vpop.f32.mrf.mxu0
      %v5059 = vadd.f32 %v4898, %v5058
      %v5060 = vpop.f32.mrf.mxu0
      %v5061 = vpop.f32.mrf.mxu0
      %v5062 = vadd.f32 %v4901, %v5061
      %v5063 = vpop.f32.mrf.mxu0
      %5064 = vmatprep.mubr.bf16.mxu0 0
      %5065 = vmatmul.mubr.bf16.gmra.mxu0 %v3752
      %v5066 = vpop.f32.mrf.mxu0
      %v5067 = vadd.f32 %v4906, %v5066
      %v5068 = vpop.f32.mrf.mxu0
      %v5069 = vpop.f32.mrf.mxu0
      %v5070 = vadd.f32 %v4909, %v5069
      %v5071 = vpop.f32.mrf.mxu0
      %5072 = vmatprep.mubr.bf16.mxu0 0
      %5073 = vmatmul.mubr.bf16.gmra.mxu0 %v3753
      %v5074 = vpop.f32.mrf.mxu0
      %v5075 = vadd.f32 %v4914, %v5074
      %v5076 = vpop.f32.mrf.mxu0
      %v5077 = vpop.f32.mrf.mxu0
      %v5078 = vadd.f32 %v4917, %v5077
      %v5079 = vpop.f32.mrf.mxu0
      %5080 = vmatprep.mubr.bf16.mxu0 0
      %5081 = vmatmul.mubr.bf16.gmra.mxu0 %v3754
      %v5082 = vpop.f32.mrf.mxu0
      %v5083 = vadd.f32 %v4922, %v5082
      %v5084 = vpop.f32.mrf.mxu0
      %v5085 = vpop.f32.mrf.mxu0
      %v5086 = vadd.f32 %v4925, %v5085
      %v5087 = vpop.f32.mrf.mxu0
      %5088 = vmatprep.mubr.bf16.mxu0 0
      %5089 = vmatmul.mubr.bf16.gmra.mxu0 %v3755
      %v5090 = vpop.f32.mrf.mxu0
      %v5091 = vadd.f32 %v4930, %v5090
      %v5092 = vpop.f32.mrf.mxu0
      %v5093 = vpop.f32.mrf.mxu0
      %v5094 = vadd.f32 %v4933, %v5093
      %v5095 = vpop.f32.mrf.mxu0
      %5096 = vmatprep.mubr.bf16.mxu0 0
      %5097 = vmatmul.mubr.bf16.gmra.mxu0 %v3756
      %v5098 = vpop.f32.mrf.mxu0
      %v5099 = vadd.f32 %v4938, %v5098
      %v5100 = vpop.f32.mrf.mxu0
      %v5101 = vpop.f32.mrf.mxu0
      %v5102 = vadd.f32 %v4941, %v5101
      %v5103 = vpop.f32.mrf.mxu0
      %5104 = vmatprep.mubr.bf16.mxu0 0
      %5105 = vmatmul.mubr.bf16.gmra.mxu0 %v3757
      %v5106 = vpop.f32.mrf.mxu0
      %v5107 = vadd.f32 %v4946, %v5106
      %v5108 = vpop.f32.mrf.mxu0
      %v5109 = vpop.f32.mrf.mxu0
      %v5110 = vadd.f32 %v4949, %v5109
      %v5111 = vpop.f32.mrf.mxu0
      %5112 = vmatprep.mubr.bf16.mxu0 0
      %5113 = vmatmul.mubr.bf16.gmra.mxu0 %v3758
      %v5114 = vpop.f32.mrf.mxu0
      %v5115 = vadd.f32 %v4954, %v5114
      %v5116 = vpop.f32.mrf.mxu0
      %v5117 = vpop.f32.mrf.mxu0
      %v5118 = vadd.f32 %v4957, %v5117
      %v5119 = vpop.f32.mrf.mxu0
      %5120 = vmatprep.mubr.bf16.mxu0 0
      %5121 = vmatmul.mubr.bf16.gmra.mxu0 %v3759
      %v5122 = vpop.f32.mrf.mxu0
      %v5123 = vadd.f32 %v4962, %v5122
      %v5124 = vpop.f32.mrf.mxu0
      %v5125 = vpop.f32.mrf.mxu0
      %v5126 = vadd.f32 %v4965, %v5125
      %v5127 = vpop.f32.mrf.mxu0
      %5128 = vmatprep.mubr.bf16.mxu0 0
      %5129 = vmatmul.mubr.bf16.gmra.mxu0 %v3760
      %v5130 = vpop.f32.mrf.mxu0
      %v5131 = vadd.f32 %v4970, %v5130
      %v5132 = vpop.f32.mrf.mxu0
      %v5133 = vpop.f32.mrf.mxu0
      %v5134 = vadd.f32 %v4973, %v5133
      %v5135 = vpop.f32.mrf.mxu0
      %5136 = vmatprep.mubr.bf16.mxu0 0
      %5137 = vmatmul.mubr.bf16.gmra.mxu0 %v3761
      %v5138 = vpop.f32.mrf.mxu0
      %v5139 = vadd.f32 %v4978, %v5138
      %v5140 = vpop.f32.mrf.mxu0
      %v5141 = vpop.f32.mrf.mxu0
      %v5142 = vadd.f32 %v4981, %v5141
      %v5143 = vpop.f32.mrf.mxu0
      %5144 = vmatprep.mubr.bf16.mxu0 0
      %5145 = vmatmul.mubr.bf16.gmra.mxu0 %v3762
      %v5146 = vpop.f32.mrf.mxu0
      %v5147 = vadd.f32 %v4986, %v5146
      %v5148 = vpop.f32.mrf.mxu0
      %v5149 = vpop.f32.mrf.mxu0
      %v5150 = vadd.f32 %v4989, %v5149
      %v5151 = vpop.f32.mrf.mxu0
      %5152 = vmatprep.mubr.bf16.mxu0 0
      %5153 = vmatmul.mubr.bf16.gmra.mxu0 %v3763
      %v5154 = vpop.f32.mrf.mxu0
      %v5155 = vadd.f32 %v4994, %v5154
      %v5156 = vpop.f32.mrf.mxu0
      %v5157 = vpop.f32.mrf.mxu0
      %v5158 = vadd.f32 %v4997, %v5157
      %v5159 = vpop.f32.mrf.mxu0
      %5160 = vdwg.mxu0
      %v5161 = vpack.c.bf16 %v5038, %v5035
      %v5162 = vpack.c.bf16 %v5046, %v5043
      %v5163 = vpack.c.bf16 %v5054, %v5051
      %v5164 = vpack.c.bf16 %v5062, %v5059
      %v5165 = vpack.c.bf16 %v5070, %v5067
      %v5166 = vpack.c.bf16 %v5078, %v5075
      %v5167 = vpack.c.bf16 %v5086, %v5083
      %v5168 = vpack.c.bf16 %v5094, %v5091
      %v5169 = vpack.c.bf16 %v5102, %v5099
      %v5170 = vpack.c.bf16 %v5110, %v5107
      %v5171 = vpack.c.bf16 %v5118, %v5115
      %v5172 = vpack.c.bf16 %v5126, %v5123
      %v5173 = vpack.c.bf16 %v5134, %v5131
      %v5174 = vpack.c.bf16 %v5142, %v5139
      %v5175 = vpack.c.bf16 %v5150, %v5147
      %v5176 = vpack.c.bf16 %v5158, %v5155
      %v5193 = vunpack.c.l.b16 %v5161
      %v5194 = vunpack.c.h.b16 %v5161
      %v5195 = vunpack.c.l.b16 %v5162
      %v5196 = vunpack.c.h.b16 %v5162
      %v5197 = vunpack.c.l.b16 %v5163
      %v5198 = vunpack.c.h.b16 %v5163
      %v5199 = vunpack.c.l.b16 %v5164
      %v5200 = vunpack.c.h.b16 %v5164
      %v5201 = vunpack.c.l.b16 %v5165
      %v5202 = vunpack.c.h.b16 %v5165
      %v5203 = vunpack.c.l.b16 %v5166
      %v5204 = vunpack.c.h.b16 %v5166
      %v5205 = vunpack.c.l.b16 %v5167
      %v5206 = vunpack.c.h.b16 %v5167
      %v5207 = vunpack.c.l.b16 %v5168
      %v5208 = vunpack.c.h.b16 %v5168
      %v5209 = vunpack.c.l.b16 %v5169
      %v5210 = vunpack.c.h.b16 %v5169
      %v5211 = vunpack.c.l.b16 %v5170
      %v5212 = vunpack.c.h.b16 %v5170
      %v5213 = vunpack.c.l.b16 %v5171
      %v5214 = vunpack.c.h.b16 %v5171
      %v5215 = vunpack.c.l.b16 %v5172
      %v5216 = vunpack.c.h.b16 %v5172
      %v5217 = vunpack.c.l.b16 %v5173
      %v5218 = vunpack.c.h.b16 %v5173
      %v5219 = vunpack.c.l.b16 %v5174
      %v5220 = vunpack.c.h.b16 %v5174
      %v5221 = vunpack.c.l.b16 %v5175
      %v5222 = vunpack.c.h.b16 %v5175
      %v5223 = vunpack.c.l.b16 %v5176
      %v5224 = vunpack.c.h.b16 %v5176
      %v5225 = vpack.c.b16 %v5193, %v5193
      %v5226 = vpack.c.b16 %v5194, %v5194
      %v5227 = vpack.c.b16 %v5195, %v5195
      %v5228 = vpack.c.b16 %v5196, %v5196
      %v5229 = vpack.c.b16 %v5197, %v5197
      %v5230 = vpack.c.b16 %v5198, %v5198
      %v5231 = vpack.c.b16 %v5199, %v5199
      %v5232 = vpack.c.b16 %v5200, %v5200
      %v5233 = vpack.c.b16 %v5201, %v5201
      %v5234 = vpack.c.b16 %v5202, %v5202
      %v5235 = vpack.c.b16 %v5203, %v5203
      %v5236 = vpack.c.b16 %v5204, %v5204
      %v5237 = vpack.c.b16 %v5205, %v5205
      %v5238 = vpack.c.b16 %v5206, %v5206
      %v5239 = vpack.c.b16 %v5207, %v5207
      %v5240 = vpack.c.b16 %v5208, %v5208
      %v5241 = vpack.c.b16 %v5209, %v5209
      %v5242 = vpack.c.b16 %v5210, %v5210
      %v5243 = vpack.c.b16 %v5211, %v5211
      %v5244 = vpack.c.b16 %v5212, %v5212
      %v5245 = vpack.c.b16 %v5213, %v5213
      %v5246 = vpack.c.b16 %v5214, %v5214
      %v5247 = vpack.c.b16 %v5215, %v5215
      %v5248 = vpack.c.b16 %v5216, %v5216
      %v5249 = vpack.c.b16 %v5217, %v5217
      %v5250 = vpack.c.b16 %v5218, %v5218
      %v5251 = vpack.c.b16 %v5219, %v5219
      %v5252 = vpack.c.b16 %v5220, %v5220
      %v5253 = vpack.c.b16 %v5221, %v5221
      %v5254 = vpack.c.b16 %v5222, %v5222
      %v5255 = vpack.c.b16 %v5223, %v5223
      %v5256 = vpack.c.b16 %v5224, %v5224
      %5289 = vst [vmem:[%s457] sm:$0xf] %v5225
      %5290 = vst [vmem:[%s457 + $0x4] sm:$0xf] %v5226
      %5291 = vst [vmem:[%s457 + $0x8] sm:$0xf] %v5227
      %5292 = vst [vmem:[%s457 + $0xc] sm:$0xf] %v5228
      %5293 = vst [vmem:[%s457 + $0x10] sm:$0xf] %v5229
      %5294 = vst [vmem:[%s457 + $0x14] sm:$0xf] %v5230
      %5295 = vst [vmem:[%s457 + $0x18] sm:$0xf] %v5231
      %5296 = vst [vmem:[%s457 + $0x1c] sm:$0xf] %v5232
      %5297 = vst [vmem:[%s457 + $0x20] sm:$0xf] %v5233
      %5298 = vst [vmem:[%s457 + $0x24] sm:$0xf] %v5234
      %5299 = vst [vmem:[%s457 + $0x28] sm:$0xf] %v5235
      %5300 = vst [vmem:[%s457 + $0x2c] sm:$0xf] %v5236
      %5301 = vst [vmem:[%s457 + $0x30] sm:$0xf] %v5237
      %5302 = vst [vmem:[%s457 + $0x34] sm:$0xf] %v5238
      %5303 = vst [vmem:[%s457 + $0x38] sm:$0xf] %v5239
      %5304 = vst [vmem:[%s457 + $0x3c] sm:$0xf] %v5240
      %5305 = vst [vmem:[%s457 + $0x40] sm:$0xf] %v5241
      %5306 = vst [vmem:[%s457 + $0x44] sm:$0xf] %v5242
      %5307 = vst [vmem:[%s457 + $0x48] sm:$0xf] %v5243
      %5308 = vst [vmem:[%s457 + $0x4c] sm:$0xf] %v5244
      %5309 = vst [vmem:[%s457 + $0x50] sm:$0xf] %v5245
      %5310 = vst [vmem:[%s457 + $0x54] sm:$0xf] %v5246
      %5311 = vst [vmem:[%s457 + $0x58] sm:$0xf] %v5247
      %5312 = vst [vmem:[%s457 + $0x5c] sm:$0xf] %v5248
      %5313 = vst [vmem:[%s457 + $0x60] sm:$0xf] %v5249
      %5314 = vst [vmem:[%s457 + $0x64] sm:$0xf] %v5250
      %5315 = vst [vmem:[%s457 + $0x68] sm:$0xf] %v5251
      %5316 = vst [vmem:[%s457 + $0x6c] sm:$0xf] %v5252
      %5317 = vst [vmem:[%s457 + $0x70] sm:$0xf] %v5253
      %5318 = vst [vmem:[%s457 + $0x74] sm:$0xf] %v5254
      %5319 = vst [vmem:[%s457 + $0x78] sm:$0xf] %v5255
      %5320 = vst [vmem:[%s457 + $0x7c] sm:$0xf] %v5256
      %v5321 = vadd.f32 %v5035, %v5038
      %v5322 = vadd.f32 %v5321, %v5043
      %v5323 = vadd.f32 %v5322, %v5046
      %v5324 = vadd.f32 %v5323, %v5051
      %v5325 = vadd.f32 %v5324, %v5054
      %v5326 = vadd.f32 %v5325, %v5059
      %v5327 = vadd.f32 %v5326, %v5062
      %v5328 = vadd.f32 %v5327, %v5067
      %v5329 = vadd.f32 %v5328, %v5070
      %v5330 = vadd.f32 %v5329, %v5075
      %v5331 = vadd.f32 %v5330, %v5078
      %v5332 = vadd.f32 %v5331, %v5083
      %v5333 = vadd.f32 %v5332, %v5086
      %v5334 = vadd.f32 %v5333, %v5091
      %v5335 = vadd.f32 %v5334, %v5094
      %v5336 = vadd.f32 %v5335, %v5099
      %v5337 = vadd.f32 %v5336, %v5102
      %v5338 = vadd.f32 %v5337, %v5107
      %v5339 = vadd.f32 %v5338, %v5110
      %v5340 = vadd.f32 %v5339, %v5115
      %v5341 = vadd.f32 %v5340, %v5118
      %v5342 = vadd.f32 %v5341, %v5123
      %v5343 = vadd.f32 %v5342, %v5126
      %v5344 = vadd.f32 %v5343, %v5131
      %v5345 = vadd.f32 %v5344, %v5134
      %v5346 = vadd.f32 %v5345, %v5139
      %v5347 = vadd.f32 %v5346, %v5142
      %v5348 = vadd.f32 %v5347, %v5147
      %v5349 = vadd.f32 %v5348, %v5150
      %v5350 = vadd.f32 %v5349, %v5155
      %v5351 = vadd.f32 %v5350, %v5158
      %v5352 = vrot.slane %v5351, 4
      %v5353 = vadd.f32 %v5351, %v5352
      %v5354 = vrot.slane %v5353, 2
      %v5355 = vadd.f32 %v5353, %v5354
      %v5356 = vrot.slane %v5355, 1
      %v5357 = vadd.f32 %v5355, %v5356
      %v5358 = vmul.f32 %v5035, %v5035
      %v5359 = vmul.f32 %v5038, %v5038
      %v5360 = vmul.f32 %v5043, %v5043
      %v5361 = vmul.f32 %v5046, %v5046
      %v5362 = vmul.f32 %v5051, %v5051
      %v5363 = vmul.f32 %v5054, %v5054
      %v5364 = vmul.f32 %v5059, %v5059
      %v5365 = vmul.f32 %v5062, %v5062
      %v5366 = vmul.f32 %v5067, %v5067
      %v5367 = vmul.f32 %v5070, %v5070
      %v5368 = vmul.f32 %v5075, %v5075
      %v5369 = vmul.f32 %v5078, %v5078
      %v5370 = vmul.f32 %v5083, %v5083
      %v5371 = vmul.f32 %v5086, %v5086
      %v5372 = vmul.f32 %v5091, %v5091
      %v5373 = vmul.f32 %v5094, %v5094
      %v5374 = vmul.f32 %v5099, %v5099
      %v5375 = vmul.f32 %v5102, %v5102
      %v5376 = vmul.f32 %v5107, %v5107
      %v5377 = vmul.f32 %v5110, %v5110
      %v5378 = vmul.f32 %v5115, %v5115
      %v5379 = vmul.f32 %v5118, %v5118
      %v5380 = vmul.f32 %v5123, %v5123
      %v5381 = vmul.f32 %v5126, %v5126
      %v5382 = vmul.f32 %v5131, %v5131
      %v5383 = vmul.f32 %v5134, %v5134
      %v5384 = vmul.f32 %v5139, %v5139
      %v5385 = vmul.f32 %v5142, %v5142
      %v5386 = vmul.f32 %v5147, %v5147
      %v5387 = vmul.f32 %v5150, %v5150
      %v5388 = vmul.f32 %v5155, %v5155
      %v5389 = vmul.f32 %v5158, %v5158
      %v5390 = vadd.f32 %v5358, %v5359
      %v5391 = vadd.f32 %v5390, %v5360
      %v5392 = vadd.f32 %v5391, %v5361
      %v5393 = vadd.f32 %v5392, %v5362
      %v5394 = vadd.f32 %v5393, %v5363
      %v5395 = vadd.f32 %v5394, %v5364
      %v5396 = vadd.f32 %v5395, %v5365
      %v5397 = vadd.f32 %v5396, %v5366
      %v5398 = vadd.f32 %v5397, %v5367
      %v5399 = vadd.f32 %v5398, %v5368
      %v5400 = vadd.f32 %v5399, %v5369
      %v5401 = vadd.f32 %v5400, %v5370
      %v5402 = vadd.f32 %v5401, %v5371
      %v5403 = vadd.f32 %v5402, %v5372
      %v5404 = vadd.f32 %v5403, %v5373
      %v5405 = vadd.f32 %v5404, %v5374
      %v5406 = vadd.f32 %v5405, %v5375
      %v5407 = vadd.f32 %v5406, %v5376
      %v5408 = vadd.f32 %v5407, %v5377
      %v5409 = vadd.f32 %v5408, %v5378
      %v5410 = vadd.f32 %v5409, %v5379
      %v5411 = vadd.f32 %v5410, %v5380
      %v5412 = vadd.f32 %v5411, %v5381
      %v5413 = vadd.f32 %v5412, %v5382
      %v5414 = vadd.f32 %v5413, %v5383
      %v5415 = vadd.f32 %v5414, %v5384
      %v5416 = vadd.f32 %v5415, %v5385
      %v5417 = vadd.f32 %v5416, %v5386
      %v5418 = vadd.f32 %v5417, %v5387
      %v5419 = vadd.f32 %v5418, %v5388
      %v5420 = vadd.f32 %v5419, %v5389
      %v5421 = vrot.slane %v5420, 4
      %v5422 = vadd.f32 %v5420, %v5421
      %v5423 = vrot.slane %v5422, 2
      %v5424 = vadd.f32 %v5422, %v5423
      %v5425 = vrot.slane %v5424, 1
      %v5426 = vadd.f32 %v5424, %v5425
      %vm5427 = vcmask 1040384
      %v5428 = vsel %vm5427, %v5357, %v5426
      %5429 = vst [vmem:[%s465] sm:$0x3] %v5428
      %s5430 = smul.u32 16, %s24
      %p5431 = scmp.lt.s32.totalorder %s23, 1
      %s5432 = scalar_select %p5431, %s23, 1
      %p5433 = scmp.lt.s32.totalorder %s5430, 15
      %s5434 = scalar_select %p5433, %s5430, 15
      %s5435 = smul.addr %s5434, 2
      %s5436 = smul.addr %s5432, 32
      %s5437 = sadd.s32 %s5435, %s5436
      %s5438 = smul.addr %s5437, 4
      %s5439 = scalar_lea.vmem %s6, %s5438
      %p5440 = scmp.lt.s32.totalorder %s23, 1
      %s5441 = scalar_select %p5440, %s23, 1
      %p5442 = scmp.lt.s32.totalorder %s24, 0
      %s5443 = scalar_select %p5442, %s24, 0
      %s5444 = sadd.s32 %s5443, %s5441
      %s5445 = smul.addr %s5444, 2
      %s5446 = scalar_lea.vmem %s7, %s5445
      // Predicated region
      $region45: #{double_conv_forward.4} parent=43 // pred_check
        %p5447 = pneg %p214
      $region46: #{double_conv_forward.4} parent=43 // pred_check_branch
        %5449 = sbr.rel (%p5447) target = $region48
      $region47: #{double_conv_forward.4} parent=43 // pred_region
        %s5450 = smul.u32 16, %s24
      $region48: #{double_conv_forward.4} parent=43 // pred_fallthru
        _
      // Predicated region
      $region49: #{double_conv_forward.4} parent=43 // pred_check
        %p5451 = pneg %p242
      $region50: #{double_conv_forward.4} parent=43 // pred_check_branch
        %5453 = sbr.rel (%p5451) target = $region52
      $region51: #{double_conv_forward.4} parent=43 // pred_region
        _
      $region52: #{double_conv_forward.4} parent=43 // pred_fallthru
        _
    $region44: #{double_conv_forward.4} parent=5 // pred_fallthru
      _
    %p5454 = scmp.le.s32.totalorder 2, %s14
    // Predicated region
    $region53: #{double_conv_forward.4} parent=5 // pred_check
      %p5455 = pneg %p5454
    $region54: #{double_conv_forward.4} parent=5 // pred_check_branch
      %5457 = sbr.rel (%p5455) target = $region56
    $region55: #{double_conv_forward.4} parent=5 // pred_region
      %s5458 = ssub.s32 %s14, 2
      // Predicated region
      $region57: #{double_conv_forward.4} parent=55 // pred_check
        %p5459 = pneg %p220
      $region58: #{double_conv_forward.4} parent=55 // pred_check_branch
        %5461 = sbr.rel (%p5459) target = $region60
      $region59: #{double_conv_forward.4} parent=55 // pred_region
        %s5462 = smul.u32 16, %s26
        %p5463 = scmp.lt.s32.totalorder %s25, 1
        %s5464 = scalar_select %p5463, %s25, 1
        %p5465 = scmp.lt.s32.totalorder %s5462, 15
        %s5466 = scalar_select %p5465, %s5462, 15
        %s5467 = smul.addr %s5466, 2
        %s5468 = smul.addr %s5464, 32
        %s5469 = sadd.s32 %s5467, %s5468
        %s5470 = smul.addr %s5469, 4
        %s5471 = scalar_lea.vmem %s6, %s5470
      $region60: #{double_conv_forward.4} parent=55 // pred_fallthru
        _
      // Predicated region
      $region61: #{double_conv_forward.4} parent=55 // pred_check
        %p5472 = pneg %p248
      $region62: #{double_conv_forward.4} parent=55 // pred_check_branch
        %5474 = sbr.rel (%p5472) target = $region64
      $region63: #{double_conv_forward.4} parent=55 // pred_region
        %p5475 = scmp.lt.s32.totalorder %s25, 1
        %s5476 = scalar_select %p5475, %s25, 1
        %p5477 = scmp.lt.s32.totalorder %s26, 0
        %s5478 = scalar_select %p5477, %s26, 0
        %s5479 = sadd.s32 %s5478, %s5476
        %s5480 = smul.addr %s5479, 2
        %s5481 = scalar_lea.vmem %s7, %s5480
      $region64: #{double_conv_forward.4} parent=55 // pred_fallthru
        _
    $region56: #{double_conv_forward.4} parent=5 // pred_fallthru
      _
  $region6: #{double_conv_forward.4} parent=0 // loop_footer
    %s18 = sadd.s32 1, %s14
  $region7: #{double_conv_forward.4} parent=0 // loop_footer_branch
    %13 = sbr.rel target = $region3
  $region8: #{double_conv_forward.4} parent=0 // loop_exit
    _

</llo_original>
